<compile_context>
chip_gen: v7x
topology: tpu7x:2x2x1
jax: 0.10.0
libtpu: 0.0.40
codegen_flags: <defaults>
</compile_context>

<pallas_src>
import math
import functools

import jax
import jax.numpy as jnp
from jax.experimental import pallas as pl
from jax.experimental.pallas import tpu as pltpu


# ----------------------------------------------------------------------------
# Positional encoding (glue, plain JAX) -- matches Encoder.positionalencoding1d
# ----------------------------------------------------------------------------
def positionalencoding1d(length, d_model, temp=10000.0):
    if d_model % 2 != 0:
        raise ValueError("d_model must be even")
    pos = jnp.arange(length, dtype=jnp.float32)[:, None]
    div = jnp.exp(
        jnp.arange(0, d_model, 2, dtype=jnp.float32) * -(math.log(temp) / d_model)
    )
    pe = jnp.zeros((length, d_model), dtype=jnp.float32)
    pe = pe.at[:, 0::2].set(jnp.sin(pos * div))
    pe = pe.at[:, 1::2].set(jnp.cos(pos * div))
    return pe


# ----------------------------------------------------------------------------
# In-kernel building blocks (operate on loaded f32 / bf16 arrays)
# ----------------------------------------------------------------------------
def _layernorm(t, g, b, eps=1e-5):
    mu = jnp.mean(t, axis=-1, keepdims=True)
    var = jnp.mean(jnp.square(t - mu), axis=-1, keepdims=True)
    return (t - mu) * jax.lax.rsqrt(var + eps) * g + b


def _softmax_attention(q, k, v, n_heads):
    """FullAttention, static unroll over heads on lane slices (no relayouts).

    q: (Lq, D) f32, k/v: (Lk, D) f32.  Returns (Lq, D) f32.
    """
    D = q.shape[-1]
    E = D // n_heads
    scale = 1.0 / math.sqrt(E)

    qb = (q * scale).astype(jnp.bfloat16)   # fold softmax temp while f32
    kb = k.astype(jnp.bfloat16)
    vb = v.astype(jnp.bfloat16)

    outs = []
    for h in range(n_heads):                # static unroll, lane slices
        lo, hi = h * E, (h + 1) * E
        qh = qb[:, lo:hi]                   # (Lq, E)
        kh = kb[:, lo:hi]                   # (Lk, E)
        vh = vb[:, lo:hi]                   # (Lk, E)
        s = jax.lax.dot_general(
            qh, kh, (((1,), (1,)), ((), ())),
            preferred_element_type=jnp.float32)          # (Lq, Lk) f32
        s = s - jnp.max(s, axis=-1, keepdims=True)
        p = jnp.exp(s)
        p = p * pl.reciprocal(jnp.sum(p, axis=-1, keepdims=True), approx=True)
        oh = jnp.dot(p.astype(jnp.bfloat16), vh,
                     preferred_element_type=jnp.float32)  # (Lq, E)
        outs.append(oh)
    return jnp.concatenate(outs, axis=-1)   # (Lq, D)


def _mha_fused_qkv(x, n_heads, wqkv, bq, bk, bv, wo, bo):
    """Self-attention with merged (D, 3D) Q/K/V projection."""
    D = x.shape[-1]
    qkv = jnp.dot(x.astype(jnp.bfloat16), wqkv,
                  preferred_element_type=jnp.float32)     # (L, 3D)
    q = qkv[:, :D] + bq
    k = qkv[:, D:2 * D] + bk
    v = qkv[:, 2 * D:] + bv
    att = _softmax_attention(q, k, v, n_heads)
    return jnp.dot(att.astype(jnp.bfloat16), wo,
                   preferred_element_type=jnp.float32) + bo


def _encoder_layer(x, n_heads, wqkv, wo, w1, w2, bd, bf):
    # bd rows: 0 bq, 1 bk, 2 bv, 3 bo, 4 b2, 5 ln1g, 6 ln1b, 7 ln2g, 8 ln2b
    att = _mha_fused_qkv(x, n_heads, wqkv,
                         bd[0:1], bd[1:2], bd[2:3], wo, bd[3:4])
    x = _layernorm(x + att, bd[5:6], bd[6:7])
    y = jnp.maximum(
        jnp.dot(x.astype(jnp.bfloat16), w1,
                preferred_element_type=jnp.float32) + bf, 0.0)
    y = jnp.dot(y.astype(jnp.bfloat16), w2,
                preferred_element_type=jnp.float32) + bd[4:5]
    return _layernorm(x + y, bd[7:8], bd[8:9])


def _decoder_layer(x, mem_bf, n_heads,
                   swqkv, swo, cwq, cwkv, cwo, w1, w2, bd, bf):
    # bd rows: 0 sbq, 1 sbk, 2 sbv, 3 sbo, 4 cbq, 5 cbk, 6 cbv, 7 cbo, 8 b2,
    #          9 ln1g, 10 ln1b, 11 ln2g, 12 ln2b, 13 ln3g, 14 ln3b
    D = x.shape[-1]

    # self-attention
    att = _mha_fused_qkv(x, n_heads, swqkv,
                         bd[0:1], bd[1:2], bd[2:3], swo, bd[3:4])
    x = _layernorm(x + att, bd[9:10], bd[10:11])

    # cross-attention (K/V projections merged; mem already bf16, cast once)
    q = jnp.dot(x.astype(jnp.bfloat16), cwq,
                preferred_element_type=jnp.float32) + bd[4:5]
    kv = jnp.dot(mem_bf, cwkv, preferred_element_type=jnp.float32)  # (Lk, 2D)
    k = kv[:, :D] + bd[5:6]
    v = kv[:, D:] + bd[6:7]
    att = _softmax_attention(q, k, v, n_heads)
    att = jnp.dot(att.astype(jnp.bfloat16), cwo,
                  preferred_element_type=jnp.float32) + bd[7:8]
    x = _layernorm(x + att, bd[11:12], bd[12:13])

    # feed-forward
    y = jnp.maximum(
        jnp.dot(x.astype(jnp.bfloat16), w1,
                preferred_element_type=jnp.float32) + bf, 0.0)
    y = jnp.dot(y.astype(jnp.bfloat16), w2,
                preferred_element_type=jnp.float32) + bd[8:9]
    return _layernorm(x + y, bd[13:14], bd[14:15])


# ----------------------------------------------------------------------------
# Single fused kernel: full encoder stack + full decoder stack per batch elem
# ----------------------------------------------------------------------------
def _transformer_kernel(n_heads, n_enc, n_dec,
                        q_ref, k_ref, pe_ref,
                        ewqkv_ref, ewo_ref, ew1_ref, ew2_ref, ebd_ref, ebf_ref,
                        swqkv_ref, swo_ref, cwq_ref, cwkv_ref, cwo_ref,
                        dw1_ref, dw2_ref, dbd_ref, dbf_ref,
                        o_ref):
    # encoder: positional encoding fused, activation stays on-chip
    mem = k_ref[0].astype(jnp.float32) + pe_ref[...]          # (Lk, D)
    for l in range(n_enc):                                    # static unroll
        mem = _encoder_layer(mem, n_heads,
                             ewqkv_ref[l], ewo_ref[l], ew1_ref[l], ew2_ref[l],
                             ebd_ref[l], ebf_ref[l])

    mem_bf = mem.astype(jnp.bfloat16)   # cast once, reused by every layer

    # decoder
    x = q_ref[0].astype(jnp.float32)                          # (Lq, D)
    for l in range(n_dec):                                    # static unroll
        x = _decoder_layer(x, mem_bf, n_heads,
                           swqkv_ref[l], swo_ref[l], cwq_ref[l], cwkv_ref[l],
                           cwo_ref[l], dw1_ref[l], dw2_ref[l],
                           dbd_ref[l], dbf_ref[l])
    o_ref[0] = x.astype(o_ref.dtype)


def _const_spec(arr):
    nd = arr.ndim
    return pl.BlockSpec(arr.shape, lambda n, _nd=nd: (0,) * _nd)


def transformer_forward(Q, K, enc_params, dec_params, n_heads):
    N, Lq, D = Q.shape
    _, Lk, _ = K.shape
    pe = positionalencoding1d(Lk, D)           # constant-folded under jit

    n_enc = enc_params["wqkv"].shape[0]
    n_dec = dec_params["swqkv"].shape[0]

    weight_args = [
        pe,
        enc_params["wqkv"], enc_params["wo"], enc_params["w1"],
        enc_params["w2"], enc_params["bd"], enc_params["bf"],
        dec_params["swqkv"], dec_params["swo"], dec_params["cwq"],
        dec_params["cwkv"], dec_params["cwo"], dec_params["w1"],
        dec_params["w2"], dec_params["bd"], dec_params["bf"],
    ]

    in_specs = [
        pl.BlockSpec((1, Lq, D), lambda n: (n, 0, 0)),
        pl.BlockSpec((1, Lk, D), lambda n: (n, 0, 0)),
    ] + [_const_spec(a) for a in weight_args]

    return pl.pallas_call(
        functools.partial(_transformer_kernel, n_heads, n_enc, n_dec),
        out_shape=jax.ShapeDtypeStruct((N, Lq, D), Q.dtype),
        grid=(N,),
        in_specs=in_specs,
        out_specs=pl.BlockSpec((1, Lq, D), lambda n: (n, 0, 0)),
        compiler_params=pltpu.CompilerParams(dimension_semantics=("parallel",)),
    )(Q, K, *weight_args)


# ----------------------------------------------------------------------------
# Deterministic parameter init (shapes follow the PyTorch module).
# Weights stacked per stack along a leading layer axis, stored in bf16 (MXU
# operands); biases / layernorm params packed into f32 slabs.
# ----------------------------------------------------------------------------
def _lin_w(key, fan_in, shape):
    return (jax.random.normal(key, shape, jnp.float32) / math.sqrt(fan_in)).astype(
        jnp.bfloat16
    )


def init_encoder_params(key, n_layers, d_model, d_ff):
    keys = jax.random.split(key, n_layers * 6)
    wqkv, wo, w1, w2 = [], [], [], []
    for l in range(n_layers):
        k = keys[l * 6:(l + 1) * 6]
        wqkv.append(jnp.concatenate(
            [_lin_w(k[0], d_model, (d_model, d_model)),
             _lin_w(k[1], d_model, (d_model, d_model)),
             _lin_w(k[2], d_model, (d_model, d_model))], axis=1))
        wo.append(_lin_w(k[3], d_model, (d_model, d_model)))
        w1.append(_lin_w(k[4], d_model, (d_model, d_ff)))
        w2.append(_lin_w(k[5], d_ff, (d_ff, d_model)))
    # bias / LN slab rows: bq, bk, bv, bo, b2, ln1g, ln1b, ln2g, ln2b
    bd = jnp.zeros((n_layers, 9, d_model), jnp.float32)
    bd = bd.at[:, 5].set(1.0).at[:, 7].set(1.0)
    bf = jnp.zeros((n_layers, 1, d_ff), jnp.float32)   # row: b1
    return {"wqkv": jnp.stack(wqkv), "wo": jnp.stack(wo),
            "w1": jnp.stack(w1), "w2": jnp.stack(w2), "bd": bd, "bf": bf}


def init_decoder_params(key, n_layers, d_model, d_ff):
    keys = jax.random.split(key, n_layers * 10)
    swqkv, swo, cwq, cwkv, cwo, w1, w2 = [], [], [], [], [], [], []
    for l in range(n_layers):
        k = keys[l * 10:(l + 1) * 10]
        swqkv.append(jnp.concatenate(
            [_lin_w(k[0], d_model, (d_model, d_model)),
             _lin_w(k[1], d_model, (d_model, d_model)),
             _lin_w(k[2], d_model, (d_model, d_model))], axis=1))
        swo.append(_lin_w(k[3], d_model, (d_model, d_model)))
        cwq.append(_lin_w(k[4], d_model, (d_model, d_model)))
        cwkv.append(jnp.concatenate(
            [_lin_w(k[5], d_model, (d_model, d_model)),
             _lin_w(k[6], d_model, (d_model, d_model))], axis=1))
        cwo.append(_lin_w(k[7], d_model, (d_model, d_model)))
        w1.append(_lin_w(k[8], d_model, (d_model, d_ff)))
        w2.append(_lin_w(k[9], d_ff, (d_ff, d_model)))
    # slab rows: sbq,sbk,sbv,sbo, cbq,cbk,cbv,cbo, b2, ln1g,ln1b,ln2g,ln2b,ln3g,ln3b
    bd = jnp.zeros((n_layers, 15, d_model), jnp.float32)
    bd = bd.at[:, 9].set(1.0).at[:, 11].set(1.0).at[:, 13].set(1.0)
    bf = jnp.zeros((n_layers, 1, d_ff), jnp.float32)   # row: b1
    return {"swqkv": jnp.stack(swqkv), "swo": jnp.stack(swo),
            "cwq": jnp.stack(cwq), "cwkv": jnp.stack(cwkv),
            "cwo": jnp.stack(cwo), "w1": jnp.stack(w1), "w2": jnp.stack(w2),
            "bd": bd, "bf": bf}


# ----------------------------------------------------------------------------
# Demo
# ----------------------------------------------------------------------------
if __name__ == "__main__":
    # Small, lane-dense shapes consistent with the module (dim / ffn multiples
    # of 128, sequence lengths multiples of 8).
    N, Lq, Lk, D = 2, 16, 16, 128
    n_heads, d_ff = 4, 256
    n_enc_layers, n_dec_layers = 2, 2

    key = jax.random.PRNGKey(0)
    kq, kk, kpe, kpd = jax.random.split(key, 4)
    Q = jax.random.normal(kq, (N, Lq, D), jnp.float32)
    K = jax.random.normal(kk, (N, Lk, D), jnp.float32)

    enc_params = init_encoder_params(kpe, n_enc_layers, D, d_ff)
    dec_params = init_decoder_params(kpd, n_dec_layers, D, d_ff)

    fwd = jax.jit(functools.partial(transformer_forward, n_heads=n_heads))
    out = fwd(Q, K, enc_params, dec_params)
    out = jax.block_until_ready(out)

    assert out.shape == (N, Lq, D), out.shape
    assert bool(jnp.all(jnp.isfinite(out)))
    print("KERNEL_OK")
</pallas_src>

<mosaic_0001>
module attributes {stable_mosaic.version = 11 : i64} {
  func.func @_transformer_kernel(%arg0: i32, %arg1: memref<1x16x128xf32, #tpu.memory_space<vmem>>, %arg2: memref<1x16x128xf32, #tpu.memory_space<vmem>>, %arg3: memref<16x128xf32, #tpu.memory_space<vmem>>, %arg4: memref<2x128x384xbf16, #tpu.memory_space<vmem>>, %arg5: memref<2x128x128xbf16, #tpu.memory_space<vmem>>, %arg6: memref<2x128x256xbf16, #tpu.memory_space<vmem>>, %arg7: memref<2x256x128xbf16, #tpu.memory_space<vmem>>, %arg8: memref<2x9x128xf32, #tpu.memory_space<vmem>>, %arg9: memref<2x1x256xf32, #tpu.memory_space<vmem>>, %arg10: memref<2x128x384xbf16, #tpu.memory_space<vmem>>, %arg11: memref<2x128x128xbf16, #tpu.memory_space<vmem>>, %arg12: memref<2x128x128xbf16, #tpu.memory_space<vmem>>, %arg13: memref<2x128x256xbf16, #tpu.memory_space<vmem>>, %arg14: memref<2x128x128xbf16, #tpu.memory_space<vmem>>, %arg15: memref<2x128x256xbf16, #tpu.memory_space<vmem>>, %arg16: memref<2x256x128xbf16, #tpu.memory_space<vmem>>, %arg17: memref<2x15x128xf32, #tpu.memory_space<vmem>>, %arg18: memref<2x1x256xf32, #tpu.memory_space<vmem>>, %arg19: memref<1x16x128xf32, #tpu.memory_space<vmem>>) attributes {dimension_semantics = [#tpu.dimension_semantics<parallel>], iteration_bounds = array<i64: 2>, scalar_prefetch = 0 : i64, scratch_operands = 0 : i64, tpu.core_type = #tpu.core_type<tc>, window_params = [{transform_indices = @transform_0, window_bounds = array<i64: 1, 16, 128>}, {transform_indices = @transform_1, window_bounds = array<i64: 1, 16, 128>}, {pipeline_mode = #tpu.pipeline_mode<synchronous>, transform_indices = @transform_2, window_bounds = array<i64: 16, 128>}, {pipeline_mode = #tpu.pipeline_mode<synchronous>, transform_indices = @transform_3, window_bounds = array<i64: 2, 128, 384>}, {pipeline_mode = #tpu.pipeline_mode<synchronous>, transform_indices = @transform_4, window_bounds = array<i64: 2, 128, 128>}, {pipeline_mode = #tpu.pipeline_mode<synchronous>, transform_indices = @transform_5, window_bounds = array<i64: 2, 128, 256>}, {pipeline_mode = #tpu.pipeline_mode<synchronous>, transform_indices = @transform_6, window_bounds = array<i64: 2, 256, 128>}, {pipeline_mode = #tpu.pipeline_mode<synchronous>, transform_indices = @transform_7, window_bounds = array<i64: 2, 9, 128>}, {pipeline_mode = #tpu.pipeline_mode<synchronous>, transform_indices = @transform_8, window_bounds = array<i64: 2, 1, 256>}, {pipeline_mode = #tpu.pipeline_mode<synchronous>, transform_indices = @transform_9, window_bounds = array<i64: 2, 128, 384>}, {pipeline_mode = #tpu.pipeline_mode<synchronous>, transform_indices = @transform_10, window_bounds = array<i64: 2, 128, 128>}, {pipeline_mode = #tpu.pipeline_mode<synchronous>, transform_indices = @transform_11, window_bounds = array<i64: 2, 128, 128>}, {pipeline_mode = #tpu.pipeline_mode<synchronous>, transform_indices = @transform_12, window_bounds = array<i64: 2, 128, 256>}, {pipeline_mode = #tpu.pipeline_mode<synchronous>, transform_indices = @transform_13, window_bounds = array<i64: 2, 128, 128>}, {pipeline_mode = #tpu.pipeline_mode<synchronous>, transform_indices = @transform_14, window_bounds = array<i64: 2, 128, 256>}, {pipeline_mode = #tpu.pipeline_mode<synchronous>, transform_indices = @transform_15, window_bounds = array<i64: 2, 256, 128>}, {pipeline_mode = #tpu.pipeline_mode<synchronous>, transform_indices = @transform_16, window_bounds = array<i64: 2, 15, 128>}, {pipeline_mode = #tpu.pipeline_mode<synchronous>, transform_indices = @transform_17, window_bounds = array<i64: 2, 1, 256>}, {transform_indices = @transform_18, window_bounds = array<i64: 1, 16, 128>}]} {
    %c0 = arith.constant 0 : index
    %c0_0 = arith.constant 0 : index
    %c0_1 = arith.constant 0 : index
    %0 = vector.load %arg2[%c0, %c0_0, %c0_1] : memref<1x16x128xf32, #tpu.memory_space<vmem>>, vector<1x16x128xf32>
    %1 = vector.shape_cast %0 : vector<1x16x128xf32> to vector<16x128xf32>
    %c0_2 = arith.constant 0 : index
    %c0_3 = arith.constant 0 : index
    %2 = vector.load %arg3[%c0_2, %c0_3] : memref<16x128xf32, #tpu.memory_space<vmem>>, vector<16x128xf32>
    %3 = arith.addf %1, %2 : vector<16x128xf32>
    %c0_4 = arith.constant 0 : index
    %c0_5 = arith.constant 0 : index
    %c0_6 = arith.constant 0 : index
    %4 = vector.load %arg4[%c0_4, %c0_5, %c0_6] : memref<2x128x384xbf16, #tpu.memory_space<vmem>>, vector<1x128x384xbf16>
    %5 = vector.shape_cast %4 : vector<1x128x384xbf16> to vector<128x384xbf16>
    %c0_7 = arith.constant 0 : index
    %c0_8 = arith.constant 0 : index
    %c0_9 = arith.constant 0 : index
    %6 = vector.load %arg5[%c0_7, %c0_8, %c0_9] : memref<2x128x128xbf16, #tpu.memory_space<vmem>>, vector<1x128x128xbf16>
    %7 = vector.shape_cast %6 : vector<1x128x128xbf16> to vector<128x128xbf16>
    %c0_10 = arith.constant 0 : index
    %c0_11 = arith.constant 0 : index
    %c0_12 = arith.constant 0 : index
    %8 = vector.load %arg6[%c0_10, %c0_11, %c0_12] : memref<2x128x256xbf16, #tpu.memory_space<vmem>>, vector<1x128x256xbf16>
    %9 = vector.shape_cast %8 : vector<1x128x256xbf16> to vector<128x256xbf16>
    %c0_13 = arith.constant 0 : index
    %c0_14 = arith.constant 0 : index
    %c0_15 = arith.constant 0 : index
    %10 = vector.load %arg7[%c0_13, %c0_14, %c0_15] : memref<2x256x128xbf16, #tpu.memory_space<vmem>>, vector<1x256x128xbf16>
    %11 = vector.shape_cast %10 : vector<1x256x128xbf16> to vector<256x128xbf16>
    %c0_16 = arith.constant 0 : index
    %c0_17 = arith.constant 0 : index
    %c0_18 = arith.constant 0 : index
    %12 = vector.load %arg8[%c0_16, %c0_17, %c0_18] : memref<2x9x128xf32, #tpu.memory_space<vmem>>, vector<1x9x128xf32>
    %13 = vector.shape_cast %12 : vector<1x9x128xf32> to vector<9x128xf32>
    %c0_19 = arith.constant 0 : index
    %c0_20 = arith.constant 0 : index
    %c0_21 = arith.constant 0 : index
    %14 = vector.load %arg9[%c0_19, %c0_20, %c0_21] : memref<2x1x256xf32, #tpu.memory_space<vmem>>, vector<1x1x256xf32>
    %15 = vector.shape_cast %14 : vector<1x1x256xf32> to vector<1x256xf32>
    %16 = vector.extract_strided_slice %13 {offsets = [0, 0], sizes = [1, 128], strides = [1, 1]} : vector<9x128xf32> to vector<1x128xf32>
    %17 = vector.extract_strided_slice %13 {offsets = [1, 0], sizes = [1, 128], strides = [1, 1]} : vector<9x128xf32> to vector<1x128xf32>
    %18 = vector.extract_strided_slice %13 {offsets = [2, 0], sizes = [1, 128], strides = [1, 1]} : vector<9x128xf32> to vector<1x128xf32>
    %19 = vector.extract_strided_slice %13 {offsets = [3, 0], sizes = [1, 128], strides = [1, 1]} : vector<9x128xf32> to vector<1x128xf32>
    %20 = arith.truncf %3 : vector<16x128xf32> to vector<16x128xbf16>
    %cst = arith.constant dense<0.000000e+00> : vector<16x384xf32>
    %21 = tpu.matmul %20, %5, %cst {dimension_numbers = #tpu.dot_dimension_numbers<[1], [0], [0], [1], [0, 0, 1, 1], [], []>} : vector<16x128xbf16>, vector<128x384xbf16>, vector<16x384xf32> -> vector<16x384xf32>
    %22 = vector.extract_strided_slice %21 {offsets = [0, 0], sizes = [16, 128], strides = [1, 1]} : vector<16x384xf32> to vector<16x128xf32>
    %23 = vector.broadcast %16 : vector<1x128xf32> to vector<16x128xf32>
    %24 = arith.addf %22, %23 : vector<16x128xf32>
    %25 = vector.extract_strided_slice %21 {offsets = [0, 128], sizes = [16, 128], strides = [1, 1]} : vector<16x384xf32> to vector<16x128xf32>
    %26 = vector.broadcast %17 : vector<1x128xf32> to vector<16x128xf32>
    %27 = arith.addf %25, %26 : vector<16x128xf32>
    %28 = vector.extract_strided_slice %21 {offsets = [0, 256], sizes = [16, 128], strides = [1, 1]} : vector<16x384xf32> to vector<16x128xf32>
    %29 = vector.broadcast %18 : vector<1x128xf32> to vector<16x128xf32>
    %30 = arith.addf %28, %29 : vector<16x128xf32>
    %cst_22 = arith.constant 0.176776692 : f32
    %31 = vector.broadcast %cst_22 : f32 to vector<16x128xf32>
    %32 = arith.mulf %24, %31 : vector<16x128xf32>
    %33 = arith.truncf %32 : vector<16x128xf32> to vector<16x128xbf16>
    %34 = arith.truncf %27 : vector<16x128xf32> to vector<16x128xbf16>
    %35 = arith.truncf %30 : vector<16x128xf32> to vector<16x128xbf16>
    %36 = vector.extract_strided_slice %33 {offsets = [0, 0], sizes = [16, 32], strides = [1, 1]} : vector<16x128xbf16> to vector<16x32xbf16>
    %37 = vector.extract_strided_slice %34 {offsets = [0, 0], sizes = [16, 32], strides = [1, 1]} : vector<16x128xbf16> to vector<16x32xbf16>
    %38 = vector.extract_strided_slice %35 {offsets = [0, 0], sizes = [16, 32], strides = [1, 1]} : vector<16x128xbf16> to vector<16x32xbf16>
    %cst_23 = arith.constant dense<0.000000e+00> : vector<16x16xf32>
    %39 = tpu.matmul %36, %37, %cst_23 {dimension_numbers = #tpu.dot_dimension_numbers<[1], [1], [0], [0], [0, 0, 1, 0], [], []>} : vector<16x32xbf16>, vector<16x32xbf16>, vector<16x16xf32> -> vector<16x16xf32>
    %cst_24 = arith.constant dense<0xFF800000> : vector<16xf32>
    %40 = vector.multi_reduction <maximumf>, %39, %cst_24 [1] : vector<16x16xf32> to vector<16xf32>
    %41 = vector.shape_cast %40 : vector<16xf32> to vector<16x1xf32>
    %42 = vector.broadcast %41 : vector<16x1xf32> to vector<16x16xf32>
    %43 = arith.subf %39, %42 : vector<16x16xf32>
    %44 = math.exp %43 : vector<16x16xf32>
    %cst_25 = arith.constant dense<0.000000e+00> : vector<16xf32>
    %45 = vector.multi_reduction <add>, %44, %cst_25 [1] : vector<16x16xf32> to vector<16xf32>
    %46 = vector.shape_cast %45 : vector<16xf32> to vector<16x1xf32>
    %47 = tpu.reciprocal %46 {approx = true} : vector<16x1xf32> -> vector<16x1xf32>
    %48 = vector.broadcast %47 : vector<16x1xf32> to vector<16x16xf32>
    %49 = arith.mulf %44, %48 : vector<16x16xf32>
    %50 = arith.truncf %49 : vector<16x16xf32> to vector<16x16xbf16>
    %cst_26 = arith.constant dense<0.000000e+00> : vector<16x32xf32>
    %51 = tpu.matmul %50, %38, %cst_26 {dimension_numbers = #tpu.dot_dimension_numbers<[1], [0], [0], [1], [0, 0, 1, 1], [], []>} : vector<16x16xbf16>, vector<16x32xbf16>, vector<16x32xf32> -> vector<16x32xf32>
    %52 = vector.extract_strided_slice %33 {offsets = [0, 32], sizes = [16, 32], strides = [1, 1]} : vector<16x128xbf16> to vector<16x32xbf16>
    %53 = vector.extract_strided_slice %34 {offsets = [0, 32], sizes = [16, 32], strides = [1, 1]} : vector<16x128xbf16> to vector<16x32xbf16>
    %54 = vector.extract_strided_slice %35 {offsets = [0, 32], sizes = [16, 32], strides = [1, 1]} : vector<16x128xbf16> to vector<16x32xbf16>
    %cst_27 = arith.constant dense<0.000000e+00> : vector<16x16xf32>
    %55 = tpu.matmul %52, %53, %cst_27 {dimension_numbers = #tpu.dot_dimension_numbers<[1], [1], [0], [0], [0, 0, 1, 0], [], []>} : vector<16x32xbf16>, vector<16x32xbf16>, vector<16x16xf32> -> vector<16x16xf32>
    %cst_28 = arith.constant dense<0xFF800000> : vector<16xf32>
    %56 = vector.multi_reduction <maximumf>, %55, %cst_28 [1] : vector<16x16xf32> to vector<16xf32>
    %57 = vector.shape_cast %56 : vector<16xf32> to vector<16x1xf32>
    %58 = vector.broadcast %57 : vector<16x1xf32> to vector<16x16xf32>
    %59 = arith.subf %55, %58 : vector<16x16xf32>
    %60 = math.exp %59 : vector<16x16xf32>
    %cst_29 = arith.constant dense<0.000000e+00> : vector<16xf32>
    %61 = vector.multi_reduction <add>, %60, %cst_29 [1] : vector<16x16xf32> to vector<16xf32>
    %62 = vector.shape_cast %61 : vector<16xf32> to vector<16x1xf32>
    %63 = tpu.reciprocal %62 {approx = true} : vector<16x1xf32> -> vector<16x1xf32>
    %64 = vector.broadcast %63 : vector<16x1xf32> to vector<16x16xf32>
    %65 = arith.mulf %60, %64 : vector<16x16xf32>
    %66 = arith.truncf %65 : vector<16x16xf32> to vector<16x16xbf16>
    %cst_30 = arith.constant dense<0.000000e+00> : vector<16x32xf32>
    %67 = tpu.matmul %66, %54, %cst_30 {dimension_numbers = #tpu.dot_dimension_numbers<[1], [0], [0], [1], [0, 0, 1, 1], [], []>} : vector<16x16xbf16>, vector<16x32xbf16>, vector<16x32xf32> -> vector<16x32xf32>
    %68 = vector.extract_strided_slice %33 {offsets = [0, 64], sizes = [16, 32], strides = [1, 1]} : vector<16x128xbf16> to vector<16x32xbf16>
    %69 = vector.extract_strided_slice %34 {offsets = [0, 64], sizes = [16, 32], strides = [1, 1]} : vector<16x128xbf16> to vector<16x32xbf16>
    %70 = vector.extract_strided_slice %35 {offsets = [0, 64], sizes = [16, 32], strides = [1, 1]} : vector<16x128xbf16> to vector<16x32xbf16>
    %cst_31 = arith.constant dense<0.000000e+00> : vector<16x16xf32>
    %71 = tpu.matmul %68, %69, %cst_31 {dimension_numbers = #tpu.dot_dimension_numbers<[1], [1], [0], [0], [0, 0, 1, 0], [], []>} : vector<16x32xbf16>, vector<16x32xbf16>, vector<16x16xf32> -> vector<16x16xf32>
    %cst_32 = arith.constant dense<0xFF800000> : vector<16xf32>
    %72 = vector.multi_reduction <maximumf>, %71, %cst_32 [1] : vector<16x16xf32> to vector<16xf32>
    %73 = vector.shape_cast %72 : vector<16xf32> to vector<16x1xf32>
    %74 = vector.broadcast %73 : vector<16x1xf32> to vector<16x16xf32>
    %75 = arith.subf %71, %74 : vector<16x16xf32>
    %76 = math.exp %75 : vector<16x16xf32>
    %cst_33 = arith.constant dense<0.000000e+00> : vector<16xf32>
    %77 = vector.multi_reduction <add>, %76, %cst_33 [1] : vector<16x16xf32> to vector<16xf32>
    %78 = vector.shape_cast %77 : vector<16xf32> to vector<16x1xf32>
    %79 = tpu.reciprocal %78 {approx = true} : vector<16x1xf32> -> vector<16x1xf32>
    %80 = vector.broadcast %79 : vector<16x1xf32> to vector<16x16xf32>
    %81 = arith.mulf %76, %80 : vector<16x16xf32>
    %82 = arith.truncf %81 : vector<16x16xf32> to vector<16x16xbf16>
    %cst_34 = arith.constant dense<0.000000e+00> : vector<16x32xf32>
    %83 = tpu.matmul %82, %70, %cst_34 {dimension_numbers = #tpu.dot_dimension_numbers<[1], [0], [0], [1], [0, 0, 1, 1], [], []>} : vector<16x16xbf16>, vector<16x32xbf16>, vector<16x32xf32> -> vector<16x32xf32>
    %84 = vector.extract_strided_slice %33 {offsets = [0, 96], sizes = [16, 32], strides = [1, 1]} : vector<16x128xbf16> to vector<16x32xbf16>
    %85 = vector.extract_strided_slice %34 {offsets = [0, 96], sizes = [16, 32], strides = [1, 1]} : vector<16x128xbf16> to vector<16x32xbf16>
    %86 = vector.extract_strided_slice %35 {offsets = [0, 96], sizes = [16, 32], strides = [1, 1]} : vector<16x128xbf16> to vector<16x32xbf16>
    %cst_35 = arith.constant dense<0.000000e+00> : vector<16x16xf32>
    %87 = tpu.matmul %84, %85, %cst_35 {dimension_numbers = #tpu.dot_dimension_numbers<[1], [1], [0], [0], [0, 0, 1, 0], [], []>} : vector<16x32xbf16>, vector<16x32xbf16>, vector<16x16xf32> -> vector<16x16xf32>
    %cst_36 = arith.constant dense<0xFF800000> : vector<16xf32>
    %88 = vector.multi_reduction <maximumf>, %87, %cst_36 [1] : vector<16x16xf32> to vector<16xf32>
    %89 = vector.shape_cast %88 : vector<16xf32> to vector<16x1xf32>
    %90 = vector.broadcast %89 : vector<16x1xf32> to vector<16x16xf32>
    %91 = arith.subf %87, %90 : vector<16x16xf32>
    %92 = math.exp %91 : vector<16x16xf32>
    %cst_37 = arith.constant dense<0.000000e+00> : vector<16xf32>
    %93 = vector.multi_reduction <add>, %92, %cst_37 [1] : vector<16x16xf32> to vector<16xf32>
    %94 = vector.shape_cast %93 : vector<16xf32> to vector<16x1xf32>
    %95 = tpu.reciprocal %94 {approx = true} : vector<16x1xf32> -> vector<16x1xf32>
    %96 = vector.broadcast %95 : vector<16x1xf32> to vector<16x16xf32>
    %97 = arith.mulf %92, %96 : vector<16x16xf32>
    %98 = arith.truncf %97 : vector<16x16xf32> to vector<16x16xbf16>
    %cst_38 = arith.constant dense<0.000000e+00> : vector<16x32xf32>
    %99 = tpu.matmul %98, %86, %cst_38 {dimension_numbers = #tpu.dot_dimension_numbers<[1], [0], [0], [1], [0, 0, 1, 1], [], []>} : vector<16x16xbf16>, vector<16x32xbf16>, vector<16x32xf32> -> vector<16x32xf32>
    %100 = tpu.concatenate %51, %67, %83, %99 in 1 : vector<16x32xf32>, vector<16x32xf32>, vector<16x32xf32>, vector<16x32xf32> -> vector<16x128xf32>
    %101 = arith.truncf %100 : vector<16x128xf32> to vector<16x128xbf16>
    %cst_39 = arith.constant dense<0.000000e+00> : vector<16x128xf32>
    %102 = tpu.matmul %101, %7, %cst_39 {dimension_numbers = #tpu.dot_dimension_numbers<[1], [0], [0], [1], [0, 0, 1, 1], [], []>} : vector<16x128xbf16>, vector<128x128xbf16>, vector<16x128xf32> -> vector<16x128xf32>
    %103 = vector.broadcast %19 : vector<1x128xf32> to vector<16x128xf32>
    %104 = arith.addf %102, %103 : vector<16x128xf32>
    %105 = arith.addf %3, %104 : vector<16x128xf32>
    %106 = vector.extract_strided_slice %13 {offsets = [5, 0], sizes = [1, 128], strides = [1, 1]} : vector<9x128xf32> to vector<1x128xf32>
    %107 = vector.extract_strided_slice %13 {offsets = [6, 0], sizes = [1, 128], strides = [1, 1]} : vector<9x128xf32> to vector<1x128xf32>
    %cst_40 = arith.constant dense<0.000000e+00> : vector<16xf32>
    %108 = vector.multi_reduction <add>, %105, %cst_40 [1] : vector<16x128xf32> to vector<16xf32>
    %109 = vector.shape_cast %108 : vector<16xf32> to vector<16x1xf32>
    %cst_41 = arith.constant 1.280000e+02 : f32
    %110 = vector.broadcast %cst_41 : f32 to vector<16x1xf32>
    %111 = arith.divf %109, %110 : vector<16x1xf32>
    %112 = vector.broadcast %111 : vector<16x1xf32> to vector<16x128xf32>
    %113 = arith.subf %105, %112 : vector<16x128xf32>
    %114 = arith.mulf %113, %113 : vector<16x128xf32>
    %cst_42 = arith.constant dense<0.000000e+00> : vector<16xf32>
    %115 = vector.multi_reduction <add>, %114, %cst_42 [1] : vector<16x128xf32> to vector<16xf32>
    %116 = vector.shape_cast %115 : vector<16xf32> to vector<16x1xf32>
    %cst_43 = arith.constant 1.280000e+02 : f32
    %117 = vector.broadcast %cst_43 : f32 to vector<16x1xf32>
    %118 = arith.divf %116, %117 : vector<16x1xf32>
    %119 = vector.broadcast %111 : vector<16x1xf32> to vector<16x128xf32>
    %120 = arith.subf %105, %119 : vector<16x128xf32>
    %cst_44 = arith.constant 9.99999974E-6 : f32
    %121 = vector.broadcast %cst_44 : f32 to vector<16x1xf32>
    %122 = arith.addf %118, %121 : vector<16x1xf32>
    %123 = math.rsqrt %122 : vector<16x1xf32>
    %124 = vector.broadcast %123 : vector<16x1xf32> to vector<16x128xf32>
    %125 = arith.mulf %120, %124 : vector<16x128xf32>
    %126 = vector.broadcast %106 : vector<1x128xf32> to vector<16x128xf32>
    %127 = arith.mulf %125, %126 : vector<16x128xf32>
    %128 = vector.broadcast %107 : vector<1x128xf32> to vector<16x128xf32>
    %129 = arith.addf %127, %128 : vector<16x128xf32>
    %130 = arith.truncf %129 : vector<16x128xf32> to vector<16x128xbf16>
    %cst_45 = arith.constant dense<0.000000e+00> : vector<16x256xf32>
    %131 = tpu.matmul %130, %9, %cst_45 {dimension_numbers = #tpu.dot_dimension_numbers<[1], [0], [0], [1], [0, 0, 1, 1], [], []>} : vector<16x128xbf16>, vector<128x256xbf16>, vector<16x256xf32> -> vector<16x256xf32>
    %132 = vector.broadcast %15 : vector<1x256xf32> to vector<16x256xf32>
    %133 = arith.addf %131, %132 : vector<16x256xf32>
    %cst_46 = arith.constant 0.000000e+00 : f32
    %134 = vector.broadcast %cst_46 : f32 to vector<16x256xf32>
    %135 = arith.maximumf %133, %134 : vector<16x256xf32>
    %136 = arith.truncf %135 : vector<16x256xf32> to vector<16x256xbf16>
    %cst_47 = arith.constant dense<0.000000e+00> : vector<16x128xf32>
    %137 = tpu.matmul %136, %11, %cst_47 {dimension_numbers = #tpu.dot_dimension_numbers<[1], [0], [0], [1], [0, 0, 1, 1], [], []>} : vector<16x256xbf16>, vector<256x128xbf16>, vector<16x128xf32> -> vector<16x128xf32>
    %138 = vector.extract_strided_slice %13 {offsets = [4, 0], sizes = [1, 128], strides = [1, 1]} : vector<9x128xf32> to vector<1x128xf32>
    %139 = vector.broadcast %138 : vector<1x128xf32> to vector<16x128xf32>
    %140 = arith.addf %137, %139 : vector<16x128xf32>
    %141 = arith.addf %129, %140 : vector<16x128xf32>
    %142 = vector.extract_strided_slice %13 {offsets = [7, 0], sizes = [1, 128], strides = [1, 1]} : vector<9x128xf32> to vector<1x128xf32>
    %143 = vector.extract_strided_slice %13 {offsets = [8, 0], sizes = [1, 128], strides = [1, 1]} : vector<9x128xf32> to vector<1x128xf32>
    %cst_48 = arith.constant dense<0.000000e+00> : vector<16xf32>
    %144 = vector.multi_reduction <add>, %141, %cst_48 [1] : vector<16x128xf32> to vector<16xf32>
    %145 = vector.shape_cast %144 : vector<16xf32> to vector<16x1xf32>
    %cst_49 = arith.constant 1.280000e+02 : f32
    %146 = vector.broadcast %cst_49 : f32 to vector<16x1xf32>
    %147 = arith.divf %145, %146 : vector<16x1xf32>
    %148 = vector.broadcast %147 : vector<16x1xf32> to vector<16x128xf32>
    %149 = arith.subf %141, %148 : vector<16x128xf32>
    %150 = arith.mulf %149, %149 : vector<16x128xf32>
    %cst_50 = arith.constant dense<0.000000e+00> : vector<16xf32>
    %151 = vector.multi_reduction <add>, %150, %cst_50 [1] : vector<16x128xf32> to vector<16xf32>
    %152 = vector.shape_cast %151 : vector<16xf32> to vector<16x1xf32>
    %cst_51 = arith.constant 1.280000e+02 : f32
    %153 = vector.broadcast %cst_51 : f32 to vector<16x1xf32>
    %154 = arith.divf %152, %153 : vector<16x1xf32>
    %155 = vector.broadcast %147 : vector<16x1xf32> to vector<16x128xf32>
    %156 = arith.subf %141, %155 : vector<16x128xf32>
    %cst_52 = arith.constant 9.99999974E-6 : f32
    %157 = vector.broadcast %cst_52 : f32 to vector<16x1xf32>
    %158 = arith.addf %154, %157 : vector<16x1xf32>
    %159 = math.rsqrt %158 : vector<16x1xf32>
    %160 = vector.broadcast %159 : vector<16x1xf32> to vector<16x128xf32>
    %161 = arith.mulf %156, %160 : vector<16x128xf32>
    %162 = vector.broadcast %142 : vector<1x128xf32> to vector<16x128xf32>
    %163 = arith.mulf %161, %162 : vector<16x128xf32>
    %164 = vector.broadcast %143 : vector<1x128xf32> to vector<16x128xf32>
    %165 = arith.addf %163, %164 : vector<16x128xf32>
    %c1 = arith.constant 1 : index
    %c0_53 = arith.constant 0 : index
    %c0_54 = arith.constant 0 : index
    %166 = vector.load %arg4[%c1, %c0_53, %c0_54] : memref<2x128x384xbf16, #tpu.memory_space<vmem>>, vector<1x128x384xbf16>
    %167 = vector.shape_cast %166 : vector<1x128x384xbf16> to vector<128x384xbf16>
    %c1_55 = arith.constant 1 : index
    %c0_56 = arith.constant 0 : index
    %c0_57 = arith.constant 0 : index
    %168 = vector.load %arg5[%c1_55, %c0_56, %c0_57] : memref<2x128x128xbf16, #tpu.memory_space<vmem>>, vector<1x128x128xbf16>
    %169 = vector.shape_cast %168 : vector<1x128x128xbf16> to vector<128x128xbf16>
    %c1_58 = arith.constant 1 : index
    %c0_59 = arith.constant 0 : index
    %c0_60 = arith.constant 0 : index
    %170 = vector.load %arg6[%c1_58, %c0_59, %c0_60] : memref<2x128x256xbf16, #tpu.memory_space<vmem>>, vector<1x128x256xbf16>
    %171 = vector.shape_cast %170 : vector<1x128x256xbf16> to vector<128x256xbf16>
    %c1_61 = arith.constant 1 : index
    %c0_62 = arith.constant 0 : index
    %c0_63 = arith.constant 0 : index
    %172 = vector.load %arg7[%c1_61, %c0_62, %c0_63] : memref<2x256x128xbf16, #tpu.memory_space<vmem>>, vector<1x256x128xbf16>
    %173 = vector.shape_cast %172 : vector<1x256x128xbf16> to vector<256x128xbf16>
    %c1_64 = arith.constant 1 : index
    %c0_65 = arith.constant 0 : index
    %c0_66 = arith.constant 0 : index
    %174 = vector.load %arg8[%c1_64, %c0_65, %c0_66] : memref<2x9x128xf32, #tpu.memory_space<vmem>>, vector<1x9x128xf32>
    %175 = vector.shape_cast %174 : vector<1x9x128xf32> to vector<9x128xf32>
    %c1_67 = arith.constant 1 : index
    %c0_68 = arith.constant 0 : index
    %c0_69 = arith.constant 0 : index
    %176 = vector.load %arg9[%c1_67, %c0_68, %c0_69] : memref<2x1x256xf32, #tpu.memory_space<vmem>>, vector<1x1x256xf32>
    %177 = vector.shape_cast %176 : vector<1x1x256xf32> to vector<1x256xf32>
    %178 = vector.extract_strided_slice %175 {offsets = [0, 0], sizes = [1, 128], strides = [1, 1]} : vector<9x128xf32> to vector<1x128xf32>
    %179 = vector.extract_strided_slice %175 {offsets = [1, 0], sizes = [1, 128], strides = [1, 1]} : vector<9x128xf32> to vector<1x128xf32>
    %180 = vector.extract_strided_slice %175 {offsets = [2, 0], sizes = [1, 128], strides = [1, 1]} : vector<9x128xf32> to vector<1x128xf32>
    %181 = vector.extract_strided_slice %175 {offsets = [3, 0], sizes = [1, 128], strides = [1, 1]} : vector<9x128xf32> to vector<1x128xf32>
    %182 = arith.truncf %165 : vector<16x128xf32> to vector<16x128xbf16>
    %cst_70 = arith.constant dense<0.000000e+00> : vector<16x384xf32>
    %183 = tpu.matmul %182, %167, %cst_70 {dimension_numbers = #tpu.dot_dimension_numbers<[1], [0], [0], [1], [0, 0, 1, 1], [], []>} : vector<16x128xbf16>, vector<128x384xbf16>, vector<16x384xf32> -> vector<16x384xf32>
    %184 = vector.extract_strided_slice %183 {offsets = [0, 0], sizes = [16, 128], strides = [1, 1]} : vector<16x384xf32> to vector<16x128xf32>
    %185 = vector.broadcast %178 : vector<1x128xf32> to vector<16x128xf32>
    %186 = arith.addf %184, %185 : vector<16x128xf32>
    %187 = vector.extract_strided_slice %183 {offsets = [0, 128], sizes = [16, 128], strides = [1, 1]} : vector<16x384xf32> to vector<16x128xf32>
    %188 = vector.broadcast %179 : vector<1x128xf32> to vector<16x128xf32>
    %189 = arith.addf %187, %188 : vector<16x128xf32>
    %190 = vector.extract_strided_slice %183 {offsets = [0, 256], sizes = [16, 128], strides = [1, 1]} : vector<16x384xf32> to vector<16x128xf32>
    %191 = vector.broadcast %180 : vector<1x128xf32> to vector<16x128xf32>
    %192 = arith.addf %190, %191 : vector<16x128xf32>
    %cst_71 = arith.constant 0.176776692 : f32
    %193 = vector.broadcast %cst_71 : f32 to vector<16x128xf32>
    %194 = arith.mulf %186, %193 : vector<16x128xf32>
    %195 = arith.truncf %194 : vector<16x128xf32> to vector<16x128xbf16>
    %196 = arith.truncf %189 : vector<16x128xf32> to vector<16x128xbf16>
    %197 = arith.truncf %192 : vector<16x128xf32> to vector<16x128xbf16>
    %198 = vector.extract_strided_slice %195 {offsets = [0, 0], sizes = [16, 32], strides = [1, 1]} : vector<16x128xbf16> to vector<16x32xbf16>
    %199 = vector.extract_strided_slice %196 {offsets = [0, 0], sizes = [16, 32], strides = [1, 1]} : vector<16x128xbf16> to vector<16x32xbf16>
    %200 = vector.extract_strided_slice %197 {offsets = [0, 0], sizes = [16, 32], strides = [1, 1]} : vector<16x128xbf16> to vector<16x32xbf16>
    %cst_72 = arith.constant dense<0.000000e+00> : vector<16x16xf32>
    %201 = tpu.matmul %198, %199, %cst_72 {dimension_numbers = #tpu.dot_dimension_numbers<[1], [1], [0], [0], [0, 0, 1, 0], [], []>} : vector<16x32xbf16>, vector<16x32xbf16>, vector<16x16xf32> -> vector<16x16xf32>
    %cst_73 = arith.constant dense<0xFF800000> : vector<16xf32>
    %202 = vector.multi_reduction <maximumf>, %201, %cst_73 [1] : vector<16x16xf32> to vector<16xf32>
    %203 = vector.shape_cast %202 : vector<16xf32> to vector<16x1xf32>
    %204 = vector.broadcast %203 : vector<16x1xf32> to vector<16x16xf32>
    %205 = arith.subf %201, %204 : vector<16x16xf32>
    %206 = math.exp %205 : vector<16x16xf32>
    %cst_74 = arith.constant dense<0.000000e+00> : vector<16xf32>
    %207 = vector.multi_reduction <add>, %206, %cst_74 [1] : vector<16x16xf32> to vector<16xf32>
    %208 = vector.shape_cast %207 : vector<16xf32> to vector<16x1xf32>
    %209 = tpu.reciprocal %208 {approx = true} : vector<16x1xf32> -> vector<16x1xf32>
    %210 = vector.broadcast %209 : vector<16x1xf32> to vector<16x16xf32>
    %211 = arith.mulf %206, %210 : vector<16x16xf32>
    %212 = arith.truncf %211 : vector<16x16xf32> to vector<16x16xbf16>
    %cst_75 = arith.constant dense<0.000000e+00> : vector<16x32xf32>
    %213 = tpu.matmul %212, %200, %cst_75 {dimension_numbers = #tpu.dot_dimension_numbers<[1], [0], [0], [1], [0, 0, 1, 1], [], []>} : vector<16x16xbf16>, vector<16x32xbf16>, vector<16x32xf32> -> vector<16x32xf32>
    %214 = vector.extract_strided_slice %195 {offsets = [0, 32], sizes = [16, 32], strides = [1, 1]} : vector<16x128xbf16> to vector<16x32xbf16>
    %215 = vector.extract_strided_slice %196 {offsets = [0, 32], sizes = [16, 32], strides = [1, 1]} : vector<16x128xbf16> to vector<16x32xbf16>
    %216 = vector.extract_strided_slice %197 {offsets = [0, 32], sizes = [16, 32], strides = [1, 1]} : vector<16x128xbf16> to vector<16x32xbf16>
    %cst_76 = arith.constant dense<0.000000e+00> : vector<16x16xf32>
    %217 = tpu.matmul %214, %215, %cst_76 {dimension_numbers = #tpu.dot_dimension_numbers<[1], [1], [0], [0], [0, 0, 1, 0], [], []>} : vector<16x32xbf16>, vector<16x32xbf16>, vector<16x16xf32> -> vector<16x16xf32>
    %cst_77 = arith.constant dense<0xFF800000> : vector<16xf32>
    %218 = vector.multi_reduction <maximumf>, %217, %cst_77 [1] : vector<16x16xf32> to vector<16xf32>
    %219 = vector.shape_cast %218 : vector<16xf32> to vector<16x1xf32>
    %220 = vector.broadcast %219 : vector<16x1xf32> to vector<16x16xf32>
    %221 = arith.subf %217, %220 : vector<16x16xf32>
    %222 = math.exp %221 : vector<16x16xf32>
    %cst_78 = arith.constant dense<0.000000e+00> : vector<16xf32>
    %223 = vector.multi_reduction <add>, %222, %cst_78 [1] : vector<16x16xf32> to vector<16xf32>
    %224 = vector.shape_cast %223 : vector<16xf32> to vector<16x1xf32>
    %225 = tpu.reciprocal %224 {approx = true} : vector<16x1xf32> -> vector<16x1xf32>
    %226 = vector.broadcast %225 : vector<16x1xf32> to vector<16x16xf32>
    %227 = arith.mulf %222, %226 : vector<16x16xf32>
    %228 = arith.truncf %227 : vector<16x16xf32> to vector<16x16xbf16>
    %cst_79 = arith.constant dense<0.000000e+00> : vector<16x32xf32>
    %229 = tpu.matmul %228, %216, %cst_79 {dimension_numbers = #tpu.dot_dimension_numbers<[1], [0], [0], [1], [0, 0, 1, 1], [], []>} : vector<16x16xbf16>, vector<16x32xbf16>, vector<16x32xf32> -> vector<16x32xf32>
    %230 = vector.extract_strided_slice %195 {offsets = [0, 64], sizes = [16, 32], strides = [1, 1]} : vector<16x128xbf16> to vector<16x32xbf16>
    %231 = vector.extract_strided_slice %196 {offsets = [0, 64], sizes = [16, 32], strides = [1, 1]} : vector<16x128xbf16> to vector<16x32xbf16>
    %232 = vector.extract_strided_slice %197 {offsets = [0, 64], sizes = [16, 32], strides = [1, 1]} : vector<16x128xbf16> to vector<16x32xbf16>
    %cst_80 = arith.constant dense<0.000000e+00> : vector<16x16xf32>
    %233 = tpu.matmul %230, %231, %cst_80 {dimension_numbers = #tpu.dot_dimension_numbers<[1], [1], [0], [0], [0, 0, 1, 0], [], []>} : vector<16x32xbf16>, vector<16x32xbf16>, vector<16x16xf32> -> vector<16x16xf32>
    %cst_81 = arith.constant dense<0xFF800000> : vector<16xf32>
    %234 = vector.multi_reduction <maximumf>, %233, %cst_81 [1] : vector<16x16xf32> to vector<16xf32>
    %235 = vector.shape_cast %234 : vector<16xf32> to vector<16x1xf32>
    %236 = vector.broadcast %235 : vector<16x1xf32> to vector<16x16xf32>
    %237 = arith.subf %233, %236 : vector<16x16xf32>
    %238 = math.exp %237 : vector<16x16xf32>
    %cst_82 = arith.constant dense<0.000000e+00> : vector<16xf32>
    %239 = vector.multi_reduction <add>, %238, %cst_82 [1] : vector<16x16xf32> to vector<16xf32>
    %240 = vector.shape_cast %239 : vector<16xf32> to vector<16x1xf32>
    %241 = tpu.reciprocal %240 {approx = true} : vector<16x1xf32> -> vector<16x1xf32>
    %242 = vector.broadcast %241 : vector<16x1xf32> to vector<16x16xf32>
    %243 = arith.mulf %238, %242 : vector<16x16xf32>
    %244 = arith.truncf %243 : vector<16x16xf32> to vector<16x16xbf16>
    %cst_83 = arith.constant dense<0.000000e+00> : vector<16x32xf32>
    %245 = tpu.matmul %244, %232, %cst_83 {dimension_numbers = #tpu.dot_dimension_numbers<[1], [0], [0], [1], [0, 0, 1, 1], [], []>} : vector<16x16xbf16>, vector<16x32xbf16>, vector<16x32xf32> -> vector<16x32xf32>
    %246 = vector.extract_strided_slice %195 {offsets = [0, 96], sizes = [16, 32], strides = [1, 1]} : vector<16x128xbf16> to vector<16x32xbf16>
    %247 = vector.extract_strided_slice %196 {offsets = [0, 96], sizes = [16, 32], strides = [1, 1]} : vector<16x128xbf16> to vector<16x32xbf16>
    %248 = vector.extract_strided_slice %197 {offsets = [0, 96], sizes = [16, 32], strides = [1, 1]} : vector<16x128xbf16> to vector<16x32xbf16>
    %cst_84 = arith.constant dense<0.000000e+00> : vector<16x16xf32>
    %249 = tpu.matmul %246, %247, %cst_84 {dimension_numbers = #tpu.dot_dimension_numbers<[1], [1], [0], [0], [0, 0, 1, 0], [], []>} : vector<16x32xbf16>, vector<16x32xbf16>, vector<16x16xf32> -> vector<16x16xf32>
    %cst_85 = arith.constant dense<0xFF800000> : vector<16xf32>
    %250 = vector.multi_reduction <maximumf>, %249, %cst_85 [1] : vector<16x16xf32> to vector<16xf32>
    %251 = vector.shape_cast %250 : vector<16xf32> to vector<16x1xf32>
    %252 = vector.broadcast %251 : vector<16x1xf32> to vector<16x16xf32>
    %253 = arith.subf %249, %252 : vector<16x16xf32>
    %254 = math.exp %253 : vector<16x16xf32>
    %cst_86 = arith.constant dense<0.000000e+00> : vector<16xf32>
    %255 = vector.multi_reduction <add>, %254, %cst_86 [1] : vector<16x16xf32> to vector<16xf32>
    %256 = vector.shape_cast %255 : vector<16xf32> to vector<16x1xf32>
    %257 = tpu.reciprocal %256 {approx = true} : vector<16x1xf32> -> vector<16x1xf32>
    %258 = vector.broadcast %257 : vector<16x1xf32> to vector<16x16xf32>
    %259 = arith.mulf %254, %258 : vector<16x16xf32>
    %260 = arith.truncf %259 : vector<16x16xf32> to vector<16x16xbf16>
    %cst_87 = arith.constant dense<0.000000e+00> : vector<16x32xf32>
    %261 = tpu.matmul %260, %248, %cst_87 {dimension_numbers = #tpu.dot_dimension_numbers<[1], [0], [0], [1], [0, 0, 1, 1], [], []>} : vector<16x16xbf16>, vector<16x32xbf16>, vector<16x32xf32> -> vector<16x32xf32>
    %262 = tpu.concatenate %213, %229, %245, %261 in 1 : vector<16x32xf32>, vector<16x32xf32>, vector<16x32xf32>, vector<16x32xf32> -> vector<16x128xf32>
    %263 = arith.truncf %262 : vector<16x128xf32> to vector<16x128xbf16>
    %cst_88 = arith.constant dense<0.000000e+00> : vector<16x128xf32>
    %264 = tpu.matmul %263, %169, %cst_88 {dimension_numbers = #tpu.dot_dimension_numbers<[1], [0], [0], [1], [0, 0, 1, 1], [], []>} : vector<16x128xbf16>, vector<128x128xbf16>, vector<16x128xf32> -> vector<16x128xf32>
    %265 = vector.broadcast %181 : vector<1x128xf32> to vector<16x128xf32>
    %266 = arith.addf %264, %265 : vector<16x128xf32>
    %267 = arith.addf %165, %266 : vector<16x128xf32>
    %268 = vector.extract_strided_slice %175 {offsets = [5, 0], sizes = [1, 128], strides = [1, 1]} : vector<9x128xf32> to vector<1x128xf32>
    %269 = vector.extract_strided_slice %175 {offsets = [6, 0], sizes = [1, 128], strides = [1, 1]} : vector<9x128xf32> to vector<1x128xf32>
    %cst_89 = arith.constant dense<0.000000e+00> : vector<16xf32>
    %270 = vector.multi_reduction <add>, %267, %cst_89 [1] : vector<16x128xf32> to vector<16xf32>
    %271 = vector.shape_cast %270 : vector<16xf32> to vector<16x1xf32>
    %cst_90 = arith.constant 1.280000e+02 : f32
    %272 = vector.broadcast %cst_90 : f32 to vector<16x1xf32>
    %273 = arith.divf %271, %272 : vector<16x1xf32>
    %274 = vector.broadcast %273 : vector<16x1xf32> to vector<16x128xf32>
    %275 = arith.subf %267, %274 : vector<16x128xf32>
    %276 = arith.mulf %275, %275 : vector<16x128xf32>
    %cst_91 = arith.constant dense<0.000000e+00> : vector<16xf32>
    %277 = vector.multi_reduction <add>, %276, %cst_91 [1] : vector<16x128xf32> to vector<16xf32>
    %278 = vector.shape_cast %277 : vector<16xf32> to vector<16x1xf32>
    %cst_92 = arith.constant 1.280000e+02 : f32
    %279 = vector.broadcast %cst_92 : f32 to vector<16x1xf32>
    %280 = arith.divf %278, %279 : vector<16x1xf32>
    %281 = vector.broadcast %273 : vector<16x1xf32> to vector<16x128xf32>
    %282 = arith.subf %267, %281 : vector<16x128xf32>
    %cst_93 = arith.constant 9.99999974E-6 : f32
    %283 = vector.broadcast %cst_93 : f32 to vector<16x1xf32>
    %284 = arith.addf %280, %283 : vector<16x1xf32>
    %285 = math.rsqrt %284 : vector<16x1xf32>
    %286 = vector.broadcast %285 : vector<16x1xf32> to vector<16x128xf32>
    %287 = arith.mulf %282, %286 : vector<16x128xf32>
    %288 = vector.broadcast %268 : vector<1x128xf32> to vector<16x128xf32>
    %289 = arith.mulf %287, %288 : vector<16x128xf32>
    %290 = vector.broadcast %269 : vector<1x128xf32> to vector<16x128xf32>
    %291 = arith.addf %289, %290 : vector<16x128xf32>
    %292 = arith.truncf %291 : vector<16x128xf32> to vector<16x128xbf16>
    %cst_94 = arith.constant dense<0.000000e+00> : vector<16x256xf32>
    %293 = tpu.matmul %292, %171, %cst_94 {dimension_numbers = #tpu.dot_dimension_numbers<[1], [0], [0], [1], [0, 0, 1, 1], [], []>} : vector<16x128xbf16>, vector<128x256xbf16>, vector<16x256xf32> -> vector<16x256xf32>
    %294 = vector.broadcast %177 : vector<1x256xf32> to vector<16x256xf32>
    %295 = arith.addf %293, %294 : vector<16x256xf32>
    %cst_95 = arith.constant 0.000000e+00 : f32
    %296 = vector.broadcast %cst_95 : f32 to vector<16x256xf32>
    %297 = arith.maximumf %295, %296 : vector<16x256xf32>
    %298 = arith.truncf %297 : vector<16x256xf32> to vector<16x256xbf16>
    %cst_96 = arith.constant dense<0.000000e+00> : vector<16x128xf32>
    %299 = tpu.matmul %298, %173, %cst_96 {dimension_numbers = #tpu.dot_dimension_numbers<[1], [0], [0], [1], [0, 0, 1, 1], [], []>} : vector<16x256xbf16>, vector<256x128xbf16>, vector<16x128xf32> -> vector<16x128xf32>
    %300 = vector.extract_strided_slice %175 {offsets = [4, 0], sizes = [1, 128], strides = [1, 1]} : vector<9x128xf32> to vector<1x128xf32>
    %301 = vector.broadcast %300 : vector<1x128xf32> to vector<16x128xf32>
    %302 = arith.addf %299, %301 : vector<16x128xf32>
    %303 = arith.addf %291, %302 : vector<16x128xf32>
    %304 = vector.extract_strided_slice %175 {offsets = [7, 0], sizes = [1, 128], strides = [1, 1]} : vector<9x128xf32> to vector<1x128xf32>
    %305 = vector.extract_strided_slice %175 {offsets = [8, 0], sizes = [1, 128], strides = [1, 1]} : vector<9x128xf32> to vector<1x128xf32>
    %cst_97 = arith.constant dense<0.000000e+00> : vector<16xf32>
    %306 = vector.multi_reduction <add>, %303, %cst_97 [1] : vector<16x128xf32> to vector<16xf32>
    %307 = vector.shape_cast %306 : vector<16xf32> to vector<16x1xf32>
    %cst_98 = arith.constant 1.280000e+02 : f32
    %308 = vector.broadcast %cst_98 : f32 to vector<16x1xf32>
    %309 = arith.divf %307, %308 : vector<16x1xf32>
    %310 = vector.broadcast %309 : vector<16x1xf32> to vector<16x128xf32>
    %311 = arith.subf %303, %310 : vector<16x128xf32>
    %312 = arith.mulf %311, %311 : vector<16x128xf32>
    %cst_99 = arith.constant dense<0.000000e+00> : vector<16xf32>
    %313 = vector.multi_reduction <add>, %312, %cst_99 [1] : vector<16x128xf32> to vector<16xf32>
    %314 = vector.shape_cast %313 : vector<16xf32> to vector<16x1xf32>
    %cst_100 = arith.constant 1.280000e+02 : f32
    %315 = vector.broadcast %cst_100 : f32 to vector<16x1xf32>
    %316 = arith.divf %314, %315 : vector<16x1xf32>
    %317 = vector.broadcast %309 : vector<16x1xf32> to vector<16x128xf32>
    %318 = arith.subf %303, %317 : vector<16x128xf32>
    %cst_101 = arith.constant 9.99999974E-6 : f32
    %319 = vector.broadcast %cst_101 : f32 to vector<16x1xf32>
    %320 = arith.addf %316, %319 : vector<16x1xf32>
    %321 = math.rsqrt %320 : vector<16x1xf32>
    %322 = vector.broadcast %321 : vector<16x1xf32> to vector<16x128xf32>
    %323 = arith.mulf %318, %322 : vector<16x128xf32>
    %324 = vector.broadcast %304 : vector<1x128xf32> to vector<16x128xf32>
    %325 = arith.mulf %323, %324 : vector<16x128xf32>
    %326 = vector.broadcast %305 : vector<1x128xf32> to vector<16x128xf32>
    %327 = arith.addf %325, %326 : vector<16x128xf32>
    %328 = arith.truncf %327 : vector<16x128xf32> to vector<16x128xbf16>
    %c0_102 = arith.constant 0 : index
    %c0_103 = arith.constant 0 : index
    %c0_104 = arith.constant 0 : index
    %329 = vector.load %arg1[%c0_102, %c0_103, %c0_104] : memref<1x16x128xf32, #tpu.memory_space<vmem>>, vector<1x16x128xf32>
    %330 = vector.shape_cast %329 : vector<1x16x128xf32> to vector<16x128xf32>
    %c0_105 = arith.constant 0 : index
    %c0_106 = arith.constant 0 : index
    %c0_107 = arith.constant 0 : index
    %331 = vector.load %arg10[%c0_105, %c0_106, %c0_107] : memref<2x128x384xbf16, #tpu.memory_space<vmem>>, vector<1x128x384xbf16>
    %332 = vector.shape_cast %331 : vector<1x128x384xbf16> to vector<128x384xbf16>
    %c0_108 = arith.constant 0 : index
    %c0_109 = arith.constant 0 : index
    %c0_110 = arith.constant 0 : index
    %333 = vector.load %arg11[%c0_108, %c0_109, %c0_110] : memref<2x128x128xbf16, #tpu.memory_space<vmem>>, vector<1x128x128xbf16>
    %334 = vector.shape_cast %333 : vector<1x128x128xbf16> to vector<128x128xbf16>
    %c0_111 = arith.constant 0 : index
    %c0_112 = arith.constant 0 : index
    %c0_113 = arith.constant 0 : index
    %335 = vector.load %arg12[%c0_111, %c0_112, %c0_113] : memref<2x128x128xbf16, #tpu.memory_space<vmem>>, vector<1x128x128xbf16>
    %336 = vector.shape_cast %335 : vector<1x128x128xbf16> to vector<128x128xbf16>
    %c0_114 = arith.constant 0 : index
    %c0_115 = arith.constant 0 : index
    %c0_116 = arith.constant 0 : index
    %337 = vector.load %arg13[%c0_114, %c0_115, %c0_116] : memref<2x128x256xbf16, #tpu.memory_space<vmem>>, vector<1x128x256xbf16>
    %338 = vector.shape_cast %337 : vector<1x128x256xbf16> to vector<128x256xbf16>
    %c0_117 = arith.constant 0 : index
    %c0_118 = arith.constant 0 : index
    %c0_119 = arith.constant 0 : index
    %339 = vector.load %arg14[%c0_117, %c0_118, %c0_119] : memref<2x128x128xbf16, #tpu.memory_space<vmem>>, vector<1x128x128xbf16>
    %340 = vector.shape_cast %339 : vector<1x128x128xbf16> to vector<128x128xbf16>
    %c0_120 = arith.constant 0 : index
    %c0_121 = arith.constant 0 : index
    %c0_122 = arith.constant 0 : index
    %341 = vector.load %arg15[%c0_120, %c0_121, %c0_122] : memref<2x128x256xbf16, #tpu.memory_space<vmem>>, vector<1x128x256xbf16>
    %342 = vector.shape_cast %341 : vector<1x128x256xbf16> to vector<128x256xbf16>
    %c0_123 = arith.constant 0 : index
    %c0_124 = arith.constant 0 : index
    %c0_125 = arith.constant 0 : index
    %343 = vector.load %arg16[%c0_123, %c0_124, %c0_125] : memref<2x256x128xbf16, #tpu.memory_space<vmem>>, vector<1x256x128xbf16>
    %344 = vector.shape_cast %343 : vector<1x256x128xbf16> to vector<256x128xbf16>
    %c0_126 = arith.constant 0 : index
    %c0_127 = arith.constant 0 : index
    %c0_128 = arith.constant 0 : index
    %345 = vector.load %arg17[%c0_126, %c0_127, %c0_128] : memref<2x15x128xf32, #tpu.memory_space<vmem>>, vector<1x15x128xf32>
    %346 = vector.shape_cast %345 : vector<1x15x128xf32> to vector<15x128xf32>
    %c0_129 = arith.constant 0 : index
    %c0_130 = arith.constant 0 : index
    %c0_131 = arith.constant 0 : index
    %347 = vector.load %arg18[%c0_129, %c0_130, %c0_131] : memref<2x1x256xf32, #tpu.memory_space<vmem>>, vector<1x1x256xf32>
    %348 = vector.shape_cast %347 : vector<1x1x256xf32> to vector<1x256xf32>
    %349 = vector.extract_strided_slice %346 {offsets = [0, 0], sizes = [1, 128], strides = [1, 1]} : vector<15x128xf32> to vector<1x128xf32>
    %350 = vector.extract_strided_slice %346 {offsets = [1, 0], sizes = [1, 128], strides = [1, 1]} : vector<15x128xf32> to vector<1x128xf32>
    %351 = vector.extract_strided_slice %346 {offsets = [2, 0], sizes = [1, 128], strides = [1, 1]} : vector<15x128xf32> to vector<1x128xf32>
    %352 = vector.extract_strided_slice %346 {offsets = [3, 0], sizes = [1, 128], strides = [1, 1]} : vector<15x128xf32> to vector<1x128xf32>
    %353 = arith.truncf %330 : vector<16x128xf32> to vector<16x128xbf16>
    %cst_132 = arith.constant dense<0.000000e+00> : vector<16x384xf32>
    %354 = tpu.matmul %353, %332, %cst_132 {dimension_numbers = #tpu.dot_dimension_numbers<[1], [0], [0], [1], [0, 0, 1, 1], [], []>} : vector<16x128xbf16>, vector<128x384xbf16>, vector<16x384xf32> -> vector<16x384xf32>
    %355 = vector.extract_strided_slice %354 {offsets = [0, 0], sizes = [16, 128], strides = [1, 1]} : vector<16x384xf32> to vector<16x128xf32>
    %356 = vector.broadcast %349 : vector<1x128xf32> to vector<16x128xf32>
    %357 = arith.addf %355, %356 : vector<16x128xf32>
    %358 = vector.extract_strided_slice %354 {offsets = [0, 128], sizes = [16, 128], strides = [1, 1]} : vector<16x384xf32> to vector<16x128xf32>
    %359 = vector.broadcast %350 : vector<1x128xf32> to vector<16x128xf32>
    %360 = arith.addf %358, %359 : vector<16x128xf32>
    %361 = vector.extract_strided_slice %354 {offsets = [0, 256], sizes = [16, 128], strides = [1, 1]} : vector<16x384xf32> to vector<16x128xf32>
    %362 = vector.broadcast %351 : vector<1x128xf32> to vector<16x128xf32>
    %363 = arith.addf %361, %362 : vector<16x128xf32>
    %cst_133 = arith.constant 0.176776692 : f32
    %364 = vector.broadcast %cst_133 : f32 to vector<16x128xf32>
    %365 = arith.mulf %357, %364 : vector<16x128xf32>
    %366 = arith.truncf %365 : vector<16x128xf32> to vector<16x128xbf16>
    %367 = arith.truncf %360 : vector<16x128xf32> to vector<16x128xbf16>
    %368 = arith.truncf %363 : vector<16x128xf32> to vector<16x128xbf16>
    %369 = vector.extract_strided_slice %366 {offsets = [0, 0], sizes = [16, 32], strides = [1, 1]} : vector<16x128xbf16> to vector<16x32xbf16>
    %370 = vector.extract_strided_slice %367 {offsets = [0, 0], sizes = [16, 32], strides = [1, 1]} : vector<16x128xbf16> to vector<16x32xbf16>
    %371 = vector.extract_strided_slice %368 {offsets = [0, 0], sizes = [16, 32], strides = [1, 1]} : vector<16x128xbf16> to vector<16x32xbf16>
    %cst_134 = arith.constant dense<0.000000e+00> : vector<16x16xf32>
    %372 = tpu.matmul %369, %370, %cst_134 {dimension_numbers = #tpu.dot_dimension_numbers<[1], [1], [0], [0], [0, 0, 1, 0], [], []>} : vector<16x32xbf16>, vector<16x32xbf16>, vector<16x16xf32> -> vector<16x16xf32>
    %cst_135 = arith.constant dense<0xFF800000> : vector<16xf32>
    %373 = vector.multi_reduction <maximumf>, %372, %cst_135 [1] : vector<16x16xf32> to vector<16xf32>
    %374 = vector.shape_cast %373 : vector<16xf32> to vector<16x1xf32>
    %375 = vector.broadcast %374 : vector<16x1xf32> to vector<16x16xf32>
    %376 = arith.subf %372, %375 : vector<16x16xf32>
    %377 = math.exp %376 : vector<16x16xf32>
    %cst_136 = arith.constant dense<0.000000e+00> : vector<16xf32>
    %378 = vector.multi_reduction <add>, %377, %cst_136 [1] : vector<16x16xf32> to vector<16xf32>
    %379 = vector.shape_cast %378 : vector<16xf32> to vector<16x1xf32>
    %380 = tpu.reciprocal %379 {approx = true} : vector<16x1xf32> -> vector<16x1xf32>
    %381 = vector.broadcast %380 : vector<16x1xf32> to vector<16x16xf32>
    %382 = arith.mulf %377, %381 : vector<16x16xf32>
    %383 = arith.truncf %382 : vector<16x16xf32> to vector<16x16xbf16>
    %cst_137 = arith.constant dense<0.000000e+00> : vector<16x32xf32>
    %384 = tpu.matmul %383, %371, %cst_137 {dimension_numbers = #tpu.dot_dimension_numbers<[1], [0], [0], [1], [0, 0, 1, 1], [], []>} : vector<16x16xbf16>, vector<16x32xbf16>, vector<16x32xf32> -> vector<16x32xf32>
    %385 = vector.extract_strided_slice %366 {offsets = [0, 32], sizes = [16, 32], strides = [1, 1]} : vector<16x128xbf16> to vector<16x32xbf16>
    %386 = vector.extract_strided_slice %367 {offsets = [0, 32], sizes = [16, 32], strides = [1, 1]} : vector<16x128xbf16> to vector<16x32xbf16>
    %387 = vector.extract_strided_slice %368 {offsets = [0, 32], sizes = [16, 32], strides = [1, 1]} : vector<16x128xbf16> to vector<16x32xbf16>
    %cst_138 = arith.constant dense<0.000000e+00> : vector<16x16xf32>
    %388 = tpu.matmul %385, %386, %cst_138 {dimension_numbers = #tpu.dot_dimension_numbers<[1], [1], [0], [0], [0, 0, 1, 0], [], []>} : vector<16x32xbf16>, vector<16x32xbf16>, vector<16x16xf32> -> vector<16x16xf32>
    %cst_139 = arith.constant dense<0xFF800000> : vector<16xf32>
    %389 = vector.multi_reduction <maximumf>, %388, %cst_139 [1] : vector<16x16xf32> to vector<16xf32>
    %390 = vector.shape_cast %389 : vector<16xf32> to vector<16x1xf32>
    %391 = vector.broadcast %390 : vector<16x1xf32> to vector<16x16xf32>
    %392 = arith.subf %388, %391 : vector<16x16xf32>
    %393 = math.exp %392 : vector<16x16xf32>
    %cst_140 = arith.constant dense<0.000000e+00> : vector<16xf32>
    %394 = vector.multi_reduction <add>, %393, %cst_140 [1] : vector<16x16xf32> to vector<16xf32>
    %395 = vector.shape_cast %394 : vector<16xf32> to vector<16x1xf32>
    %396 = tpu.reciprocal %395 {approx = true} : vector<16x1xf32> -> vector<16x1xf32>
    %397 = vector.broadcast %396 : vector<16x1xf32> to vector<16x16xf32>
    %398 = arith.mulf %393, %397 : vector<16x16xf32>
    %399 = arith.truncf %398 : vector<16x16xf32> to vector<16x16xbf16>
    %cst_141 = arith.constant dense<0.000000e+00> : vector<16x32xf32>
    %400 = tpu.matmul %399, %387, %cst_141 {dimension_numbers = #tpu.dot_dimension_numbers<[1], [0], [0], [1], [0, 0, 1, 1], [], []>} : vector<16x16xbf16>, vector<16x32xbf16>, vector<16x32xf32> -> vector<16x32xf32>
    %401 = vector.extract_strided_slice %366 {offsets = [0, 64], sizes = [16, 32], strides = [1, 1]} : vector<16x128xbf16> to vector<16x32xbf16>
    %402 = vector.extract_strided_slice %367 {offsets = [0, 64], sizes = [16, 32], strides = [1, 1]} : vector<16x128xbf16> to vector<16x32xbf16>
    %403 = vector.extract_strided_slice %368 {offsets = [0, 64], sizes = [16, 32], strides = [1, 1]} : vector<16x128xbf16> to vector<16x32xbf16>
    %cst_142 = arith.constant dense<0.000000e+00> : vector<16x16xf32>
    %404 = tpu.matmul %401, %402, %cst_142 {dimension_numbers = #tpu.dot_dimension_numbers<[1], [1], [0], [0], [0, 0, 1, 0], [], []>} : vector<16x32xbf16>, vector<16x32xbf16>, vector<16x16xf32> -> vector<16x16xf32>
    %cst_143 = arith.constant dense<0xFF800000> : vector<16xf32>
    %405 = vector.multi_reduction <maximumf>, %404, %cst_143 [1] : vector<16x16xf32> to vector<16xf32>
    %406 = vector.shape_cast %405 : vector<16xf32> to vector<16x1xf32>
    %407 = vector.broadcast %406 : vector<16x1xf32> to vector<16x16xf32>
    %408 = arith.subf %404, %407 : vector<16x16xf32>
    %409 = math.exp %408 : vector<16x16xf32>
    %cst_144 = arith.constant dense<0.000000e+00> : vector<16xf32>
    %410 = vector.multi_reduction <add>, %409, %cst_144 [1] : vector<16x16xf32> to vector<16xf32>
    %411 = vector.shape_cast %410 : vector<16xf32> to vector<16x1xf32>
    %412 = tpu.reciprocal %411 {approx = true} : vector<16x1xf32> -> vector<16x1xf32>
    %413 = vector.broadcast %412 : vector<16x1xf32> to vector<16x16xf32>
    %414 = arith.mulf %409, %413 : vector<16x16xf32>
    %415 = arith.truncf %414 : vector<16x16xf32> to vector<16x16xbf16>
    %cst_145 = arith.constant dense<0.000000e+00> : vector<16x32xf32>
    %416 = tpu.matmul %415, %403, %cst_145 {dimension_numbers = #tpu.dot_dimension_numbers<[1], [0], [0], [1], [0, 0, 1, 1], [], []>} : vector<16x16xbf16>, vector<16x32xbf16>, vector<16x32xf32> -> vector<16x32xf32>
    %417 = vector.extract_strided_slice %366 {offsets = [0, 96], sizes = [16, 32], strides = [1, 1]} : vector<16x128xbf16> to vector<16x32xbf16>
    %418 = vector.extract_strided_slice %367 {offsets = [0, 96], sizes = [16, 32], strides = [1, 1]} : vector<16x128xbf16> to vector<16x32xbf16>
    %419 = vector.extract_strided_slice %368 {offsets = [0, 96], sizes = [16, 32], strides = [1, 1]} : vector<16x128xbf16> to vector<16x32xbf16>
    %cst_146 = arith.constant dense<0.000000e+00> : vector<16x16xf32>
    %420 = tpu.matmul %417, %418, %cst_146 {dimension_numbers = #tpu.dot_dimension_numbers<[1], [1], [0], [0], [0, 0, 1, 0], [], []>} : vector<16x32xbf16>, vector<16x32xbf16>, vector<16x16xf32> -> vector<16x16xf32>
    %cst_147 = arith.constant dense<0xFF800000> : vector<16xf32>
    %421 = vector.multi_reduction <maximumf>, %420, %cst_147 [1] : vector<16x16xf32> to vector<16xf32>
    %422 = vector.shape_cast %421 : vector<16xf32> to vector<16x1xf32>
    %423 = vector.broadcast %422 : vector<16x1xf32> to vector<16x16xf32>
    %424 = arith.subf %420, %423 : vector<16x16xf32>
    %425 = math.exp %424 : vector<16x16xf32>
    %cst_148 = arith.constant dense<0.000000e+00> : vector<16xf32>
    %426 = vector.multi_reduction <add>, %425, %cst_148 [1] : vector<16x16xf32> to vector<16xf32>
    %427 = vector.shape_cast %426 : vector<16xf32> to vector<16x1xf32>
    %428 = tpu.reciprocal %427 {approx = true} : vector<16x1xf32> -> vector<16x1xf32>
    %429 = vector.broadcast %428 : vector<16x1xf32> to vector<16x16xf32>
    %430 = arith.mulf %425, %429 : vector<16x16xf32>
    %431 = arith.truncf %430 : vector<16x16xf32> to vector<16x16xbf16>
    %cst_149 = arith.constant dense<0.000000e+00> : vector<16x32xf32>
    %432 = tpu.matmul %431, %419, %cst_149 {dimension_numbers = #tpu.dot_dimension_numbers<[1], [0], [0], [1], [0, 0, 1, 1], [], []>} : vector<16x16xbf16>, vector<16x32xbf16>, vector<16x32xf32> -> vector<16x32xf32>
    %433 = tpu.concatenate %384, %400, %416, %432 in 1 : vector<16x32xf32>, vector<16x32xf32>, vector<16x32xf32>, vector<16x32xf32> -> vector<16x128xf32>
    %434 = arith.truncf %433 : vector<16x128xf32> to vector<16x128xbf16>
    %cst_150 = arith.constant dense<0.000000e+00> : vector<16x128xf32>
    %435 = tpu.matmul %434, %334, %cst_150 {dimension_numbers = #tpu.dot_dimension_numbers<[1], [0], [0], [1], [0, 0, 1, 1], [], []>} : vector<16x128xbf16>, vector<128x128xbf16>, vector<16x128xf32> -> vector<16x128xf32>
    %436 = vector.broadcast %352 : vector<1x128xf32> to vector<16x128xf32>
    %437 = arith.addf %435, %436 : vector<16x128xf32>
    %438 = arith.addf %330, %437 : vector<16x128xf32>
    %439 = vector.extract_strided_slice %346 {offsets = [9, 0], sizes = [1, 128], strides = [1, 1]} : vector<15x128xf32> to vector<1x128xf32>
    %440 = vector.extract_strided_slice %346 {offsets = [10, 0], sizes = [1, 128], strides = [1, 1]} : vector<15x128xf32> to vector<1x128xf32>
    %cst_151 = arith.constant dense<0.000000e+00> : vector<16xf32>
    %441 = vector.multi_reduction <add>, %438, %cst_151 [1] : vector<16x128xf32> to vector<16xf32>
    %442 = vector.shape_cast %441 : vector<16xf32> to vector<16x1xf32>
    %cst_152 = arith.constant 1.280000e+02 : f32
    %443 = vector.broadcast %cst_152 : f32 to vector<16x1xf32>
    %444 = arith.divf %442, %443 : vector<16x1xf32>
    %445 = vector.broadcast %444 : vector<16x1xf32> to vector<16x128xf32>
    %446 = arith.subf %438, %445 : vector<16x128xf32>
    %447 = arith.mulf %446, %446 : vector<16x128xf32>
    %cst_153 = arith.constant dense<0.000000e+00> : vector<16xf32>
    %448 = vector.multi_reduction <add>, %447, %cst_153 [1] : vector<16x128xf32> to vector<16xf32>
    %449 = vector.shape_cast %448 : vector<16xf32> to vector<16x1xf32>
    %cst_154 = arith.constant 1.280000e+02 : f32
    %450 = vector.broadcast %cst_154 : f32 to vector<16x1xf32>
    %451 = arith.divf %449, %450 : vector<16x1xf32>
    %452 = vector.broadcast %444 : vector<16x1xf32> to vector<16x128xf32>
    %453 = arith.subf %438, %452 : vector<16x128xf32>
    %cst_155 = arith.constant 9.99999974E-6 : f32
    %454 = vector.broadcast %cst_155 : f32 to vector<16x1xf32>
    %455 = arith.addf %451, %454 : vector<16x1xf32>
    %456 = math.rsqrt %455 : vector<16x1xf32>
    %457 = vector.broadcast %456 : vector<16x1xf32> to vector<16x128xf32>
    %458 = arith.mulf %453, %457 : vector<16x128xf32>
    %459 = vector.broadcast %439 : vector<1x128xf32> to vector<16x128xf32>
    %460 = arith.mulf %458, %459 : vector<16x128xf32>
    %461 = vector.broadcast %440 : vector<1x128xf32> to vector<16x128xf32>
    %462 = arith.addf %460, %461 : vector<16x128xf32>
    %463 = arith.truncf %462 : vector<16x128xf32> to vector<16x128xbf16>
    %cst_156 = arith.constant dense<0.000000e+00> : vector<16x128xf32>
    %464 = tpu.matmul %463, %336, %cst_156 {dimension_numbers = #tpu.dot_dimension_numbers<[1], [0], [0], [1], [0, 0, 1, 1], [], []>} : vector<16x128xbf16>, vector<128x128xbf16>, vector<16x128xf32> -> vector<16x128xf32>
    %465 = vector.extract_strided_slice %346 {offsets = [4, 0], sizes = [1, 128], strides = [1, 1]} : vector<15x128xf32> to vector<1x128xf32>
    %466 = vector.broadcast %465 : vector<1x128xf32> to vector<16x128xf32>
    %467 = arith.addf %464, %466 : vector<16x128xf32>
    %cst_157 = arith.constant dense<0.000000e+00> : vector<16x256xf32>
    %468 = tpu.matmul %328, %338, %cst_157 {dimension_numbers = #tpu.dot_dimension_numbers<[1], [0], [0], [1], [0, 0, 1, 1], [], []>} : vector<16x128xbf16>, vector<128x256xbf16>, vector<16x256xf32> -> vector<16x256xf32>
    %469 = vector.extract_strided_slice %468 {offsets = [0, 0], sizes = [16, 128], strides = [1, 1]} : vector<16x256xf32> to vector<16x128xf32>
    %470 = vector.extract_strided_slice %346 {offsets = [5, 0], sizes = [1, 128], strides = [1, 1]} : vector<15x128xf32> to vector<1x128xf32>
    %471 = vector.broadcast %470 : vector<1x128xf32> to vector<16x128xf32>
    %472 = arith.addf %469, %471 : vector<16x128xf32>
    %473 = vector.extract_strided_slice %468 {offsets = [0, 128], sizes = [16, 128], strides = [1, 1]} : vector<16x256xf32> to vector<16x128xf32>
    %474 = vector.extract_strided_slice %346 {offsets = [6, 0], sizes = [1, 128], strides = [1, 1]} : vector<15x128xf32> to vector<1x128xf32>
    %475 = vector.broadcast %474 : vector<1x128xf32> to vector<16x128xf32>
    %476 = arith.addf %473, %475 : vector<16x128xf32>
    %cst_158 = arith.constant 0.176776692 : f32
    %477 = vector.broadcast %cst_158 : f32 to vector<16x128xf32>
    %478 = arith.mulf %467, %477 : vector<16x128xf32>
    %479 = arith.truncf %478 : vector<16x128xf32> to vector<16x128xbf16>
    %480 = arith.truncf %472 : vector<16x128xf32> to vector<16x128xbf16>
    %481 = arith.truncf %476 : vector<16x128xf32> to vector<16x128xbf16>
    %482 = vector.extract_strided_slice %479 {offsets = [0, 0], sizes = [16, 32], strides = [1, 1]} : vector<16x128xbf16> to vector<16x32xbf16>
    %483 = vector.extract_strided_slice %480 {offsets = [0, 0], sizes = [16, 32], strides = [1, 1]} : vector<16x128xbf16> to vector<16x32xbf16>
    %484 = vector.extract_strided_slice %481 {offsets = [0, 0], sizes = [16, 32], strides = [1, 1]} : vector<16x128xbf16> to vector<16x32xbf16>
    %cst_159 = arith.constant dense<0.000000e+00> : vector<16x16xf32>
    %485 = tpu.matmul %482, %483, %cst_159 {dimension_numbers = #tpu.dot_dimension_numbers<[1], [1], [0], [0], [0, 0, 1, 0], [], []>} : vector<16x32xbf16>, vector<16x32xbf16>, vector<16x16xf32> -> vector<16x16xf32>
    %cst_160 = arith.constant dense<0xFF800000> : vector<16xf32>
    %486 = vector.multi_reduction <maximumf>, %485, %cst_160 [1] : vector<16x16xf32> to vector<16xf32>
    %487 = vector.shape_cast %486 : vector<16xf32> to vector<16x1xf32>
    %488 = vector.broadcast %487 : vector<16x1xf32> to vector<16x16xf32>
    %489 = arith.subf %485, %488 : vector<16x16xf32>
    %490 = math.exp %489 : vector<16x16xf32>
    %cst_161 = arith.constant dense<0.000000e+00> : vector<16xf32>
    %491 = vector.multi_reduction <add>, %490, %cst_161 [1] : vector<16x16xf32> to vector<16xf32>
    %492 = vector.shape_cast %491 : vector<16xf32> to vector<16x1xf32>
    %493 = tpu.reciprocal %492 {approx = true} : vector<16x1xf32> -> vector<16x1xf32>
    %494 = vector.broadcast %493 : vector<16x1xf32> to vector<16x16xf32>
    %495 = arith.mulf %490, %494 : vector<16x16xf32>
    %496 = arith.truncf %495 : vector<16x16xf32> to vector<16x16xbf16>
    %cst_162 = arith.constant dense<0.000000e+00> : vector<16x32xf32>
    %497 = tpu.matmul %496, %484, %cst_162 {dimension_numbers = #tpu.dot_dimension_numbers<[1], [0], [0], [1], [0, 0, 1, 1], [], []>} : vector<16x16xbf16>, vector<16x32xbf16>, vector<16x32xf32> -> vector<16x32xf32>
    %498 = vector.extract_strided_slice %479 {offsets = [0, 32], sizes = [16, 32], strides = [1, 1]} : vector<16x128xbf16> to vector<16x32xbf16>
    %499 = vector.extract_strided_slice %480 {offsets = [0, 32], sizes = [16, 32], strides = [1, 1]} : vector<16x128xbf16> to vector<16x32xbf16>
    %500 = vector.extract_strided_slice %481 {offsets = [0, 32], sizes = [16, 32], strides = [1, 1]} : vector<16x128xbf16> to vector<16x32xbf16>
    %cst_163 = arith.constant dense<0.000000e+00> : vector<16x16xf32>
    %501 = tpu.matmul %498, %499, %cst_163 {dimension_numbers = #tpu.dot_dimension_numbers<[1], [1], [0], [0], [0, 0, 1, 0], [], []>} : vector<16x32xbf16>, vector<16x32xbf16>, vector<16x16xf32> -> vector<16x16xf32>
    %cst_164 = arith.constant dense<0xFF800000> : vector<16xf32>
    %502 = vector.multi_reduction <maximumf>, %501, %cst_164 [1] : vector<16x16xf32> to vector<16xf32>
    %503 = vector.shape_cast %502 : vector<16xf32> to vector<16x1xf32>
    %504 = vector.broadcast %503 : vector<16x1xf32> to vector<16x16xf32>
    %505 = arith.subf %501, %504 : vector<16x16xf32>
    %506 = math.exp %505 : vector<16x16xf32>
    %cst_165 = arith.constant dense<0.000000e+00> : vector<16xf32>
    %507 = vector.multi_reduction <add>, %506, %cst_165 [1] : vector<16x16xf32> to vector<16xf32>
    %508 = vector.shape_cast %507 : vector<16xf32> to vector<16x1xf32>
    %509 = tpu.reciprocal %508 {approx = true} : vector<16x1xf32> -> vector<16x1xf32>
    %510 = vector.broadcast %509 : vector<16x1xf32> to vector<16x16xf32>
    %511 = arith.mulf %506, %510 : vector<16x16xf32>
    %512 = arith.truncf %511 : vector<16x16xf32> to vector<16x16xbf16>
    %cst_166 = arith.constant dense<0.000000e+00> : vector<16x32xf32>
    %513 = tpu.matmul %512, %500, %cst_166 {dimension_numbers = #tpu.dot_dimension_numbers<[1], [0], [0], [1], [0, 0, 1, 1], [], []>} : vector<16x16xbf16>, vector<16x32xbf16>, vector<16x32xf32> -> vector<16x32xf32>
    %514 = vector.extract_strided_slice %479 {offsets = [0, 64], sizes = [16, 32], strides = [1, 1]} : vector<16x128xbf16> to vector<16x32xbf16>
    %515 = vector.extract_strided_slice %480 {offsets = [0, 64], sizes = [16, 32], strides = [1, 1]} : vector<16x128xbf16> to vector<16x32xbf16>
    %516 = vector.extract_strided_slice %481 {offsets = [0, 64], sizes = [16, 32], strides = [1, 1]} : vector<16x128xbf16> to vector<16x32xbf16>
    %cst_167 = arith.constant dense<0.000000e+00> : vector<16x16xf32>
    %517 = tpu.matmul %514, %515, %cst_167 {dimension_numbers = #tpu.dot_dimension_numbers<[1], [1], [0], [0], [0, 0, 1, 0], [], []>} : vector<16x32xbf16>, vector<16x32xbf16>, vector<16x16xf32> -> vector<16x16xf32>
    %cst_168 = arith.constant dense<0xFF800000> : vector<16xf32>
    %518 = vector.multi_reduction <maximumf>, %517, %cst_168 [1] : vector<16x16xf32> to vector<16xf32>
    %519 = vector.shape_cast %518 : vector<16xf32> to vector<16x1xf32>
    %520 = vector.broadcast %519 : vector<16x1xf32> to vector<16x16xf32>
    %521 = arith.subf %517, %520 : vector<16x16xf32>
    %522 = math.exp %521 : vector<16x16xf32>
    %cst_169 = arith.constant dense<0.000000e+00> : vector<16xf32>
    %523 = vector.multi_reduction <add>, %522, %cst_169 [1] : vector<16x16xf32> to vector<16xf32>
    %524 = vector.shape_cast %523 : vector<16xf32> to vector<16x1xf32>
    %525 = tpu.reciprocal %524 {approx = true} : vector<16x1xf32> -> vector<16x1xf32>
    %526 = vector.broadcast %525 : vector<16x1xf32> to vector<16x16xf32>
    %527 = arith.mulf %522, %526 : vector<16x16xf32>
    %528 = arith.truncf %527 : vector<16x16xf32> to vector<16x16xbf16>
    %cst_170 = arith.constant dense<0.000000e+00> : vector<16x32xf32>
    %529 = tpu.matmul %528, %516, %cst_170 {dimension_numbers = #tpu.dot_dimension_numbers<[1], [0], [0], [1], [0, 0, 1, 1], [], []>} : vector<16x16xbf16>, vector<16x32xbf16>, vector<16x32xf32> -> vector<16x32xf32>
    %530 = vector.extract_strided_slice %479 {offsets = [0, 96], sizes = [16, 32], strides = [1, 1]} : vector<16x128xbf16> to vector<16x32xbf16>
    %531 = vector.extract_strided_slice %480 {offsets = [0, 96], sizes = [16, 32], strides = [1, 1]} : vector<16x128xbf16> to vector<16x32xbf16>
    %532 = vector.extract_strided_slice %481 {offsets = [0, 96], sizes = [16, 32], strides = [1, 1]} : vector<16x128xbf16> to vector<16x32xbf16>
    %cst_171 = arith.constant dense<0.000000e+00> : vector<16x16xf32>
    %533 = tpu.matmul %530, %531, %cst_171 {dimension_numbers = #tpu.dot_dimension_numbers<[1], [1], [0], [0], [0, 0, 1, 0], [], []>} : vector<16x32xbf16>, vector<16x32xbf16>, vector<16x16xf32> -> vector<16x16xf32>
    %cst_172 = arith.constant dense<0xFF800000> : vector<16xf32>
    %534 = vector.multi_reduction <maximumf>, %533, %cst_172 [1] : vector<16x16xf32> to vector<16xf32>
    %535 = vector.shape_cast %534 : vector<16xf32> to vector<16x1xf32>
    %536 = vector.broadcast %535 : vector<16x1xf32> to vector<16x16xf32>
    %537 = arith.subf %533, %536 : vector<16x16xf32>
    %538 = math.exp %537 : vector<16x16xf32>
    %cst_173 = arith.constant dense<0.000000e+00> : vector<16xf32>
    %539 = vector.multi_reduction <add>, %538, %cst_173 [1] : vector<16x16xf32> to vector<16xf32>
    %540 = vector.shape_cast %539 : vector<16xf32> to vector<16x1xf32>
    %541 = tpu.reciprocal %540 {approx = true} : vector<16x1xf32> -> vector<16x1xf32>
    %542 = vector.broadcast %541 : vector<16x1xf32> to vector<16x16xf32>
    %543 = arith.mulf %538, %542 : vector<16x16xf32>
    %544 = arith.truncf %543 : vector<16x16xf32> to vector<16x16xbf16>
    %cst_174 = arith.constant dense<0.000000e+00> : vector<16x32xf32>
    %545 = tpu.matmul %544, %532, %cst_174 {dimension_numbers = #tpu.dot_dimension_numbers<[1], [0], [0], [1], [0, 0, 1, 1], [], []>} : vector<16x16xbf16>, vector<16x32xbf16>, vector<16x32xf32> -> vector<16x32xf32>
    %546 = tpu.concatenate %497, %513, %529, %545 in 1 : vector<16x32xf32>, vector<16x32xf32>, vector<16x32xf32>, vector<16x32xf32> -> vector<16x128xf32>
    %547 = arith.truncf %546 : vector<16x128xf32> to vector<16x128xbf16>
    %cst_175 = arith.constant dense<0.000000e+00> : vector<16x128xf32>
    %548 = tpu.matmul %547, %340, %cst_175 {dimension_numbers = #tpu.dot_dimension_numbers<[1], [0], [0], [1], [0, 0, 1, 1], [], []>} : vector<16x128xbf16>, vector<128x128xbf16>, vector<16x128xf32> -> vector<16x128xf32>
    %549 = vector.extract_strided_slice %346 {offsets = [7, 0], sizes = [1, 128], strides = [1, 1]} : vector<15x128xf32> to vector<1x128xf32>
    %550 = vector.broadcast %549 : vector<1x128xf32> to vector<16x128xf32>
    %551 = arith.addf %548, %550 : vector<16x128xf32>
    %552 = arith.addf %462, %551 : vector<16x128xf32>
    %553 = vector.extract_strided_slice %346 {offsets = [11, 0], sizes = [1, 128], strides = [1, 1]} : vector<15x128xf32> to vector<1x128xf32>
    %554 = vector.extract_strided_slice %346 {offsets = [12, 0], sizes = [1, 128], strides = [1, 1]} : vector<15x128xf32> to vector<1x128xf32>
    %cst_176 = arith.constant dense<0.000000e+00> : vector<16xf32>
    %555 = vector.multi_reduction <add>, %552, %cst_176 [1] : vector<16x128xf32> to vector<16xf32>
    %556 = vector.shape_cast %555 : vector<16xf32> to vector<16x1xf32>
    %cst_177 = arith.constant 1.280000e+02 : f32
    %557 = vector.broadcast %cst_177 : f32 to vector<16x1xf32>
    %558 = arith.divf %556, %557 : vector<16x1xf32>
    %559 = vector.broadcast %558 : vector<16x1xf32> to vector<16x128xf32>
    %560 = arith.subf %552, %559 : vector<16x128xf32>
    %561 = arith.mulf %560, %560 : vector<16x128xf32>
    %cst_178 = arith.constant dense<0.000000e+00> : vector<16xf32>
    %562 = vector.multi_reduction <add>, %561, %cst_178 [1] : vector<16x128xf32> to vector<16xf32>
    %563 = vector.shape_cast %562 : vector<16xf32> to vector<16x1xf32>
    %cst_179 = arith.constant 1.280000e+02 : f32
    %564 = vector.broadcast %cst_179 : f32 to vector<16x1xf32>
    %565 = arith.divf %563, %564 : vector<16x1xf32>
    %566 = vector.broadcast %558 : vector<16x1xf32> to vector<16x128xf32>
    %567 = arith.subf %552, %566 : vector<16x128xf32>
    %cst_180 = arith.constant 9.99999974E-6 : f32
    %568 = vector.broadcast %cst_180 : f32 to vector<16x1xf32>
    %569 = arith.addf %565, %568 : vector<16x1xf32>
    %570 = math.rsqrt %569 : vector<16x1xf32>
    %571 = vector.broadcast %570 : vector<16x1xf32> to vector<16x128xf32>
    %572 = arith.mulf %567, %571 : vector<16x128xf32>
    %573 = vector.broadcast %553 : vector<1x128xf32> to vector<16x128xf32>
    %574 = arith.mulf %572, %573 : vector<16x128xf32>
    %575 = vector.broadcast %554 : vector<1x128xf32> to vector<16x128xf32>
    %576 = arith.addf %574, %575 : vector<16x128xf32>
    %577 = arith.truncf %576 : vector<16x128xf32> to vector<16x128xbf16>
    %cst_181 = arith.constant dense<0.000000e+00> : vector<16x256xf32>
    %578 = tpu.matmul %577, %342, %cst_181 {dimension_numbers = #tpu.dot_dimension_numbers<[1], [0], [0], [1], [0, 0, 1, 1], [], []>} : vector<16x128xbf16>, vector<128x256xbf16>, vector<16x256xf32> -> vector<16x256xf32>
    %579 = vector.broadcast %348 : vector<1x256xf32> to vector<16x256xf32>
    %580 = arith.addf %578, %579 : vector<16x256xf32>
    %cst_182 = arith.constant 0.000000e+00 : f32
    %581 = vector.broadcast %cst_182 : f32 to vector<16x256xf32>
    %582 = arith.maximumf %580, %581 : vector<16x256xf32>
    %583 = arith.truncf %582 : vector<16x256xf32> to vector<16x256xbf16>
    %cst_183 = arith.constant dense<0.000000e+00> : vector<16x128xf32>
    %584 = tpu.matmul %583, %344, %cst_183 {dimension_numbers = #tpu.dot_dimension_numbers<[1], [0], [0], [1], [0, 0, 1, 1], [], []>} : vector<16x256xbf16>, vector<256x128xbf16>, vector<16x128xf32> -> vector<16x128xf32>
    %585 = vector.extract_strided_slice %346 {offsets = [8, 0], sizes = [1, 128], strides = [1, 1]} : vector<15x128xf32> to vector<1x128xf32>
    %586 = vector.broadcast %585 : vector<1x128xf32> to vector<16x128xf32>
    %587 = arith.addf %584, %586 : vector<16x128xf32>
    %588 = arith.addf %576, %587 : vector<16x128xf32>
    %589 = vector.extract_strided_slice %346 {offsets = [13, 0], sizes = [1, 128], strides = [1, 1]} : vector<15x128xf32> to vector<1x128xf32>
    %590 = vector.extract_strided_slice %346 {offsets = [14, 0], sizes = [1, 128], strides = [1, 1]} : vector<15x128xf32> to vector<1x128xf32>
    %cst_184 = arith.constant dense<0.000000e+00> : vector<16xf32>
    %591 = vector.multi_reduction <add>, %588, %cst_184 [1] : vector<16x128xf32> to vector<16xf32>
    %592 = vector.shape_cast %591 : vector<16xf32> to vector<16x1xf32>
    %cst_185 = arith.constant 1.280000e+02 : f32
    %593 = vector.broadcast %cst_185 : f32 to vector<16x1xf32>
    %594 = arith.divf %592, %593 : vector<16x1xf32>
    %595 = vector.broadcast %594 : vector<16x1xf32> to vector<16x128xf32>
    %596 = arith.subf %588, %595 : vector<16x128xf32>
    %597 = arith.mulf %596, %596 : vector<16x128xf32>
    %cst_186 = arith.constant dense<0.000000e+00> : vector<16xf32>
    %598 = vector.multi_reduction <add>, %597, %cst_186 [1] : vector<16x128xf32> to vector<16xf32>
    %599 = vector.shape_cast %598 : vector<16xf32> to vector<16x1xf32>
    %cst_187 = arith.constant 1.280000e+02 : f32
    %600 = vector.broadcast %cst_187 : f32 to vector<16x1xf32>
    %601 = arith.divf %599, %600 : vector<16x1xf32>
    %602 = vector.broadcast %594 : vector<16x1xf32> to vector<16x128xf32>
    %603 = arith.subf %588, %602 : vector<16x128xf32>
    %cst_188 = arith.constant 9.99999974E-6 : f32
    %604 = vector.broadcast %cst_188 : f32 to vector<16x1xf32>
    %605 = arith.addf %601, %604 : vector<16x1xf32>
    %606 = math.rsqrt %605 : vector<16x1xf32>
    %607 = vector.broadcast %606 : vector<16x1xf32> to vector<16x128xf32>
    %608 = arith.mulf %603, %607 : vector<16x128xf32>
    %609 = vector.broadcast %589 : vector<1x128xf32> to vector<16x128xf32>
    %610 = arith.mulf %608, %609 : vector<16x128xf32>
    %611 = vector.broadcast %590 : vector<1x128xf32> to vector<16x128xf32>
    %612 = arith.addf %610, %611 : vector<16x128xf32>
    %c1_189 = arith.constant 1 : index
    %c0_190 = arith.constant 0 : index
    %c0_191 = arith.constant 0 : index
    %613 = vector.load %arg10[%c1_189, %c0_190, %c0_191] : memref<2x128x384xbf16, #tpu.memory_space<vmem>>, vector<1x128x384xbf16>
    %614 = vector.shape_cast %613 : vector<1x128x384xbf16> to vector<128x384xbf16>
    %c1_192 = arith.constant 1 : index
    %c0_193 = arith.constant 0 : index
    %c0_194 = arith.constant 0 : index
    %615 = vector.load %arg11[%c1_192, %c0_193, %c0_194] : memref<2x128x128xbf16, #tpu.memory_space<vmem>>, vector<1x128x128xbf16>
    %616 = vector.shape_cast %615 : vector<1x128x128xbf16> to vector<128x128xbf16>
    %c1_195 = arith.constant 1 : index
    %c0_196 = arith.constant 0 : index
    %c0_197 = arith.constant 0 : index
    %617 = vector.load %arg12[%c1_195, %c0_196, %c0_197] : memref<2x128x128xbf16, #tpu.memory_space<vmem>>, vector<1x128x128xbf16>
    %618 = vector.shape_cast %617 : vector<1x128x128xbf16> to vector<128x128xbf16>
    %c1_198 = arith.constant 1 : index
    %c0_199 = arith.constant 0 : index
    %c0_200 = arith.constant 0 : index
    %619 = vector.load %arg13[%c1_198, %c0_199, %c0_200] : memref<2x128x256xbf16, #tpu.memory_space<vmem>>, vector<1x128x256xbf16>
    %620 = vector.shape_cast %619 : vector<1x128x256xbf16> to vector<128x256xbf16>
    %c1_201 = arith.constant 1 : index
    %c0_202 = arith.constant 0 : index
    %c0_203 = arith.constant 0 : index
    %621 = vector.load %arg14[%c1_201, %c0_202, %c0_203] : memref<2x128x128xbf16, #tpu.memory_space<vmem>>, vector<1x128x128xbf16>
    %622 = vector.shape_cast %621 : vector<1x128x128xbf16> to vector<128x128xbf16>
    %c1_204 = arith.constant 1 : index
    %c0_205 = arith.constant 0 : index
    %c0_206 = arith.constant 0 : index
    %623 = vector.load %arg15[%c1_204, %c0_205, %c0_206] : memref<2x128x256xbf16, #tpu.memory_space<vmem>>, vector<1x128x256xbf16>
    %624 = vector.shape_cast %623 : vector<1x128x256xbf16> to vector<128x256xbf16>
    %c1_207 = arith.constant 1 : index
    %c0_208 = arith.constant 0 : index
    %c0_209 = arith.constant 0 : index
    %625 = vector.load %arg16[%c1_207, %c0_208, %c0_209] : memref<2x256x128xbf16, #tpu.memory_space<vmem>>, vector<1x256x128xbf16>
    %626 = vector.shape_cast %625 : vector<1x256x128xbf16> to vector<256x128xbf16>
    %c1_210 = arith.constant 1 : index
    %c0_211 = arith.constant 0 : index
    %c0_212 = arith.constant 0 : index
    %627 = vector.load %arg17[%c1_210, %c0_211, %c0_212] : memref<2x15x128xf32, #tpu.memory_space<vmem>>, vector<1x15x128xf32>
    %628 = vector.shape_cast %627 : vector<1x15x128xf32> to vector<15x128xf32>
    %c1_213 = arith.constant 1 : index
    %c0_214 = arith.constant 0 : index
    %c0_215 = arith.constant 0 : index
    %629 = vector.load %arg18[%c1_213, %c0_214, %c0_215] : memref<2x1x256xf32, #tpu.memory_space<vmem>>, vector<1x1x256xf32>
    %630 = vector.shape_cast %629 : vector<1x1x256xf32> to vector<1x256xf32>
    %631 = vector.extract_strided_slice %628 {offsets = [0, 0], sizes = [1, 128], strides = [1, 1]} : vector<15x128xf32> to vector<1x128xf32>
    %632 = vector.extract_strided_slice %628 {offsets = [1, 0], sizes = [1, 128], strides = [1, 1]} : vector<15x128xf32> to vector<1x128xf32>
    %633 = vector.extract_strided_slice %628 {offsets = [2, 0], sizes = [1, 128], strides = [1, 1]} : vector<15x128xf32> to vector<1x128xf32>
    %634 = vector.extract_strided_slice %628 {offsets = [3, 0], sizes = [1, 128], strides = [1, 1]} : vector<15x128xf32> to vector<1x128xf32>
    %635 = arith.truncf %612 : vector<16x128xf32> to vector<16x128xbf16>
    %cst_216 = arith.constant dense<0.000000e+00> : vector<16x384xf32>
    %636 = tpu.matmul %635, %614, %cst_216 {dimension_numbers = #tpu.dot_dimension_numbers<[1], [0], [0], [1], [0, 0, 1, 1], [], []>} : vector<16x128xbf16>, vector<128x384xbf16>, vector<16x384xf32> -> vector<16x384xf32>
    %637 = vector.extract_strided_slice %636 {offsets = [0, 0], sizes = [16, 128], strides = [1, 1]} : vector<16x384xf32> to vector<16x128xf32>
    %638 = vector.broadcast %631 : vector<1x128xf32> to vector<16x128xf32>
    %639 = arith.addf %637, %638 : vector<16x128xf32>
    %640 = vector.extract_strided_slice %636 {offsets = [0, 128], sizes = [16, 128], strides = [1, 1]} : vector<16x384xf32> to vector<16x128xf32>
    %641 = vector.broadcast %632 : vector<1x128xf32> to vector<16x128xf32>
    %642 = arith.addf %640, %641 : vector<16x128xf32>
    %643 = vector.extract_strided_slice %636 {offsets = [0, 256], sizes = [16, 128], strides = [1, 1]} : vector<16x384xf32> to vector<16x128xf32>
    %644 = vector.broadcast %633 : vector<1x128xf32> to vector<16x128xf32>
    %645 = arith.addf %643, %644 : vector<16x128xf32>
    %cst_217 = arith.constant 0.176776692 : f32
    %646 = vector.broadcast %cst_217 : f32 to vector<16x128xf32>
    %647 = arith.mulf %639, %646 : vector<16x128xf32>
    %648 = arith.truncf %647 : vector<16x128xf32> to vector<16x128xbf16>
    %649 = arith.truncf %642 : vector<16x128xf32> to vector<16x128xbf16>
    %650 = arith.truncf %645 : vector<16x128xf32> to vector<16x128xbf16>
    %651 = vector.extract_strided_slice %648 {offsets = [0, 0], sizes = [16, 32], strides = [1, 1]} : vector<16x128xbf16> to vector<16x32xbf16>
    %652 = vector.extract_strided_slice %649 {offsets = [0, 0], sizes = [16, 32], strides = [1, 1]} : vector<16x128xbf16> to vector<16x32xbf16>
    %653 = vector.extract_strided_slice %650 {offsets = [0, 0], sizes = [16, 32], strides = [1, 1]} : vector<16x128xbf16> to vector<16x32xbf16>
    %cst_218 = arith.constant dense<0.000000e+00> : vector<16x16xf32>
    %654 = tpu.matmul %651, %652, %cst_218 {dimension_numbers = #tpu.dot_dimension_numbers<[1], [1], [0], [0], [0, 0, 1, 0], [], []>} : vector<16x32xbf16>, vector<16x32xbf16>, vector<16x16xf32> -> vector<16x16xf32>
    %cst_219 = arith.constant dense<0xFF800000> : vector<16xf32>
    %655 = vector.multi_reduction <maximumf>, %654, %cst_219 [1] : vector<16x16xf32> to vector<16xf32>
    %656 = vector.shape_cast %655 : vector<16xf32> to vector<16x1xf32>
    %657 = vector.broadcast %656 : vector<16x1xf32> to vector<16x16xf32>
    %658 = arith.subf %654, %657 : vector<16x16xf32>
    %659 = math.exp %658 : vector<16x16xf32>
    %cst_220 = arith.constant dense<0.000000e+00> : vector<16xf32>
    %660 = vector.multi_reduction <add>, %659, %cst_220 [1] : vector<16x16xf32> to vector<16xf32>
    %661 = vector.shape_cast %660 : vector<16xf32> to vector<16x1xf32>
    %662 = tpu.reciprocal %661 {approx = true} : vector<16x1xf32> -> vector<16x1xf32>
    %663 = vector.broadcast %662 : vector<16x1xf32> to vector<16x16xf32>
    %664 = arith.mulf %659, %663 : vector<16x16xf32>
    %665 = arith.truncf %664 : vector<16x16xf32> to vector<16x16xbf16>
    %cst_221 = arith.constant dense<0.000000e+00> : vector<16x32xf32>
    %666 = tpu.matmul %665, %653, %cst_221 {dimension_numbers = #tpu.dot_dimension_numbers<[1], [0], [0], [1], [0, 0, 1, 1], [], []>} : vector<16x16xbf16>, vector<16x32xbf16>, vector<16x32xf32> -> vector<16x32xf32>
    %667 = vector.extract_strided_slice %648 {offsets = [0, 32], sizes = [16, 32], strides = [1, 1]} : vector<16x128xbf16> to vector<16x32xbf16>
    %668 = vector.extract_strided_slice %649 {offsets = [0, 32], sizes = [16, 32], strides = [1, 1]} : vector<16x128xbf16> to vector<16x32xbf16>
    %669 = vector.extract_strided_slice %650 {offsets = [0, 32], sizes = [16, 32], strides = [1, 1]} : vector<16x128xbf16> to vector<16x32xbf16>
    %cst_222 = arith.constant dense<0.000000e+00> : vector<16x16xf32>
    %670 = tpu.matmul %667, %668, %cst_222 {dimension_numbers = #tpu.dot_dimension_numbers<[1], [1], [0], [0], [0, 0, 1, 0], [], []>} : vector<16x32xbf16>, vector<16x32xbf16>, vector<16x16xf32> -> vector<16x16xf32>
    %cst_223 = arith.constant dense<0xFF800000> : vector<16xf32>
    %671 = vector.multi_reduction <maximumf>, %670, %cst_223 [1] : vector<16x16xf32> to vector<16xf32>
    %672 = vector.shape_cast %671 : vector<16xf32> to vector<16x1xf32>
    %673 = vector.broadcast %672 : vector<16x1xf32> to vector<16x16xf32>
    %674 = arith.subf %670, %673 : vector<16x16xf32>
    %675 = math.exp %674 : vector<16x16xf32>
    %cst_224 = arith.constant dense<0.000000e+00> : vector<16xf32>
    %676 = vector.multi_reduction <add>, %675, %cst_224 [1] : vector<16x16xf32> to vector<16xf32>
    %677 = vector.shape_cast %676 : vector<16xf32> to vector<16x1xf32>
    %678 = tpu.reciprocal %677 {approx = true} : vector<16x1xf32> -> vector<16x1xf32>
    %679 = vector.broadcast %678 : vector<16x1xf32> to vector<16x16xf32>
    %680 = arith.mulf %675, %679 : vector<16x16xf32>
    %681 = arith.truncf %680 : vector<16x16xf32> to vector<16x16xbf16>
    %cst_225 = arith.constant dense<0.000000e+00> : vector<16x32xf32>
    %682 = tpu.matmul %681, %669, %cst_225 {dimension_numbers = #tpu.dot_dimension_numbers<[1], [0], [0], [1], [0, 0, 1, 1], [], []>} : vector<16x16xbf16>, vector<16x32xbf16>, vector<16x32xf32> -> vector<16x32xf32>
    %683 = vector.extract_strided_slice %648 {offsets = [0, 64], sizes = [16, 32], strides = [1, 1]} : vector<16x128xbf16> to vector<16x32xbf16>
    %684 = vector.extract_strided_slice %649 {offsets = [0, 64], sizes = [16, 32], strides = [1, 1]} : vector<16x128xbf16> to vector<16x32xbf16>
    %685 = vector.extract_strided_slice %650 {offsets = [0, 64], sizes = [16, 32], strides = [1, 1]} : vector<16x128xbf16> to vector<16x32xbf16>
    %cst_226 = arith.constant dense<0.000000e+00> : vector<16x16xf32>
    %686 = tpu.matmul %683, %684, %cst_226 {dimension_numbers = #tpu.dot_dimension_numbers<[1], [1], [0], [0], [0, 0, 1, 0], [], []>} : vector<16x32xbf16>, vector<16x32xbf16>, vector<16x16xf32> -> vector<16x16xf32>
    %cst_227 = arith.constant dense<0xFF800000> : vector<16xf32>
    %687 = vector.multi_reduction <maximumf>, %686, %cst_227 [1] : vector<16x16xf32> to vector<16xf32>
    %688 = vector.shape_cast %687 : vector<16xf32> to vector<16x1xf32>
    %689 = vector.broadcast %688 : vector<16x1xf32> to vector<16x16xf32>
    %690 = arith.subf %686, %689 : vector<16x16xf32>
    %691 = math.exp %690 : vector<16x16xf32>
    %cst_228 = arith.constant dense<0.000000e+00> : vector<16xf32>
    %692 = vector.multi_reduction <add>, %691, %cst_228 [1] : vector<16x16xf32> to vector<16xf32>
    %693 = vector.shape_cast %692 : vector<16xf32> to vector<16x1xf32>
    %694 = tpu.reciprocal %693 {approx = true} : vector<16x1xf32> -> vector<16x1xf32>
    %695 = vector.broadcast %694 : vector<16x1xf32> to vector<16x16xf32>
    %696 = arith.mulf %691, %695 : vector<16x16xf32>
    %697 = arith.truncf %696 : vector<16x16xf32> to vector<16x16xbf16>
    %cst_229 = arith.constant dense<0.000000e+00> : vector<16x32xf32>
    %698 = tpu.matmul %697, %685, %cst_229 {dimension_numbers = #tpu.dot_dimension_numbers<[1], [0], [0], [1], [0, 0, 1, 1], [], []>} : vector<16x16xbf16>, vector<16x32xbf16>, vector<16x32xf32> -> vector<16x32xf32>
    %699 = vector.extract_strided_slice %648 {offsets = [0, 96], sizes = [16, 32], strides = [1, 1]} : vector<16x128xbf16> to vector<16x32xbf16>
    %700 = vector.extract_strided_slice %649 {offsets = [0, 96], sizes = [16, 32], strides = [1, 1]} : vector<16x128xbf16> to vector<16x32xbf16>
    %701 = vector.extract_strided_slice %650 {offsets = [0, 96], sizes = [16, 32], strides = [1, 1]} : vector<16x128xbf16> to vector<16x32xbf16>
    %cst_230 = arith.constant dense<0.000000e+00> : vector<16x16xf32>
    %702 = tpu.matmul %699, %700, %cst_230 {dimension_numbers = #tpu.dot_dimension_numbers<[1], [1], [0], [0], [0, 0, 1, 0], [], []>} : vector<16x32xbf16>, vector<16x32xbf16>, vector<16x16xf32> -> vector<16x16xf32>
    %cst_231 = arith.constant dense<0xFF800000> : vector<16xf32>
    %703 = vector.multi_reduction <maximumf>, %702, %cst_231 [1] : vector<16x16xf32> to vector<16xf32>
    %704 = vector.shape_cast %703 : vector<16xf32> to vector<16x1xf32>
    %705 = vector.broadcast %704 : vector<16x1xf32> to vector<16x16xf32>
    %706 = arith.subf %702, %705 : vector<16x16xf32>
    %707 = math.exp %706 : vector<16x16xf32>
    %cst_232 = arith.constant dense<0.000000e+00> : vector<16xf32>
    %708 = vector.multi_reduction <add>, %707, %cst_232 [1] : vector<16x16xf32> to vector<16xf32>
    %709 = vector.shape_cast %708 : vector<16xf32> to vector<16x1xf32>
    %710 = tpu.reciprocal %709 {approx = true} : vector<16x1xf32> -> vector<16x1xf32>
    %711 = vector.broadcast %710 : vector<16x1xf32> to vector<16x16xf32>
    %712 = arith.mulf %707, %711 : vector<16x16xf32>
    %713 = arith.truncf %712 : vector<16x16xf32> to vector<16x16xbf16>
    %cst_233 = arith.constant dense<0.000000e+00> : vector<16x32xf32>
    %714 = tpu.matmul %713, %701, %cst_233 {dimension_numbers = #tpu.dot_dimension_numbers<[1], [0], [0], [1], [0, 0, 1, 1], [], []>} : vector<16x16xbf16>, vector<16x32xbf16>, vector<16x32xf32> -> vector<16x32xf32>
    %715 = tpu.concatenate %666, %682, %698, %714 in 1 : vector<16x32xf32>, vector<16x32xf32>, vector<16x32xf32>, vector<16x32xf32> -> vector<16x128xf32>
    %716 = arith.truncf %715 : vector<16x128xf32> to vector<16x128xbf16>
    %cst_234 = arith.constant dense<0.000000e+00> : vector<16x128xf32>
    %717 = tpu.matmul %716, %616, %cst_234 {dimension_numbers = #tpu.dot_dimension_numbers<[1], [0], [0], [1], [0, 0, 1, 1], [], []>} : vector<16x128xbf16>, vector<128x128xbf16>, vector<16x128xf32> -> vector<16x128xf32>
    %718 = vector.broadcast %634 : vector<1x128xf32> to vector<16x128xf32>
    %719 = arith.addf %717, %718 : vector<16x128xf32>
    %720 = arith.addf %612, %719 : vector<16x128xf32>
    %721 = vector.extract_strided_slice %628 {offsets = [9, 0], sizes = [1, 128], strides = [1, 1]} : vector<15x128xf32> to vector<1x128xf32>
    %722 = vector.extract_strided_slice %628 {offsets = [10, 0], sizes = [1, 128], strides = [1, 1]} : vector<15x128xf32> to vector<1x128xf32>
    %cst_235 = arith.constant dense<0.000000e+00> : vector<16xf32>
    %723 = vector.multi_reduction <add>, %720, %cst_235 [1] : vector<16x128xf32> to vector<16xf32>
    %724 = vector.shape_cast %723 : vector<16xf32> to vector<16x1xf32>
    %cst_236 = arith.constant 1.280000e+02 : f32
    %725 = vector.broadcast %cst_236 : f32 to vector<16x1xf32>
    %726 = arith.divf %724, %725 : vector<16x1xf32>
    %727 = vector.broadcast %726 : vector<16x1xf32> to vector<16x128xf32>
    %728 = arith.subf %720, %727 : vector<16x128xf32>
    %729 = arith.mulf %728, %728 : vector<16x128xf32>
    %cst_237 = arith.constant dense<0.000000e+00> : vector<16xf32>
    %730 = vector.multi_reduction <add>, %729, %cst_237 [1] : vector<16x128xf32> to vector<16xf32>
    %731 = vector.shape_cast %730 : vector<16xf32> to vector<16x1xf32>
    %cst_238 = arith.constant 1.280000e+02 : f32
    %732 = vector.broadcast %cst_238 : f32 to vector<16x1xf32>
    %733 = arith.divf %731, %732 : vector<16x1xf32>
    %734 = vector.broadcast %726 : vector<16x1xf32> to vector<16x128xf32>
    %735 = arith.subf %720, %734 : vector<16x128xf32>
    %cst_239 = arith.constant 9.99999974E-6 : f32
    %736 = vector.broadcast %cst_239 : f32 to vector<16x1xf32>
    %737 = arith.addf %733, %736 : vector<16x1xf32>
    %738 = math.rsqrt %737 : vector<16x1xf32>
    %739 = vector.broadcast %738 : vector<16x1xf32> to vector<16x128xf32>
    %740 = arith.mulf %735, %739 : vector<16x128xf32>
    %741 = vector.broadcast %721 : vector<1x128xf32> to vector<16x128xf32>
    %742 = arith.mulf %740, %741 : vector<16x128xf32>
    %743 = vector.broadcast %722 : vector<1x128xf32> to vector<16x128xf32>
    %744 = arith.addf %742, %743 : vector<16x128xf32>
    %745 = arith.truncf %744 : vector<16x128xf32> to vector<16x128xbf16>
    %cst_240 = arith.constant dense<0.000000e+00> : vector<16x128xf32>
    %746 = tpu.matmul %745, %618, %cst_240 {dimension_numbers = #tpu.dot_dimension_numbers<[1], [0], [0], [1], [0, 0, 1, 1], [], []>} : vector<16x128xbf16>, vector<128x128xbf16>, vector<16x128xf32> -> vector<16x128xf32>
    %747 = vector.extract_strided_slice %628 {offsets = [4, 0], sizes = [1, 128], strides = [1, 1]} : vector<15x128xf32> to vector<1x128xf32>
    %748 = vector.broadcast %747 : vector<1x128xf32> to vector<16x128xf32>
    %749 = arith.addf %746, %748 : vector<16x128xf32>
    %cst_241 = arith.constant dense<0.000000e+00> : vector<16x256xf32>
    %750 = tpu.matmul %328, %620, %cst_241 {dimension_numbers = #tpu.dot_dimension_numbers<[1], [0], [0], [1], [0, 0, 1, 1], [], []>} : vector<16x128xbf16>, vector<128x256xbf16>, vector<16x256xf32> -> vector<16x256xf32>
    %751 = vector.extract_strided_slice %750 {offsets = [0, 0], sizes = [16, 128], strides = [1, 1]} : vector<16x256xf32> to vector<16x128xf32>
    %752 = vector.extract_strided_slice %628 {offsets = [5, 0], sizes = [1, 128], strides = [1, 1]} : vector<15x128xf32> to vector<1x128xf32>
    %753 = vector.broadcast %752 : vector<1x128xf32> to vector<16x128xf32>
    %754 = arith.addf %751, %753 : vector<16x128xf32>
    %755 = vector.extract_strided_slice %750 {offsets = [0, 128], sizes = [16, 128], strides = [1, 1]} : vector<16x256xf32> to vector<16x128xf32>
    %756 = vector.extract_strided_slice %628 {offsets = [6, 0], sizes = [1, 128], strides = [1, 1]} : vector<15x128xf32> to vector<1x128xf32>
    %757 = vector.broadcast %756 : vector<1x128xf32> to vector<16x128xf32>
    %758 = arith.addf %755, %757 : vector<16x128xf32>
    %cst_242 = arith.constant 0.176776692 : f32
    %759 = vector.broadcast %cst_242 : f32 to vector<16x128xf32>
    %760 = arith.mulf %749, %759 : vector<16x128xf32>
    %761 = arith.truncf %760 : vector<16x128xf32> to vector<16x128xbf16>
    %762 = arith.truncf %754 : vector<16x128xf32> to vector<16x128xbf16>
    %763 = arith.truncf %758 : vector<16x128xf32> to vector<16x128xbf16>
    %764 = vector.extract_strided_slice %761 {offsets = [0, 0], sizes = [16, 32], strides = [1, 1]} : vector<16x128xbf16> to vector<16x32xbf16>
    %765 = vector.extract_strided_slice %762 {offsets = [0, 0], sizes = [16, 32], strides = [1, 1]} : vector<16x128xbf16> to vector<16x32xbf16>
    %766 = vector.extract_strided_slice %763 {offsets = [0, 0], sizes = [16, 32], strides = [1, 1]} : vector<16x128xbf16> to vector<16x32xbf16>
    %cst_243 = arith.constant dense<0.000000e+00> : vector<16x16xf32>
    %767 = tpu.matmul %764, %765, %cst_243 {dimension_numbers = #tpu.dot_dimension_numbers<[1], [1], [0], [0], [0, 0, 1, 0], [], []>} : vector<16x32xbf16>, vector<16x32xbf16>, vector<16x16xf32> -> vector<16x16xf32>
    %cst_244 = arith.constant dense<0xFF800000> : vector<16xf32>
    %768 = vector.multi_reduction <maximumf>, %767, %cst_244 [1] : vector<16x16xf32> to vector<16xf32>
    %769 = vector.shape_cast %768 : vector<16xf32> to vector<16x1xf32>
    %770 = vector.broadcast %769 : vector<16x1xf32> to vector<16x16xf32>
    %771 = arith.subf %767, %770 : vector<16x16xf32>
    %772 = math.exp %771 : vector<16x16xf32>
    %cst_245 = arith.constant dense<0.000000e+00> : vector<16xf32>
    %773 = vector.multi_reduction <add>, %772, %cst_245 [1] : vector<16x16xf32> to vector<16xf32>
    %774 = vector.shape_cast %773 : vector<16xf32> to vector<16x1xf32>
    %775 = tpu.reciprocal %774 {approx = true} : vector<16x1xf32> -> vector<16x1xf32>
    %776 = vector.broadcast %775 : vector<16x1xf32> to vector<16x16xf32>
    %777 = arith.mulf %772, %776 : vector<16x16xf32>
    %778 = arith.truncf %777 : vector<16x16xf32> to vector<16x16xbf16>
    %cst_246 = arith.constant dense<0.000000e+00> : vector<16x32xf32>
    %779 = tpu.matmul %778, %766, %cst_246 {dimension_numbers = #tpu.dot_dimension_numbers<[1], [0], [0], [1], [0, 0, 1, 1], [], []>} : vector<16x16xbf16>, vector<16x32xbf16>, vector<16x32xf32> -> vector<16x32xf32>
    %780 = vector.extract_strided_slice %761 {offsets = [0, 32], sizes = [16, 32], strides = [1, 1]} : vector<16x128xbf16> to vector<16x32xbf16>
    %781 = vector.extract_strided_slice %762 {offsets = [0, 32], sizes = [16, 32], strides = [1, 1]} : vector<16x128xbf16> to vector<16x32xbf16>
    %782 = vector.extract_strided_slice %763 {offsets = [0, 32], sizes = [16, 32], strides = [1, 1]} : vector<16x128xbf16> to vector<16x32xbf16>
    %cst_247 = arith.constant dense<0.000000e+00> : vector<16x16xf32>
    %783 = tpu.matmul %780, %781, %cst_247 {dimension_numbers = #tpu.dot_dimension_numbers<[1], [1], [0], [0], [0, 0, 1, 0], [], []>} : vector<16x32xbf16>, vector<16x32xbf16>, vector<16x16xf32> -> vector<16x16xf32>
    %cst_248 = arith.constant dense<0xFF800000> : vector<16xf32>
    %784 = vector.multi_reduction <maximumf>, %783, %cst_248 [1] : vector<16x16xf32> to vector<16xf32>
    %785 = vector.shape_cast %784 : vector<16xf32> to vector<16x1xf32>
    %786 = vector.broadcast %785 : vector<16x1xf32> to vector<16x16xf32>
    %787 = arith.subf %783, %786 : vector<16x16xf32>
    %788 = math.exp %787 : vector<16x16xf32>
    %cst_249 = arith.constant dense<0.000000e+00> : vector<16xf32>
    %789 = vector.multi_reduction <add>, %788, %cst_249 [1] : vector<16x16xf32> to vector<16xf32>
    %790 = vector.shape_cast %789 : vector<16xf32> to vector<16x1xf32>
    %791 = tpu.reciprocal %790 {approx = true} : vector<16x1xf32> -> vector<16x1xf32>
    %792 = vector.broadcast %791 : vector<16x1xf32> to vector<16x16xf32>
    %793 = arith.mulf %788, %792 : vector<16x16xf32>
    %794 = arith.truncf %793 : vector<16x16xf32> to vector<16x16xbf16>
    %cst_250 = arith.constant dense<0.000000e+00> : vector<16x32xf32>
    %795 = tpu.matmul %794, %782, %cst_250 {dimension_numbers = #tpu.dot_dimension_numbers<[1], [0], [0], [1], [0, 0, 1, 1], [], []>} : vector<16x16xbf16>, vector<16x32xbf16>, vector<16x32xf32> -> vector<16x32xf32>
    %796 = vector.extract_strided_slice %761 {offsets = [0, 64], sizes = [16, 32], strides = [1, 1]} : vector<16x128xbf16> to vector<16x32xbf16>
    %797 = vector.extract_strided_slice %762 {offsets = [0, 64], sizes = [16, 32], strides = [1, 1]} : vector<16x128xbf16> to vector<16x32xbf16>
    %798 = vector.extract_strided_slice %763 {offsets = [0, 64], sizes = [16, 32], strides = [1, 1]} : vector<16x128xbf16> to vector<16x32xbf16>
    %cst_251 = arith.constant dense<0.000000e+00> : vector<16x16xf32>
    %799 = tpu.matmul %796, %797, %cst_251 {dimension_numbers = #tpu.dot_dimension_numbers<[1], [1], [0], [0], [0, 0, 1, 0], [], []>} : vector<16x32xbf16>, vector<16x32xbf16>, vector<16x16xf32> -> vector<16x16xf32>
    %cst_252 = arith.constant dense<0xFF800000> : vector<16xf32>
    %800 = vector.multi_reduction <maximumf>, %799, %cst_252 [1] : vector<16x16xf32> to vector<16xf32>
    %801 = vector.shape_cast %800 : vector<16xf32> to vector<16x1xf32>
    %802 = vector.broadcast %801 : vector<16x1xf32> to vector<16x16xf32>
    %803 = arith.subf %799, %802 : vector<16x16xf32>
    %804 = math.exp %803 : vector<16x16xf32>
    %cst_253 = arith.constant dense<0.000000e+00> : vector<16xf32>
    %805 = vector.multi_reduction <add>, %804, %cst_253 [1] : vector<16x16xf32> to vector<16xf32>
    %806 = vector.shape_cast %805 : vector<16xf32> to vector<16x1xf32>
    %807 = tpu.reciprocal %806 {approx = true} : vector<16x1xf32> -> vector<16x1xf32>
    %808 = vector.broadcast %807 : vector<16x1xf32> to vector<16x16xf32>
    %809 = arith.mulf %804, %808 : vector<16x16xf32>
    %810 = arith.truncf %809 : vector<16x16xf32> to vector<16x16xbf16>
    %cst_254 = arith.constant dense<0.000000e+00> : vector<16x32xf32>
    %811 = tpu.matmul %810, %798, %cst_254 {dimension_numbers = #tpu.dot_dimension_numbers<[1], [0], [0], [1], [0, 0, 1, 1], [], []>} : vector<16x16xbf16>, vector<16x32xbf16>, vector<16x32xf32> -> vector<16x32xf32>
    %812 = vector.extract_strided_slice %761 {offsets = [0, 96], sizes = [16, 32], strides = [1, 1]} : vector<16x128xbf16> to vector<16x32xbf16>
    %813 = vector.extract_strided_slice %762 {offsets = [0, 96], sizes = [16, 32], strides = [1, 1]} : vector<16x128xbf16> to vector<16x32xbf16>
    %814 = vector.extract_strided_slice %763 {offsets = [0, 96], sizes = [16, 32], strides = [1, 1]} : vector<16x128xbf16> to vector<16x32xbf16>
    %cst_255 = arith.constant dense<0.000000e+00> : vector<16x16xf32>
    %815 = tpu.matmul %812, %813, %cst_255 {dimension_numbers = #tpu.dot_dimension_numbers<[1], [1], [0], [0], [0, 0, 1, 0], [], []>} : vector<16x32xbf16>, vector<16x32xbf16>, vector<16x16xf32> -> vector<16x16xf32>
    %cst_256 = arith.constant dense<0xFF800000> : vector<16xf32>
    %816 = vector.multi_reduction <maximumf>, %815, %cst_256 [1] : vector<16x16xf32> to vector<16xf32>
    %817 = vector.shape_cast %816 : vector<16xf32> to vector<16x1xf32>
    %818 = vector.broadcast %817 : vector<16x1xf32> to vector<16x16xf32>
    %819 = arith.subf %815, %818 : vector<16x16xf32>
    %820 = math.exp %819 : vector<16x16xf32>
    %cst_257 = arith.constant dense<0.000000e+00> : vector<16xf32>
    %821 = vector.multi_reduction <add>, %820, %cst_257 [1] : vector<16x16xf32> to vector<16xf32>
    %822 = vector.shape_cast %821 : vector<16xf32> to vector<16x1xf32>
    %823 = tpu.reciprocal %822 {approx = true} : vector<16x1xf32> -> vector<16x1xf32>
    %824 = vector.broadcast %823 : vector<16x1xf32> to vector<16x16xf32>
    %825 = arith.mulf %820, %824 : vector<16x16xf32>
    %826 = arith.truncf %825 : vector<16x16xf32> to vector<16x16xbf16>
    %cst_258 = arith.constant dense<0.000000e+00> : vector<16x32xf32>
    %827 = tpu.matmul %826, %814, %cst_258 {dimension_numbers = #tpu.dot_dimension_numbers<[1], [0], [0], [1], [0, 0, 1, 1], [], []>} : vector<16x16xbf16>, vector<16x32xbf16>, vector<16x32xf32> -> vector<16x32xf32>
    %828 = tpu.concatenate %779, %795, %811, %827 in 1 : vector<16x32xf32>, vector<16x32xf32>, vector<16x32xf32>, vector<16x32xf32> -> vector<16x128xf32>
    %829 = arith.truncf %828 : vector<16x128xf32> to vector<16x128xbf16>
    %cst_259 = arith.constant dense<0.000000e+00> : vector<16x128xf32>
    %830 = tpu.matmul %829, %622, %cst_259 {dimension_numbers = #tpu.dot_dimension_numbers<[1], [0], [0], [1], [0, 0, 1, 1], [], []>} : vector<16x128xbf16>, vector<128x128xbf16>, vector<16x128xf32> -> vector<16x128xf32>
    %831 = vector.extract_strided_slice %628 {offsets = [7, 0], sizes = [1, 128], strides = [1, 1]} : vector<15x128xf32> to vector<1x128xf32>
    %832 = vector.broadcast %831 : vector<1x128xf32> to vector<16x128xf32>
    %833 = arith.addf %830, %832 : vector<16x128xf32>
    %834 = arith.addf %744, %833 : vector<16x128xf32>
    %835 = vector.extract_strided_slice %628 {offsets = [11, 0], sizes = [1, 128], strides = [1, 1]} : vector<15x128xf32> to vector<1x128xf32>
    %836 = vector.extract_strided_slice %628 {offsets = [12, 0], sizes = [1, 128], strides = [1, 1]} : vector<15x128xf32> to vector<1x128xf32>
    %cst_260 = arith.constant dense<0.000000e+00> : vector<16xf32>
    %837 = vector.multi_reduction <add>, %834, %cst_260 [1] : vector<16x128xf32> to vector<16xf32>
    %838 = vector.shape_cast %837 : vector<16xf32> to vector<16x1xf32>
    %cst_261 = arith.constant 1.280000e+02 : f32
    %839 = vector.broadcast %cst_261 : f32 to vector<16x1xf32>
    %840 = arith.divf %838, %839 : vector<16x1xf32>
    %841 = vector.broadcast %840 : vector<16x1xf32> to vector<16x128xf32>
    %842 = arith.subf %834, %841 : vector<16x128xf32>
    %843 = arith.mulf %842, %842 : vector<16x128xf32>
    %cst_262 = arith.constant dense<0.000000e+00> : vector<16xf32>
    %844 = vector.multi_reduction <add>, %843, %cst_262 [1] : vector<16x128xf32> to vector<16xf32>
    %845 = vector.shape_cast %844 : vector<16xf32> to vector<16x1xf32>
    %cst_263 = arith.constant 1.280000e+02 : f32
    %846 = vector.broadcast %cst_263 : f32 to vector<16x1xf32>
    %847 = arith.divf %845, %846 : vector<16x1xf32>
    %848 = vector.broadcast %840 : vector<16x1xf32> to vector<16x128xf32>
    %849 = arith.subf %834, %848 : vector<16x128xf32>
    %cst_264 = arith.constant 9.99999974E-6 : f32
    %850 = vector.broadcast %cst_264 : f32 to vector<16x1xf32>
    %851 = arith.addf %847, %850 : vector<16x1xf32>
    %852 = math.rsqrt %851 : vector<16x1xf32>
    %853 = vector.broadcast %852 : vector<16x1xf32> to vector<16x128xf32>
    %854 = arith.mulf %849, %853 : vector<16x128xf32>
    %855 = vector.broadcast %835 : vector<1x128xf32> to vector<16x128xf32>
    %856 = arith.mulf %854, %855 : vector<16x128xf32>
    %857 = vector.broadcast %836 : vector<1x128xf32> to vector<16x128xf32>
    %858 = arith.addf %856, %857 : vector<16x128xf32>
    %859 = arith.truncf %858 : vector<16x128xf32> to vector<16x128xbf16>
    %cst_265 = arith.constant dense<0.000000e+00> : vector<16x256xf32>
    %860 = tpu.matmul %859, %624, %cst_265 {dimension_numbers = #tpu.dot_dimension_numbers<[1], [0], [0], [1], [0, 0, 1, 1], [], []>} : vector<16x128xbf16>, vector<128x256xbf16>, vector<16x256xf32> -> vector<16x256xf32>
    %861 = vector.broadcast %630 : vector<1x256xf32> to vector<16x256xf32>
    %862 = arith.addf %860, %861 : vector<16x256xf32>
    %cst_266 = arith.constant 0.000000e+00 : f32
    %863 = vector.broadcast %cst_266 : f32 to vector<16x256xf32>
    %864 = arith.maximumf %862, %863 : vector<16x256xf32>
    %865 = arith.truncf %864 : vector<16x256xf32> to vector<16x256xbf16>
    %cst_267 = arith.constant dense<0.000000e+00> : vector<16x128xf32>
    %866 = tpu.matmul %865, %626, %cst_267 {dimension_numbers = #tpu.dot_dimension_numbers<[1], [0], [0], [1], [0, 0, 1, 1], [], []>} : vector<16x256xbf16>, vector<256x128xbf16>, vector<16x128xf32> -> vector<16x128xf32>
    %867 = vector.extract_strided_slice %628 {offsets = [8, 0], sizes = [1, 128], strides = [1, 1]} : vector<15x128xf32> to vector<1x128xf32>
    %868 = vector.broadcast %867 : vector<1x128xf32> to vector<16x128xf32>
    %869 = arith.addf %866, %868 : vector<16x128xf32>
    %870 = arith.addf %858, %869 : vector<16x128xf32>
    %871 = vector.extract_strided_slice %628 {offsets = [13, 0], sizes = [1, 128], strides = [1, 1]} : vector<15x128xf32> to vector<1x128xf32>
    %872 = vector.extract_strided_slice %628 {offsets = [14, 0], sizes = [1, 128], strides = [1, 1]} : vector<15x128xf32> to vector<1x128xf32>
    %cst_268 = arith.constant dense<0.000000e+00> : vector<16xf32>
    %873 = vector.multi_reduction <add>, %870, %cst_268 [1] : vector<16x128xf32> to vector<16xf32>
    %874 = vector.shape_cast %873 : vector<16xf32> to vector<16x1xf32>
    %cst_269 = arith.constant 1.280000e+02 : f32
    %875 = vector.broadcast %cst_269 : f32 to vector<16x1xf32>
    %876 = arith.divf %874, %875 : vector<16x1xf32>
    %877 = vector.broadcast %876 : vector<16x1xf32> to vector<16x128xf32>
    %878 = arith.subf %870, %877 : vector<16x128xf32>
    %879 = arith.mulf %878, %878 : vector<16x128xf32>
    %cst_270 = arith.constant dense<0.000000e+00> : vector<16xf32>
    %880 = vector.multi_reduction <add>, %879, %cst_270 [1] : vector<16x128xf32> to vector<16xf32>
    %881 = vector.shape_cast %880 : vector<16xf32> to vector<16x1xf32>
    %cst_271 = arith.constant 1.280000e+02 : f32
    %882 = vector.broadcast %cst_271 : f32 to vector<16x1xf32>
    %883 = arith.divf %881, %882 : vector<16x1xf32>
    %884 = vector.broadcast %876 : vector<16x1xf32> to vector<16x128xf32>
    %885 = arith.subf %870, %884 : vector<16x128xf32>
    %cst_272 = arith.constant 9.99999974E-6 : f32
    %886 = vector.broadcast %cst_272 : f32 to vector<16x1xf32>
    %887 = arith.addf %883, %886 : vector<16x1xf32>
    %888 = math.rsqrt %887 : vector<16x1xf32>
    %889 = vector.broadcast %888 : vector<16x1xf32> to vector<16x128xf32>
    %890 = arith.mulf %885, %889 : vector<16x128xf32>
    %891 = vector.broadcast %871 : vector<1x128xf32> to vector<16x128xf32>
    %892 = arith.mulf %890, %891 : vector<16x128xf32>
    %893 = vector.broadcast %872 : vector<1x128xf32> to vector<16x128xf32>
    %894 = arith.addf %892, %893 : vector<16x128xf32>
    %c0_273 = arith.constant 0 : index
    %c0_274 = arith.constant 0 : index
    %c0_275 = arith.constant 0 : index
    %895 = vector.load %arg19[%c0_273, %c0_274, %c0_275] : memref<1x16x128xf32, #tpu.memory_space<vmem>>, vector<1x16x128xf32>
    %896 = vector.shape_cast %895 : vector<1x16x128xf32> to vector<16x128xf32>
    %897 = vector.shape_cast %894 : vector<16x128xf32> to vector<1x16x128xf32>
    tpu.vector_store %arg19[%c0_273, %c0_274, %c0_275], %897 {strides = array<i32>} : memref<1x16x128xf32, #tpu.memory_space<vmem>>, vector<1x16x128xf32>,
    return
  }
  func.func @transform_0(%arg0: i32) -> (i32, i32, i32) {
    %c0_i32 = arith.constant 0 : i32
    %c0_i32_0 = arith.constant 0 : i32
    %c0_i32_1 = arith.constant 0 : i32
    return %arg0, %c0_i32, %c0_i32_0 : i32, i32, i32
  }
  func.func @transform_1(%arg0: i32) -> (i32, i32, i32) {
    %c0_i32 = arith.constant 0 : i32
    %c0_i32_0 = arith.constant 0 : i32
    %c0_i32_1 = arith.constant 0 : i32
    return %arg0, %c0_i32, %c0_i32_0 : i32, i32, i32
  }
  func.func @transform_2(%arg0: i32) -> (i32, i32) {
    %c0_i32 = arith.constant 0 : i32
    %c0_i32_0 = arith.constant 0 : i32
    %c0_i32_1 = arith.constant 0 : i32
    return %c0_i32, %c0_i32_0 : i32, i32
  }
  func.func @transform_3(%arg0: i32) -> (i32, i32, i32) {
    %c0_i32 = arith.constant 0 : i32
    %c0_i32_0 = arith.constant 0 : i32
    %c0_i32_1 = arith.constant 0 : i32
    %c0_i32_2 = arith.constant 0 : i32
    return %c0_i32, %c0_i32_0, %c0_i32_1 : i32, i32, i32
  }
  func.func @transform_4(%arg0: i32) -> (i32, i32, i32) {
    %c0_i32 = arith.constant 0 : i32
    %c0_i32_0 = arith.constant 0 : i32
    %c0_i32_1 = arith.constant 0 : i32
    %c0_i32_2 = arith.constant 0 : i32
    return %c0_i32, %c0_i32_0, %c0_i32_1 : i32, i32, i32
  }
  func.func @transform_5(%arg0: i32) -> (i32, i32, i32) {
    %c0_i32 = arith.constant 0 : i32
    %c0_i32_0 = arith.constant 0 : i32
    %c0_i32_1 = arith.constant 0 : i32
    %c0_i32_2 = arith.constant 0 : i32
    return %c0_i32, %c0_i32_0, %c0_i32_1 : i32, i32, i32
  }
  func.func @transform_6(%arg0: i32) -> (i32, i32, i32) {
    %c0_i32 = arith.constant 0 : i32
    %c0_i32_0 = arith.constant 0 : i32
    %c0_i32_1 = arith.constant 0 : i32
    %c0_i32_2 = arith.constant 0 : i32
    return %c0_i32, %c0_i32_0, %c0_i32_1 : i32, i32, i32
  }
  func.func @transform_7(%arg0: i32) -> (i32, i32, i32) {
    %c0_i32 = arith.constant 0 : i32
    %c0_i32_0 = arith.constant 0 : i32
    %c0_i32_1 = arith.constant 0 : i32
    %c0_i32_2 = arith.constant 0 : i32
    return %c0_i32, %c0_i32_0, %c0_i32_1 : i32, i32, i32
  }
  func.func @transform_8(%arg0: i32) -> (i32, i32, i32) {
    %c0_i32 = arith.constant 0 : i32
    %c0_i32_0 = arith.constant 0 : i32
    %c0_i32_1 = arith.constant 0 : i32
    %c0_i32_2 = arith.constant 0 : i32
    return %c0_i32, %c0_i32_0, %c0_i32_1 : i32, i32, i32
  }
  func.func @transform_9(%arg0: i32) -> (i32, i32, i32) {
    %c0_i32 = arith.constant 0 : i32
    %c0_i32_0 = arith.constant 0 : i32
    %c0_i32_1 = arith.constant 0 : i32
    %c0_i32_2 = arith.constant 0 : i32
    return %c0_i32, %c0_i32_0, %c0_i32_1 : i32, i32, i32
  }
  func.func @transform_10(%arg0: i32) -> (i32, i32, i32) {
    %c0_i32 = arith.constant 0 : i32
    %c0_i32_0 = arith.constant 0 : i32
    %c0_i32_1 = arith.constant 0 : i32
    %c0_i32_2 = arith.constant 0 : i32
    return %c0_i32, %c0_i32_0, %c0_i32_1 : i32, i32, i32
  }
  func.func @transform_11(%arg0: i32) -> (i32, i32, i32) {
    %c0_i32 = arith.constant 0 : i32
    %c0_i32_0 = arith.constant 0 : i32
    %c0_i32_1 = arith.constant 0 : i32
    %c0_i32_2 = arith.constant 0 : i32
    return %c0_i32, %c0_i32_0, %c0_i32_1 : i32, i32, i32
  }
  func.func @transform_12(%arg0: i32) -> (i32, i32, i32) {
    %c0_i32 = arith.constant 0 : i32
    %c0_i32_0 = arith.constant 0 : i32
    %c0_i32_1 = arith.constant 0 : i32
    %c0_i32_2 = arith.constant 0 : i32
    return %c0_i32, %c0_i32_0, %c0_i32_1 : i32, i32, i32
  }
  func.func @transform_13(%arg0: i32) -> (i32, i32, i32) {
    %c0_i32 = arith.constant 0 : i32
    %c0_i32_0 = arith.constant 0 : i32
    %c0_i32_1 = arith.constant 0 : i32
    %c0_i32_2 = arith.constant 0 : i32
    return %c0_i32, %c0_i32_0, %c0_i32_1 : i32, i32, i32
  }
  func.func @transform_14(%arg0: i32) -> (i32, i32, i32) {
    %c0_i32 = arith.constant 0 : i32
    %c0_i32_0 = arith.constant 0 : i32
    %c0_i32_1 = arith.constant 0 : i32
    %c0_i32_2 = arith.constant 0 : i32
    return %c0_i32, %c0_i32_0, %c0_i32_1 : i32, i32, i32
  }
  func.func @transform_15(%arg0: i32) -> (i32, i32, i32) {
    %c0_i32 = arith.constant 0 : i32
    %c0_i32_0 = arith.constant 0 : i32
    %c0_i32_1 = arith.constant 0 : i32
    %c0_i32_2 = arith.constant 0 : i32
    return %c0_i32, %c0_i32_0, %c0_i32_1 : i32, i32, i32
  }
  func.func @transform_16(%arg0: i32) -> (i32, i32, i32) {
    %c0_i32 = arith.constant 0 : i32
    %c0_i32_0 = arith.constant 0 : i32
    %c0_i32_1 = arith.constant 0 : i32
    %c0_i32_2 = arith.constant 0 : i32
    return %c0_i32, %c0_i32_0, %c0_i32_1 : i32, i32, i32
  }
  func.func @transform_17(%arg0: i32) -> (i32, i32, i32) {
    %c0_i32 = arith.constant 0 : i32
    %c0_i32_0 = arith.constant 0 : i32
    %c0_i32_1 = arith.constant 0 : i32
    %c0_i32_2 = arith.constant 0 : i32
    return %c0_i32, %c0_i32_0, %c0_i32_1 : i32, i32, i32
  }
  func.func @transform_18(%arg0: i32) -> (i32, i32, i32) {
    %c0_i32 = arith.constant 0 : i32
    %c0_i32_0 = arith.constant 0 : i32
    %c0_i32_1 = arith.constant 0 : i32
    return %arg0, %c0_i32, %c0_i32_0 : i32, i32, i32
  }
}

</mosaic_0001>

<llo_original>
// kernel: transformer_forward.1
$region0: #{transformer_forward.1}
  #allocation0 [shape = 'u32[]', space=smem, size = 0x4, offset = 0x4, fixed_abs, tag = 'smem constant byte address 0x4 - core index']
  #allocation1 [shape = 'u32[144,128]{1,0:T(1,128)}', space=vmem, size = 0x12000, scoped, tag = 'internal scratch']
  %s0 = inlined_call_operand.vmem [shape: f32[2,16,128], index: 0, kind: input, shape index: {}]
  %s1 = inlined_call_operand.vmem [shape: f32[2,16,128], index: 1, kind: input, shape index: {}]
  %s2 = inlined_call_operand.vmem [shape: f32[16,128], index: 2, kind: input, shape index: {}]
  %s3 = inlined_call_operand.vmem [shape: bf16[2,128,384], index: 3, kind: input, shape index: {}]
  %s4 = inlined_call_operand.vmem [shape: bf16[2,128,128], index: 4, kind: input, shape index: {}]
  %s5 = inlined_call_operand.hbm [shape: bf16[2,128,256], index: 5, kind: input, shape index: {}]
  %s6 = inlined_call_operand.hbm [shape: bf16[2,256,128], index: 6, kind: input, shape index: {}]
  %s7 = inlined_call_operand.vmem [shape: f32[2,9,128], index: 7, kind: input, shape index: {}]
  %s8 = inlined_call_operand.hbm [shape: f32[2,1,256], index: 8, kind: input, shape index: {}]
  %s9 = inlined_call_operand.hbm [shape: bf16[2,128,384], index: 9, kind: input, shape index: {}]
  %s10 = inlined_call_operand.hbm [shape: bf16[2,128,128], index: 10, kind: input, shape index: {}]
  %s11 = inlined_call_operand.hbm [shape: bf16[2,128,128], index: 11, kind: input, shape index: {}]
  %s12 = inlined_call_operand.hbm [shape: bf16[2,128,256], index: 12, kind: input, shape index: {}]
  %s13 = inlined_call_operand.hbm [shape: bf16[2,128,128], index: 13, kind: input, shape index: {}]
  %s14 = inlined_call_operand.hbm [shape: bf16[2,128,256], index: 14, kind: input, shape index: {}]
  %s15 = inlined_call_operand.hbm [shape: bf16[2,256,128], index: 15, kind: input, shape index: {}]
  %s16 = inlined_call_operand.vmem [shape: f32[2,15,128], index: 16, kind: input, shape index: {}]
  %s17 = inlined_call_operand.hbm [shape: f32[2,1,256], index: 17, kind: input, shape index: {}]
  %s18 = inlined_call_operand.hbm [shape: f32[2,16,128], index: 18, kind: output, shape index: {}]
  %s19 = sld [smem:[#allocation0]]
  $region149: #{transformer_forward.1} parent=0
    _
  %s21 = ssub.s32 1, %s19
  %s22 = scalar_select 0, %s21, %s19
  $region1: #{transformer_forward.1} parent=0
    #allocation2 [shape = 'u8[131072]{0}', space=vmem, size = 0x20000, scoped, tag = 'input window, operand 5, single buffered']
    #allocation3 [shape = 's32[2]{0}', space=sflag, size = 0x8, scoped, tag = 'scoped memory for transformer_forward.1']
    #allocation4 [shape = 's32[2]{0}', space=sflag, size = 0x8, scoped, tag = 'scoped memory for transformer_forward.1']
    #allocation5 [shape = 'u8[131072]{0}', space=vmem, size = 0x20000, scoped, tag = 'input window, operand 6, single buffered']
    #allocation6 [shape = 's32[1]{0}', space=sflag, size = 0x4, scoped, tag = 'scoped memory for transformer_forward.1']
    #allocation7 [shape = 'u8[2048]{0}', space=vmem, size = 0x800, scoped, tag = 'input window, operand 8, single buffered']
    #allocation8 [shape = 'u8[196608]{0}', space=vmem, size = 0x30000, scoped, tag = 'input window, operand 9, single buffered']
    #allocation9 [shape = 's32[1]{0}', space=sflag, size = 0x4, scoped, tag = 'scoped memory for transformer_forward.1']
    #allocation10 [shape = 'u8[65536]{0}', space=vmem, size = 0x10000, scoped, tag = 'input window, operand 10, single buffered']
    #allocation11 [shape = 'u8[65536]{0}', space=vmem, size = 0x10000, scoped, tag = 'input window, operand 11, single buffered']
    #allocation12 [shape = 's32[1]{0}', space=sflag, size = 0x4, scoped, tag = 'scoped memory for transformer_forward.1']
    #allocation13 [shape = 'u8[131072]{0}', space=vmem, size = 0x20000, scoped, tag = 'input window, operand 12, single buffered']
    #allocation14 [shape = 'u8[65536]{0}', space=vmem, size = 0x10000, scoped, tag = 'input window, operand 13, single buffered']
    #allocation15 [shape = 's32[1]{0}', space=sflag, size = 0x4, scoped, tag = 'scoped memory for transformer_forward.1']
    #allocation16 [shape = 'u8[131072]{0}', space=vmem, size = 0x20000, scoped, tag = 'input window, operand 14, single buffered']
    #allocation17 [shape = 'u8[131072]{0}', space=vmem, size = 0x20000, scoped, tag = 'input window, operand 15, single buffered']
    #allocation18 [shape = 's32[1]{0}', space=sflag, size = 0x4, scoped, tag = 'scoped memory for transformer_forward.1']
    #allocation19 [shape = 'u8[2048]{0}', space=vmem, size = 0x800, scoped, tag = 'input window, operand 17, single buffered']
    #allocation20 [shape = 'u8[16384]{0}', space=vmem, size = 0x4000, scoped, tag = 'output window, operand 0']
    %23 = vsyncpa [#allocation3], 0
    %24 = vsyncpa [#allocation6], 0
    %25 = vsyncpa [#allocation9], 0
    %26 = vsyncpa [#allocation12], 0
    %27 = vsyncpa [#allocation15], 0
    %28 = vsyncpa [#allocation18], 0
    %29 = vsyncpa [#allocation4], 0
    %s30 = scalar_lea.sflag [#allocation4], 1
    %31 = vsyncpa %s30, 0
    loop: start=0, step=1, limit=4
    $region2: #{transformer_forward.1} parent=1 // loop_pre_header
      _
    $region3: #{transformer_forward.1} parent=1 // loop_header
      %s33 = sphi 0, %s37
      %p34 = scmp.ge.s32.totalorder %s33, 4
      %s43 = sphi 0, %s45
      %s46 = sphi 0, %s43
      %s47 = sphi 0, %s46
      %s63 = sphi 0, %s47
      %s69 = sphi 0, %s71
      %s72 = sphi 0, %s69
      %s73 = sphi 0, %s72
      %s89 = sphi 0, %s73
      %s93 = sphi 0, %s93
      %s95 = sphi 0, %s93
      %s96 = sphi 0, %s95
      %s110 = sphi 0, %s96
      %s114 = sphi 0, %s114
      %s116 = sphi 0, %s114
      %s117 = sphi 0, %s116
      %s131 = sphi 0, %s117
      %s135 = sphi 0, %s135
      %s137 = sphi 0, %s135
      %s138 = sphi 0, %s137
      %s152 = sphi 0, %s138
      %s156 = sphi 0, %s156
      %s158 = sphi 0, %s156
      %s159 = sphi 0, %s158
      %s173 = sphi 0, %s159
      %s177 = sphi 0, %s177
      %s179 = sphi 0, %s177
      %s180 = sphi 0, %s179
      %s194 = sphi 0, %s180
      %s198 = sphi 0, %s198
      %s200 = sphi 0, %s198
      %s201 = sphi 0, %s200
      %s215 = sphi 0, %s201
      %s219 = sphi 0, %s219
      %s221 = sphi 0, %s219
      %s222 = sphi 0, %s221
      %s236 = sphi 0, %s222
      %s240 = sphi 0, %s240
      %s242 = sphi 0, %s240
      %s243 = sphi 0, %s242
      %s257 = sphi 0, %s243
      %s261 = sphi 0, %s261
      %s263 = sphi 0, %s261
      %s264 = sphi 0, %s263
      %s278 = sphi 0, %s264
      %s282 = sphi 0, %s282
      %s284 = sphi 0, %s282
      %s285 = sphi 0, %s284
      %s299 = sphi 0, %s285
      %s303 = sphi 0, %s303
      %s305 = sphi 0, %s303
      %s306 = sphi 0, %s305
      %s320 = sphi 0, %s306
      %s324 = sphi 0, %s324
      %s326 = sphi 0, %s324
      %s327 = sphi 0, %s326
      %s341 = sphi 0, %s327
      %s345 = sphi 0, %s345
      %s347 = sphi 0, %s345
      %s348 = sphi 0, %s347
      %s362 = sphi 0, %s348
      %s366 = sphi 0, %s366
      %s368 = sphi 0, %s366
      %s369 = sphi 0, %s368
      %s383 = sphi 0, %s369
      %s387 = sphi 0, %s387
      %s389 = sphi 0, %s387
      %s390 = sphi 0, %s389
      %s404 = sphi 0, %s390
      %s408 = sphi 0, %s408
      %s410 = sphi 0, %s408
      %s411 = sphi 0, %s410
      %s425 = sphi 0, %s411
      %s431 = sphi 0, %s433
      %s434 = sphi 0, %s431
      %s435 = sphi 0, %s434
      %s451 = sphi 0, %s435
    $region4: #{transformer_forward.1} parent=1 // loop_header_branch
      %36 = sbr.rel (%p34) target = $region8
    $region5: #{transformer_forward.1} parent=1 // loop_body
      %s38 = ssub.s32 %s33, 1
      %s39 = ssub.s32 %s33, 2
      %s40 = sadd.s32 %s33, 1
      %s41 = ssub.s32 %s33, %s40
      %p42 = scmp.eq.s32.totalorder %s41, 0
      %s44 = sadd.s32 %s43, 1
      %s45 = scalar_select %p42, %s43, %s44
      %p48 = pneg %p42
      %p49 = scmp.eq.s32.totalorder %s33, 1
      %p50 = por %p48, %p49
      %p51 = scmp.ne.s32.totalorder %s43, %s46
      %p52 = scmp.eq.s32.totalorder %s33, 0
      %p53 = por %p51, %p52
      %p54 = scmp.ne.s32.totalorder %s43, %s46
      %p55 = scmp.eq.s32.totalorder %s38, 1
      %p56 = por %p54, %p55
      %p57 = scmp.ne.s32.totalorder %s46, %s47
      %p58 = scmp.eq.s32.totalorder %s38, 0
      %p59 = por %p57, %p58
      %p60 = scmp.ne.s32.totalorder %s46, %s47
      %p61 = scmp.eq.s32.totalorder %s39, 1
      %p62 = por %p60, %p61
      %p64 = scmp.ne.s32.totalorder %s47, %s63
      %p65 = scmp.eq.s32.totalorder %s39, 0
      %p66 = por %p64, %p65
      %s67 = ssub.s32 %s33, %s40
      %p68 = scmp.eq.s32.totalorder %s67, 0
      %s70 = sadd.s32 %s69, 1
      %s71 = scalar_select %p68, %s69, %s70
      %p74 = pneg %p68
      %p75 = scmp.eq.s32.totalorder %s33, 1
      %p76 = por %p74, %p75
      %p77 = scmp.ne.s32.totalorder %s69, %s72
      %p78 = scmp.eq.s32.totalorder %s33, 0
      %p79 = por %p77, %p78
      %p80 = scmp.ne.s32.totalorder %s69, %s72
      %p81 = scmp.eq.s32.totalorder %s38, 1
      %p82 = por %p80, %p81
      %p83 = scmp.ne.s32.totalorder %s72, %s73
      %p84 = scmp.eq.s32.totalorder %s38, 0
      %p85 = por %p83, %p84
      %p86 = scmp.ne.s32.totalorder %s72, %s73
      %p87 = scmp.eq.s32.totalorder %s39, 1
      %p88 = por %p86, %p87
      %p90 = scmp.ne.s32.totalorder %s73, %s89
      %p91 = scmp.eq.s32.totalorder %s39, 0
      %p92 = por %p90, %p91
      %s94 = sadd.s32 %s93, 1
      %p97 = scmp.eq.s32.totalorder %s33, 1
      %p98 = scmp.ne.s32.totalorder %s93, %s95
      %p99 = scmp.eq.s32.totalorder %s33, 0
      %p100 = por %p98, %p99
      %p101 = scmp.ne.s32.totalorder %s93, %s95
      %p102 = scmp.eq.s32.totalorder %s38, 1
      %p103 = por %p101, %p102
      %p104 = scmp.ne.s32.totalorder %s95, %s96
      %p105 = scmp.eq.s32.totalorder %s38, 0
      %p106 = por %p104, %p105
      %p107 = scmp.ne.s32.totalorder %s95, %s96
      %p108 = scmp.eq.s32.totalorder %s39, 1
      %p109 = por %p107, %p108
      %p111 = scmp.ne.s32.totalorder %s96, %s110
      %p112 = scmp.eq.s32.totalorder %s39, 0
      %p113 = por %p111, %p112
      %s115 = sadd.s32 %s114, 1
      %p118 = scmp.eq.s32.totalorder %s33, 1
      %p119 = scmp.ne.s32.totalorder %s114, %s116
      %p120 = scmp.eq.s32.totalorder %s33, 0
      %p121 = por %p119, %p120
      %p122 = scmp.ne.s32.totalorder %s114, %s116
      %p123 = scmp.eq.s32.totalorder %s38, 1
      %p124 = por %p122, %p123
      %p125 = scmp.ne.s32.totalorder %s116, %s117
      %p126 = scmp.eq.s32.totalorder %s38, 0
      %p127 = por %p125, %p126
      %p128 = scmp.ne.s32.totalorder %s116, %s117
      %p129 = scmp.eq.s32.totalorder %s39, 1
      %p130 = por %p128, %p129
      %p132 = scmp.ne.s32.totalorder %s117, %s131
      %p133 = scmp.eq.s32.totalorder %s39, 0
      %p134 = por %p132, %p133
      %s136 = sadd.s32 %s135, 1
      %p139 = scmp.eq.s32.totalorder %s33, 1
      %p140 = scmp.ne.s32.totalorder %s135, %s137
      %p141 = scmp.eq.s32.totalorder %s33, 0
      %p142 = por %p140, %p141
      %p143 = scmp.ne.s32.totalorder %s135, %s137
      %p144 = scmp.eq.s32.totalorder %s38, 1
      %p145 = por %p143, %p144
      %p146 = scmp.ne.s32.totalorder %s137, %s138
      %p147 = scmp.eq.s32.totalorder %s38, 0
      %p148 = por %p146, %p147
      %p149 = scmp.ne.s32.totalorder %s137, %s138
      %p150 = scmp.eq.s32.totalorder %s39, 1
      %p151 = por %p149, %p150
      %p153 = scmp.ne.s32.totalorder %s138, %s152
      %p154 = scmp.eq.s32.totalorder %s39, 0
      %p155 = por %p153, %p154
      %s157 = sadd.s32 %s156, 1
      %p160 = scmp.eq.s32.totalorder %s33, 1
      %p161 = scmp.ne.s32.totalorder %s156, %s158
      %p162 = scmp.eq.s32.totalorder %s33, 0
      %p163 = por %p161, %p162
      %p164 = scmp.ne.s32.totalorder %s156, %s158
      %p165 = scmp.eq.s32.totalorder %s38, 1
      %p166 = por %p164, %p165
      %p167 = scmp.ne.s32.totalorder %s158, %s159
      %p168 = scmp.eq.s32.totalorder %s38, 0
      %p169 = por %p167, %p168
      %p170 = scmp.ne.s32.totalorder %s158, %s159
      %p171 = scmp.eq.s32.totalorder %s39, 1
      %p172 = por %p170, %p171
      %p174 = scmp.ne.s32.totalorder %s159, %s173
      %p175 = scmp.eq.s32.totalorder %s39, 0
      %p176 = por %p174, %p175
      %s178 = sadd.s32 %s177, 1
      %p181 = scmp.eq.s32.totalorder %s33, 1
      %p182 = scmp.ne.s32.totalorder %s177, %s179
      %p183 = scmp.eq.s32.totalorder %s33, 0
      %p184 = por %p182, %p183
      %p185 = scmp.ne.s32.totalorder %s177, %s179
      %p186 = scmp.eq.s32.totalorder %s38, 1
      %p187 = por %p185, %p186
      %p188 = scmp.ne.s32.totalorder %s179, %s180
      %p189 = scmp.eq.s32.totalorder %s38, 0
      %p190 = por %p188, %p189
      %p191 = scmp.ne.s32.totalorder %s179, %s180
      %p192 = scmp.eq.s32.totalorder %s39, 1
      %p193 = por %p191, %p192
      %p195 = scmp.ne.s32.totalorder %s180, %s194
      %p196 = scmp.eq.s32.totalorder %s39, 0
      %p197 = por %p195, %p196
      %s199 = sadd.s32 %s198, 1
      %p202 = scmp.eq.s32.totalorder %s33, 1
      %p203 = scmp.ne.s32.totalorder %s198, %s200
      %p204 = scmp.eq.s32.totalorder %s33, 0
      %p205 = por %p203, %p204
      %p206 = scmp.ne.s32.totalorder %s198, %s200
      %p207 = scmp.eq.s32.totalorder %s38, 1
      %p208 = por %p206, %p207
      %p209 = scmp.ne.s32.totalorder %s200, %s201
      %p210 = scmp.eq.s32.totalorder %s38, 0
      %p211 = por %p209, %p210
      %p212 = scmp.ne.s32.totalorder %s200, %s201
      %p213 = scmp.eq.s32.totalorder %s39, 1
      %p214 = por %p212, %p213
      %p216 = scmp.ne.s32.totalorder %s201, %s215
      %p217 = scmp.eq.s32.totalorder %s39, 0
      %p218 = por %p216, %p217
      %s220 = sadd.s32 %s219, 1
      %p223 = scmp.eq.s32.totalorder %s33, 1
      %p224 = scmp.ne.s32.totalorder %s219, %s221
      %p225 = scmp.eq.s32.totalorder %s33, 0
      %p226 = por %p224, %p225
      %p227 = scmp.ne.s32.totalorder %s219, %s221
      %p228 = scmp.eq.s32.totalorder %s38, 1
      %p229 = por %p227, %p228
      %p230 = scmp.ne.s32.totalorder %s221, %s222
      %p231 = scmp.eq.s32.totalorder %s38, 0
      %p232 = por %p230, %p231
      %p233 = scmp.ne.s32.totalorder %s221, %s222
      %p234 = scmp.eq.s32.totalorder %s39, 1
      %p235 = por %p233, %p234
      %p237 = scmp.ne.s32.totalorder %s222, %s236
      %p238 = scmp.eq.s32.totalorder %s39, 0
      %p239 = por %p237, %p238
      %s241 = sadd.s32 %s240, 1
      %p244 = scmp.eq.s32.totalorder %s33, 1
      %p245 = scmp.ne.s32.totalorder %s240, %s242
      %p246 = scmp.eq.s32.totalorder %s33, 0
      %p247 = por %p245, %p246
      %p248 = scmp.ne.s32.totalorder %s240, %s242
      %p249 = scmp.eq.s32.totalorder %s38, 1
      %p250 = por %p248, %p249
      %p251 = scmp.ne.s32.totalorder %s242, %s243
      %p252 = scmp.eq.s32.totalorder %s38, 0
      %p253 = por %p251, %p252
      %p254 = scmp.ne.s32.totalorder %s242, %s243
      %p255 = scmp.eq.s32.totalorder %s39, 1
      %p256 = por %p254, %p255
      %p258 = scmp.ne.s32.totalorder %s243, %s257
      %p259 = scmp.eq.s32.totalorder %s39, 0
      %p260 = por %p258, %p259
      %s262 = sadd.s32 %s261, 1
      %p265 = scmp.eq.s32.totalorder %s33, 1
      %p266 = scmp.ne.s32.totalorder %s261, %s263
      %p267 = scmp.eq.s32.totalorder %s33, 0
      %p268 = por %p266, %p267
      %p269 = scmp.ne.s32.totalorder %s261, %s263
      %p270 = scmp.eq.s32.totalorder %s38, 1
      %p271 = por %p269, %p270
      %p272 = scmp.ne.s32.totalorder %s263, %s264
      %p273 = scmp.eq.s32.totalorder %s38, 0
      %p274 = por %p272, %p273
      %p275 = scmp.ne.s32.totalorder %s263, %s264
      %p276 = scmp.eq.s32.totalorder %s39, 1
      %p277 = por %p275, %p276
      %p279 = scmp.ne.s32.totalorder %s264, %s278
      %p280 = scmp.eq.s32.totalorder %s39, 0
      %p281 = por %p279, %p280
      %s283 = sadd.s32 %s282, 1
      %p286 = scmp.eq.s32.totalorder %s33, 1
      %p287 = scmp.ne.s32.totalorder %s282, %s284
      %p288 = scmp.eq.s32.totalorder %s33, 0
      %p289 = por %p287, %p288
      %p290 = scmp.ne.s32.totalorder %s282, %s284
      %p291 = scmp.eq.s32.totalorder %s38, 1
      %p292 = por %p290, %p291
      %p293 = scmp.ne.s32.totalorder %s284, %s285
      %p294 = scmp.eq.s32.totalorder %s38, 0
      %p295 = por %p293, %p294
      %p296 = scmp.ne.s32.totalorder %s284, %s285
      %p297 = scmp.eq.s32.totalorder %s39, 1
      %p298 = por %p296, %p297
      %p300 = scmp.ne.s32.totalorder %s285, %s299
      %p301 = scmp.eq.s32.totalorder %s39, 0
      %p302 = por %p300, %p301
      %s304 = sadd.s32 %s303, 1
      %p307 = scmp.eq.s32.totalorder %s33, 1
      %p308 = scmp.ne.s32.totalorder %s303, %s305
      %p309 = scmp.eq.s32.totalorder %s33, 0
      %p310 = por %p308, %p309
      %p311 = scmp.ne.s32.totalorder %s303, %s305
      %p312 = scmp.eq.s32.totalorder %s38, 1
      %p313 = por %p311, %p312
      %p314 = scmp.ne.s32.totalorder %s305, %s306
      %p315 = scmp.eq.s32.totalorder %s38, 0
      %p316 = por %p314, %p315
      %p317 = scmp.ne.s32.totalorder %s305, %s306
      %p318 = scmp.eq.s32.totalorder %s39, 1
      %p319 = por %p317, %p318
      %p321 = scmp.ne.s32.totalorder %s306, %s320
      %p322 = scmp.eq.s32.totalorder %s39, 0
      %p323 = por %p321, %p322
      %s325 = sadd.s32 %s324, 1
      %p328 = scmp.eq.s32.totalorder %s33, 1
      %p329 = scmp.ne.s32.totalorder %s324, %s326
      %p330 = scmp.eq.s32.totalorder %s33, 0
      %p331 = por %p329, %p330
      %p332 = scmp.ne.s32.totalorder %s324, %s326
      %p333 = scmp.eq.s32.totalorder %s38, 1
      %p334 = por %p332, %p333
      %p335 = scmp.ne.s32.totalorder %s326, %s327
      %p336 = scmp.eq.s32.totalorder %s38, 0
      %p337 = por %p335, %p336
      %p338 = scmp.ne.s32.totalorder %s326, %s327
      %p339 = scmp.eq.s32.totalorder %s39, 1
      %p340 = por %p338, %p339
      %p342 = scmp.ne.s32.totalorder %s327, %s341
      %p343 = scmp.eq.s32.totalorder %s39, 0
      %p344 = por %p342, %p343
      %s346 = sadd.s32 %s345, 1
      %p349 = scmp.eq.s32.totalorder %s33, 1
      %p350 = scmp.ne.s32.totalorder %s345, %s347
      %p351 = scmp.eq.s32.totalorder %s33, 0
      %p352 = por %p350, %p351
      %p353 = scmp.ne.s32.totalorder %s345, %s347
      %p354 = scmp.eq.s32.totalorder %s38, 1
      %p355 = por %p353, %p354
      %p356 = scmp.ne.s32.totalorder %s347, %s348
      %p357 = scmp.eq.s32.totalorder %s38, 0
      %p358 = por %p356, %p357
      %p359 = scmp.ne.s32.totalorder %s347, %s348
      %p360 = scmp.eq.s32.totalorder %s39, 1
      %p361 = por %p359, %p360
      %p363 = scmp.ne.s32.totalorder %s348, %s362
      %p364 = scmp.eq.s32.totalorder %s39, 0
      %p365 = por %p363, %p364
      %s367 = sadd.s32 %s366, 1
      %p370 = scmp.eq.s32.totalorder %s33, 1
      %p371 = scmp.ne.s32.totalorder %s366, %s368
      %p372 = scmp.eq.s32.totalorder %s33, 0
      %p373 = por %p371, %p372
      %p374 = scmp.ne.s32.totalorder %s366, %s368
      %p375 = scmp.eq.s32.totalorder %s38, 1
      %p376 = por %p374, %p375
      %p377 = scmp.ne.s32.totalorder %s368, %s369
      %p378 = scmp.eq.s32.totalorder %s38, 0
      %p379 = por %p377, %p378
      %p380 = scmp.ne.s32.totalorder %s368, %s369
      %p381 = scmp.eq.s32.totalorder %s39, 1
      %p382 = por %p380, %p381
      %p384 = scmp.ne.s32.totalorder %s369, %s383
      %p385 = scmp.eq.s32.totalorder %s39, 0
      %p386 = por %p384, %p385
      %s388 = sadd.s32 %s387, 1
      %p391 = scmp.eq.s32.totalorder %s33, 1
      %p392 = scmp.ne.s32.totalorder %s387, %s389
      %p393 = scmp.eq.s32.totalorder %s33, 0
      %p394 = por %p392, %p393
      %p395 = scmp.ne.s32.totalorder %s387, %s389
      %p396 = scmp.eq.s32.totalorder %s38, 1
      %p397 = por %p395, %p396
      %p398 = scmp.ne.s32.totalorder %s389, %s390
      %p399 = scmp.eq.s32.totalorder %s38, 0
      %p400 = por %p398, %p399
      %p401 = scmp.ne.s32.totalorder %s389, %s390
      %p402 = scmp.eq.s32.totalorder %s39, 1
      %p403 = por %p401, %p402
      %p405 = scmp.ne.s32.totalorder %s390, %s404
      %p406 = scmp.eq.s32.totalorder %s39, 0
      %p407 = por %p405, %p406
      %s409 = sadd.s32 %s408, 1
      %p412 = scmp.eq.s32.totalorder %s33, 1
      %p413 = scmp.ne.s32.totalorder %s408, %s410
      %p414 = scmp.eq.s32.totalorder %s33, 0
      %p415 = por %p413, %p414
      %p416 = scmp.ne.s32.totalorder %s408, %s410
      %p417 = scmp.eq.s32.totalorder %s38, 1
      %p418 = por %p416, %p417
      %p419 = scmp.ne.s32.totalorder %s410, %s411
      %p420 = scmp.eq.s32.totalorder %s38, 0
      %p421 = por %p419, %p420
      %p422 = scmp.ne.s32.totalorder %s410, %s411
      %p423 = scmp.eq.s32.totalorder %s39, 1
      %p424 = por %p422, %p423
      %p426 = scmp.ne.s32.totalorder %s411, %s425
      %p427 = scmp.eq.s32.totalorder %s39, 0
      %p428 = por %p426, %p427
      %s429 = ssub.s32 %s33, %s40
      %p430 = scmp.eq.s32.totalorder %s429, 0
      %s432 = sadd.s32 %s431, 1
      %s433 = scalar_select %p430, %s431, %s432
      %p436 = pneg %p430
      %p437 = scmp.eq.s32.totalorder %s33, 1
      %p438 = por %p436, %p437
      %p439 = scmp.ne.s32.totalorder %s431, %s434
      %p440 = scmp.eq.s32.totalorder %s33, 0
      %p441 = por %p439, %p440
      %p442 = scmp.ne.s32.totalorder %s431, %s434
      %p443 = scmp.eq.s32.totalorder %s38, 1
      %p444 = por %p442, %p443
      %p445 = scmp.ne.s32.totalorder %s434, %s435
      %p446 = scmp.eq.s32.totalorder %s38, 0
      %p447 = por %p445, %p446
      %p448 = scmp.ne.s32.totalorder %s434, %s435
      %p449 = scmp.eq.s32.totalorder %s39, 1
      %p450 = por %p448, %p449
      %p452 = scmp.ne.s32.totalorder %s435, %s451
      %p453 = scmp.eq.s32.totalorder %s39, 0
      %p454 = por %p452, %p453
      %p455 = scmp.le.s32.totalorder 1, %s33
      %p456 = scmp.lt.s32.totalorder %s33, 3
      %p457 = pnand %p455, %p456
      %p458 = pneg %p457
      // Predicated region
      $region9: #{transformer_forward.1} parent=5 // pred_check
        _
      $region10: #{transformer_forward.1} parent=5 // pred_check_branch
        %460 = sbr.rel (%p457) target = $region12
      $region11: #{transformer_forward.1} parent=5 // pred_region
        %s461 = ssub.s32 %s33, 1
        // Predicated region
        $region13: #{transformer_forward.1} parent=11 // pred_check
          %p462 = pneg %p106
        $region14: #{transformer_forward.1} parent=11 // pred_check_branch
          %464 = sbr.rel (%p462) target = $region16
        $region15: #{transformer_forward.1} parent=11 // pred_region
          _
        $region16: #{transformer_forward.1} parent=11 // pred_fallthru
          _
        // Predicated region
        $region17: #{transformer_forward.1} parent=11 // pred_check
          %p465 = pneg %p127
        $region18: #{transformer_forward.1} parent=11 // pred_check_branch
          %467 = sbr.rel (%p465) target = $region20
        $region19: #{transformer_forward.1} parent=11 // pred_region
          _
        $region20: #{transformer_forward.1} parent=11 // pred_fallthru
          _
        // Predicated region
        $region21: #{transformer_forward.1} parent=11 // pred_check
          %p468 = pneg %p148
        $region22: #{transformer_forward.1} parent=11 // pred_check_branch
          %470 = sbr.rel (%p468) target = $region24
        $region23: #{transformer_forward.1} parent=11 // pred_region
          _
        $region24: #{transformer_forward.1} parent=11 // pred_fallthru
          _
        // Predicated region
        $region25: #{transformer_forward.1} parent=11 // pred_check
          %p471 = pneg %p169
        $region26: #{transformer_forward.1} parent=11 // pred_check_branch
          %473 = sbr.rel (%p471) target = $region28
        $region27: #{transformer_forward.1} parent=11 // pred_region
          %s475 = ssub.s32 4096, 4096
          %476 = vsyncadd [#allocation3], %s475
          %s477 = sshll.u32 [#allocation2], 4
          %s478 = int_to_ptr.vmem [resolvable:$true] %s477
          %483 = dma.hbm_to_vmem [thread:$0]  %s5, 4096, %s478, [#allocation3], 128, 128, 8
        $region28: #{transformer_forward.1} parent=11 // pred_fallthru
          _
        // Predicated region
        $region29: #{transformer_forward.1} parent=11 // pred_check
          %p484 = pneg %p190
        $region30: #{transformer_forward.1} parent=11 // pred_check_branch
          %486 = sbr.rel (%p484) target = $region32
        $region31: #{transformer_forward.1} parent=11 // pred_region
          %s488 = ssub.s32 4096, 4096
          %489 = vsyncadd [#allocation6], %s488
          %s490 = sshll.u32 [#allocation5], 4
          %s491 = int_to_ptr.vmem [resolvable:$true] %s490
          %496 = dma.hbm_to_vmem [thread:$0]  %s6, 4096, %s491, [#allocation6], 64, 64, 4
        $region32: #{transformer_forward.1} parent=11 // pred_fallthru
          _
        // Predicated region
        $region33: #{transformer_forward.1} parent=11 // pred_check
          %p497 = pneg %p211
        $region34: #{transformer_forward.1} parent=11 // pred_check_branch
          %499 = sbr.rel (%p497) target = $region36
        $region35: #{transformer_forward.1} parent=11 // pred_region
          _
        $region36: #{transformer_forward.1} parent=11 // pred_fallthru
          _
        // Predicated region
        $region37: #{transformer_forward.1} parent=11 // pred_check
          %p500 = pneg %p232
        $region38: #{transformer_forward.1} parent=11 // pred_check_branch
          %502 = sbr.rel (%p500) target = $region40
        $region39: #{transformer_forward.1} parent=11 // pred_region
          %s504 = ssub.s32 64, 64
          %505 = vsyncadd [#allocation6], %s504
          %s506 = sshll.u32 [#allocation7], 4
          %s507 = int_to_ptr.vmem [resolvable:$true] %s506
          %512 = dma.hbm_to_vmem [thread:$0]  %s8, 64, %s507, [#allocation6], 32, 32, 2
        $region40: #{transformer_forward.1} parent=11 // pred_fallthru
          _
        // Predicated region
        $region41: #{transformer_forward.1} parent=11 // pred_check
          %p513 = pneg %p253
        $region42: #{transformer_forward.1} parent=11 // pred_check_branch
          %515 = sbr.rel (%p513) target = $region44
        $region43: #{transformer_forward.1} parent=11 // pred_region
          %s517 = ssub.s32 6144, 6144
          %518 = vsyncadd [#allocation9], %s517
          %s519 = sshll.u32 [#allocation8], 4
          %s520 = int_to_ptr.vmem [resolvable:$true] %s519
          %525 = dma.hbm_to_vmem [thread:$0]  %s9, 6144, %s520, [#allocation9], 192, 192, 12
        $region44: #{transformer_forward.1} parent=11 // pred_fallthru
          _
        // Predicated region
        $region45: #{transformer_forward.1} parent=11 // pred_check
          %p526 = pneg %p274
        $region46: #{transformer_forward.1} parent=11 // pred_check_branch
          %528 = sbr.rel (%p526) target = $region48
        $region47: #{transformer_forward.1} parent=11 // pred_region
          %s530 = ssub.s32 2048, 2048
          %531 = vsyncadd [#allocation9], %s530
          %s532 = sshll.u32 [#allocation10], 4
          %s533 = int_to_ptr.vmem [resolvable:$true] %s532
          %538 = dma.hbm_to_vmem [thread:$0]  %s10, 2048, %s533, [#allocation9], 64, 64, 4
        $region48: #{transformer_forward.1} parent=11 // pred_fallthru
          _
        // Predicated region
        $region49: #{transformer_forward.1} parent=11 // pred_check
          %p539 = pneg %p295
        $region50: #{transformer_forward.1} parent=11 // pred_check_branch
          %541 = sbr.rel (%p539) target = $region52
        $region51: #{transformer_forward.1} parent=11 // pred_region
          %s543 = ssub.s32 2048, 2048
          %544 = vsyncadd [#allocation12], %s543
          %s545 = sshll.u32 [#allocation11], 4
          %s546 = int_to_ptr.vmem [resolvable:$true] %s545
          %551 = dma.hbm_to_vmem [thread:$0]  %s11, 2048, %s546, [#allocation12], 64, 64, 4
        $region52: #{transformer_forward.1} parent=11 // pred_fallthru
          _
        // Predicated region
        $region53: #{transformer_forward.1} parent=11 // pred_check
          %p552 = pneg %p316
        $region54: #{transformer_forward.1} parent=11 // pred_check_branch
          %554 = sbr.rel (%p552) target = $region56
        $region55: #{transformer_forward.1} parent=11 // pred_region
          %s556 = ssub.s32 4096, 4096
          %557 = vsyncadd [#allocation12], %s556
          %s558 = sshll.u32 [#allocation13], 4
          %s559 = int_to_ptr.vmem [resolvable:$true] %s558
          %564 = dma.hbm_to_vmem [thread:$0]  %s12, 4096, %s559, [#allocation12], 128, 128, 8
        $region56: #{transformer_forward.1} parent=11 // pred_fallthru
          _
        // Predicated region
        $region57: #{transformer_forward.1} parent=11 // pred_check
          %p565 = pneg %p337
        $region58: #{transformer_forward.1} parent=11 // pred_check_branch
          %567 = sbr.rel (%p565) target = $region60
        $region59: #{transformer_forward.1} parent=11 // pred_region
          %s569 = ssub.s32 2048, 2048
          %570 = vsyncadd [#allocation15], %s569
          %s571 = sshll.u32 [#allocation14], 4
          %s572 = int_to_ptr.vmem [resolvable:$true] %s571
          %577 = dma.hbm_to_vmem [thread:$0]  %s13, 2048, %s572, [#allocation15], 64, 64, 4
        $region60: #{transformer_forward.1} parent=11 // pred_fallthru
          _
        // Predicated region
        $region61: #{transformer_forward.1} parent=11 // pred_check
          %p578 = pneg %p358
        $region62: #{transformer_forward.1} parent=11 // pred_check_branch
          %580 = sbr.rel (%p578) target = $region64
        $region63: #{transformer_forward.1} parent=11 // pred_region
          %s582 = ssub.s32 4096, 4096
          %583 = vsyncadd [#allocation15], %s582
          %s584 = sshll.u32 [#allocation16], 4
          %s585 = int_to_ptr.vmem [resolvable:$true] %s584
          %590 = dma.hbm_to_vmem [thread:$0]  %s14, 4096, %s585, [#allocation15], 128, 128, 8
        $region64: #{transformer_forward.1} parent=11 // pred_fallthru
          _
        // Predicated region
        $region65: #{transformer_forward.1} parent=11 // pred_check
          %p591 = pneg %p379
        $region66: #{transformer_forward.1} parent=11 // pred_check_branch
          %593 = sbr.rel (%p591) target = $region68
        $region67: #{transformer_forward.1} parent=11 // pred_region
          %s595 = ssub.s32 4096, 4096
          %596 = vsyncadd [#allocation18], %s595
          %s597 = sshll.u32 [#allocation17], 4
          %s598 = int_to_ptr.vmem [resolvable:$true] %s597
          %603 = dma.hbm_to_vmem [thread:$0]  %s15, 4096, %s598, [#allocation18], 64, 64, 4
        $region68: #{transformer_forward.1} parent=11 // pred_fallthru
          _
        // Predicated region
        $region69: #{transformer_forward.1} parent=11 // pred_check
          %p604 = pneg %p400
        $region70: #{transformer_forward.1} parent=11 // pred_check_branch
          %606 = sbr.rel (%p604) target = $region72
        $region71: #{transformer_forward.1} parent=11 // pred_region
          _
        $region72: #{transformer_forward.1} parent=11 // pred_fallthru
          _
        // Predicated region
        $region73: #{transformer_forward.1} parent=11 // pred_check
          %p607 = pneg %p421
        $region74: #{transformer_forward.1} parent=11 // pred_check_branch
          %609 = sbr.rel (%p607) target = $region76
        $region75: #{transformer_forward.1} parent=11 // pred_region
          %s611 = ssub.s32 64, 64
          %612 = vsyncadd [#allocation18], %s611
          %s613 = sshll.u32 [#allocation19], 4
          %s614 = int_to_ptr.vmem [resolvable:$true] %s613
          %619 = dma.hbm_to_vmem [thread:$0]  %s17, 64, %s614, [#allocation18], 32, 32, 2
        $region76: #{transformer_forward.1} parent=11 // pred_fallthru
          _
      $region12: #{transformer_forward.1} parent=5 // pred_fallthru
        _
      %p620 = scmp.lt.s32.totalorder %s33, 2
      // Predicated region
      $region77: #{transformer_forward.1} parent=5 // pred_check
        %p621 = pneg %p620
      $region78: #{transformer_forward.1} parent=5 // pred_check_branch
        %623 = sbr.rel (%p621) target = $region80
      $region79: #{transformer_forward.1} parent=5 // pred_region
        // Predicated region
        $region81: #{transformer_forward.1} parent=79 // pred_check
          %p624 = pneg %p53
        $region82: #{transformer_forward.1} parent=79 // pred_check_branch
          %626 = sbr.rel (%p624) target = $region84
        $region83: #{transformer_forward.1} parent=79 // pred_region
          %p627 = scmp.lt.s32.totalorder %s33, 1
          %s628 = scalar_select %p627, %s33, 1
          %s629 = smul.addr %s628, 2
          %s630 = smul.addr %s629, 8
          %s631 = scalar_lea.vmem %s0, %s630
        $region84: #{transformer_forward.1} parent=79 // pred_fallthru
          _
        // Predicated region
        $region85: #{transformer_forward.1} parent=79 // pred_check
          %p632 = pneg %p79
        $region86: #{transformer_forward.1} parent=79 // pred_check_branch
          %634 = sbr.rel (%p632) target = $region88
        $region87: #{transformer_forward.1} parent=79 // pred_region
          %p635 = scmp.lt.s32.totalorder %s33, 1
          %s636 = scalar_select %p635, %s33, 1
          %s637 = smul.addr %s636, 2
          %s638 = smul.addr %s637, 8
          %s639 = scalar_lea.vmem %s1, %s638
        $region88: #{transformer_forward.1} parent=79 // pred_fallthru
          _
      $region80: #{transformer_forward.1} parent=5 // pred_fallthru
        _
      %p640 = scmp.le.s32.totalorder 1, %s33
      %p641 = scmp.lt.s32.totalorder %s33, 3
      %p642 = pnand %p640, %p641
      %p643 = pneg %p642
      // Predicated region
      $region89: #{transformer_forward.1} parent=5 // pred_check
        _
      $region90: #{transformer_forward.1} parent=5 // pred_check_branch
        %645 = sbr.rel (%p642) target = $region92
      $region91: #{transformer_forward.1} parent=5 // pred_region
        %s646 = ssub.s32 %s33, 1
        // Predicated region
        $region93: #{transformer_forward.1} parent=91 // pred_check
          %p647 = pneg %p169
        $region94: #{transformer_forward.1} parent=91 // pred_check_branch
          %649 = sbr.rel (%p647) target = $region96
        $region95: #{transformer_forward.1} parent=91 // pred_region
          %650 = dma.done [#allocation3], 4096
        $region96: #{transformer_forward.1} parent=91 // pred_fallthru
          _
        // Predicated region
        $region97: #{transformer_forward.1} parent=91 // pred_check
          %p651 = pneg %p190
        $region98: #{transformer_forward.1} parent=91 // pred_check_branch
          %653 = sbr.rel (%p651) target = $region100
        $region99: #{transformer_forward.1} parent=91 // pred_region
          %654 = dma.done [#allocation6], 4096
        $region100: #{transformer_forward.1} parent=91 // pred_fallthru
          _
        // Predicated region
        $region101: #{transformer_forward.1} parent=91 // pred_check
          %p655 = pneg %p232
        $region102: #{transformer_forward.1} parent=91 // pred_check_branch
          %657 = sbr.rel (%p655) target = $region104
        $region103: #{transformer_forward.1} parent=91 // pred_region
          %658 = dma.done [#allocation6], 64
        $region104: #{transformer_forward.1} parent=91 // pred_fallthru
          _
        // Predicated region
        $region105: #{transformer_forward.1} parent=91 // pred_check
          %p659 = pneg %p253
        $region106: #{transformer_forward.1} parent=91 // pred_check_branch
          %661 = sbr.rel (%p659) target = $region108
        $region107: #{transformer_forward.1} parent=91 // pred_region
          %662 = dma.done [#allocation9], 6144
        $region108: #{transformer_forward.1} parent=91 // pred_fallthru
          _
        // Predicated region
        $region109: #{transformer_forward.1} parent=91 // pred_check
          %p663 = pneg %p274
        $region110: #{transformer_forward.1} parent=91 // pred_check_branch
          %665 = sbr.rel (%p663) target = $region112
        $region111: #{transformer_forward.1} parent=91 // pred_region
          %666 = dma.done [#allocation9], 2048
        $region112: #{transformer_forward.1} parent=91 // pred_fallthru
          _
        // Predicated region
        $region113: #{transformer_forward.1} parent=91 // pred_check
          %p667 = pneg %p295
        $region114: #{transformer_forward.1} parent=91 // pred_check_branch
          %669 = sbr.rel (%p667) target = $region116
        $region115: #{transformer_forward.1} parent=91 // pred_region
          %670 = dma.done [#allocation12], 2048
        $region116: #{transformer_forward.1} parent=91 // pred_fallthru
          _
        // Predicated region
        $region117: #{transformer_forward.1} parent=91 // pred_check
          %p671 = pneg %p316
        $region118: #{transformer_forward.1} parent=91 // pred_check_branch
          %673 = sbr.rel (%p671) target = $region120
        $region119: #{transformer_forward.1} parent=91 // pred_region
          %674 = dma.done [#allocation12], 4096
        $region120: #{transformer_forward.1} parent=91 // pred_fallthru
          _
        // Predicated region
        $region121: #{transformer_forward.1} parent=91 // pred_check
          %p675 = pneg %p337
        $region122: #{transformer_forward.1} parent=91 // pred_check_branch
          %677 = sbr.rel (%p675) target = $region124
        $region123: #{transformer_forward.1} parent=91 // pred_region
          %678 = dma.done [#allocation15], 2048
        $region124: #{transformer_forward.1} parent=91 // pred_fallthru
          _
        // Predicated region
        $region125: #{transformer_forward.1} parent=91 // pred_check
          %p679 = pneg %p358
        $region126: #{transformer_forward.1} parent=91 // pred_check_branch
          %681 = sbr.rel (%p679) target = $region128
        $region127: #{transformer_forward.1} parent=91 // pred_region
          %682 = dma.done [#allocation15], 4096
        $region128: #{transformer_forward.1} parent=91 // pred_fallthru
          _
        // Predicated region
        $region129: #{transformer_forward.1} parent=91 // pred_check
          %p683 = pneg %p379
        $region130: #{transformer_forward.1} parent=91 // pred_check_branch
          %685 = sbr.rel (%p683) target = $region132
        $region131: #{transformer_forward.1} parent=91 // pred_region
          %686 = dma.done [#allocation18], 4096
        $region132: #{transformer_forward.1} parent=91 // pred_fallthru
          _
        // Predicated region
        $region133: #{transformer_forward.1} parent=91 // pred_check
          %p687 = pneg %p421
        $region134: #{transformer_forward.1} parent=91 // pred_check_branch
          %689 = sbr.rel (%p687) target = $region136
        $region135: #{transformer_forward.1} parent=91 // pred_region
          %690 = dma.done [#allocation18], 64
        $region136: #{transformer_forward.1} parent=91 // pred_fallthru
          _
        %p691 = scmp.lt.s32.totalorder %s38, 1
        %s692 = scalar_select %p691, %s38, 1
        %s693 = smul.addr %s692, 2
        %s694 = smul.addr %s693, 8
        %s695 = scalar_lea.vmem %s0, %s694
        %p696 = pneg %p59
        %p697 = pneg %p56
        %p698 = scmp.lt.s32.totalorder %s38, 1
        %s699 = scalar_select %p698, %s38, 1
        %s700 = smul.addr %s699, 2
        %s701 = smul.addr %s700, 8
        %s702 = scalar_lea.vmem %s1, %s701
        %p703 = pneg %p85
        %p704 = pneg %p82
        %p705 = pneg %p106
        %p706 = pneg %p103
        %p707 = pneg %p127
        %p708 = pneg %p124
        %p709 = pneg %p148
        %p710 = pneg %p145
        %p711 = pneg %p169
        %p712 = pneg %p166
        %p713 = pneg %p190
        %p714 = pneg %p187
        %p715 = pneg %p211
        %p716 = pneg %p208
        %p717 = pneg %p232
        %p718 = pneg %p229
        %p719 = pneg %p253
        %p720 = pneg %p250
        %p721 = pneg %p274
        %p722 = pneg %p271
        %p723 = pneg %p295
        %p724 = pneg %p292
        %p725 = pneg %p316
        %p726 = pneg %p313
        %p727 = pneg %p337
        %p728 = pneg %p334
        %p729 = pneg %p358
        %p730 = pneg %p355
        %p731 = pneg %p379
        %p732 = pneg %p376
        %p733 = pneg %p400
        %p734 = pneg %p397
        %p735 = pneg %p421
        %p736 = pneg %p418
        %p737 = pneg %p447
        %p738 = pneg %p444
        %s739 = sand.u32 %s434, 1
        %s740 = scalar_lea.sflag [#allocation4], %s739
        %s741 = sand.u32 %s434, 1
        %s742 = smul.addr %s741, 16
        %s743 = scalar_lea.vmem [#allocation20], %s742
        %p744 = scmp.lt.s32.totalorder %s38, 1
        %s745 = scalar_select %p744, %s38, 1
        %s746 = smul.addr %s745, 2
        %s747 = smul.addr %s746, 8
        %s748 = scalar_lea.vmem %s0, %s747
        %p749 = scmp.lt.s32.totalorder %s38, 1
        %s750 = scalar_select %p749, %s38, 1
        %s751 = smul.addr %s750, 2
        %s752 = smul.addr %s751, 8
        %s753 = scalar_lea.vmem %s1, %s752
        %v755 = vld [vmem:[%s753] sm:$0xff]
        %v756 = vld [vmem:[%s753 + $0x8] sm:$0xff]
        %v757 = vld [vmem:[%s2] sm:$0xff]
        %v758 = vld [vmem:[%s2 + $0x8] sm:$0xff]
        %v759 = vadd.f32 %v755, %v757
        %v760 = vadd.f32 %v756, %v758
        %v761 = vld [vmem:[%s3] sm:$0xff]
        %v762 = vld [vmem:[%s3 + $0x8] sm:$0xf]
        %v763 = vld [vmem:[%s3 + $0xc] sm:$0xff]
        %v764 = vld [vmem:[%s3 + $0x14] sm:$0xf]
        %v765 = vld [vmem:[%s3 + $0x18] sm:$0xff]
        %v766 = vld [vmem:[%s3 + $0x20] sm:$0xf]
        %v767 = vld [vmem:[%s3 + $0x24] sm:$0xff]
        %v768 = vld [vmem:[%s3 + $0x2c] sm:$0xf]
        %v769 = vld [vmem:[%s3 + $0x30] sm:$0xff]
        %v770 = vld [vmem:[%s3 + $0x38] sm:$0xf]
        %v771 = vld [vmem:[%s3 + $0x3c] sm:$0xff]
        %v772 = vld [vmem:[%s3 + $0x44] sm:$0xf]
        %v773 = vld [vmem:[%s3 + $0x48] sm:$0xff]
        %v774 = vld [vmem:[%s3 + $0x50] sm:$0xf]
        %v775 = vld [vmem:[%s3 + $0x54] sm:$0xff]
        %v776 = vld [vmem:[%s3 + $0x5c] sm:$0xf]
        %v777 = vld [vmem:[%s3 + $0x60] sm:$0xff]
        %v778 = vld [vmem:[%s3 + $0x68] sm:$0xf]
        %v779 = vld [vmem:[%s3 + $0x6c] sm:$0xff]
        %v780 = vld [vmem:[%s3 + $0x74] sm:$0xf]
        %v781 = vld [vmem:[%s3 + $0x78] sm:$0xff]
        %v782 = vld [vmem:[%s3 + $0x80] sm:$0xf]
        %v783 = vld [vmem:[%s3 + $0x84] sm:$0xff]
        %v784 = vld [vmem:[%s3 + $0x8c] sm:$0xf]
        %v785 = vld [vmem:[%s3 + $0x90] sm:$0xff]
        %v786 = vld [vmem:[%s3 + $0x98] sm:$0xf]
        %v787 = vld [vmem:[%s3 + $0x9c] sm:$0xff]
        %v788 = vld [vmem:[%s3 + $0xa4] sm:$0xf]
        %v789 = vld [vmem:[%s3 + $0xa8] sm:$0xff]
        %v790 = vld [vmem:[%s3 + $0xb0] sm:$0xf]
        %v791 = vld [vmem:[%s3 + $0xb4] sm:$0xff]
        %v792 = vld [vmem:[%s3 + $0xbc] sm:$0xf]
        %v793 = vld [vmem:[%s4] sm:$0xf]
        %v794 = vld [vmem:[%s4 + $0x4] sm:$0xf]
        %v795 = vld [vmem:[%s4 + $0x8] sm:$0xf]
        %v796 = vld [vmem:[%s4 + $0xc] sm:$0xf]
        %v797 = vld [vmem:[%s4 + $0x10] sm:$0xf]
        %v798 = vld [vmem:[%s4 + $0x14] sm:$0xf]
        %v799 = vld [vmem:[%s4 + $0x18] sm:$0xf]
        %v800 = vld [vmem:[%s4 + $0x1c] sm:$0xf]
        %v801 = vld [vmem:[%s4 + $0x20] sm:$0xf]
        %v802 = vld [vmem:[%s4 + $0x24] sm:$0xf]
        %v803 = vld [vmem:[%s4 + $0x28] sm:$0xf]
        %v804 = vld [vmem:[%s4 + $0x2c] sm:$0xf]
        %v805 = vld [vmem:[%s4 + $0x30] sm:$0xf]
        %v806 = vld [vmem:[%s4 + $0x34] sm:$0xf]
        %v807 = vld [vmem:[%s4 + $0x38] sm:$0xf]
        %v808 = vld [vmem:[%s4 + $0x3c] sm:$0xf]
        %v809 = vld [vmem:[#allocation2] sm:$0xff]
        %v810 = vld [vmem:[#allocation2 + $0x8] sm:$0xff]
        %v811 = vld [vmem:[#allocation2 + $0x10] sm:$0xff]
        %v812 = vld [vmem:[#allocation2 + $0x18] sm:$0xff]
        %v813 = vld [vmem:[#allocation2 + $0x20] sm:$0xff]
        %v814 = vld [vmem:[#allocation2 + $0x28] sm:$0xff]
        %v815 = vld [vmem:[#allocation2 + $0x30] sm:$0xff]
        %v816 = vld [vmem:[#allocation2 + $0x38] sm:$0xff]
        %v817 = vld [vmem:[#allocation2 + $0x40] sm:$0xff]
        %v818 = vld [vmem:[#allocation2 + $0x48] sm:$0xff]
        %v819 = vld [vmem:[#allocation2 + $0x50] sm:$0xff]
        %v820 = vld [vmem:[#allocation2 + $0x58] sm:$0xff]
        %v821 = vld [vmem:[#allocation2 + $0x60] sm:$0xff]
        %v822 = vld [vmem:[#allocation2 + $0x68] sm:$0xff]
        %v823 = vld [vmem:[#allocation2 + $0x70] sm:$0xff]
        %v824 = vld [vmem:[#allocation2 + $0x78] sm:$0xff]
        %v825 = vld [vmem:[#allocation5] sm:$0xf]
        %v826 = vld [vmem:[#allocation5 + $0x4] sm:$0xf]
        %v827 = vld [vmem:[#allocation5 + $0x8] sm:$0xf]
        %v828 = vld [vmem:[#allocation5 + $0xc] sm:$0xf]
        %v829 = vld [vmem:[#allocation5 + $0x10] sm:$0xf]
        %v830 = vld [vmem:[#allocation5 + $0x14] sm:$0xf]
        %v831 = vld [vmem:[#allocation5 + $0x18] sm:$0xf]
        %v832 = vld [vmem:[#allocation5 + $0x1c] sm:$0xf]
        %v833 = vld [vmem:[#allocation5 + $0x20] sm:$0xf]
        %v834 = vld [vmem:[#allocation5 + $0x24] sm:$0xf]
        %v835 = vld [vmem:[#allocation5 + $0x28] sm:$0xf]
        %v836 = vld [vmem:[#allocation5 + $0x2c] sm:$0xf]
        %v837 = vld [vmem:[#allocation5 + $0x30] sm:$0xf]
        %v838 = vld [vmem:[#allocation5 + $0x34] sm:$0xf]
        %v839 = vld [vmem:[#allocation5 + $0x38] sm:$0xf]
        %v840 = vld [vmem:[#allocation5 + $0x3c] sm:$0xf]
        %v841 = vld [vmem:[#allocation5 + $0x40] sm:$0xf]
        %v842 = vld [vmem:[#allocation5 + $0x44] sm:$0xf]
        %v843 = vld [vmem:[#allocation5 + $0x48] sm:$0xf]
        %v844 = vld [vmem:[#allocation5 + $0x4c] sm:$0xf]
        %v845 = vld [vmem:[#allocation5 + $0x50] sm:$0xf]
        %v846 = vld [vmem:[#allocation5 + $0x54] sm:$0xf]
        %v847 = vld [vmem:[#allocation5 + $0x58] sm:$0xf]
        %v848 = vld [vmem:[#allocation5 + $0x5c] sm:$0xf]
        %v849 = vld [vmem:[#allocation5 + $0x60] sm:$0xf]
        %v850 = vld [vmem:[#allocation5 + $0x64] sm:$0xf]
        %v851 = vld [vmem:[#allocation5 + $0x68] sm:$0xf]
        %v852 = vld [vmem:[#allocation5 + $0x6c] sm:$0xf]
        %v853 = vld [vmem:[#allocation5 + $0x70] sm:$0xf]
        %v854 = vld [vmem:[#allocation5 + $0x74] sm:$0xf]
        %v855 = vld [vmem:[#allocation5 + $0x78] sm:$0xf]
        %v856 = vld [vmem:[#allocation5 + $0x7c] sm:$0xf]
        %v857 = vld [vmem:[%s7] sm:$0xff]
        %v858 = vld [vmem:[%s7 + $0x8] sm:$0x1]
        %v859 = vld [vmem:[#allocation7] sm:$0x3]
        %v860 = vpack.c.bf16 %v760, %v759
        %v893 = vunpack.c.l.b16 %v761
        %v894 = vunpack.c.h.b16 %v761
        %v895 = vunpack.c.l.b16 %v762
        %v896 = vunpack.c.l.b16 %v763
        %v897 = vunpack.c.h.b16 %v763
        %v898 = vunpack.c.l.b16 %v764
        %v899 = vunpack.c.l.b16 %v765
        %v900 = vunpack.c.h.b16 %v765
        %v901 = vunpack.c.l.b16 %v766
        %v902 = vunpack.c.l.b16 %v767
        %v903 = vunpack.c.h.b16 %v767
        %v904 = vunpack.c.l.b16 %v768
        %v905 = vunpack.c.l.b16 %v769
        %v906 = vunpack.c.h.b16 %v769
        %v907 = vunpack.c.l.b16 %v770
        %v908 = vunpack.c.l.b16 %v771
        %v909 = vunpack.c.h.b16 %v771
        %v910 = vunpack.c.l.b16 %v772
        %v911 = vunpack.c.l.b16 %v773
        %v912 = vunpack.c.h.b16 %v773
        %v913 = vunpack.c.l.b16 %v774
        %v914 = vunpack.c.l.b16 %v775
        %v915 = vunpack.c.h.b16 %v775
        %v916 = vunpack.c.l.b16 %v776
        %v917 = vunpack.c.l.b16 %v777
        %v918 = vunpack.c.h.b16 %v777
        %v919 = vunpack.c.l.b16 %v778
        %v920 = vunpack.c.l.b16 %v779
        %v921 = vunpack.c.h.b16 %v779
        %v922 = vunpack.c.l.b16 %v780
        %v923 = vunpack.c.l.b16 %v781
        %v924 = vunpack.c.h.b16 %v781
        %v925 = vunpack.c.l.b16 %v782
        %v926 = vunpack.c.l.b16 %v783
        %v927 = vunpack.c.h.b16 %v783
        %v928 = vunpack.c.l.b16 %v784
        %v929 = vunpack.c.l.b16 %v785
        %v930 = vunpack.c.h.b16 %v785
        %v931 = vunpack.c.l.b16 %v786
        %v932 = vunpack.c.l.b16 %v787
        %v933 = vunpack.c.h.b16 %v787
        %v934 = vunpack.c.l.b16 %v788
        %v935 = vunpack.c.l.b16 %v789
        %v936 = vunpack.c.h.b16 %v789
        %v937 = vunpack.c.l.b16 %v790
        %v938 = vunpack.c.l.b16 %v791
        %v939 = vunpack.c.h.b16 %v791
        %v940 = vunpack.c.l.b16 %v792
        %v941 = vpack.c.b16 %v896, %v893
        %v942 = vpack.c.b16 %v897, %v894
        %v943 = vpack.c.b16 %v898, %v895
        %v944 = vpack.c.b16 %v902, %v899
        %v945 = vpack.c.b16 %v903, %v900
        %v946 = vpack.c.b16 %v904, %v901
        %v947 = vpack.c.b16 %v908, %v905
        %v948 = vpack.c.b16 %v909, %v906
        %v949 = vpack.c.b16 %v910, %v907
        %v950 = vpack.c.b16 %v914, %v911
        %v951 = vpack.c.b16 %v915, %v912
        %v952 = vpack.c.b16 %v916, %v913
        %v953 = vpack.c.b16 %v920, %v917
        %v954 = vpack.c.b16 %v921, %v918
        %v955 = vpack.c.b16 %v922, %v919
        %v956 = vpack.c.b16 %v926, %v923
        %v957 = vpack.c.b16 %v927, %v924
        %v958 = vpack.c.b16 %v928, %v925
        %v959 = vpack.c.b16 %v932, %v929
        %v960 = vpack.c.b16 %v933, %v930
        %v961 = vpack.c.b16 %v934, %v931
        %v962 = vpack.c.b16 %v938, %v935
        %v963 = vpack.c.b16 %v939, %v936
        %v964 = vpack.c.b16 %v940, %v937
        %989 = vmatprep.subr.bf16.mxu0 %v942
        %990 = vmatpush1.bf16.msra.mxu0 %v941
        %991 = vmatprep.subr.bf16.mxu0 %v945
        %992 = vmatpush1.bf16.msra.mxu0 %v944
        %993 = vmatprep.subr.bf16.mxu0 %v948
        %994 = vmatpush1.bf16.msra.mxu0 %v947
        %995 = vmatprep.subr.bf16.mxu0 %v951
        %996 = vmatpush1.bf16.msra.mxu0 %v950
        %997 = vmatprep.subr.bf16.mxu0 %v954
        %998 = vmatpush1.bf16.msra.mxu0 %v953
        %999 = vmatprep.subr.bf16.mxu0 %v957
        %1000 = vmatpush1.bf16.msra.mxu0 %v956
        %1001 = vmatprep.subr.bf16.mxu0 %v960
        %1002 = vmatpush1.bf16.msra.mxu0 %v959
        %1003 = vmatprep.subr.bf16.mxu0 %v963
        %1004 = vmatpush1.bf16.msra.mxu0 %v962
        %1005 = vmatprep.subr.bf16.mxu0 0
        %1006 = vmatpush1.bf16.msra.mxu0 0
        %1007 = vmatprep.subr.bf16.mxu0 0
        %1008 = vmatpush1.bf16.msra.mxu0 0
        %1009 = vmatprep.subr.bf16.mxu0 0
        %1010 = vmatpush1.bf16.msra.mxu0 0
        %1011 = vmatprep.subr.bf16.mxu0 0
        %1012 = vmatpush1.bf16.msra.mxu0 0
        %1013 = vmatprep.subr.bf16.mxu0 0
        %1014 = vmatpush1.bf16.msra.mxu0 0
        %1015 = vmatprep.subr.bf16.mxu0 0
        %1016 = vmatpush1.bf16.msra.mxu0 0
        %1017 = vmatprep.subr.bf16.mxu0 0
        %1018 = vmatpush1.bf16.msra.mxu0 0
        %1019 = vmatprep.subr.bf16.mxu0 0
        %1020 = vmatpush1.bf16.msra.mxu0 0
        %1021 = vmatprep.mubr.bf16.mxu0 0
        %1022 = vmatmul.mubr.bf16.gmra.mrb[0].mxu0 %v860
        %v1023 = vpop.f32.mrb[0].mxu0
        %v1024 = vadd.f32 0.0, %v1023
        %v1025 = vpop.f32.mrb[0].mxu0
        %v1026 = vadd.f32 0.0, %v1025
        %v1027 = vpop.f32.mrb[0].mxu0
        %v1028 = vadd.f32 0.0, %v1027
        %v1029 = vpop.f32.mrb[0].mxu0
        %v1030 = vadd.f32 0.0, %v1029
        %1031 = vdwg.mxu0
        %1032 = vmatprep.subr.bf16.mxu0 0
        %1033 = vmatpush1.bf16.msra.mxu0 %v943
        %1034 = vmatprep.subr.bf16.mxu0 0
        %1035 = vmatpush1.bf16.msra.mxu0 %v946
        %1036 = vmatprep.subr.bf16.mxu0 0
        %1037 = vmatpush1.bf16.msra.mxu0 %v949
        %1038 = vmatprep.subr.bf16.mxu0 0
        %1039 = vmatpush1.bf16.msra.mxu0 %v952
        %1040 = vmatprep.subr.bf16.mxu0 0
        %1041 = vmatpush1.bf16.msra.mxu0 %v955
        %1042 = vmatprep.subr.bf16.mxu0 0
        %1043 = vmatpush1.bf16.msra.mxu0 %v958
        %1044 = vmatprep.subr.bf16.mxu0 0
        %1045 = vmatpush1.bf16.msra.mxu0 %v961
        %1046 = vmatprep.subr.bf16.mxu0 0
        %1047 = vmatpush1.bf16.msra.mxu0 %v964
        %1048 = vmatprep.subr.bf16.mxu0 0
        %1049 = vmatpush1.bf16.msra.mxu0 0
        %1050 = vmatprep.subr.bf16.mxu0 0
        %1051 = vmatpush1.bf16.msra.mxu0 0
        %1052 = vmatprep.subr.bf16.mxu0 0
        %1053 = vmatpush1.bf16.msra.mxu0 0
        %1054 = vmatprep.subr.bf16.mxu0 0
        %1055 = vmatpush1.bf16.msra.mxu0 0
        %1056 = vmatprep.subr.bf16.mxu0 0
        %1057 = vmatpush1.bf16.msra.mxu0 0
        %1058 = vmatprep.subr.bf16.mxu0 0
        %1059 = vmatpush1.bf16.msra.mxu0 0
        %1060 = vmatprep.subr.bf16.mxu0 0
        %1061 = vmatpush1.bf16.msra.mxu0 0
        %1062 = vmatprep.subr.bf16.mxu0 0
        %1063 = vmatpush1.bf16.msra.mxu0 0
        %1064 = vmatprep.mubr.bf16.mxu0 0
        %1065 = vmatmul.mubr.bf16.gmra.mrb[0].mxu0 %v860
        %v1066 = vpop.f32.mrb[0].mxu0
        %v1067 = vadd.f32 0.0, %v1066
        %v1068 = vpop.f32.mrb[0].mxu0
        %v1069 = vpop.f32.mrb[0].mxu0
        %v1070 = vadd.f32 0.0, %v1069
        %v1071 = vpop.f32.mrb[0].mxu0
        %1072 = vdwg.mxu0
        %v1073 = vlaneseq
        %v1074 = vshrl.u32 %v1073, 7
        %v1075 = vsub.s32 0, %v1074
        %v1076 = vrot.slane %v857, %v1075
        %v1077 = vadd.f32 %v1024, %v1076
        %v1078 = vadd.f32 %v1028, %v1076
        %v1079 = vlaneseq
        %v1080 = vshrl.u32 %v1079, 7
        %v1081 = vsub.s32 1, %v1080
        %v1082 = vrot.slane %v857, %v1081
        %v1083 = vadd.f32 %v1026, %v1082
        %v1084 = vadd.f32 %v1030, %v1082
        %v1085 = vlaneseq
        %v1086 = vshrl.u32 %v1085, 7
        %v1087 = vsub.s32 2, %v1086
        %v1088 = vrot.slane %v857, %v1087
        %v1089 = vadd.f32 %v1067, %v1088
        %v1090 = vadd.f32 %v1070, %v1088
        %v1091 = vmul.f32 %v1077, 0.17677669
        %v1092 = vmul.f32 %v1078, 0.17677669
        %v1093 = vpack.c.bf16 %v1092, %v1091
        %v1094 = vpack.c.bf16 %v1084, %v1083
        %v1095 = vpack.c.bf16 %v1090, %v1089
        %vm1096 = vcmask 261120
        %v1098 = vsel %vm1096, %v1093, 0
        %v1101 = vsel %vm1096, %v1094, 0
        %1103 = vmatprep.subr.bf16.mxu0 0
        %1104 = vmatpush1.bf16.xpose.msra.mxu0 %v1101
        %1105 = vmatprep.subr.bf16.mxu0 0
        %1106 = vmatpush1.bf16.xpose.msra.mxu0 0
        %1107 = vmatprep.subr.bf16.mxu0 0
        %1108 = vmatpush1.bf16.xpose.msra.mxu0 0
        %1109 = vmatprep.subr.bf16.mxu0 0
        %1110 = vmatpush1.bf16.xpose.msra.mxu0 0
        %1111 = vmatprep.subr.bf16.mxu0 0
        %1112 = vmatpush1.bf16.xpose.msra.mxu0 0
        %1113 = vmatprep.subr.bf16.mxu0 0
        %1114 = vmatpush1.bf16.xpose.msra.mxu0 0
        %1115 = vmatprep.subr.bf16.mxu0 0
        %1116 = vmatpush1.bf16.xpose.msra.mxu0 0
        %1117 = vmatprep.subr.bf16.mxu0 0
        %1118 = vmatpush1.bf16.xpose.msra.mxu0 0
        %1119 = vmatprep.subr.bf16.mxu0 0
        %1120 = vmatpush1.bf16.xpose.msra.mxu0 0
        %1121 = vmatprep.subr.bf16.mxu0 0
        %1122 = vmatpush1.bf16.xpose.msra.mxu0 0
        %1123 = vmatprep.subr.bf16.mxu0 0
        %1124 = vmatpush1.bf16.xpose.msra.mxu0 0
        %1125 = vmatprep.subr.bf16.mxu0 0
        %1126 = vmatpush1.bf16.xpose.msra.mxu0 0
        %1127 = vmatprep.subr.bf16.mxu0 0
        %1128 = vmatpush1.bf16.xpose.msra.mxu0 0
        %1129 = vmatprep.subr.bf16.mxu0 0
        %1130 = vmatpush1.bf16.xpose.msra.mxu0 0
        %1131 = vmatprep.subr.bf16.mxu0 0
        %1132 = vmatpush1.bf16.xpose.msra.mxu0 0
        %1133 = vmatprep.subr.bf16.mxu0 0
        %1134 = vmatpush1.bf16.xpose.msra.mxu0 0
        %1135 = vmatprep.mubr.bf16.mxu0 0
        %1136 = vmatmul.mubr.bf16.gmra.mrb[0].mxu0 %v1098
        %v1137 = vpop.f32.mrb[0].mxu0
        %v1138 = vadd.f32 0.0, %v1137
        %v1139 = vpop.f32.mrb[0].mxu0
        %v1140 = vpop.f32.mrb[0].mxu0
        %v1141 = vadd.f32 0.0, %v1140
        %v1142 = vpop.f32.mrb[0].mxu0
        %1143 = vdwg.mxu0
        %vm1144 = vcmask 130048
        %v1145 = vsel %vm1144, %v1138, -inf
        %1146 = vmax.xlane.f32.xlu0 %v1145
        %v1147 = vpop.xlane.xlu0 %1146
        %v1148 = vsel %vm1144, %v1141, -inf
        %1149 = vmax.xlane.f32.xlu0 %v1148
        %v1150 = vpop.xlane.xlu0 %1149
        %v1151 = vsub.f32 %v1138, %v1147
        %v1152 = vsub.f32 %v1141, %v1150
        %v1153 = vmul.f32 %v1151, 1.442695
        %v1154 = vpow.pop %v1153
        %v1155 = vmul.f32 %v1152, 1.442695
        %v1156 = vpow.pop %v1155
        %v1157 = vsel %vm1144, %v1154, 0.0
        %1158 = vadd.xlane.f32.xlu0 %v1157
        %v1159 = vpop.xlane.xlu0 %1158
        %v1160 = vsel %vm1144, %v1156, 0.0
        %1161 = vadd.xlane.f32.xlu0 %v1160
        %v1162 = vpop.xlane.xlu0 %1161
        %v1163 = vrcp.pop %v1159
        %v1164 = vrcp.pop %v1162
        %v1165 = vmul.f32 %v1154, %v1163
        %v1166 = vmul.f32 %v1156, %v1164
        %v1167 = vpack.c.bf16 %v1166, %v1165
        %v1169 = vsel %vm1144, %v1167, 0
        %1171 = vmatprep.subr.bf16.mxu0 0
        %1172 = vmatpush1.bf16.msra.mxu0 %v1095
        %1173 = vmatprep.subr.bf16.mxu0 0
        %1174 = vmatpush1.bf16.msra.mxu0 0
        %1175 = vmatprep.subr.bf16.mxu0 0
        %1176 = vmatpush1.bf16.msra.mxu0 0
        %1177 = vmatprep.subr.bf16.mxu0 0
        %1178 = vmatpush1.bf16.msra.mxu0 0
        %1179 = vmatprep.subr.bf16.mxu0 0
        %1180 = vmatpush1.bf16.msra.mxu0 0
        %1181 = vmatprep.subr.bf16.mxu0 0
        %1182 = vmatpush1.bf16.msra.mxu0 0
        %1183 = vmatprep.subr.bf16.mxu0 0
        %1184 = vmatpush1.bf16.msra.mxu0 0
        %1185 = vmatprep.subr.bf16.mxu0 0
        %1186 = vmatpush1.bf16.msra.mxu0 0
        %1187 = vmatprep.subr.bf16.mxu0 0
        %1188 = vmatpush1.bf16.msra.mxu0 0
        %1189 = vmatprep.subr.bf16.mxu0 0
        %1190 = vmatpush1.bf16.msra.mxu0 0
        %1191 = vmatprep.subr.bf16.mxu0 0
        %1192 = vmatpush1.bf16.msra.mxu0 0
        %1193 = vmatprep.subr.bf16.mxu0 0
        %1194 = vmatpush1.bf16.msra.mxu0 0
        %1195 = vmatprep.subr.bf16.mxu0 0
        %1196 = vmatpush1.bf16.msra.mxu0 0
        %1197 = vmatprep.subr.bf16.mxu0 0
        %1198 = vmatpush1.bf16.msra.mxu0 0
        %1199 = vmatprep.subr.bf16.mxu0 0
        %1200 = vmatpush1.bf16.msra.mxu0 0
        %1201 = vmatprep.subr.bf16.mxu0 0
        %1202 = vmatpush1.bf16.msra.mxu0 0
        %1203 = vmatprep.mubr.bf16.mxu0 0
        %1204 = vmatmul.mubr.bf16.gmra.mrb[0].mxu0 %v1169
        %v1205 = vpop.f32.mrb[0].mxu0
        %v1206 = vadd.f32 0.0, %v1205
        %v1207 = vpop.f32.mrb[0].mxu0
        %v1208 = vpop.f32.mrb[0].mxu0
        %v1209 = vadd.f32 0.0, %v1208
        %v1210 = vpop.f32.mrb[0].mxu0
        %1211 = vdwg.mxu0
        %1213 = vrot.lane.b32.xlu0 %v1093, 96
        %v1214 = vpop.permute.xlu0 %1213
        %1216 = vrot.lane.b32.xlu0 %v1094, 96
        %v1217 = vpop.permute.xlu0 %1216
        %v1219 = vsel %vm1096, %v1214, 0
        %v1222 = vsel %vm1096, %v1217, 0
        %1224 = vmatprep.subr.bf16.mxu0 0
        %1225 = vmatpush1.bf16.xpose.msra.mxu0 %v1222
        %1226 = vmatprep.subr.bf16.mxu0 0
        %1227 = vmatpush1.bf16.xpose.msra.mxu0 0
        %1228 = vmatprep.subr.bf16.mxu0 0
        %1229 = vmatpush1.bf16.xpose.msra.mxu0 0
        %1230 = vmatprep.subr.bf16.mxu0 0
        %1231 = vmatpush1.bf16.xpose.msra.mxu0 0
        %1232 = vmatprep.subr.bf16.mxu0 0
        %1233 = vmatpush1.bf16.xpose.msra.mxu0 0
        %1234 = vmatprep.subr.bf16.mxu0 0
        %1235 = vmatpush1.bf16.xpose.msra.mxu0 0
        %1236 = vmatprep.subr.bf16.mxu0 0
        %1237 = vmatpush1.bf16.xpose.msra.mxu0 0
        %1238 = vmatprep.subr.bf16.mxu0 0
        %1239 = vmatpush1.bf16.xpose.msra.mxu0 0
        %1240 = vmatprep.subr.bf16.mxu0 0
        %1241 = vmatpush1.bf16.xpose.msra.mxu0 0
        %1242 = vmatprep.subr.bf16.mxu0 0
        %1243 = vmatpush1.bf16.xpose.msra.mxu0 0
        %1244 = vmatprep.subr.bf16.mxu0 0
        %1245 = vmatpush1.bf16.xpose.msra.mxu0 0
        %1246 = vmatprep.subr.bf16.mxu0 0
        %1247 = vmatpush1.bf16.xpose.msra.mxu0 0
        %1248 = vmatprep.subr.bf16.mxu0 0
        %1249 = vmatpush1.bf16.xpose.msra.mxu0 0
        %1250 = vmatprep.subr.bf16.mxu0 0
        %1251 = vmatpush1.bf16.xpose.msra.mxu0 0
        %1252 = vmatprep.subr.bf16.mxu0 0
        %1253 = vmatpush1.bf16.xpose.msra.mxu0 0
        %1254 = vmatprep.subr.bf16.mxu0 0
        %1255 = vmatpush1.bf16.xpose.msra.mxu0 0
        %1256 = vmatprep.mubr.bf16.mxu0 0
        %1257 = vmatmul.mubr.bf16.gmra.mrb[0].mxu0 %v1219
        %v1258 = vpop.f32.mrb[0].mxu0
        %v1259 = vadd.f32 0.0, %v1258
        %v1260 = vpop.f32.mrb[0].mxu0
        %v1261 = vpop.f32.mrb[0].mxu0
        %v1262 = vadd.f32 0.0, %v1261
        %v1263 = vpop.f32.mrb[0].mxu0
        %1264 = vdwg.mxu0
        %v1265 = vsel %vm1144, %v1259, -inf
        %1266 = vmax.xlane.f32.xlu0 %v1265
        %v1267 = vpop.xlane.xlu0 %1266
        %v1268 = vsel %vm1144, %v1262, -inf
        %1269 = vmax.xlane.f32.xlu0 %v1268
        %v1270 = vpop.xlane.xlu0 %1269
        %v1271 = vsub.f32 %v1259, %v1267
        %v1272 = vsub.f32 %v1262, %v1270
        %v1273 = vmul.f32 %v1271, 1.442695
        %v1274 = vpow.pop %v1273
        %v1275 = vmul.f32 %v1272, 1.442695
        %v1276 = vpow.pop %v1275
        %v1277 = vsel %vm1144, %v1274, 0.0
        %1278 = vadd.xlane.f32.xlu0 %v1277
        %v1279 = vpop.xlane.xlu0 %1278
        %v1280 = vsel %vm1144, %v1276, 0.0
        %1281 = vadd.xlane.f32.xlu0 %v1280
        %v1282 = vpop.xlane.xlu0 %1281
        %v1283 = vrcp.pop %v1279
        %v1284 = vrcp.pop %v1282
        %v1285 = vmul.f32 %v1274, %v1283
        %v1286 = vmul.f32 %v1276, %v1284
        %v1287 = vpack.c.bf16 %v1286, %v1285
        %1289 = vrot.lane.b32.xlu0 %v1095, 96
        %v1290 = vpop.permute.xlu0 %1289
        %v1293 = vsel %vm1144, %v1287, 0
        %1295 = vmatprep.subr.bf16.mxu0 0
        %1296 = vmatpush1.bf16.msra.mxu0 %v1290
        %1297 = vmatprep.subr.bf16.mxu0 0
        %1298 = vmatpush1.bf16.msra.mxu0 0
        %1299 = vmatprep.subr.bf16.mxu0 0
        %1300 = vmatpush1.bf16.msra.mxu0 0
        %1301 = vmatprep.subr.bf16.mxu0 0
        %1302 = vmatpush1.bf16.msra.mxu0 0
        %1303 = vmatprep.subr.bf16.mxu0 0
        %1304 = vmatpush1.bf16.msra.mxu0 0
        %1305 = vmatprep.subr.bf16.mxu0 0
        %1306 = vmatpush1.bf16.msra.mxu0 0
        %1307 = vmatprep.subr.bf16.mxu0 0
        %1308 = vmatpush1.bf16.msra.mxu0 0
        %1309 = vmatprep.subr.bf16.mxu0 0
        %1310 = vmatpush1.bf16.msra.mxu0 0
        %1311 = vmatprep.subr.bf16.mxu0 0
        %1312 = vmatpush1.bf16.msra.mxu0 0
        %1313 = vmatprep.subr.bf16.mxu0 0
        %1314 = vmatpush1.bf16.msra.mxu0 0
        %1315 = vmatprep.subr.bf16.mxu0 0
        %1316 = vmatpush1.bf16.msra.mxu0 0
        %1317 = vmatprep.subr.bf16.mxu0 0
        %1318 = vmatpush1.bf16.msra.mxu0 0
        %1319 = vmatprep.subr.bf16.mxu0 0
        %1320 = vmatpush1.bf16.msra.mxu0 0
        %1321 = vmatprep.subr.bf16.mxu0 0
        %1322 = vmatpush1.bf16.msra.mxu0 0
        %1323 = vmatprep.subr.bf16.mxu0 0
        %1324 = vmatpush1.bf16.msra.mxu0 0
        %1325 = vmatprep.subr.bf16.mxu0 0
        %1326 = vmatpush1.bf16.msra.mxu0 0
        %1327 = vmatprep.mubr.bf16.mxu0 0
        %1328 = vmatmul.mubr.bf16.gmra.mrb[0].mxu0 %v1293
        %v1329 = vpop.f32.mrb[0].mxu0
        %v1330 = vadd.f32 0.0, %v1329
        %v1331 = vpop.f32.mrb[0].mxu0
        %v1332 = vpop.f32.mrb[0].mxu0
        %v1333 = vadd.f32 0.0, %v1332
        %v1334 = vpop.f32.mrb[0].mxu0
        %1335 = vdwg.mxu0
        %1336 = vrot.lane.b32.xlu0 %v1093, 64
        %v1337 = vpop.permute.xlu0 %1336
        %1338 = vrot.lane.b32.xlu0 %v1094, 64
        %v1339 = vpop.permute.xlu0 %1338
        %v1341 = vsel %vm1096, %v1337, 0
        %v1344 = vsel %vm1096, %v1339, 0
        %1346 = vmatprep.subr.bf16.mxu0 0
        %1347 = vmatpush1.bf16.xpose.msra.mxu0 %v1344
        %1348 = vmatprep.subr.bf16.mxu0 0
        %1349 = vmatpush1.bf16.xpose.msra.mxu0 0
        %1350 = vmatprep.subr.bf16.mxu0 0
        %1351 = vmatpush1.bf16.xpose.msra.mxu0 0
        %1352 = vmatprep.subr.bf16.mxu0 0
        %1353 = vmatpush1.bf16.xpose.msra.mxu0 0
        %1354 = vmatprep.subr.bf16.mxu0 0
        %1355 = vmatpush1.bf16.xpose.msra.mxu0 0
        %1356 = vmatprep.subr.bf16.mxu0 0
        %1357 = vmatpush1.bf16.xpose.msra.mxu0 0
        %1358 = vmatprep.subr.bf16.mxu0 0
        %1359 = vmatpush1.bf16.xpose.msra.mxu0 0
        %1360 = vmatprep.subr.bf16.mxu0 0
        %1361 = vmatpush1.bf16.xpose.msra.mxu0 0
        %1362 = vmatprep.subr.bf16.mxu0 0
        %1363 = vmatpush1.bf16.xpose.msra.mxu0 0
        %1364 = vmatprep.subr.bf16.mxu0 0
        %1365 = vmatpush1.bf16.xpose.msra.mxu0 0
        %1366 = vmatprep.subr.bf16.mxu0 0
        %1367 = vmatpush1.bf16.xpose.msra.mxu0 0
        %1368 = vmatprep.subr.bf16.mxu0 0
        %1369 = vmatpush1.bf16.xpose.msra.mxu0 0
        %1370 = vmatprep.subr.bf16.mxu0 0
        %1371 = vmatpush1.bf16.xpose.msra.mxu0 0
        %1372 = vmatprep.subr.bf16.mxu0 0
        %1373 = vmatpush1.bf16.xpose.msra.mxu0 0
        %1374 = vmatprep.subr.bf16.mxu0 0
        %1375 = vmatpush1.bf16.xpose.msra.mxu0 0
        %1376 = vmatprep.subr.bf16.mxu0 0
        %1377 = vmatpush1.bf16.xpose.msra.mxu0 0
        %1378 = vmatprep.mubr.bf16.mxu0 0
        %1379 = vmatmul.mubr.bf16.gmra.mrb[0].mxu0 %v1341
        %v1380 = vpop.f32.mrb[0].mxu0
        %v1381 = vadd.f32 0.0, %v1380
        %v1382 = vpop.f32.mrb[0].mxu0
        %v1383 = vpop.f32.mrb[0].mxu0
        %v1384 = vadd.f32 0.0, %v1383
        %v1385 = vpop.f32.mrb[0].mxu0
        %1386 = vdwg.mxu0
        %v1387 = vsel %vm1144, %v1381, -inf
        %1388 = vmax.xlane.f32.xlu0 %v1387
        %v1389 = vpop.xlane.xlu0 %1388
        %v1390 = vsel %vm1144, %v1384, -inf
        %1391 = vmax.xlane.f32.xlu0 %v1390
        %v1392 = vpop.xlane.xlu0 %1391
        %v1393 = vsub.f32 %v1381, %v1389
        %v1394 = vsub.f32 %v1384, %v1392
        %v1395 = vmul.f32 %v1393, 1.442695
        %v1396 = vpow.pop %v1395
        %v1397 = vmul.f32 %v1394, 1.442695
        %v1398 = vpow.pop %v1397
        %v1399 = vsel %vm1144, %v1396, 0.0
        %1400 = vadd.xlane.f32.xlu0 %v1399
        %v1401 = vpop.xlane.xlu0 %1400
        %v1402 = vsel %vm1144, %v1398, 0.0
        %1403 = vadd.xlane.f32.xlu0 %v1402
        %v1404 = vpop.xlane.xlu0 %1403
        %v1405 = vrcp.pop %v1401
        %v1406 = vrcp.pop %v1404
        %v1407 = vmul.f32 %v1396, %v1405
        %v1408 = vmul.f32 %v1398, %v1406
        %v1409 = vpack.c.bf16 %v1408, %v1407
        %1410 = vrot.lane.b32.xlu0 %v1095, 64
        %v1411 = vpop.permute.xlu0 %1410
        %v1414 = vsel %vm1144, %v1409, 0
        %1416 = vmatprep.subr.bf16.mxu0 0
        %1417 = vmatpush1.bf16.msra.mxu0 %v1411
        %1418 = vmatprep.subr.bf16.mxu0 0
        %1419 = vmatpush1.bf16.msra.mxu0 0
        %1420 = vmatprep.subr.bf16.mxu0 0
        %1421 = vmatpush1.bf16.msra.mxu0 0
        %1422 = vmatprep.subr.bf16.mxu0 0
        %1423 = vmatpush1.bf16.msra.mxu0 0
        %1424 = vmatprep.subr.bf16.mxu0 0
        %1425 = vmatpush1.bf16.msra.mxu0 0
        %1426 = vmatprep.subr.bf16.mxu0 0
        %1427 = vmatpush1.bf16.msra.mxu0 0
        %1428 = vmatprep.subr.bf16.mxu0 0
        %1429 = vmatpush1.bf16.msra.mxu0 0
        %1430 = vmatprep.subr.bf16.mxu0 0
        %1431 = vmatpush1.bf16.msra.mxu0 0
        %1432 = vmatprep.subr.bf16.mxu0 0
        %1433 = vmatpush1.bf16.msra.mxu0 0
        %1434 = vmatprep.subr.bf16.mxu0 0
        %1435 = vmatpush1.bf16.msra.mxu0 0
        %1436 = vmatprep.subr.bf16.mxu0 0
        %1437 = vmatpush1.bf16.msra.mxu0 0
        %1438 = vmatprep.subr.bf16.mxu0 0
        %1439 = vmatpush1.bf16.msra.mxu0 0
        %1440 = vmatprep.subr.bf16.mxu0 0
        %1441 = vmatpush1.bf16.msra.mxu0 0
        %1442 = vmatprep.subr.bf16.mxu0 0
        %1443 = vmatpush1.bf16.msra.mxu0 0
        %1444 = vmatprep.subr.bf16.mxu0 0
        %1445 = vmatpush1.bf16.msra.mxu0 0
        %1446 = vmatprep.subr.bf16.mxu0 0
        %1447 = vmatpush1.bf16.msra.mxu0 0
        %1448 = vmatprep.mubr.bf16.mxu0 0
        %1449 = vmatmul.mubr.bf16.gmra.mrb[0].mxu0 %v1414
        %v1450 = vpop.f32.mrb[0].mxu0
        %v1451 = vadd.f32 0.0, %v1450
        %v1452 = vpop.f32.mrb[0].mxu0
        %v1453 = vpop.f32.mrb[0].mxu0
        %v1454 = vadd.f32 0.0, %v1453
        %v1455 = vpop.f32.mrb[0].mxu0
        %1456 = vdwg.mxu0
        %1457 = vrot.lane.b32.xlu0 %v1093, 32
        %v1458 = vpop.permute.xlu0 %1457
        %1459 = vrot.lane.b32.xlu0 %v1094, 32
        %v1460 = vpop.permute.xlu0 %1459
        %v1462 = vsel %vm1096, %v1458, 0
        %v1465 = vsel %vm1096, %v1460, 0
        %1467 = vmatprep.subr.bf16.mxu0 0
        %1468 = vmatpush1.bf16.xpose.msra.mxu0 %v1465
        %1469 = vmatprep.subr.bf16.mxu0 0
        %1470 = vmatpush1.bf16.xpose.msra.mxu0 0
        %1471 = vmatprep.subr.bf16.mxu0 0
        %1472 = vmatpush1.bf16.xpose.msra.mxu0 0
        %1473 = vmatprep.subr.bf16.mxu0 0
        %1474 = vmatpush1.bf16.xpose.msra.mxu0 0
        %1475 = vmatprep.subr.bf16.mxu0 0
        %1476 = vmatpush1.bf16.xpose.msra.mxu0 0
        %1477 = vmatprep.subr.bf16.mxu0 0
        %1478 = vmatpush1.bf16.xpose.msra.mxu0 0
        %1479 = vmatprep.subr.bf16.mxu0 0
        %1480 = vmatpush1.bf16.xpose.msra.mxu0 0
        %1481 = vmatprep.subr.bf16.mxu0 0
        %1482 = vmatpush1.bf16.xpose.msra.mxu0 0
        %1483 = vmatprep.subr.bf16.mxu0 0
        %1484 = vmatpush1.bf16.xpose.msra.mxu0 0
        %1485 = vmatprep.subr.bf16.mxu0 0
        %1486 = vmatpush1.bf16.xpose.msra.mxu0 0
        %1487 = vmatprep.subr.bf16.mxu0 0
        %1488 = vmatpush1.bf16.xpose.msra.mxu0 0
        %1489 = vmatprep.subr.bf16.mxu0 0
        %1490 = vmatpush1.bf16.xpose.msra.mxu0 0
        %1491 = vmatprep.subr.bf16.mxu0 0
        %1492 = vmatpush1.bf16.xpose.msra.mxu0 0
        %1493 = vmatprep.subr.bf16.mxu0 0
        %1494 = vmatpush1.bf16.xpose.msra.mxu0 0
        %1495 = vmatprep.subr.bf16.mxu0 0
        %1496 = vmatpush1.bf16.xpose.msra.mxu0 0
        %1497 = vmatprep.subr.bf16.mxu0 0
        %1498 = vmatpush1.bf16.xpose.msra.mxu0 0
        %1499 = vmatprep.mubr.bf16.mxu0 0
        %1500 = vmatmul.mubr.bf16.gmra.mrb[0].mxu0 %v1462
        %v1501 = vpop.f32.mrb[0].mxu0
        %v1502 = vadd.f32 0.0, %v1501
        %v1503 = vpop.f32.mrb[0].mxu0
        %v1504 = vpop.f32.mrb[0].mxu0
        %v1505 = vadd.f32 0.0, %v1504
        %v1506 = vpop.f32.mrb[0].mxu0
        %1507 = vdwg.mxu0
        %v1508 = vsel %vm1144, %v1502, -inf
        %1509 = vmax.xlane.f32.xlu0 %v1508
        %v1510 = vpop.xlane.xlu0 %1509
        %v1511 = vsel %vm1144, %v1505, -inf
        %1512 = vmax.xlane.f32.xlu0 %v1511
        %v1513 = vpop.xlane.xlu0 %1512
        %v1514 = vsub.f32 %v1502, %v1510
        %v1515 = vsub.f32 %v1505, %v1513
        %v1516 = vmul.f32 %v1514, 1.442695
        %v1517 = vpow.pop %v1516
        %v1518 = vmul.f32 %v1515, 1.442695
        %v1519 = vpow.pop %v1518
        %v1520 = vsel %vm1144, %v1517, 0.0
        %1521 = vadd.xlane.f32.xlu0 %v1520
        %v1522 = vpop.xlane.xlu0 %1521
        %v1523 = vsel %vm1144, %v1519, 0.0
        %1524 = vadd.xlane.f32.xlu0 %v1523
        %v1525 = vpop.xlane.xlu0 %1524
        %v1526 = vrcp.pop %v1522
        %v1527 = vrcp.pop %v1525
        %v1528 = vmul.f32 %v1517, %v1526
        %v1529 = vmul.f32 %v1519, %v1527
        %v1530 = vpack.c.bf16 %v1529, %v1528
        %1531 = vrot.lane.b32.xlu0 %v1095, 32
        %v1532 = vpop.permute.xlu0 %1531
        %v1535 = vsel %vm1144, %v1530, 0
        %1537 = vmatprep.subr.bf16.mxu0 0
        %1538 = vmatpush1.bf16.msra.mxu0 %v1532
        %1539 = vmatprep.subr.bf16.mxu0 0
        %1540 = vmatpush1.bf16.msra.mxu0 0
        %1541 = vmatprep.subr.bf16.mxu0 0
        %1542 = vmatpush1.bf16.msra.mxu0 0
        %1543 = vmatprep.subr.bf16.mxu0 0
        %1544 = vmatpush1.bf16.msra.mxu0 0
        %1545 = vmatprep.subr.bf16.mxu0 0
        %1546 = vmatpush1.bf16.msra.mxu0 0
        %1547 = vmatprep.subr.bf16.mxu0 0
        %1548 = vmatpush1.bf16.msra.mxu0 0
        %1549 = vmatprep.subr.bf16.mxu0 0
        %1550 = vmatpush1.bf16.msra.mxu0 0
        %1551 = vmatprep.subr.bf16.mxu0 0
        %1552 = vmatpush1.bf16.msra.mxu0 0
        %1553 = vmatprep.subr.bf16.mxu0 0
        %1554 = vmatpush1.bf16.msra.mxu0 0
        %1555 = vmatprep.subr.bf16.mxu0 0
        %1556 = vmatpush1.bf16.msra.mxu0 0
        %1557 = vmatprep.subr.bf16.mxu0 0
        %1558 = vmatpush1.bf16.msra.mxu0 0
        %1559 = vmatprep.subr.bf16.mxu0 0
        %1560 = vmatpush1.bf16.msra.mxu0 0
        %1561 = vmatprep.subr.bf16.mxu0 0
        %1562 = vmatpush1.bf16.msra.mxu0 0
        %1563 = vmatprep.subr.bf16.mxu0 0
        %1564 = vmatpush1.bf16.msra.mxu0 0
        %1565 = vmatprep.subr.bf16.mxu0 0
        %1566 = vmatpush1.bf16.msra.mxu0 0
        %1567 = vmatprep.subr.bf16.mxu0 0
        %1568 = vmatpush1.bf16.msra.mxu0 0
        %1569 = vmatprep.mubr.bf16.mxu0 0
        %1570 = vmatmul.mubr.bf16.gmra.mrb[0].mxu0 %v1535
        %v1571 = vpop.f32.mrb[0].mxu0
        %v1572 = vadd.f32 0.0, %v1571
        %v1573 = vpop.f32.mrb[0].mxu0
        %v1574 = vpop.f32.mrb[0].mxu0
        %v1575 = vadd.f32 0.0, %v1574
        %v1576 = vpop.f32.mrb[0].mxu0
        %1577 = vdwg.mxu0
        %1580 = vrot.lane.b32.xlu0 %v1330, 32
        %v1581 = vpop.permute.xlu0 %1580
        %1582 = vrot.lane.b32.xlu0 %v1333, 32
        %v1583 = vpop.permute.xlu0 %1582
        %1588 = vrot.lane.b32.xlu0 %v1451, 64
        %v1589 = vpop.permute.xlu0 %1588
        %1590 = vrot.lane.b32.xlu0 %v1454, 64
        %v1591 = vpop.permute.xlu0 %1590
        %1596 = vrot.lane.b32.xlu0 %v1572, 96
        %v1597 = vpop.permute.xlu0 %1596
        %1598 = vrot.lane.b32.xlu0 %v1575, 96
        %v1599 = vpop.permute.xlu0 %1598
        %v1602 = vsel %vm1096, %v1206, %v1581
        %v1603 = vsel %vm1096, %v1209, %v1583
        %vm1604 = vcmask 523264
        %v1605 = vsel %vm1604, %v1602, %v1589
        %v1606 = vsel %vm1604, %v1603, %v1591
        %vm1607 = vcmask 785408
        %v1608 = vsel %vm1607, %v1605, %v1597
        %v1609 = vsel %vm1607, %v1606, %v1599
        %v1610 = vpack.c.bf16 %v1609, %v1608
        %v1611 = vlaneseq
        %v1612 = vshrl.u32 %v1611, 7
        %v1613 = vsub.s32 3, %v1612
        %v1614 = vrot.slane %v857, %v1613
        %v1631 = vunpack.c.l.b16 %v793
        %v1632 = vunpack.c.l.b16 %v794
        %v1633 = vunpack.c.l.b16 %v795
        %v1634 = vunpack.c.l.b16 %v796
        %v1635 = vunpack.c.l.b16 %v797
        %v1636 = vunpack.c.l.b16 %v798
        %v1637 = vunpack.c.l.b16 %v799
        %v1638 = vunpack.c.l.b16 %v800
        %v1639 = vunpack.c.l.b16 %v801
        %v1640 = vunpack.c.l.b16 %v802
        %v1641 = vunpack.c.l.b16 %v803
        %v1642 = vunpack.c.l.b16 %v804
        %v1643 = vunpack.c.l.b16 %v805
        %v1644 = vunpack.c.l.b16 %v806
        %v1645 = vunpack.c.l.b16 %v807
        %v1646 = vunpack.c.l.b16 %v808
        %v1647 = vpack.c.b16 %v1632, %v1631
        %v1648 = vpack.c.b16 %v1634, %v1633
        %v1649 = vpack.c.b16 %v1636, %v1635
        %v1650 = vpack.c.b16 %v1638, %v1637
        %v1651 = vpack.c.b16 %v1640, %v1639
        %v1652 = vpack.c.b16 %v1642, %v1641
        %v1653 = vpack.c.b16 %v1644, %v1643
        %v1654 = vpack.c.b16 %v1646, %v1645
        %1663 = vmatprep.subr.bf16.mxu0 0
        %1664 = vmatpush1.bf16.msra.mxu0 %v1647
        %1665 = vmatprep.subr.bf16.mxu0 0
        %1666 = vmatpush1.bf16.msra.mxu0 %v1648
        %1667 = vmatprep.subr.bf16.mxu0 0
        %1668 = vmatpush1.bf16.msra.mxu0 %v1649
        %1669 = vmatprep.subr.bf16.mxu0 0
        %1670 = vmatpush1.bf16.msra.mxu0 %v1650
        %1671 = vmatprep.subr.bf16.mxu0 0
        %1672 = vmatpush1.bf16.msra.mxu0 %v1651
        %1673 = vmatprep.subr.bf16.mxu0 0
        %1674 = vmatpush1.bf16.msra.mxu0 %v1652
        %1675 = vmatprep.subr.bf16.mxu0 0
        %1676 = vmatpush1.bf16.msra.mxu0 %v1653
        %1677 = vmatprep.subr.bf16.mxu0 0
        %1678 = vmatpush1.bf16.msra.mxu0 %v1654
        %1679 = vmatprep.subr.bf16.mxu0 0
        %1680 = vmatpush1.bf16.msra.mxu0 0
        %1681 = vmatprep.subr.bf16.mxu0 0
        %1682 = vmatpush1.bf16.msra.mxu0 0
        %1683 = vmatprep.subr.bf16.mxu0 0
        %1684 = vmatpush1.bf16.msra.mxu0 0
        %1685 = vmatprep.subr.bf16.mxu0 0
        %1686 = vmatpush1.bf16.msra.mxu0 0
        %1687 = vmatprep.subr.bf16.mxu0 0
        %1688 = vmatpush1.bf16.msra.mxu0 0
        %1689 = vmatprep.subr.bf16.mxu0 0
        %1690 = vmatpush1.bf16.msra.mxu0 0
        %1691 = vmatprep.subr.bf16.mxu0 0
        %1692 = vmatpush1.bf16.msra.mxu0 0
        %1693 = vmatprep.subr.bf16.mxu0 0
        %1694 = vmatpush1.bf16.msra.mxu0 0
        %1695 = vmatprep.mubr.bf16.mxu0 0
        %1696 = vmatmul.mubr.bf16.gmra.mrb[0].mxu0 %v1610
        %v1697 = vpop.f32.mrb[0].mxu0
        %v1698 = vadd.f32 %v1614, %v1697
        %v1699 = vpop.f32.mrb[0].mxu0
        %v1700 = vpop.f32.mrb[0].mxu0
        %v1701 = vadd.f32 %v1614, %v1700
        %v1702 = vpop.f32.mrb[0].mxu0
        %1703 = vdwg.mxu0
        %v1704 = vadd.f32 %v759, %v1698
        %v1705 = vadd.f32 %v760, %v1701
        %1706 = vadd.xlane.f32.xlu0 %v1704
        %v1707 = vpop.xlane.xlu0 %1706
        %1708 = vadd.xlane.f32.xlu0 %v1705
        %v1709 = vpop.xlane.xlu0 %1708
        %v1710 = vrcp.pop 128.0
        %v1711 = vmul.f32 %v1707, %v1710
        %v1712 = vmul.f32 %v1709, %v1710
        %v1713 = vsub.f32 %v1704, %v1711
        %v1714 = vsub.f32 %v1705, %v1712
        %v1715 = vmul.f32 %v1713, %v1713
        %v1716 = vmul.f32 %v1714, %v1714
        %1717 = vadd.xlane.f32.xlu0 %v1715
        %v1718 = vpop.xlane.xlu0 %1717
        %1719 = vadd.xlane.f32.xlu0 %v1716
        %v1720 = vpop.xlane.xlu0 %1719
        %v1721 = vmul.f32 %v1718, %v1710
        %v1722 = vmul.f32 %v1720, %v1710
        %v1723 = vadd.f32 %v1721, 1e-05
        %v1724 = vadd.f32 %v1722, 1e-05
        %v1725 = vrsqrt.pop %v1723
        %v1726 = vrsqrt.pop %v1724
        %v1727 = vmul.f32 %v1713, %v1725
        %v1728 = vmul.f32 %v1714, %v1726
        %v1729 = vlaneseq
        %v1730 = vshrl.u32 %v1729, 7
        %v1731 = vsub.s32 5, %v1730
        %v1732 = vrot.slane %v857, %v1731
        %v1733 = vmul.f32 %v1727, %v1732
        %v1734 = vmul.f32 %v1728, %v1732
        %v1735 = vlaneseq
        %v1736 = vshrl.u32 %v1735, 7
        %v1737 = vsub.s32 6, %v1736
        %v1738 = vrot.slane %v857, %v1737
        %v1739 = vadd.f32 %v1733, %v1738
        %v1740 = vadd.f32 %v1734, %v1738
        %v1741 = vpack.c.bf16 %v1740, %v1739
        %v1743 = vlaneseq
        %v1744 = vshrl.u32 %v1743, 7
        %v1745 = vsub.s32 0, %v1744
        %v1746 = vrot.slane %v859, %v1745
        %v1747 = vlaneseq
        %v1748 = vshrl.u32 %v1747, 7
        %v1749 = vsub.s32 1, %v1748
        %v1750 = vrot.slane %v859, %v1749
        %v1769 = vunpack.c.l.b16 %v809
        %v1770 = vunpack.c.h.b16 %v809
        %v1771 = vunpack.c.l.b16 %v810
        %v1772 = vunpack.c.h.b16 %v810
        %v1773 = vunpack.c.l.b16 %v811
        %v1774 = vunpack.c.h.b16 %v811
        %v1775 = vunpack.c.l.b16 %v812
        %v1776 = vunpack.c.h.b16 %v812
        %v1777 = vunpack.c.l.b16 %v813
        %v1778 = vunpack.c.h.b16 %v813
        %v1779 = vunpack.c.l.b16 %v814
        %v1780 = vunpack.c.h.b16 %v814
        %v1781 = vunpack.c.l.b16 %v815
        %v1782 = vunpack.c.h.b16 %v815
        %v1783 = vunpack.c.l.b16 %v816
        %v1784 = vunpack.c.h.b16 %v816
        %v1785 = vunpack.c.l.b16 %v817
        %v1786 = vunpack.c.h.b16 %v817
        %v1787 = vunpack.c.l.b16 %v818
        %v1788 = vunpack.c.h.b16 %v818
        %v1789 = vunpack.c.l.b16 %v819
        %v1790 = vunpack.c.h.b16 %v819
        %v1791 = vunpack.c.l.b16 %v820
        %v1792 = vunpack.c.h.b16 %v820
        %v1793 = vunpack.c.l.b16 %v821
        %v1794 = vunpack.c.h.b16 %v821
        %v1795 = vunpack.c.l.b16 %v822
        %v1796 = vunpack.c.h.b16 %v822
        %v1797 = vunpack.c.l.b16 %v823
        %v1798 = vunpack.c.h.b16 %v823
        %v1799 = vunpack.c.l.b16 %v824
        %v1800 = vunpack.c.h.b16 %v824
        %v1801 = vpack.c.b16 %v1771, %v1769
        %v1802 = vpack.c.b16 %v1772, %v1770
        %v1803 = vpack.c.b16 %v1775, %v1773
        %v1804 = vpack.c.b16 %v1776, %v1774
        %v1805 = vpack.c.b16 %v1779, %v1777
        %v1806 = vpack.c.b16 %v1780, %v1778
        %v1807 = vpack.c.b16 %v1783, %v1781
        %v1808 = vpack.c.b16 %v1784, %v1782
        %v1809 = vpack.c.b16 %v1787, %v1785
        %v1810 = vpack.c.b16 %v1788, %v1786
        %v1811 = vpack.c.b16 %v1791, %v1789
        %v1812 = vpack.c.b16 %v1792, %v1790
        %v1813 = vpack.c.b16 %v1795, %v1793
        %v1814 = vpack.c.b16 %v1796, %v1794
        %v1815 = vpack.c.b16 %v1799, %v1797
        %v1816 = vpack.c.b16 %v1800, %v1798
        %1833 = vmatprep.subr.bf16.mxu0 %v1802
        %1834 = vmatpush1.bf16.msra.mxu0 %v1801
        %1835 = vmatprep.subr.bf16.mxu0 %v1804
        %1836 = vmatpush1.bf16.msra.mxu0 %v1803
        %1837 = vmatprep.subr.bf16.mxu0 %v1806
        %1838 = vmatpush1.bf16.msra.mxu0 %v1805
        %1839 = vmatprep.subr.bf16.mxu0 %v1808
        %1840 = vmatpush1.bf16.msra.mxu0 %v1807
        %1841 = vmatprep.subr.bf16.mxu0 %v1810
        %1842 = vmatpush1.bf16.msra.mxu0 %v1809
        %1843 = vmatprep.subr.bf16.mxu0 %v1812
        %1844 = vmatpush1.bf16.msra.mxu0 %v1811
        %1845 = vmatprep.subr.bf16.mxu0 %v1814
        %1846 = vmatpush1.bf16.msra.mxu0 %v1813
        %1847 = vmatprep.subr.bf16.mxu0 %v1816
        %1848 = vmatpush1.bf16.msra.mxu0 %v1815
        %1849 = vmatprep.subr.bf16.mxu0 0
        %1850 = vmatpush1.bf16.msra.mxu0 0
        %1851 = vmatprep.subr.bf16.mxu0 0
        %1852 = vmatpush1.bf16.msra.mxu0 0
        %1853 = vmatprep.subr.bf16.mxu0 0
        %1854 = vmatpush1.bf16.msra.mxu0 0
        %1855 = vmatprep.subr.bf16.mxu0 0
        %1856 = vmatpush1.bf16.msra.mxu0 0
        %1857 = vmatprep.subr.bf16.mxu0 0
        %1858 = vmatpush1.bf16.msra.mxu0 0
        %1859 = vmatprep.subr.bf16.mxu0 0
        %1860 = vmatpush1.bf16.msra.mxu0 0
        %1861 = vmatprep.subr.bf16.mxu0 0
        %1862 = vmatpush1.bf16.msra.mxu0 0
        %1863 = vmatprep.subr.bf16.mxu0 0
        %1864 = vmatpush1.bf16.msra.mxu0 0
        %1865 = vmatprep.mubr.bf16.mxu0 0
        %1866 = vmatmul.mubr.bf16.gmra.mrb[0].mxu0 %v1741
        %v1867 = vpop.f32.mrb[0].mxu0
        %v1868 = vadd.f32 %v1746, %v1867
        %v1869 = vpop.f32.mrb[0].mxu0
        %v1870 = vadd.f32 %v1750, %v1869
        %v1871 = vpop.f32.mrb[0].mxu0
        %v1872 = vadd.f32 %v1746, %v1871
        %v1873 = vpop.f32.mrb[0].mxu0
        %v1874 = vadd.f32 %v1750, %v1873
        %1875 = vdwg.mxu0
        %v1876 = vmax.f32 %v1868, 0.0
        %v1877 = vmax.f32 %v1870, 0.0
        %v1878 = vmax.f32 %v1872, 0.0
        %v1879 = vmax.f32 %v1874, 0.0
        %v1880 = vpack.c.bf16 %v1878, %v1876
        %v1881 = vpack.c.bf16 %v1879, %v1877
        %v1882 = vlaneseq
        %v1883 = vshrl.u32 %v1882, 7
        %v1884 = vsub.s32 4, %v1883
        %v1885 = vrot.slane %v857, %v1884
        %v1918 = vunpack.c.l.b16 %v825
        %v1919 = vunpack.c.l.b16 %v826
        %v1920 = vunpack.c.l.b16 %v827
        %v1921 = vunpack.c.l.b16 %v828
        %v1922 = vunpack.c.l.b16 %v829
        %v1923 = vunpack.c.l.b16 %v830
        %v1924 = vunpack.c.l.b16 %v831
        %v1925 = vunpack.c.l.b16 %v832
        %v1926 = vunpack.c.l.b16 %v833
        %v1927 = vunpack.c.l.b16 %v834
        %v1928 = vunpack.c.l.b16 %v835
        %v1929 = vunpack.c.l.b16 %v836
        %v1930 = vunpack.c.l.b16 %v837
        %v1931 = vunpack.c.l.b16 %v838
        %v1932 = vunpack.c.l.b16 %v839
        %v1933 = vunpack.c.l.b16 %v840
        %v1934 = vunpack.c.l.b16 %v841
        %v1935 = vunpack.c.l.b16 %v842
        %v1936 = vunpack.c.l.b16 %v843
        %v1937 = vunpack.c.l.b16 %v844
        %v1938 = vunpack.c.l.b16 %v845
        %v1939 = vunpack.c.l.b16 %v846
        %v1940 = vunpack.c.l.b16 %v847
        %v1941 = vunpack.c.l.b16 %v848
        %v1942 = vunpack.c.l.b16 %v849
        %v1943 = vunpack.c.l.b16 %v850
        %v1944 = vunpack.c.l.b16 %v851
        %v1945 = vunpack.c.l.b16 %v852
        %v1946 = vunpack.c.l.b16 %v853
        %v1947 = vunpack.c.l.b16 %v854
        %v1948 = vunpack.c.l.b16 %v855
        %v1949 = vunpack.c.l.b16 %v856
        %v1950 = vpack.c.b16 %v1919, %v1918
        %v1951 = vpack.c.b16 %v1921, %v1920
        %v1952 = vpack.c.b16 %v1923, %v1922
        %v1953 = vpack.c.b16 %v1925, %v1924
        %v1954 = vpack.c.b16 %v1927, %v1926
        %v1955 = vpack.c.b16 %v1929, %v1928
        %v1956 = vpack.c.b16 %v1931, %v1930
        %v1957 = vpack.c.b16 %v1933, %v1932
        %v1958 = vpack.c.b16 %v1935, %v1934
        %v1959 = vpack.c.b16 %v1937, %v1936
        %v1960 = vpack.c.b16 %v1939, %v1938
        %v1961 = vpack.c.b16 %v1941, %v1940
        %v1962 = vpack.c.b16 %v1943, %v1942
        %v1963 = vpack.c.b16 %v1945, %v1944
        %v1964 = vpack.c.b16 %v1947, %v1946
        %v1965 = vpack.c.b16 %v1949, %v1948
        %1982 = vmatprep.subr.bf16.mxu0 0
        %1983 = vmatpush1.bf16.msra.mxu0 %v1950
        %1984 = vmatprep.subr.bf16.mxu0 0
        %1985 = vmatpush1.bf16.msra.mxu0 %v1951
        %1986 = vmatprep.subr.bf16.mxu0 0
        %1987 = vmatpush1.bf16.msra.mxu0 %v1952
        %1988 = vmatprep.subr.bf16.mxu0 0
        %1989 = vmatpush1.bf16.msra.mxu0 %v1953
        %1990 = vmatprep.subr.bf16.mxu0 0
        %1991 = vmatpush1.bf16.msra.mxu0 %v1954
        %1992 = vmatprep.subr.bf16.mxu0 0
        %1993 = vmatpush1.bf16.msra.mxu0 %v1955
        %1994 = vmatprep.subr.bf16.mxu0 0
        %1995 = vmatpush1.bf16.msra.mxu0 %v1956
        %1996 = vmatprep.subr.bf16.mxu0 0
        %1997 = vmatpush1.bf16.msra.mxu0 %v1957
        %1998 = vmatprep.subr.bf16.mxu0 0
        %1999 = vmatpush1.bf16.msra.mxu0 %v1958
        %2000 = vmatprep.subr.bf16.mxu0 0
        %2001 = vmatpush1.bf16.msra.mxu0 %v1959
        %2002 = vmatprep.subr.bf16.mxu0 0
        %2003 = vmatpush1.bf16.msra.mxu0 %v1960
        %2004 = vmatprep.subr.bf16.mxu0 0
        %2005 = vmatpush1.bf16.msra.mxu0 %v1961
        %2006 = vmatprep.subr.bf16.mxu0 0
        %2007 = vmatpush1.bf16.msra.mxu0 %v1962
        %2008 = vmatprep.subr.bf16.mxu0 0
        %2009 = vmatpush1.bf16.msra.mxu0 %v1963
        %2010 = vmatprep.subr.bf16.mxu0 0
        %2011 = vmatpush1.bf16.msra.mxu0 %v1964
        %2012 = vmatprep.subr.bf16.mxu0 0
        %2013 = vmatpush1.bf16.msra.mxu0 %v1965
        %2014 = vmatprep.mubr.bf16.mxu0 %v1881
        %2015 = vmatmul.mubr.bf16.gmra.mrb[0].mxu0 %v1880
        %v2016 = vpop.f32.mrb[0].mxu0
        %v2017 = vadd.f32 %v1885, %v2016
        %v2018 = vpop.f32.mrb[0].mxu0
        %v2019 = vpop.f32.mrb[0].mxu0
        %v2020 = vadd.f32 %v1885, %v2019
        %v2021 = vpop.f32.mrb[0].mxu0
        %2022 = vdwg.mxu0
        %v2023 = vadd.f32 %v1739, %v2017
        %v2024 = vadd.f32 %v1740, %v2020
        %2025 = vadd.xlane.f32.xlu0 %v2023
        %v2026 = vpop.xlane.xlu0 %2025
        %2027 = vadd.xlane.f32.xlu0 %v2024
        %v2028 = vpop.xlane.xlu0 %2027
        %v2029 = vmul.f32 %v2026, %v1710
        %v2030 = vmul.f32 %v2028, %v1710
        %v2031 = vsub.f32 %v2023, %v2029
        %v2032 = vsub.f32 %v2024, %v2030
        %v2033 = vmul.f32 %v2031, %v2031
        %v2034 = vmul.f32 %v2032, %v2032
        %2035 = vadd.xlane.f32.xlu0 %v2033
        %v2036 = vpop.xlane.xlu0 %2035
        %2037 = vadd.xlane.f32.xlu0 %v2034
        %v2038 = vpop.xlane.xlu0 %2037
        %v2039 = vmul.f32 %v2036, %v1710
        %v2040 = vmul.f32 %v2038, %v1710
        %v2041 = vadd.f32 %v2039, 1e-05
        %v2042 = vadd.f32 %v2040, 1e-05
        %v2043 = vrsqrt.pop %v2041
        %v2044 = vrsqrt.pop %v2042
        %v2045 = vmul.f32 %v2031, %v2043
        %v2046 = vmul.f32 %v2032, %v2044
        %v2047 = vlaneseq
        %v2048 = vshrl.u32 %v2047, 7
        %v2049 = vsub.s32 7, %v2048
        %v2050 = vrot.slane %v857, %v2049
        %v2051 = vmul.f32 %v2045, %v2050
        %v2052 = vmul.f32 %v2046, %v2050
        %v2053 = vlaneseq
        %v2054 = vshrl.u32 %v2053, 7
        %v2055 = vsub.s32 0, %v2054
        %v2056 = vrot.slane %v858, %v2055
        %v2057 = vadd.f32 %v2051, %v2056
        %v2058 = vadd.f32 %v2052, %v2056
        %s2059 = scalar_lea.vmem %s3, 192
        %v2060 = vld [vmem:[%s2059] sm:$0xff]
        %v2061 = vld [vmem:[%s2059 + $0x8] sm:$0xf]
        %v2062 = vld [vmem:[%s2059 + $0xc] sm:$0xff]
        %v2063 = vld [vmem:[%s2059 + $0x14] sm:$0xf]
        %v2064 = vld [vmem:[%s2059 + $0x18] sm:$0xff]
        %v2065 = vld [vmem:[%s2059 + $0x20] sm:$0xf]
        %v2066 = vld [vmem:[%s2059 + $0x24] sm:$0xff]
        %v2067 = vld [vmem:[%s2059 + $0x2c] sm:$0xf]
        %v2068 = vld [vmem:[%s2059 + $0x30] sm:$0xff]
        %v2069 = vld [vmem:[%s2059 + $0x38] sm:$0xf]
        %v2070 = vld [vmem:[%s2059 + $0x3c] sm:$0xff]
        %v2071 = vld [vmem:[%s2059 + $0x44] sm:$0xf]
        %v2072 = vld [vmem:[%s2059 + $0x48] sm:$0xff]
        %v2073 = vld [vmem:[%s2059 + $0x50] sm:$0xf]
        %v2074 = vld [vmem:[%s2059 + $0x54] sm:$0xff]
        %v2075 = vld [vmem:[%s2059 + $0x5c] sm:$0xf]
        %v2076 = vld [vmem:[%s2059 + $0x60] sm:$0xff]
        %v2077 = vld [vmem:[%s2059 + $0x68] sm:$0xf]
        %v2078 = vld [vmem:[%s2059 + $0x6c] sm:$0xff]
        %v2079 = vld [vmem:[%s2059 + $0x74] sm:$0xf]
        %v2080 = vld [vmem:[%s2059 + $0x78] sm:$0xff]
        %v2081 = vld [vmem:[%s2059 + $0x80] sm:$0xf]
        %v2082 = vld [vmem:[%s2059 + $0x84] sm:$0xff]
        %v2083 = vld [vmem:[%s2059 + $0x8c] sm:$0xf]
        %v2084 = vld [vmem:[%s2059 + $0x90] sm:$0xff]
        %v2085 = vld [vmem:[%s2059 + $0x98] sm:$0xf]
        %v2086 = vld [vmem:[%s2059 + $0x9c] sm:$0xff]
        %v2087 = vld [vmem:[%s2059 + $0xa4] sm:$0xf]
        %v2088 = vld [vmem:[%s2059 + $0xa8] sm:$0xff]
        %v2089 = vld [vmem:[%s2059 + $0xb0] sm:$0xf]
        %v2090 = vld [vmem:[%s2059 + $0xb4] sm:$0xff]
        %v2091 = vld [vmem:[%s2059 + $0xbc] sm:$0xf]
        %s2092 = scalar_lea.vmem %s4, 64
        %v2093 = vld [vmem:[%s2092] sm:$0xf]
        %v2094 = vld [vmem:[%s2092 + $0x4] sm:$0xf]
        %v2095 = vld [vmem:[%s2092 + $0x8] sm:$0xf]
        %v2096 = vld [vmem:[%s2092 + $0xc] sm:$0xf]
        %v2097 = vld [vmem:[%s2092 + $0x10] sm:$0xf]
        %v2098 = vld [vmem:[%s2092 + $0x14] sm:$0xf]
        %v2099 = vld [vmem:[%s2092 + $0x18] sm:$0xf]
        %v2100 = vld [vmem:[%s2092 + $0x1c] sm:$0xf]
        %v2101 = vld [vmem:[%s2092 + $0x20] sm:$0xf]
        %v2102 = vld [vmem:[%s2092 + $0x24] sm:$0xf]
        %v2103 = vld [vmem:[%s2092 + $0x28] sm:$0xf]
        %v2104 = vld [vmem:[%s2092 + $0x2c] sm:$0xf]
        %v2105 = vld [vmem:[%s2092 + $0x30] sm:$0xf]
        %v2106 = vld [vmem:[%s2092 + $0x34] sm:$0xf]
        %v2107 = vld [vmem:[%s2092 + $0x38] sm:$0xf]
        %v2108 = vld [vmem:[%s2092 + $0x3c] sm:$0xf]
        %s2109 = scalar_lea.vmem [#allocation2], 128
        %v2110 = vld [vmem:[%s2109] sm:$0xff]
        %v2111 = vld [vmem:[%s2109 + $0x8] sm:$0xff]
        %v2112 = vld [vmem:[%s2109 + $0x10] sm:$0xff]
        %v2113 = vld [vmem:[%s2109 + $0x18] sm:$0xff]
        %v2114 = vld [vmem:[%s2109 + $0x20] sm:$0xff]
        %v2115 = vld [vmem:[%s2109 + $0x28] sm:$0xff]
        %v2116 = vld [vmem:[%s2109 + $0x30] sm:$0xff]
        %v2117 = vld [vmem:[%s2109 + $0x38] sm:$0xff]
        %v2118 = vld [vmem:[%s2109 + $0x40] sm:$0xff]
        %v2119 = vld [vmem:[%s2109 + $0x48] sm:$0xff]
        %v2120 = vld [vmem:[%s2109 + $0x50] sm:$0xff]
        %v2121 = vld [vmem:[%s2109 + $0x58] sm:$0xff]
        %v2122 = vld [vmem:[%s2109 + $0x60] sm:$0xff]
        %v2123 = vld [vmem:[%s2109 + $0x68] sm:$0xff]
        %v2124 = vld [vmem:[%s2109 + $0x70] sm:$0xff]
        %v2125 = vld [vmem:[%s2109 + $0x78] sm:$0xff]
        %s2126 = scalar_lea.vmem [#allocation5], 128
        %v2127 = vld [vmem:[%s2126] sm:$0xf]
        %v2128 = vld [vmem:[%s2126 + $0x4] sm:$0xf]
        %v2129 = vld [vmem:[%s2126 + $0x8] sm:$0xf]
        %v2130 = vld [vmem:[%s2126 + $0xc] sm:$0xf]
        %v2131 = vld [vmem:[%s2126 + $0x10] sm:$0xf]
        %v2132 = vld [vmem:[%s2126 + $0x14] sm:$0xf]
        %v2133 = vld [vmem:[%s2126 + $0x18] sm:$0xf]
        %v2134 = vld [vmem:[%s2126 + $0x1c] sm:$0xf]
        %v2135 = vld [vmem:[%s2126 + $0x20] sm:$0xf]
        %v2136 = vld [vmem:[%s2126 + $0x24] sm:$0xf]
        %v2137 = vld [vmem:[%s2126 + $0x28] sm:$0xf]
        %v2138 = vld [vmem:[%s2126 + $0x2c] sm:$0xf]
        %v2139 = vld [vmem:[%s2126 + $0x30] sm:$0xf]
        %v2140 = vld [vmem:[%s2126 + $0x34] sm:$0xf]
        %v2141 = vld [vmem:[%s2126 + $0x38] sm:$0xf]
        %v2142 = vld [vmem:[%s2126 + $0x3c] sm:$0xf]
        %v2143 = vld [vmem:[%s2126 + $0x40] sm:$0xf]
        %v2144 = vld [vmem:[%s2126 + $0x44] sm:$0xf]
        %v2145 = vld [vmem:[%s2126 + $0x48] sm:$0xf]
        %v2146 = vld [vmem:[%s2126 + $0x4c] sm:$0xf]
        %v2147 = vld [vmem:[%s2126 + $0x50] sm:$0xf]
        %v2148 = vld [vmem:[%s2126 + $0x54] sm:$0xf]
        %v2149 = vld [vmem:[%s2126 + $0x58] sm:$0xf]
        %v2150 = vld [vmem:[%s2126 + $0x5c] sm:$0xf]
        %v2151 = vld [vmem:[%s2126 + $0x60] sm:$0xf]
        %v2152 = vld [vmem:[%s2126 + $0x64] sm:$0xf]
        %v2153 = vld [vmem:[%s2126 + $0x68] sm:$0xf]
        %v2154 = vld [vmem:[%s2126 + $0x6c] sm:$0xf]
        %v2155 = vld [vmem:[%s2126 + $0x70] sm:$0xf]
        %v2156 = vld [vmem:[%s2126 + $0x74] sm:$0xf]
        %v2157 = vld [vmem:[%s2126 + $0x78] sm:$0xf]
        %v2158 = vld [vmem:[%s2126 + $0x7c] sm:$0xf]
        %s2159 = scalar_lea.vmem %s7, 16
        %v2160 = vld [vmem:[%s2159] sm:$0xff]
        %v2161 = vld [vmem:[%s2159 + $0x8] sm:$0x1]
        %s2162 = scalar_lea.vmem [#allocation7], 2
        %v2163 = vld [vmem:[%s2162] sm:$0x3]
        %v2164 = vpack.c.bf16 %v2058, %v2057
        %v2197 = vunpack.c.l.b16 %v2060
        %v2198 = vunpack.c.h.b16 %v2060
        %v2199 = vunpack.c.l.b16 %v2061
        %v2200 = vunpack.c.l.b16 %v2062
        %v2201 = vunpack.c.h.b16 %v2062
        %v2202 = vunpack.c.l.b16 %v2063
        %v2203 = vunpack.c.l.b16 %v2064
        %v2204 = vunpack.c.h.b16 %v2064
        %v2205 = vunpack.c.l.b16 %v2065
        %v2206 = vunpack.c.l.b16 %v2066
        %v2207 = vunpack.c.h.b16 %v2066
        %v2208 = vunpack.c.l.b16 %v2067
        %v2209 = vunpack.c.l.b16 %v2068
        %v2210 = vunpack.c.h.b16 %v2068
        %v2211 = vunpack.c.l.b16 %v2069
        %v2212 = vunpack.c.l.b16 %v2070
        %v2213 = vunpack.c.h.b16 %v2070
        %v2214 = vunpack.c.l.b16 %v2071
        %v2215 = vunpack.c.l.b16 %v2072
        %v2216 = vunpack.c.h.b16 %v2072
        %v2217 = vunpack.c.l.b16 %v2073
        %v2218 = vunpack.c.l.b16 %v2074
        %v2219 = vunpack.c.h.b16 %v2074
        %v2220 = vunpack.c.l.b16 %v2075
        %v2221 = vunpack.c.l.b16 %v2076
        %v2222 = vunpack.c.h.b16 %v2076
        %v2223 = vunpack.c.l.b16 %v2077
        %v2224 = vunpack.c.l.b16 %v2078
        %v2225 = vunpack.c.h.b16 %v2078
        %v2226 = vunpack.c.l.b16 %v2079
        %v2227 = vunpack.c.l.b16 %v2080
        %v2228 = vunpack.c.h.b16 %v2080
        %v2229 = vunpack.c.l.b16 %v2081
        %v2230 = vunpack.c.l.b16 %v2082
        %v2231 = vunpack.c.h.b16 %v2082
        %v2232 = vunpack.c.l.b16 %v2083
        %v2233 = vunpack.c.l.b16 %v2084
        %v2234 = vunpack.c.h.b16 %v2084
        %v2235 = vunpack.c.l.b16 %v2085
        %v2236 = vunpack.c.l.b16 %v2086
        %v2237 = vunpack.c.h.b16 %v2086
        %v2238 = vunpack.c.l.b16 %v2087
        %v2239 = vunpack.c.l.b16 %v2088
        %v2240 = vunpack.c.h.b16 %v2088
        %v2241 = vunpack.c.l.b16 %v2089
        %v2242 = vunpack.c.l.b16 %v2090
        %v2243 = vunpack.c.h.b16 %v2090
        %v2244 = vunpack.c.l.b16 %v2091
        %v2245 = vpack.c.b16 %v2200, %v2197
        %v2246 = vpack.c.b16 %v2201, %v2198
        %v2247 = vpack.c.b16 %v2202, %v2199
        %v2248 = vpack.c.b16 %v2206, %v2203
        %v2249 = vpack.c.b16 %v2207, %v2204
        %v2250 = vpack.c.b16 %v2208, %v2205
        %v2251 = vpack.c.b16 %v2212, %v2209
        %v2252 = vpack.c.b16 %v2213, %v2210
        %v2253 = vpack.c.b16 %v2214, %v2211
        %v2254 = vpack.c.b16 %v2218, %v2215
        %v2255 = vpack.c.b16 %v2219, %v2216
        %v2256 = vpack.c.b16 %v2220, %v2217
        %v2257 = vpack.c.b16 %v2224, %v2221
        %v2258 = vpack.c.b16 %v2225, %v2222
        %v2259 = vpack.c.b16 %v2226, %v2223
        %v2260 = vpack.c.b16 %v2230, %v2227
        %v2261 = vpack.c.b16 %v2231, %v2228
        %v2262 = vpack.c.b16 %v2232, %v2229
        %v2263 = vpack.c.b16 %v2236, %v2233
        %v2264 = vpack.c.b16 %v2237, %v2234
        %v2265 = vpack.c.b16 %v2238, %v2235
        %v2266 = vpack.c.b16 %v2242, %v2239
        %v2267 = vpack.c.b16 %v2243, %v2240
        %v2268 = vpack.c.b16 %v2244, %v2241
        %2293 = vmatprep.subr.bf16.mxu0 %v2246
        %2294 = vmatpush1.bf16.msra.mxu0 %v2245
        %2295 = vmatprep.subr.bf16.mxu0 %v2249
        %2296 = vmatpush1.bf16.msra.mxu0 %v2248
        %2297 = vmatprep.subr.bf16.mxu0 %v2252
        %2298 = vmatpush1.bf16.msra.mxu0 %v2251
        %2299 = vmatprep.subr.bf16.mxu0 %v2255
        %2300 = vmatpush1.bf16.msra.mxu0 %v2254
        %2301 = vmatprep.subr.bf16.mxu0 %v2258
        %2302 = vmatpush1.bf16.msra.mxu0 %v2257
        %2303 = vmatprep.subr.bf16.mxu0 %v2261
        %2304 = vmatpush1.bf16.msra.mxu0 %v2260
        %2305 = vmatprep.subr.bf16.mxu0 %v2264
        %2306 = vmatpush1.bf16.msra.mxu0 %v2263
        %2307 = vmatprep.subr.bf16.mxu0 %v2267
        %2308 = vmatpush1.bf16.msra.mxu0 %v2266
        %2309 = vmatprep.subr.bf16.mxu0 0
        %2310 = vmatpush1.bf16.msra.mxu0 0
        %2311 = vmatprep.subr.bf16.mxu0 0
        %2312 = vmatpush1.bf16.msra.mxu0 0
        %2313 = vmatprep.subr.bf16.mxu0 0
        %2314 = vmatpush1.bf16.msra.mxu0 0
        %2315 = vmatprep.subr.bf16.mxu0 0
        %2316 = vmatpush1.bf16.msra.mxu0 0
        %2317 = vmatprep.subr.bf16.mxu0 0
        %2318 = vmatpush1.bf16.msra.mxu0 0
        %2319 = vmatprep.subr.bf16.mxu0 0
        %2320 = vmatpush1.bf16.msra.mxu0 0
        %2321 = vmatprep.subr.bf16.mxu0 0
        %2322 = vmatpush1.bf16.msra.mxu0 0
        %2323 = vmatprep.subr.bf16.mxu0 0
        %2324 = vmatpush1.bf16.msra.mxu0 0
        %2325 = vmatprep.mubr.bf16.mxu0 0
        %2326 = vmatmul.mubr.bf16.gmra.mrb[0].mxu0 %v2164
        %v2327 = vpop.f32.mrb[0].mxu0
        %v2328 = vadd.f32 0.0, %v2327
        %v2329 = vpop.f32.mrb[0].mxu0
        %v2330 = vadd.f32 0.0, %v2329
        %v2331 = vpop.f32.mrb[0].mxu0
        %v2332 = vadd.f32 0.0, %v2331
        %v2333 = vpop.f32.mrb[0].mxu0
        %v2334 = vadd.f32 0.0, %v2333
        %2335 = vdwg.mxu0
        %2336 = vmatprep.subr.bf16.mxu0 0
        %2337 = vmatpush1.bf16.msra.mxu0 %v2247
        %2338 = vmatprep.subr.bf16.mxu0 0
        %2339 = vmatpush1.bf16.msra.mxu0 %v2250
        %2340 = vmatprep.subr.bf16.mxu0 0
        %2341 = vmatpush1.bf16.msra.mxu0 %v2253
        %2342 = vmatprep.subr.bf16.mxu0 0
        %2343 = vmatpush1.bf16.msra.mxu0 %v2256
        %2344 = vmatprep.subr.bf16.mxu0 0
        %2345 = vmatpush1.bf16.msra.mxu0 %v2259
        %2346 = vmatprep.subr.bf16.mxu0 0
        %2347 = vmatpush1.bf16.msra.mxu0 %v2262
        %2348 = vmatprep.subr.bf16.mxu0 0
        %2349 = vmatpush1.bf16.msra.mxu0 %v2265
        %2350 = vmatprep.subr.bf16.mxu0 0
        %2351 = vmatpush1.bf16.msra.mxu0 %v2268
        %2352 = vmatprep.subr.bf16.mxu0 0
        %2353 = vmatpush1.bf16.msra.mxu0 0
        %2354 = vmatprep.subr.bf16.mxu0 0
        %2355 = vmatpush1.bf16.msra.mxu0 0
        %2356 = vmatprep.subr.bf16.mxu0 0
        %2357 = vmatpush1.bf16.msra.mxu0 0
        %2358 = vmatprep.subr.bf16.mxu0 0
        %2359 = vmatpush1.bf16.msra.mxu0 0
        %2360 = vmatprep.subr.bf16.mxu0 0
        %2361 = vmatpush1.bf16.msra.mxu0 0
        %2362 = vmatprep.subr.bf16.mxu0 0
        %2363 = vmatpush1.bf16.msra.mxu0 0
        %2364 = vmatprep.subr.bf16.mxu0 0
        %2365 = vmatpush1.bf16.msra.mxu0 0
        %2366 = vmatprep.subr.bf16.mxu0 0
        %2367 = vmatpush1.bf16.msra.mxu0 0
        %2368 = vmatprep.mubr.bf16.mxu0 0
        %2369 = vmatmul.mubr.bf16.gmra.mrb[0].mxu0 %v2164
        %v2370 = vpop.f32.mrb[0].mxu0
        %v2371 = vadd.f32 0.0, %v2370
        %v2372 = vpop.f32.mrb[0].mxu0
        %v2373 = vpop.f32.mrb[0].mxu0
        %v2374 = vadd.f32 0.0, %v2373
        %v2375 = vpop.f32.mrb[0].mxu0
        %2376 = vdwg.mxu0
        %v2377 = vlaneseq
        %v2378 = vshrl.u32 %v2377, 7
        %v2379 = vsub.s32 0, %v2378
        %v2380 = vrot.slane %v2160, %v2379
        %v2381 = vadd.f32 %v2328, %v2380
        %v2382 = vadd.f32 %v2332, %v2380
        %v2383 = vlaneseq
        %v2384 = vshrl.u32 %v2383, 7
        %v2385 = vsub.s32 1, %v2384
        %v2386 = vrot.slane %v2160, %v2385
        %v2387 = vadd.f32 %v2330, %v2386
        %v2388 = vadd.f32 %v2334, %v2386
        %v2389 = vlaneseq
        %v2390 = vshrl.u32 %v2389, 7
        %v2391 = vsub.s32 2, %v2390
        %v2392 = vrot.slane %v2160, %v2391
        %v2393 = vadd.f32 %v2371, %v2392
        %v2394 = vadd.f32 %v2374, %v2392
        %v2395 = vmul.f32 %v2381, 0.17677669
        %v2396 = vmul.f32 %v2382, 0.17677669
        %v2397 = vpack.c.bf16 %v2396, %v2395
        %v2398 = vpack.c.bf16 %v2388, %v2387
        %v2399 = vpack.c.bf16 %v2394, %v2393
        %v2401 = vsel %vm1096, %v2397, 0
        %v2404 = vsel %vm1096, %v2398, 0
        %2406 = vmatprep.subr.bf16.mxu0 0
        %2407 = vmatpush1.bf16.xpose.msra.mxu0 %v2404
        %2408 = vmatprep.subr.bf16.mxu0 0
        %2409 = vmatpush1.bf16.xpose.msra.mxu0 0
        %2410 = vmatprep.subr.bf16.mxu0 0
        %2411 = vmatpush1.bf16.xpose.msra.mxu0 0
        %2412 = vmatprep.subr.bf16.mxu0 0
        %2413 = vmatpush1.bf16.xpose.msra.mxu0 0
        %2414 = vmatprep.subr.bf16.mxu0 0
        %2415 = vmatpush1.bf16.xpose.msra.mxu0 0
        %2416 = vmatprep.subr.bf16.mxu0 0
        %2417 = vmatpush1.bf16.xpose.msra.mxu0 0
        %2418 = vmatprep.subr.bf16.mxu0 0
        %2419 = vmatpush1.bf16.xpose.msra.mxu0 0
        %2420 = vmatprep.subr.bf16.mxu0 0
        %2421 = vmatpush1.bf16.xpose.msra.mxu0 0
        %2422 = vmatprep.subr.bf16.mxu0 0
        %2423 = vmatpush1.bf16.xpose.msra.mxu0 0
        %2424 = vmatprep.subr.bf16.mxu0 0
        %2425 = vmatpush1.bf16.xpose.msra.mxu0 0
        %2426 = vmatprep.subr.bf16.mxu0 0
        %2427 = vmatpush1.bf16.xpose.msra.mxu0 0
        %2428 = vmatprep.subr.bf16.mxu0 0
        %2429 = vmatpush1.bf16.xpose.msra.mxu0 0
        %2430 = vmatprep.subr.bf16.mxu0 0
        %2431 = vmatpush1.bf16.xpose.msra.mxu0 0
        %2432 = vmatprep.subr.bf16.mxu0 0
        %2433 = vmatpush1.bf16.xpose.msra.mxu0 0
        %2434 = vmatprep.subr.bf16.mxu0 0
        %2435 = vmatpush1.bf16.xpose.msra.mxu0 0
        %2436 = vmatprep.subr.bf16.mxu0 0
        %2437 = vmatpush1.bf16.xpose.msra.mxu0 0
        %2438 = vmatprep.mubr.bf16.mxu0 0
        %2439 = vmatmul.mubr.bf16.gmra.mrb[0].mxu0 %v2401
        %v2440 = vpop.f32.mrb[0].mxu0
        %v2441 = vadd.f32 0.0, %v2440
        %v2442 = vpop.f32.mrb[0].mxu0
        %v2443 = vpop.f32.mrb[0].mxu0
        %v2444 = vadd.f32 0.0, %v2443
        %v2445 = vpop.f32.mrb[0].mxu0
        %2446 = vdwg.mxu0
        %v2447 = vsel %vm1144, %v2441, -inf
        %2448 = vmax.xlane.f32.xlu0 %v2447
        %v2449 = vpop.xlane.xlu0 %2448
        %v2450 = vsel %vm1144, %v2444, -inf
        %2451 = vmax.xlane.f32.xlu0 %v2450
        %v2452 = vpop.xlane.xlu0 %2451
        %v2453 = vsub.f32 %v2441, %v2449
        %v2454 = vsub.f32 %v2444, %v2452
        %v2455 = vmul.f32 %v2453, 1.442695
        %v2456 = vpow.pop %v2455
        %v2457 = vmul.f32 %v2454, 1.442695
        %v2458 = vpow.pop %v2457
        %v2459 = vsel %vm1144, %v2456, 0.0
        %2460 = vadd.xlane.f32.xlu0 %v2459
        %v2461 = vpop.xlane.xlu0 %2460
        %v2462 = vsel %vm1144, %v2458, 0.0
        %2463 = vadd.xlane.f32.xlu0 %v2462
        %v2464 = vpop.xlane.xlu0 %2463
        %v2465 = vrcp.pop %v2461
        %v2466 = vrcp.pop %v2464
        %v2467 = vmul.f32 %v2456, %v2465
        %v2468 = vmul.f32 %v2458, %v2466
        %v2469 = vpack.c.bf16 %v2468, %v2467
        %v2471 = vsel %vm1144, %v2469, 0
        %2473 = vmatprep.subr.bf16.mxu0 0
        %2474 = vmatpush1.bf16.msra.mxu0 %v2399
        %2475 = vmatprep.subr.bf16.mxu0 0
        %2476 = vmatpush1.bf16.msra.mxu0 0
        %2477 = vmatprep.subr.bf16.mxu0 0
        %2478 = vmatpush1.bf16.msra.mxu0 0
        %2479 = vmatprep.subr.bf16.mxu0 0
        %2480 = vmatpush1.bf16.msra.mxu0 0
        %2481 = vmatprep.subr.bf16.mxu0 0
        %2482 = vmatpush1.bf16.msra.mxu0 0
        %2483 = vmatprep.subr.bf16.mxu0 0
        %2484 = vmatpush1.bf16.msra.mxu0 0
        %2485 = vmatprep.subr.bf16.mxu0 0
        %2486 = vmatpush1.bf16.msra.mxu0 0
        %2487 = vmatprep.subr.bf16.mxu0 0
        %2488 = vmatpush1.bf16.msra.mxu0 0
        %2489 = vmatprep.subr.bf16.mxu0 0
        %2490 = vmatpush1.bf16.msra.mxu0 0
        %2491 = vmatprep.subr.bf16.mxu0 0
        %2492 = vmatpush1.bf16.msra.mxu0 0
        %2493 = vmatprep.subr.bf16.mxu0 0
        %2494 = vmatpush1.bf16.msra.mxu0 0
        %2495 = vmatprep.subr.bf16.mxu0 0
        %2496 = vmatpush1.bf16.msra.mxu0 0
        %2497 = vmatprep.subr.bf16.mxu0 0
        %2498 = vmatpush1.bf16.msra.mxu0 0
        %2499 = vmatprep.subr.bf16.mxu0 0
        %2500 = vmatpush1.bf16.msra.mxu0 0
        %2501 = vmatprep.subr.bf16.mxu0 0
        %2502 = vmatpush1.bf16.msra.mxu0 0
        %2503 = vmatprep.subr.bf16.mxu0 0
        %2504 = vmatpush1.bf16.msra.mxu0 0
        %2505 = vmatprep.mubr.bf16.mxu0 0
        %2506 = vmatmul.mubr.bf16.gmra.mrb[0].mxu0 %v2471
        %v2507 = vpop.f32.mrb[0].mxu0
        %v2508 = vadd.f32 0.0, %v2507
        %v2509 = vpop.f32.mrb[0].mxu0
        %v2510 = vpop.f32.mrb[0].mxu0
        %v2511 = vadd.f32 0.0, %v2510
        %v2512 = vpop.f32.mrb[0].mxu0
        %2513 = vdwg.mxu0
        %2515 = vrot.lane.b32.xlu0 %v2397, 96
        %v2516 = vpop.permute.xlu0 %2515
        %2518 = vrot.lane.b32.xlu0 %v2398, 96
        %v2519 = vpop.permute.xlu0 %2518
        %v2521 = vsel %vm1096, %v2516, 0
        %v2524 = vsel %vm1096, %v2519, 0
        %2526 = vmatprep.subr.bf16.mxu0 0
        %2527 = vmatpush1.bf16.xpose.msra.mxu0 %v2524
        %2528 = vmatprep.subr.bf16.mxu0 0
        %2529 = vmatpush1.bf16.xpose.msra.mxu0 0
        %2530 = vmatprep.subr.bf16.mxu0 0
        %2531 = vmatpush1.bf16.xpose.msra.mxu0 0
        %2532 = vmatprep.subr.bf16.mxu0 0
        %2533 = vmatpush1.bf16.xpose.msra.mxu0 0
        %2534 = vmatprep.subr.bf16.mxu0 0
        %2535 = vmatpush1.bf16.xpose.msra.mxu0 0
        %2536 = vmatprep.subr.bf16.mxu0 0
        %2537 = vmatpush1.bf16.xpose.msra.mxu0 0
        %2538 = vmatprep.subr.bf16.mxu0 0
        %2539 = vmatpush1.bf16.xpose.msra.mxu0 0
        %2540 = vmatprep.subr.bf16.mxu0 0
        %2541 = vmatpush1.bf16.xpose.msra.mxu0 0
        %2542 = vmatprep.subr.bf16.mxu0 0
        %2543 = vmatpush1.bf16.xpose.msra.mxu0 0
        %2544 = vmatprep.subr.bf16.mxu0 0
        %2545 = vmatpush1.bf16.xpose.msra.mxu0 0
        %2546 = vmatprep.subr.bf16.mxu0 0
        %2547 = vmatpush1.bf16.xpose.msra.mxu0 0
        %2548 = vmatprep.subr.bf16.mxu0 0
        %2549 = vmatpush1.bf16.xpose.msra.mxu0 0
        %2550 = vmatprep.subr.bf16.mxu0 0
        %2551 = vmatpush1.bf16.xpose.msra.mxu0 0
        %2552 = vmatprep.subr.bf16.mxu0 0
        %2553 = vmatpush1.bf16.xpose.msra.mxu0 0
        %2554 = vmatprep.subr.bf16.mxu0 0
        %2555 = vmatpush1.bf16.xpose.msra.mxu0 0
        %2556 = vmatprep.subr.bf16.mxu0 0
        %2557 = vmatpush1.bf16.xpose.msra.mxu0 0
        %2558 = vmatprep.mubr.bf16.mxu0 0
        %2559 = vmatmul.mubr.bf16.gmra.mrb[0].mxu0 %v2521
        %v2560 = vpop.f32.mrb[0].mxu0
        %v2561 = vadd.f32 0.0, %v2560
        %v2562 = vpop.f32.mrb[0].mxu0
        %v2563 = vpop.f32.mrb[0].mxu0
        %v2564 = vadd.f32 0.0, %v2563
        %v2565 = vpop.f32.mrb[0].mxu0
        %2566 = vdwg.mxu0
        %v2567 = vsel %vm1144, %v2561, -inf
        %2568 = vmax.xlane.f32.xlu0 %v2567
        %v2569 = vpop.xlane.xlu0 %2568
        %v2570 = vsel %vm1144, %v2564, -inf
        %2571 = vmax.xlane.f32.xlu0 %v2570
        %v2572 = vpop.xlane.xlu0 %2571
        %v2573 = vsub.f32 %v2561, %v2569
        %v2574 = vsub.f32 %v2564, %v2572
        %v2575 = vmul.f32 %v2573, 1.442695
        %v2576 = vpow.pop %v2575
        %v2577 = vmul.f32 %v2574, 1.442695
        %v2578 = vpow.pop %v2577
        %v2579 = vsel %vm1144, %v2576, 0.0
        %2580 = vadd.xlane.f32.xlu0 %v2579
        %v2581 = vpop.xlane.xlu0 %2580
        %v2582 = vsel %vm1144, %v2578, 0.0
        %2583 = vadd.xlane.f32.xlu0 %v2582
        %v2584 = vpop.xlane.xlu0 %2583
        %v2585 = vrcp.pop %v2581
        %v2586 = vrcp.pop %v2584
        %v2587 = vmul.f32 %v2576, %v2585
        %v2588 = vmul.f32 %v2578, %v2586
        %v2589 = vpack.c.bf16 %v2588, %v2587
        %2591 = vrot.lane.b32.xlu0 %v2399, 96
        %v2592 = vpop.permute.xlu0 %2591
        %v2595 = vsel %vm1144, %v2589, 0
        %2597 = vmatprep.subr.bf16.mxu0 0
        %2598 = vmatpush1.bf16.msra.mxu0 %v2592
        %2599 = vmatprep.subr.bf16.mxu0 0
        %2600 = vmatpush1.bf16.msra.mxu0 0
        %2601 = vmatprep.subr.bf16.mxu0 0
        %2602 = vmatpush1.bf16.msra.mxu0 0
        %2603 = vmatprep.subr.bf16.mxu0 0
        %2604 = vmatpush1.bf16.msra.mxu0 0
        %2605 = vmatprep.subr.bf16.mxu0 0
        %2606 = vmatpush1.bf16.msra.mxu0 0
        %2607 = vmatprep.subr.bf16.mxu0 0
        %2608 = vmatpush1.bf16.msra.mxu0 0
        %2609 = vmatprep.subr.bf16.mxu0 0
        %2610 = vmatpush1.bf16.msra.mxu0 0
        %2611 = vmatprep.subr.bf16.mxu0 0
        %2612 = vmatpush1.bf16.msra.mxu0 0
        %2613 = vmatprep.subr.bf16.mxu0 0
        %2614 = vmatpush1.bf16.msra.mxu0 0
        %2615 = vmatprep.subr.bf16.mxu0 0
        %2616 = vmatpush1.bf16.msra.mxu0 0
        %2617 = vmatprep.subr.bf16.mxu0 0
        %2618 = vmatpush1.bf16.msra.mxu0 0
        %2619 = vmatprep.subr.bf16.mxu0 0
        %2620 = vmatpush1.bf16.msra.mxu0 0
        %2621 = vmatprep.subr.bf16.mxu0 0
        %2622 = vmatpush1.bf16.msra.mxu0 0
        %2623 = vmatprep.subr.bf16.mxu0 0
        %2624 = vmatpush1.bf16.msra.mxu0 0
        %2625 = vmatprep.subr.bf16.mxu0 0
        %2626 = vmatpush1.bf16.msra.mxu0 0
        %2627 = vmatprep.subr.bf16.mxu0 0
        %2628 = vmatpush1.bf16.msra.mxu0 0
        %2629 = vmatprep.mubr.bf16.mxu0 0
        %2630 = vmatmul.mubr.bf16.gmra.mrb[0].mxu0 %v2595
        %v2631 = vpop.f32.mrb[0].mxu0
        %v2632 = vadd.f32 0.0, %v2631
        %v2633 = vpop.f32.mrb[0].mxu0
        %v2634 = vpop.f32.mrb[0].mxu0
        %v2635 = vadd.f32 0.0, %v2634
        %v2636 = vpop.f32.mrb[0].mxu0
        %2637 = vdwg.mxu0
        %2638 = vrot.lane.b32.xlu0 %v2397, 64
        %v2639 = vpop.permute.xlu0 %2638
        %2640 = vrot.lane.b32.xlu0 %v2398, 64
        %v2641 = vpop.permute.xlu0 %2640
        %v2643 = vsel %vm1096, %v2639, 0
        %v2646 = vsel %vm1096, %v2641, 0
        %2648 = vmatprep.subr.bf16.mxu0 0
        %2649 = vmatpush1.bf16.xpose.msra.mxu0 %v2646
        %2650 = vmatprep.subr.bf16.mxu0 0
        %2651 = vmatpush1.bf16.xpose.msra.mxu0 0
        %2652 = vmatprep.subr.bf16.mxu0 0
        %2653 = vmatpush1.bf16.xpose.msra.mxu0 0
        %2654 = vmatprep.subr.bf16.mxu0 0
        %2655 = vmatpush1.bf16.xpose.msra.mxu0 0
        %2656 = vmatprep.subr.bf16.mxu0 0
        %2657 = vmatpush1.bf16.xpose.msra.mxu0 0
        %2658 = vmatprep.subr.bf16.mxu0 0
        %2659 = vmatpush1.bf16.xpose.msra.mxu0 0
        %2660 = vmatprep.subr.bf16.mxu0 0
        %2661 = vmatpush1.bf16.xpose.msra.mxu0 0
        %2662 = vmatprep.subr.bf16.mxu0 0
        %2663 = vmatpush1.bf16.xpose.msra.mxu0 0
        %2664 = vmatprep.subr.bf16.mxu0 0
        %2665 = vmatpush1.bf16.xpose.msra.mxu0 0
        %2666 = vmatprep.subr.bf16.mxu0 0
        %2667 = vmatpush1.bf16.xpose.msra.mxu0 0
        %2668 = vmatprep.subr.bf16.mxu0 0
        %2669 = vmatpush1.bf16.xpose.msra.mxu0 0
        %2670 = vmatprep.subr.bf16.mxu0 0
        %2671 = vmatpush1.bf16.xpose.msra.mxu0 0
        %2672 = vmatprep.subr.bf16.mxu0 0
        %2673 = vmatpush1.bf16.xpose.msra.mxu0 0
        %2674 = vmatprep.subr.bf16.mxu0 0
        %2675 = vmatpush1.bf16.xpose.msra.mxu0 0
        %2676 = vmatprep.subr.bf16.mxu0 0
        %2677 = vmatpush1.bf16.xpose.msra.mxu0 0
        %2678 = vmatprep.subr.bf16.mxu0 0
        %2679 = vmatpush1.bf16.xpose.msra.mxu0 0
        %2680 = vmatprep.mubr.bf16.mxu0 0
        %2681 = vmatmul.mubr.bf16.gmra.mrb[0].mxu0 %v2643
        %v2682 = vpop.f32.mrb[0].mxu0
        %v2683 = vadd.f32 0.0, %v2682
        %v2684 = vpop.f32.mrb[0].mxu0
        %v2685 = vpop.f32.mrb[0].mxu0
        %v2686 = vadd.f32 0.0, %v2685
        %v2687 = vpop.f32.mrb[0].mxu0
        %2688 = vdwg.mxu0
        %v2689 = vsel %vm1144, %v2683, -inf
        %2690 = vmax.xlane.f32.xlu0 %v2689
        %v2691 = vpop.xlane.xlu0 %2690
        %v2692 = vsel %vm1144, %v2686, -inf
        %2693 = vmax.xlane.f32.xlu0 %v2692
        %v2694 = vpop.xlane.xlu0 %2693
        %v2695 = vsub.f32 %v2683, %v2691
        %v2696 = vsub.f32 %v2686, %v2694
        %v2697 = vmul.f32 %v2695, 1.442695
        %v2698 = vpow.pop %v2697
        %v2699 = vmul.f32 %v2696, 1.442695
        %v2700 = vpow.pop %v2699
        %v2701 = vsel %vm1144, %v2698, 0.0
        %2702 = vadd.xlane.f32.xlu0 %v2701
        %v2703 = vpop.xlane.xlu0 %2702
        %v2704 = vsel %vm1144, %v2700, 0.0
        %2705 = vadd.xlane.f32.xlu0 %v2704
        %v2706 = vpop.xlane.xlu0 %2705
        %v2707 = vrcp.pop %v2703
        %v2708 = vrcp.pop %v2706
        %v2709 = vmul.f32 %v2698, %v2707
        %v2710 = vmul.f32 %v2700, %v2708
        %v2711 = vpack.c.bf16 %v2710, %v2709
        %2712 = vrot.lane.b32.xlu0 %v2399, 64
        %v2713 = vpop.permute.xlu0 %2712
        %v2716 = vsel %vm1144, %v2711, 0
        %2718 = vmatprep.subr.bf16.mxu0 0
        %2719 = vmatpush1.bf16.msra.mxu0 %v2713
        %2720 = vmatprep.subr.bf16.mxu0 0
        %2721 = vmatpush1.bf16.msra.mxu0 0
        %2722 = vmatprep.subr.bf16.mxu0 0
        %2723 = vmatpush1.bf16.msra.mxu0 0
        %2724 = vmatprep.subr.bf16.mxu0 0
        %2725 = vmatpush1.bf16.msra.mxu0 0
        %2726 = vmatprep.subr.bf16.mxu0 0
        %2727 = vmatpush1.bf16.msra.mxu0 0
        %2728 = vmatprep.subr.bf16.mxu0 0
        %2729 = vmatpush1.bf16.msra.mxu0 0
        %2730 = vmatprep.subr.bf16.mxu0 0
        %2731 = vmatpush1.bf16.msra.mxu0 0
        %2732 = vmatprep.subr.bf16.mxu0 0
        %2733 = vmatpush1.bf16.msra.mxu0 0
        %2734 = vmatprep.subr.bf16.mxu0 0
        %2735 = vmatpush1.bf16.msra.mxu0 0
        %2736 = vmatprep.subr.bf16.mxu0 0
        %2737 = vmatpush1.bf16.msra.mxu0 0
        %2738 = vmatprep.subr.bf16.mxu0 0
        %2739 = vmatpush1.bf16.msra.mxu0 0
        %2740 = vmatprep.subr.bf16.mxu0 0
        %2741 = vmatpush1.bf16.msra.mxu0 0
        %2742 = vmatprep.subr.bf16.mxu0 0
        %2743 = vmatpush1.bf16.msra.mxu0 0
        %2744 = vmatprep.subr.bf16.mxu0 0
        %2745 = vmatpush1.bf16.msra.mxu0 0
        %2746 = vmatprep.subr.bf16.mxu0 0
        %2747 = vmatpush1.bf16.msra.mxu0 0
        %2748 = vmatprep.subr.bf16.mxu0 0
        %2749 = vmatpush1.bf16.msra.mxu0 0
        %2750 = vmatprep.mubr.bf16.mxu0 0
        %2751 = vmatmul.mubr.bf16.gmra.mrb[0].mxu0 %v2716
        %v2752 = vpop.f32.mrb[0].mxu0
        %v2753 = vadd.f32 0.0, %v2752
        %v2754 = vpop.f32.mrb[0].mxu0
        %v2755 = vpop.f32.mrb[0].mxu0
        %v2756 = vadd.f32 0.0, %v2755
        %v2757 = vpop.f32.mrb[0].mxu0
        %2758 = vdwg.mxu0
        %2759 = vrot.lane.b32.xlu0 %v2397, 32
        %v2760 = vpop.permute.xlu0 %2759
        %2761 = vrot.lane.b32.xlu0 %v2398, 32
        %v2762 = vpop.permute.xlu0 %2761
        %v2764 = vsel %vm1096, %v2760, 0
        %v2767 = vsel %vm1096, %v2762, 0
        %2769 = vmatprep.subr.bf16.mxu0 0
        %2770 = vmatpush1.bf16.xpose.msra.mxu0 %v2767
        %2771 = vmatprep.subr.bf16.mxu0 0
        %2772 = vmatpush1.bf16.xpose.msra.mxu0 0
        %2773 = vmatprep.subr.bf16.mxu0 0
        %2774 = vmatpush1.bf16.xpose.msra.mxu0 0
        %2775 = vmatprep.subr.bf16.mxu0 0
        %2776 = vmatpush1.bf16.xpose.msra.mxu0 0
        %2777 = vmatprep.subr.bf16.mxu0 0
        %2778 = vmatpush1.bf16.xpose.msra.mxu0 0
        %2779 = vmatprep.subr.bf16.mxu0 0
        %2780 = vmatpush1.bf16.xpose.msra.mxu0 0
        %2781 = vmatprep.subr.bf16.mxu0 0
        %2782 = vmatpush1.bf16.xpose.msra.mxu0 0
        %2783 = vmatprep.subr.bf16.mxu0 0
        %2784 = vmatpush1.bf16.xpose.msra.mxu0 0
        %2785 = vmatprep.subr.bf16.mxu0 0
        %2786 = vmatpush1.bf16.xpose.msra.mxu0 0
        %2787 = vmatprep.subr.bf16.mxu0 0
        %2788 = vmatpush1.bf16.xpose.msra.mxu0 0
        %2789 = vmatprep.subr.bf16.mxu0 0
        %2790 = vmatpush1.bf16.xpose.msra.mxu0 0
        %2791 = vmatprep.subr.bf16.mxu0 0
        %2792 = vmatpush1.bf16.xpose.msra.mxu0 0
        %2793 = vmatprep.subr.bf16.mxu0 0
        %2794 = vmatpush1.bf16.xpose.msra.mxu0 0
        %2795 = vmatprep.subr.bf16.mxu0 0
        %2796 = vmatpush1.bf16.xpose.msra.mxu0 0
        %2797 = vmatprep.subr.bf16.mxu0 0
        %2798 = vmatpush1.bf16.xpose.msra.mxu0 0
        %2799 = vmatprep.subr.bf16.mxu0 0
        %2800 = vmatpush1.bf16.xpose.msra.mxu0 0
        %2801 = vmatprep.mubr.bf16.mxu0 0
        %2802 = vmatmul.mubr.bf16.gmra.mrb[0].mxu0 %v2764
        %v2803 = vpop.f32.mrb[0].mxu0
        %v2804 = vadd.f32 0.0, %v2803
        %v2805 = vpop.f32.mrb[0].mxu0
        %v2806 = vpop.f32.mrb[0].mxu0
        %v2807 = vadd.f32 0.0, %v2806
        %v2808 = vpop.f32.mrb[0].mxu0
        %2809 = vdwg.mxu0
        %v2810 = vsel %vm1144, %v2804, -inf
        %2811 = vmax.xlane.f32.xlu0 %v2810
        %v2812 = vpop.xlane.xlu0 %2811
        %v2813 = vsel %vm1144, %v2807, -inf
        %2814 = vmax.xlane.f32.xlu0 %v2813
        %v2815 = vpop.xlane.xlu0 %2814
        %v2816 = vsub.f32 %v2804, %v2812
        %v2817 = vsub.f32 %v2807, %v2815
        %v2818 = vmul.f32 %v2816, 1.442695
        %v2819 = vpow.pop %v2818
        %v2820 = vmul.f32 %v2817, 1.442695
        %v2821 = vpow.pop %v2820
        %v2822 = vsel %vm1144, %v2819, 0.0
        %2823 = vadd.xlane.f32.xlu0 %v2822
        %v2824 = vpop.xlane.xlu0 %2823
        %v2825 = vsel %vm1144, %v2821, 0.0
        %2826 = vadd.xlane.f32.xlu0 %v2825
        %v2827 = vpop.xlane.xlu0 %2826
        %v2828 = vrcp.pop %v2824
        %v2829 = vrcp.pop %v2827
        %v2830 = vmul.f32 %v2819, %v2828
        %v2831 = vmul.f32 %v2821, %v2829
        %v2832 = vpack.c.bf16 %v2831, %v2830
        %2833 = vrot.lane.b32.xlu0 %v2399, 32
        %v2834 = vpop.permute.xlu0 %2833
        %v2837 = vsel %vm1144, %v2832, 0
        %2839 = vmatprep.subr.bf16.mxu0 0
        %2840 = vmatpush1.bf16.msra.mxu0 %v2834
        %2841 = vmatprep.subr.bf16.mxu0 0
        %2842 = vmatpush1.bf16.msra.mxu0 0
        %2843 = vmatprep.subr.bf16.mxu0 0
        %2844 = vmatpush1.bf16.msra.mxu0 0
        %2845 = vmatprep.subr.bf16.mxu0 0
        %2846 = vmatpush1.bf16.msra.mxu0 0
        %2847 = vmatprep.subr.bf16.mxu0 0
        %2848 = vmatpush1.bf16.msra.mxu0 0
        %2849 = vmatprep.subr.bf16.mxu0 0
        %2850 = vmatpush1.bf16.msra.mxu0 0
        %2851 = vmatprep.subr.bf16.mxu0 0
        %2852 = vmatpush1.bf16.msra.mxu0 0
        %2853 = vmatprep.subr.bf16.mxu0 0
        %2854 = vmatpush1.bf16.msra.mxu0 0
        %2855 = vmatprep.subr.bf16.mxu0 0
        %2856 = vmatpush1.bf16.msra.mxu0 0
        %2857 = vmatprep.subr.bf16.mxu0 0
        %2858 = vmatpush1.bf16.msra.mxu0 0
        %2859 = vmatprep.subr.bf16.mxu0 0
        %2860 = vmatpush1.bf16.msra.mxu0 0
        %2861 = vmatprep.subr.bf16.mxu0 0
        %2862 = vmatpush1.bf16.msra.mxu0 0
        %2863 = vmatprep.subr.bf16.mxu0 0
        %2864 = vmatpush1.bf16.msra.mxu0 0
        %2865 = vmatprep.subr.bf16.mxu0 0
        %2866 = vmatpush1.bf16.msra.mxu0 0
        %2867 = vmatprep.subr.bf16.mxu0 0
        %2868 = vmatpush1.bf16.msra.mxu0 0
        %2869 = vmatprep.subr.bf16.mxu0 0
        %2870 = vmatpush1.bf16.msra.mxu0 0
        %2871 = vmatprep.mubr.bf16.mxu0 0
        %2872 = vmatmul.mubr.bf16.gmra.mrb[0].mxu0 %v2837
        %v2873 = vpop.f32.mrb[0].mxu0
        %v2874 = vadd.f32 0.0, %v2873
        %v2875 = vpop.f32.mrb[0].mxu0
        %v2876 = vpop.f32.mrb[0].mxu0
        %v2877 = vadd.f32 0.0, %v2876
        %v2878 = vpop.f32.mrb[0].mxu0
        %2879 = vdwg.mxu0
        %2882 = vrot.lane.b32.xlu0 %v2632, 32
        %v2883 = vpop.permute.xlu0 %2882
        %2884 = vrot.lane.b32.xlu0 %v2635, 32
        %v2885 = vpop.permute.xlu0 %2884
        %2890 = vrot.lane.b32.xlu0 %v2753, 64
        %v2891 = vpop.permute.xlu0 %2890
        %2892 = vrot.lane.b32.xlu0 %v2756, 64
        %v2893 = vpop.permute.xlu0 %2892
        %2898 = vrot.lane.b32.xlu0 %v2874, 96
        %v2899 = vpop.permute.xlu0 %2898
        %2900 = vrot.lane.b32.xlu0 %v2877, 96
        %v2901 = vpop.permute.xlu0 %2900
        %v2904 = vsel %vm1096, %v2508, %v2883
        %v2905 = vsel %vm1096, %v2511, %v2885
        %v2906 = vsel %vm1604, %v2904, %v2891
        %v2907 = vsel %vm1604, %v2905, %v2893
        %v2908 = vsel %vm1607, %v2906, %v2899
        %v2909 = vsel %vm1607, %v2907, %v2901
        %v2910 = vpack.c.bf16 %v2909, %v2908
        %v2911 = vlaneseq
        %v2912 = vshrl.u32 %v2911, 7
        %v2913 = vsub.s32 3, %v2912
        %v2914 = vrot.slane %v2160, %v2913
        %v2931 = vunpack.c.l.b16 %v2093
        %v2932 = vunpack.c.l.b16 %v2094
        %v2933 = vunpack.c.l.b16 %v2095
        %v2934 = vunpack.c.l.b16 %v2096
        %v2935 = vunpack.c.l.b16 %v2097
        %v2936 = vunpack.c.l.b16 %v2098
        %v2937 = vunpack.c.l.b16 %v2099
        %v2938 = vunpack.c.l.b16 %v2100
        %v2939 = vunpack.c.l.b16 %v2101
        %v2940 = vunpack.c.l.b16 %v2102
        %v2941 = vunpack.c.l.b16 %v2103
        %v2942 = vunpack.c.l.b16 %v2104
        %v2943 = vunpack.c.l.b16 %v2105
        %v2944 = vunpack.c.l.b16 %v2106
        %v2945 = vunpack.c.l.b16 %v2107
        %v2946 = vunpack.c.l.b16 %v2108
        %v2947 = vpack.c.b16 %v2932, %v2931
        %v2948 = vpack.c.b16 %v2934, %v2933
        %v2949 = vpack.c.b16 %v2936, %v2935
        %v2950 = vpack.c.b16 %v2938, %v2937
        %v2951 = vpack.c.b16 %v2940, %v2939
        %v2952 = vpack.c.b16 %v2942, %v2941
        %v2953 = vpack.c.b16 %v2944, %v2943
        %v2954 = vpack.c.b16 %v2946, %v2945
        %2963 = vmatprep.subr.bf16.mxu0 0
        %2964 = vmatpush1.bf16.msra.mxu0 %v2947
        %2965 = vmatprep.subr.bf16.mxu0 0
        %2966 = vmatpush1.bf16.msra.mxu0 %v2948
        %2967 = vmatprep.subr.bf16.mxu0 0
        %2968 = vmatpush1.bf16.msra.mxu0 %v2949
        %2969 = vmatprep.subr.bf16.mxu0 0
        %2970 = vmatpush1.bf16.msra.mxu0 %v2950
        %2971 = vmatprep.subr.bf16.mxu0 0
        %2972 = vmatpush1.bf16.msra.mxu0 %v2951
        %2973 = vmatprep.subr.bf16.mxu0 0
        %2974 = vmatpush1.bf16.msra.mxu0 %v2952
        %2975 = vmatprep.subr.bf16.mxu0 0
        %2976 = vmatpush1.bf16.msra.mxu0 %v2953
        %2977 = vmatprep.subr.bf16.mxu0 0
        %2978 = vmatpush1.bf16.msra.mxu0 %v2954
        %2979 = vmatprep.subr.bf16.mxu0 0
        %2980 = vmatpush1.bf16.msra.mxu0 0
        %2981 = vmatprep.subr.bf16.mxu0 0
        %2982 = vmatpush1.bf16.msra.mxu0 0
        %2983 = vmatprep.subr.bf16.mxu0 0
        %2984 = vmatpush1.bf16.msra.mxu0 0
        %2985 = vmatprep.subr.bf16.mxu0 0
        %2986 = vmatpush1.bf16.msra.mxu0 0
        %2987 = vmatprep.subr.bf16.mxu0 0
        %2988 = vmatpush1.bf16.msra.mxu0 0
        %2989 = vmatprep.subr.bf16.mxu0 0
        %2990 = vmatpush1.bf16.msra.mxu0 0
        %2991 = vmatprep.subr.bf16.mxu0 0
        %2992 = vmatpush1.bf16.msra.mxu0 0
        %2993 = vmatprep.subr.bf16.mxu0 0
        %2994 = vmatpush1.bf16.msra.mxu0 0
        %2995 = vmatprep.mubr.bf16.mxu0 0
        %2996 = vmatmul.mubr.bf16.gmra.mrb[0].mxu0 %v2910
        %v2997 = vpop.f32.mrb[0].mxu0
        %v2998 = vadd.f32 %v2914, %v2997
        %v2999 = vpop.f32.mrb[0].mxu0
        %v3000 = vpop.f32.mrb[0].mxu0
        %v3001 = vadd.f32 %v2914, %v3000
        %v3002 = vpop.f32.mrb[0].mxu0
        %3003 = vdwg.mxu0
        %v3004 = vadd.f32 %v2057, %v2998
        %v3005 = vadd.f32 %v2058, %v3001
        %3006 = vadd.xlane.f32.xlu0 %v3004
        %v3007 = vpop.xlane.xlu0 %3006
        %3008 = vadd.xlane.f32.xlu0 %v3005
        %v3009 = vpop.xlane.xlu0 %3008
        %v3010 = vmul.f32 %v3007, %v1710
        %v3011 = vmul.f32 %v3009, %v1710
        %v3012 = vsub.f32 %v3004, %v3010
        %v3013 = vsub.f32 %v3005, %v3011
        %v3014 = vmul.f32 %v3012, %v3012
        %v3015 = vmul.f32 %v3013, %v3013
        %3016 = vadd.xlane.f32.xlu0 %v3014
        %v3017 = vpop.xlane.xlu0 %3016
        %3018 = vadd.xlane.f32.xlu0 %v3015
        %v3019 = vpop.xlane.xlu0 %3018
        %v3020 = vmul.f32 %v3017, %v1710
        %v3021 = vmul.f32 %v3019, %v1710
        %v3022 = vadd.f32 %v3020, 1e-05
        %v3023 = vadd.f32 %v3021, 1e-05
        %v3024 = vrsqrt.pop %v3022
        %v3025 = vrsqrt.pop %v3023
        %v3026 = vmul.f32 %v3012, %v3024
        %v3027 = vmul.f32 %v3013, %v3025
        %v3028 = vlaneseq
        %v3029 = vshrl.u32 %v3028, 7
        %v3030 = vsub.s32 5, %v3029
        %v3031 = vrot.slane %v2160, %v3030
        %v3032 = vmul.f32 %v3026, %v3031
        %v3033 = vmul.f32 %v3027, %v3031
        %v3034 = vlaneseq
        %v3035 = vshrl.u32 %v3034, 7
        %v3036 = vsub.s32 6, %v3035
        %v3037 = vrot.slane %v2160, %v3036
        %v3038 = vadd.f32 %v3032, %v3037
        %v3039 = vadd.f32 %v3033, %v3037
        %v3040 = vpack.c.bf16 %v3039, %v3038
        %v3042 = vlaneseq
        %v3043 = vshrl.u32 %v3042, 7
        %v3044 = vsub.s32 0, %v3043
        %v3045 = vrot.slane %v2163, %v3044
        %v3046 = vlaneseq
        %v3047 = vshrl.u32 %v3046, 7
        %v3048 = vsub.s32 1, %v3047
        %v3049 = vrot.slane %v2163, %v3048
        %v3068 = vunpack.c.l.b16 %v2110
        %v3069 = vunpack.c.h.b16 %v2110
        %v3070 = vunpack.c.l.b16 %v2111
        %v3071 = vunpack.c.h.b16 %v2111
        %v3072 = vunpack.c.l.b16 %v2112
        %v3073 = vunpack.c.h.b16 %v2112
        %v3074 = vunpack.c.l.b16 %v2113
        %v3075 = vunpack.c.h.b16 %v2113
        %v3076 = vunpack.c.l.b16 %v2114
        %v3077 = vunpack.c.h.b16 %v2114
        %v3078 = vunpack.c.l.b16 %v2115
        %v3079 = vunpack.c.h.b16 %v2115
        %v3080 = vunpack.c.l.b16 %v2116
        %v3081 = vunpack.c.h.b16 %v2116
        %v3082 = vunpack.c.l.b16 %v2117
        %v3083 = vunpack.c.h.b16 %v2117
        %v3084 = vunpack.c.l.b16 %v2118
        %v3085 = vunpack.c.h.b16 %v2118
        %v3086 = vunpack.c.l.b16 %v2119
        %v3087 = vunpack.c.h.b16 %v2119
        %v3088 = vunpack.c.l.b16 %v2120
        %v3089 = vunpack.c.h.b16 %v2120
        %v3090 = vunpack.c.l.b16 %v2121
        %v3091 = vunpack.c.h.b16 %v2121
        %v3092 = vunpack.c.l.b16 %v2122
        %v3093 = vunpack.c.h.b16 %v2122
        %v3094 = vunpack.c.l.b16 %v2123
        %v3095 = vunpack.c.h.b16 %v2123
        %v3096 = vunpack.c.l.b16 %v2124
        %v3097 = vunpack.c.h.b16 %v2124
        %v3098 = vunpack.c.l.b16 %v2125
        %v3099 = vunpack.c.h.b16 %v2125
        %v3100 = vpack.c.b16 %v3070, %v3068
        %v3101 = vpack.c.b16 %v3071, %v3069
        %v3102 = vpack.c.b16 %v3074, %v3072
        %v3103 = vpack.c.b16 %v3075, %v3073
        %v3104 = vpack.c.b16 %v3078, %v3076
        %v3105 = vpack.c.b16 %v3079, %v3077
        %v3106 = vpack.c.b16 %v3082, %v3080
        %v3107 = vpack.c.b16 %v3083, %v3081
        %v3108 = vpack.c.b16 %v3086, %v3084
        %v3109 = vpack.c.b16 %v3087, %v3085
        %v3110 = vpack.c.b16 %v3090, %v3088
        %v3111 = vpack.c.b16 %v3091, %v3089
        %v3112 = vpack.c.b16 %v3094, %v3092
        %v3113 = vpack.c.b16 %v3095, %v3093
        %v3114 = vpack.c.b16 %v3098, %v3096
        %v3115 = vpack.c.b16 %v3099, %v3097
        %3132 = vmatprep.subr.bf16.mxu0 %v3101
        %3133 = vmatpush1.bf16.msra.mxu0 %v3100
        %3134 = vmatprep.subr.bf16.mxu0 %v3103
        %3135 = vmatpush1.bf16.msra.mxu0 %v3102
        %3136 = vmatprep.subr.bf16.mxu0 %v3105
        %3137 = vmatpush1.bf16.msra.mxu0 %v3104
        %3138 = vmatprep.subr.bf16.mxu0 %v3107
        %3139 = vmatpush1.bf16.msra.mxu0 %v3106
        %3140 = vmatprep.subr.bf16.mxu0 %v3109
        %3141 = vmatpush1.bf16.msra.mxu0 %v3108
        %3142 = vmatprep.subr.bf16.mxu0 %v3111
        %3143 = vmatpush1.bf16.msra.mxu0 %v3110
        %3144 = vmatprep.subr.bf16.mxu0 %v3113
        %3145 = vmatpush1.bf16.msra.mxu0 %v3112
        %3146 = vmatprep.subr.bf16.mxu0 %v3115
        %3147 = vmatpush1.bf16.msra.mxu0 %v3114
        %3148 = vmatprep.subr.bf16.mxu0 0
        %3149 = vmatpush1.bf16.msra.mxu0 0
        %3150 = vmatprep.subr.bf16.mxu0 0
        %3151 = vmatpush1.bf16.msra.mxu0 0
        %3152 = vmatprep.subr.bf16.mxu0 0
        %3153 = vmatpush1.bf16.msra.mxu0 0
        %3154 = vmatprep.subr.bf16.mxu0 0
        %3155 = vmatpush1.bf16.msra.mxu0 0
        %3156 = vmatprep.subr.bf16.mxu0 0
        %3157 = vmatpush1.bf16.msra.mxu0 0
        %3158 = vmatprep.subr.bf16.mxu0 0
        %3159 = vmatpush1.bf16.msra.mxu0 0
        %3160 = vmatprep.subr.bf16.mxu0 0
        %3161 = vmatpush1.bf16.msra.mxu0 0
        %3162 = vmatprep.subr.bf16.mxu0 0
        %3163 = vmatpush1.bf16.msra.mxu0 0
        %3164 = vmatprep.mubr.bf16.mxu0 0
        %3165 = vmatmul.mubr.bf16.gmra.mrb[0].mxu0 %v3040
        %v3166 = vpop.f32.mrb[0].mxu0
        %v3167 = vadd.f32 %v3045, %v3166
        %v3168 = vpop.f32.mrb[0].mxu0
        %v3169 = vadd.f32 %v3049, %v3168
        %v3170 = vpop.f32.mrb[0].mxu0
        %v3171 = vadd.f32 %v3045, %v3170
        %v3172 = vpop.f32.mrb[0].mxu0
        %v3173 = vadd.f32 %v3049, %v3172
        %3174 = vdwg.mxu0
        %v3175 = vmax.f32 %v3167, 0.0
        %v3176 = vmax.f32 %v3169, 0.0
        %v3177 = vmax.f32 %v3171, 0.0
        %v3178 = vmax.f32 %v3173, 0.0
        %v3179 = vpack.c.bf16 %v3177, %v3175
        %v3180 = vpack.c.bf16 %v3178, %v3176
        %v3181 = vlaneseq
        %v3182 = vshrl.u32 %v3181, 7
        %v3183 = vsub.s32 4, %v3182
        %v3184 = vrot.slane %v2160, %v3183
        %v3217 = vunpack.c.l.b16 %v2127
        %v3218 = vunpack.c.l.b16 %v2128
        %v3219 = vunpack.c.l.b16 %v2129
        %v3220 = vunpack.c.l.b16 %v2130
        %v3221 = vunpack.c.l.b16 %v2131
        %v3222 = vunpack.c.l.b16 %v2132
        %v3223 = vunpack.c.l.b16 %v2133
        %v3224 = vunpack.c.l.b16 %v2134
        %v3225 = vunpack.c.l.b16 %v2135
        %v3226 = vunpack.c.l.b16 %v2136
        %v3227 = vunpack.c.l.b16 %v2137
        %v3228 = vunpack.c.l.b16 %v2138
        %v3229 = vunpack.c.l.b16 %v2139
        %v3230 = vunpack.c.l.b16 %v2140
        %v3231 = vunpack.c.l.b16 %v2141
        %v3232 = vunpack.c.l.b16 %v2142
        %v3233 = vunpack.c.l.b16 %v2143
        %v3234 = vunpack.c.l.b16 %v2144
        %v3235 = vunpack.c.l.b16 %v2145
        %v3236 = vunpack.c.l.b16 %v2146
        %v3237 = vunpack.c.l.b16 %v2147
        %v3238 = vunpack.c.l.b16 %v2148
        %v3239 = vunpack.c.l.b16 %v2149
        %v3240 = vunpack.c.l.b16 %v2150
        %v3241 = vunpack.c.l.b16 %v2151
        %v3242 = vunpack.c.l.b16 %v2152
        %v3243 = vunpack.c.l.b16 %v2153
        %v3244 = vunpack.c.l.b16 %v2154
        %v3245 = vunpack.c.l.b16 %v2155
        %v3246 = vunpack.c.l.b16 %v2156
        %v3247 = vunpack.c.l.b16 %v2157
        %v3248 = vunpack.c.l.b16 %v2158
        %v3249 = vpack.c.b16 %v3218, %v3217
        %v3250 = vpack.c.b16 %v3220, %v3219
        %v3251 = vpack.c.b16 %v3222, %v3221
        %v3252 = vpack.c.b16 %v3224, %v3223
        %v3253 = vpack.c.b16 %v3226, %v3225
        %v3254 = vpack.c.b16 %v3228, %v3227
        %v3255 = vpack.c.b16 %v3230, %v3229
        %v3256 = vpack.c.b16 %v3232, %v3231
        %v3257 = vpack.c.b16 %v3234, %v3233
        %v3258 = vpack.c.b16 %v3236, %v3235
        %v3259 = vpack.c.b16 %v3238, %v3237
        %v3260 = vpack.c.b16 %v3240, %v3239
        %v3261 = vpack.c.b16 %v3242, %v3241
        %v3262 = vpack.c.b16 %v3244, %v3243
        %v3263 = vpack.c.b16 %v3246, %v3245
        %v3264 = vpack.c.b16 %v3248, %v3247
        %3281 = vmatprep.subr.bf16.mxu0 0
        %3282 = vmatpush1.bf16.msra.mxu0 %v3249
        %3283 = vmatprep.subr.bf16.mxu0 0
        %3284 = vmatpush1.bf16.msra.mxu0 %v3250
        %3285 = vmatprep.subr.bf16.mxu0 0
        %3286 = vmatpush1.bf16.msra.mxu0 %v3251
        %3287 = vmatprep.subr.bf16.mxu0 0
        %3288 = vmatpush1.bf16.msra.mxu0 %v3252
        %3289 = vmatprep.subr.bf16.mxu0 0
        %3290 = vmatpush1.bf16.msra.mxu0 %v3253
        %3291 = vmatprep.subr.bf16.mxu0 0
        %3292 = vmatpush1.bf16.msra.mxu0 %v3254
        %3293 = vmatprep.subr.bf16.mxu0 0
        %3294 = vmatpush1.bf16.msra.mxu0 %v3255
        %3295 = vmatprep.subr.bf16.mxu0 0
        %3296 = vmatpush1.bf16.msra.mxu0 %v3256
        %3297 = vmatprep.subr.bf16.mxu0 0
        %3298 = vmatpush1.bf16.msra.mxu0 %v3257
        %3299 = vmatprep.subr.bf16.mxu0 0
        %3300 = vmatpush1.bf16.msra.mxu0 %v3258
        %3301 = vmatprep.subr.bf16.mxu0 0
        %3302 = vmatpush1.bf16.msra.mxu0 %v3259
        %3303 = vmatprep.subr.bf16.mxu0 0
        %3304 = vmatpush1.bf16.msra.mxu0 %v3260
        %3305 = vmatprep.subr.bf16.mxu0 0
        %3306 = vmatpush1.bf16.msra.mxu0 %v3261
        %3307 = vmatprep.subr.bf16.mxu0 0
        %3308 = vmatpush1.bf16.msra.mxu0 %v3262
        %3309 = vmatprep.subr.bf16.mxu0 0
        %3310 = vmatpush1.bf16.msra.mxu0 %v3263
        %3311 = vmatprep.subr.bf16.mxu0 0
        %3312 = vmatpush1.bf16.msra.mxu0 %v3264
        %3313 = vmatprep.mubr.bf16.mxu0 %v3180
        %3314 = vmatmul.mubr.bf16.gmra.mrb[0].mxu0 %v3179
        %v3315 = vpop.f32.mrb[0].mxu0
        %v3316 = vadd.f32 %v3184, %v3315
        %v3317 = vpop.f32.mrb[0].mxu0
        %v3318 = vpop.f32.mrb[0].mxu0
        %v3319 = vadd.f32 %v3184, %v3318
        %v3320 = vpop.f32.mrb[0].mxu0
        %3321 = vdwg.mxu0
        %v3322 = vadd.f32 %v3038, %v3316
        %v3323 = vadd.f32 %v3039, %v3319
        %3324 = vadd.xlane.f32.xlu0 %v3322
        %v3325 = vpop.xlane.xlu0 %3324
        %3326 = vadd.xlane.f32.xlu0 %v3323
        %v3327 = vpop.xlane.xlu0 %3326
        %v3328 = vmul.f32 %v3325, %v1710
        %v3329 = vmul.f32 %v3327, %v1710
        %v3330 = vsub.f32 %v3322, %v3328
        %v3331 = vsub.f32 %v3323, %v3329
        %v3332 = vmul.f32 %v3330, %v3330
        %v3333 = vmul.f32 %v3331, %v3331
        %3334 = vadd.xlane.f32.xlu0 %v3332
        %v3335 = vpop.xlane.xlu0 %3334
        %3336 = vadd.xlane.f32.xlu0 %v3333
        %v3337 = vpop.xlane.xlu0 %3336
        %v3338 = vmul.f32 %v3335, %v1710
        %v3339 = vmul.f32 %v3337, %v1710
        %v3340 = vadd.f32 %v3338, 1e-05
        %v3341 = vadd.f32 %v3339, 1e-05
        %v3342 = vrsqrt.pop %v3340
        %v3343 = vrsqrt.pop %v3341
        %v3344 = vmul.f32 %v3330, %v3342
        %v3345 = vmul.f32 %v3331, %v3343
        %v3346 = vlaneseq
        %v3347 = vshrl.u32 %v3346, 7
        %v3348 = vsub.s32 7, %v3347
        %v3349 = vrot.slane %v2160, %v3348
        %v3350 = vmul.f32 %v3344, %v3349
        %v3351 = vmul.f32 %v3345, %v3349
        %v3352 = vlaneseq
        %v3353 = vshrl.u32 %v3352, 7
        %v3354 = vsub.s32 0, %v3353
        %v3355 = vrot.slane %v2161, %v3354
        %v3356 = vadd.f32 %v3350, %v3355
        %v3357 = vadd.f32 %v3351, %v3355
        %v3358 = vpack.c.bf16 %v3357, %v3356
        %v3359 = vld [vmem:[%s748] sm:$0xff]
        %v3360 = vld [vmem:[%s748 + $0x8] sm:$0xff]
        %v3361 = vld [vmem:[#allocation8] sm:$0xff]
        %v3362 = vld [vmem:[#allocation8 + $0x8] sm:$0xf]
        %v3363 = vld [vmem:[#allocation8 + $0xc] sm:$0xff]
        %v3364 = vld [vmem:[#allocation8 + $0x14] sm:$0xf]
        %v3365 = vld [vmem:[#allocation8 + $0x18] sm:$0xff]
        %v3366 = vld [vmem:[#allocation8 + $0x20] sm:$0xf]
        %v3367 = vld [vmem:[#allocation8 + $0x24] sm:$0xff]
        %v3368 = vld [vmem:[#allocation8 + $0x2c] sm:$0xf]
        %v3369 = vld [vmem:[#allocation8 + $0x30] sm:$0xff]
        %v3370 = vld [vmem:[#allocation8 + $0x38] sm:$0xf]
        %v3371 = vld [vmem:[#allocation8 + $0x3c] sm:$0xff]
        %v3372 = vld [vmem:[#allocation8 + $0x44] sm:$0xf]
        %v3373 = vld [vmem:[#allocation8 + $0x48] sm:$0xff]
        %v3374 = vld [vmem:[#allocation8 + $0x50] sm:$0xf]
        %v3375 = vld [vmem:[#allocation8 + $0x54] sm:$0xff]
        %v3376 = vld [vmem:[#allocation8 + $0x5c] sm:$0xf]
        %v3377 = vld [vmem:[#allocation8 + $0x60] sm:$0xff]
        %v3378 = vld [vmem:[#allocation8 + $0x68] sm:$0xf]
        %v3379 = vld [vmem:[#allocation8 + $0x6c] sm:$0xff]
        %v3380 = vld [vmem:[#allocation8 + $0x74] sm:$0xf]
        %v3381 = vld [vmem:[#allocation8 + $0x78] sm:$0xff]
        %v3382 = vld [vmem:[#allocation8 + $0x80] sm:$0xf]
        %v3383 = vld [vmem:[#allocation8 + $0x84] sm:$0xff]
        %v3384 = vld [vmem:[#allocation8 + $0x8c] sm:$0xf]
        %v3385 = vld [vmem:[#allocation8 + $0x90] sm:$0xff]
        %v3386 = vld [vmem:[#allocation8 + $0x98] sm:$0xf]
        %v3387 = vld [vmem:[#allocation8 + $0x9c] sm:$0xff]
        %v3388 = vld [vmem:[#allocation8 + $0xa4] sm:$0xf]
        %v3389 = vld [vmem:[#allocation8 + $0xa8] sm:$0xff]
        %v3390 = vld [vmem:[#allocation8 + $0xb0] sm:$0xf]
        %v3391 = vld [vmem:[#allocation8 + $0xb4] sm:$0xff]
        %v3392 = vld [vmem:[#allocation8 + $0xbc] sm:$0xf]
        %v3393 = vld [vmem:[#allocation10] sm:$0xf]
        %v3394 = vld [vmem:[#allocation10 + $0x4] sm:$0xf]
        %v3395 = vld [vmem:[#allocation10 + $0x8] sm:$0xf]
        %v3396 = vld [vmem:[#allocation10 + $0xc] sm:$0xf]
        %v3397 = vld [vmem:[#allocation10 + $0x10] sm:$0xf]
        %v3398 = vld [vmem:[#allocation10 + $0x14] sm:$0xf]
        %v3399 = vld [vmem:[#allocation10 + $0x18] sm:$0xf]
        %v3400 = vld [vmem:[#allocation10 + $0x1c] sm:$0xf]
        %v3401 = vld [vmem:[#allocation10 + $0x20] sm:$0xf]
        %v3402 = vld [vmem:[#allocation10 + $0x24] sm:$0xf]
        %v3403 = vld [vmem:[#allocation10 + $0x28] sm:$0xf]
        %v3404 = vld [vmem:[#allocation10 + $0x2c] sm:$0xf]
        %v3405 = vld [vmem:[#allocation10 + $0x30] sm:$0xf]
        %v3406 = vld [vmem:[#allocation10 + $0x34] sm:$0xf]
        %v3407 = vld [vmem:[#allocation10 + $0x38] sm:$0xf]
        %v3408 = vld [vmem:[#allocation10 + $0x3c] sm:$0xf]
        %v3409 = vld [vmem:[#allocation11] sm:$0xf]
        %v3410 = vld [vmem:[#allocation11 + $0x4] sm:$0xf]
        %v3411 = vld [vmem:[#allocation11 + $0x8] sm:$0xf]
        %v3412 = vld [vmem:[#allocation11 + $0xc] sm:$0xf]
        %v3413 = vld [vmem:[#allocation11 + $0x10] sm:$0xf]
        %v3414 = vld [vmem:[#allocation11 + $0x14] sm:$0xf]
        %v3415 = vld [vmem:[#allocation11 + $0x18] sm:$0xf]
        %v3416 = vld [vmem:[#allocation11 + $0x1c] sm:$0xf]
        %v3417 = vld [vmem:[#allocation11 + $0x20] sm:$0xf]
        %v3418 = vld [vmem:[#allocation11 + $0x24] sm:$0xf]
        %v3419 = vld [vmem:[#allocation11 + $0x28] sm:$0xf]
        %v3420 = vld [vmem:[#allocation11 + $0x2c] sm:$0xf]
        %v3421 = vld [vmem:[#allocation11 + $0x30] sm:$0xf]
        %v3422 = vld [vmem:[#allocation11 + $0x34] sm:$0xf]
        %v3423 = vld [vmem:[#allocation11 + $0x38] sm:$0xf]
        %v3424 = vld [vmem:[#allocation11 + $0x3c] sm:$0xf]
        %v3425 = vld [vmem:[#allocation13] sm:$0xff]
        %v3426 = vld [vmem:[#allocation13 + $0x8] sm:$0xff]
        %v3427 = vld [vmem:[#allocation13 + $0x10] sm:$0xff]
        %v3428 = vld [vmem:[#allocation13 + $0x18] sm:$0xff]
        %v3429 = vld [vmem:[#allocation13 + $0x20] sm:$0xff]
        %v3430 = vld [vmem:[#allocation13 + $0x28] sm:$0xff]
        %v3431 = vld [vmem:[#allocation13 + $0x30] sm:$0xff]
        %v3432 = vld [vmem:[#allocation13 + $0x38] sm:$0xff]
        %v3433 = vld [vmem:[#allocation13 + $0x40] sm:$0xff]
        %v3434 = vld [vmem:[#allocation13 + $0x48] sm:$0xff]
        %v3435 = vld [vmem:[#allocation13 + $0x50] sm:$0xff]
        %v3436 = vld [vmem:[#allocation13 + $0x58] sm:$0xff]
        %v3437 = vld [vmem:[#allocation13 + $0x60] sm:$0xff]
        %v3438 = vld [vmem:[#allocation13 + $0x68] sm:$0xff]
        %v3439 = vld [vmem:[#allocation13 + $0x70] sm:$0xff]
        %v3440 = vld [vmem:[#allocation13 + $0x78] sm:$0xff]
        %v3441 = vld [vmem:[#allocation14] sm:$0xf]
        %v3442 = vld [vmem:[#allocation14 + $0x4] sm:$0xf]
        %v3443 = vld [vmem:[#allocation14 + $0x8] sm:$0xf]
        %v3444 = vld [vmem:[#allocation14 + $0xc] sm:$0xf]
        %v3445 = vld [vmem:[#allocation14 + $0x10] sm:$0xf]
        %v3446 = vld [vmem:[#allocation14 + $0x14] sm:$0xf]
        %v3447 = vld [vmem:[#allocation14 + $0x18] sm:$0xf]
        %v3448 = vld [vmem:[#allocation14 + $0x1c] sm:$0xf]
        %v3449 = vld [vmem:[#allocation14 + $0x20] sm:$0xf]
        %v3450 = vld [vmem:[#allocation14 + $0x24] sm:$0xf]
        %v3451 = vld [vmem:[#allocation14 + $0x28] sm:$0xf]
        %v3452 = vld [vmem:[#allocation14 + $0x2c] sm:$0xf]
        %v3453 = vld [vmem:[#allocation14 + $0x30] sm:$0xf]
        %v3454 = vld [vmem:[#allocation14 + $0x34] sm:$0xf]
        %v3455 = vld [vmem:[#allocation14 + $0x38] sm:$0xf]
        %v3456 = vld [vmem:[#allocation14 + $0x3c] sm:$0xf]
        %v3457 = vld [vmem:[#allocation16] sm:$0xff]
        %v3458 = vld [vmem:[#allocation16 + $0x8] sm:$0xff]
        %v3459 = vld [vmem:[#allocation16 + $0x10] sm:$0xff]
        %v3460 = vld [vmem:[#allocation16 + $0x18] sm:$0xff]
        %v3461 = vld [vmem:[#allocation16 + $0x20] sm:$0xff]
        %v3462 = vld [vmem:[#allocation16 + $0x28] sm:$0xff]
        %v3463 = vld [vmem:[#allocation16 + $0x30] sm:$0xff]
        %v3464 = vld [vmem:[#allocation16 + $0x38] sm:$0xff]
        %v3465 = vld [vmem:[#allocation16 + $0x40] sm:$0xff]
        %v3466 = vld [vmem:[#allocation16 + $0x48] sm:$0xff]
        %v3467 = vld [vmem:[#allocation16 + $0x50] sm:$0xff]
        %v3468 = vld [vmem:[#allocation16 + $0x58] sm:$0xff]
        %v3469 = vld [vmem:[#allocation16 + $0x60] sm:$0xff]
        %v3470 = vld [vmem:[#allocation16 + $0x68] sm:$0xff]
        %v3471 = vld [vmem:[#allocation16 + $0x70] sm:$0xff]
        %v3472 = vld [vmem:[#allocation16 + $0x78] sm:$0xff]
        %v3473 = vld [vmem:[#allocation17] sm:$0xf]
        %v3474 = vld [vmem:[#allocation17 + $0x4] sm:$0xf]
        %v3475 = vld [vmem:[#allocation17 + $0x8] sm:$0xf]
        %v3476 = vld [vmem:[#allocation17 + $0xc] sm:$0xf]
        %v3477 = vld [vmem:[#allocation17 + $0x10] sm:$0xf]
        %v3478 = vld [vmem:[#allocation17 + $0x14] sm:$0xf]
        %v3479 = vld [vmem:[#allocation17 + $0x18] sm:$0xf]
        %v3480 = vld [vmem:[#allocation17 + $0x1c] sm:$0xf]
        %v3481 = vld [vmem:[#allocation17 + $0x20] sm:$0xf]
        %v3482 = vld [vmem:[#allocation17 + $0x24] sm:$0xf]
        %v3483 = vld [vmem:[#allocation17 + $0x28] sm:$0xf]
        %v3484 = vld [vmem:[#allocation17 + $0x2c] sm:$0xf]
        %v3485 = vld [vmem:[#allocation17 + $0x30] sm:$0xf]
        %v3486 = vld [vmem:[#allocation17 + $0x34] sm:$0xf]
        %v3487 = vld [vmem:[#allocation17 + $0x38] sm:$0xf]
        %v3488 = vld [vmem:[#allocation17 + $0x3c] sm:$0xf]
        %v3489 = vld [vmem:[#allocation17 + $0x40] sm:$0xf]
        %v3490 = vld [vmem:[#allocation17 + $0x44] sm:$0xf]
        %v3491 = vld [vmem:[#allocation17 + $0x48] sm:$0xf]
        %v3492 = vld [vmem:[#allocation17 + $0x4c] sm:$0xf]
        %v3493 = vld [vmem:[#allocation17 + $0x50] sm:$0xf]
        %v3494 = vld [vmem:[#allocation17 + $0x54] sm:$0xf]
        %v3495 = vld [vmem:[#allocation17 + $0x58] sm:$0xf]
        %v3496 = vld [vmem:[#allocation17 + $0x5c] sm:$0xf]
        %v3497 = vld [vmem:[#allocation17 + $0x60] sm:$0xf]
        %v3498 = vld [vmem:[#allocation17 + $0x64] sm:$0xf]
        %v3499 = vld [vmem:[#allocation17 + $0x68] sm:$0xf]
        %v3500 = vld [vmem:[#allocation17 + $0x6c] sm:$0xf]
        %v3501 = vld [vmem:[#allocation17 + $0x70] sm:$0xf]
        %v3502 = vld [vmem:[#allocation17 + $0x74] sm:$0xf]
        %v3503 = vld [vmem:[#allocation17 + $0x78] sm:$0xf]
        %v3504 = vld [vmem:[#allocation17 + $0x7c] sm:$0xf]
        %v3505 = vld [vmem:[%s16] sm:$0xff]
        %v3506 = vld [vmem:[%s16 + $0x8] sm:$0x7f]
        %v3507 = vld [vmem:[#allocation19] sm:$0x3]
        %v3508 = vpack.c.bf16 %v3360, %v3359
        %v3541 = vunpack.c.l.b16 %v3361
        %v3542 = vunpack.c.h.b16 %v3361
        %v3543 = vunpack.c.l.b16 %v3362
        %v3544 = vunpack.c.l.b16 %v3363
        %v3545 = vunpack.c.h.b16 %v3363
        %v3546 = vunpack.c.l.b16 %v3364
        %v3547 = vunpack.c.l.b16 %v3365
        %v3548 = vunpack.c.h.b16 %v3365
        %v3549 = vunpack.c.l.b16 %v3366
        %v3550 = vunpack.c.l.b16 %v3367
        %v3551 = vunpack.c.h.b16 %v3367
        %v3552 = vunpack.c.l.b16 %v3368
        %v3553 = vunpack.c.l.b16 %v3369
        %v3554 = vunpack.c.h.b16 %v3369
        %v3555 = vunpack.c.l.b16 %v3370
        %v3556 = vunpack.c.l.b16 %v3371
        %v3557 = vunpack.c.h.b16 %v3371
        %v3558 = vunpack.c.l.b16 %v3372
        %v3559 = vunpack.c.l.b16 %v3373
        %v3560 = vunpack.c.h.b16 %v3373
        %v3561 = vunpack.c.l.b16 %v3374
        %v3562 = vunpack.c.l.b16 %v3375
        %v3563 = vunpack.c.h.b16 %v3375
        %v3564 = vunpack.c.l.b16 %v3376
        %v3565 = vunpack.c.l.b16 %v3377
        %v3566 = vunpack.c.h.b16 %v3377
        %v3567 = vunpack.c.l.b16 %v3378
        %v3568 = vunpack.c.l.b16 %v3379
        %v3569 = vunpack.c.h.b16 %v3379
        %v3570 = vunpack.c.l.b16 %v3380
        %v3571 = vunpack.c.l.b16 %v3381
        %v3572 = vunpack.c.h.b16 %v3381
        %v3573 = vunpack.c.l.b16 %v3382
        %v3574 = vunpack.c.l.b16 %v3383
        %v3575 = vunpack.c.h.b16 %v3383
        %v3576 = vunpack.c.l.b16 %v3384
        %v3577 = vunpack.c.l.b16 %v3385
        %v3578 = vunpack.c.h.b16 %v3385
        %v3579 = vunpack.c.l.b16 %v3386
        %v3580 = vunpack.c.l.b16 %v3387
        %v3581 = vunpack.c.h.b16 %v3387
        %v3582 = vunpack.c.l.b16 %v3388
        %v3583 = vunpack.c.l.b16 %v3389
        %v3584 = vunpack.c.h.b16 %v3389
        %v3585 = vunpack.c.l.b16 %v3390
        %v3586 = vunpack.c.l.b16 %v3391
        %v3587 = vunpack.c.h.b16 %v3391
        %v3588 = vunpack.c.l.b16 %v3392
        %v3589 = vpack.c.b16 %v3544, %v3541
        %v3590 = vpack.c.b16 %v3545, %v3542
        %v3591 = vpack.c.b16 %v3546, %v3543
        %v3592 = vpack.c.b16 %v3550, %v3547
        %v3593 = vpack.c.b16 %v3551, %v3548
        %v3594 = vpack.c.b16 %v3552, %v3549
        %v3595 = vpack.c.b16 %v3556, %v3553
        %v3596 = vpack.c.b16 %v3557, %v3554
        %v3597 = vpack.c.b16 %v3558, %v3555
        %v3598 = vpack.c.b16 %v3562, %v3559
        %v3599 = vpack.c.b16 %v3563, %v3560
        %v3600 = vpack.c.b16 %v3564, %v3561
        %v3601 = vpack.c.b16 %v3568, %v3565
        %v3602 = vpack.c.b16 %v3569, %v3566
        %v3603 = vpack.c.b16 %v3570, %v3567
        %v3604 = vpack.c.b16 %v3574, %v3571
        %v3605 = vpack.c.b16 %v3575, %v3572
        %v3606 = vpack.c.b16 %v3576, %v3573
        %v3607 = vpack.c.b16 %v3580, %v3577
        %v3608 = vpack.c.b16 %v3581, %v3578
        %v3609 = vpack.c.b16 %v3582, %v3579
        %v3610 = vpack.c.b16 %v3586, %v3583
        %v3611 = vpack.c.b16 %v3587, %v3584
        %v3612 = vpack.c.b16 %v3588, %v3585
        %3637 = vmatprep.subr.bf16.mxu0 %v3590
        %3638 = vmatpush1.bf16.msra.mxu0 %v3589
        %3639 = vmatprep.subr.bf16.mxu0 %v3593
        %3640 = vmatpush1.bf16.msra.mxu0 %v3592
        %3641 = vmatprep.subr.bf16.mxu0 %v3596
        %3642 = vmatpush1.bf16.msra.mxu0 %v3595
        %3643 = vmatprep.subr.bf16.mxu0 %v3599
        %3644 = vmatpush1.bf16.msra.mxu0 %v3598
        %3645 = vmatprep.subr.bf16.mxu0 %v3602
        %3646 = vmatpush1.bf16.msra.mxu0 %v3601
        %3647 = vmatprep.subr.bf16.mxu0 %v3605
        %3648 = vmatpush1.bf16.msra.mxu0 %v3604
        %3649 = vmatprep.subr.bf16.mxu0 %v3608
        %3650 = vmatpush1.bf16.msra.mxu0 %v3607
        %3651 = vmatprep.subr.bf16.mxu0 %v3611
        %3652 = vmatpush1.bf16.msra.mxu0 %v3610
        %3653 = vmatprep.subr.bf16.mxu0 0
        %3654 = vmatpush1.bf16.msra.mxu0 0
        %3655 = vmatprep.subr.bf16.mxu0 0
        %3656 = vmatpush1.bf16.msra.mxu0 0
        %3657 = vmatprep.subr.bf16.mxu0 0
        %3658 = vmatpush1.bf16.msra.mxu0 0
        %3659 = vmatprep.subr.bf16.mxu0 0
        %3660 = vmatpush1.bf16.msra.mxu0 0
        %3661 = vmatprep.subr.bf16.mxu0 0
        %3662 = vmatpush1.bf16.msra.mxu0 0
        %3663 = vmatprep.subr.bf16.mxu0 0
        %3664 = vmatpush1.bf16.msra.mxu0 0
        %3665 = vmatprep.subr.bf16.mxu0 0
        %3666 = vmatpush1.bf16.msra.mxu0 0
        %3667 = vmatprep.subr.bf16.mxu0 0
        %3668 = vmatpush1.bf16.msra.mxu0 0
        %3669 = vmatprep.mubr.bf16.mxu0 0
        %3670 = vmatmul.mubr.bf16.gmra.mrb[0].mxu0 %v3508
        %v3671 = vpop.f32.mrb[0].mxu0
        %v3672 = vadd.f32 0.0, %v3671
        %v3673 = vpop.f32.mrb[0].mxu0
        %v3674 = vadd.f32 0.0, %v3673
        %v3675 = vpop.f32.mrb[0].mxu0
        %v3676 = vadd.f32 0.0, %v3675
        %v3677 = vpop.f32.mrb[0].mxu0
        %v3678 = vadd.f32 0.0, %v3677
        %3679 = vdwg.mxu0
        %3680 = vmatprep.subr.bf16.mxu0 0
        %3681 = vmatpush1.bf16.msra.mxu0 %v3591
        %3682 = vmatprep.subr.bf16.mxu0 0
        %3683 = vmatpush1.bf16.msra.mxu0 %v3594
        %3684 = vmatprep.subr.bf16.mxu0 0
        %3685 = vmatpush1.bf16.msra.mxu0 %v3597
        %3686 = vmatprep.subr.bf16.mxu0 0
        %3687 = vmatpush1.bf16.msra.mxu0 %v3600
        %3688 = vmatprep.subr.bf16.mxu0 0
        %3689 = vmatpush1.bf16.msra.mxu0 %v3603
        %3690 = vmatprep.subr.bf16.mxu0 0
        %3691 = vmatpush1.bf16.msra.mxu0 %v3606
        %3692 = vmatprep.subr.bf16.mxu0 0
        %3693 = vmatpush1.bf16.msra.mxu0 %v3609
        %3694 = vmatprep.subr.bf16.mxu0 0
        %3695 = vmatpush1.bf16.msra.mxu0 %v3612
        %3696 = vmatprep.subr.bf16.mxu0 0
        %3697 = vmatpush1.bf16.msra.mxu0 0
        %3698 = vmatprep.subr.bf16.mxu0 0
        %3699 = vmatpush1.bf16.msra.mxu0 0
        %3700 = vmatprep.subr.bf16.mxu0 0
        %3701 = vmatpush1.bf16.msra.mxu0 0
        %3702 = vmatprep.subr.bf16.mxu0 0
        %3703 = vmatpush1.bf16.msra.mxu0 0
        %3704 = vmatprep.subr.bf16.mxu0 0
        %3705 = vmatpush1.bf16.msra.mxu0 0
        %3706 = vmatprep.subr.bf16.mxu0 0
        %3707 = vmatpush1.bf16.msra.mxu0 0
        %3708 = vmatprep.subr.bf16.mxu0 0
        %3709 = vmatpush1.bf16.msra.mxu0 0
        %3710 = vmatprep.subr.bf16.mxu0 0
        %3711 = vmatpush1.bf16.msra.mxu0 0
        %3712 = vmatprep.mubr.bf16.mxu0 0
        %3713 = vmatmul.mubr.bf16.gmra.mrb[0].mxu0 %v3508
        %v3714 = vpop.f32.mrb[0].mxu0
        %v3715 = vadd.f32 0.0, %v3714
        %v3716 = vpop.f32.mrb[0].mxu0
        %v3717 = vpop.f32.mrb[0].mxu0
        %v3718 = vadd.f32 0.0, %v3717
        %v3719 = vpop.f32.mrb[0].mxu0
        %3720 = vdwg.mxu0
        %v3721 = vlaneseq
        %v3722 = vshrl.u32 %v3721, 7
        %v3723 = vsub.s32 0, %v3722
        %v3724 = vrot.slane %v3505, %v3723
        %v3725 = vadd.f32 %v3672, %v3724
        %v3726 = vadd.f32 %v3676, %v3724
        %v3727 = vlaneseq
        %v3728 = vshrl.u32 %v3727, 7
        %v3729 = vsub.s32 1, %v3728
        %v3730 = vrot.slane %v3505, %v3729
        %v3731 = vadd.f32 %v3674, %v3730
        %v3732 = vadd.f32 %v3678, %v3730
        %v3733 = vlaneseq
        %v3734 = vshrl.u32 %v3733, 7
        %v3735 = vsub.s32 2, %v3734
        %v3736 = vrot.slane %v3505, %v3735
        %v3737 = vadd.f32 %v3715, %v3736
        %v3738 = vadd.f32 %v3718, %v3736
        %v3739 = vmul.f32 %v3725, 0.17677669
        %v3740 = vmul.f32 %v3726, 0.17677669
        %v3741 = vpack.c.bf16 %v3740, %v3739
        %v3742 = vpack.c.bf16 %v3732, %v3731
        %v3743 = vpack.c.bf16 %v3738, %v3737
        %v3745 = vsel %vm1096, %v3741, 0
        %v3748 = vsel %vm1096, %v3742, 0
        %3750 = vmatprep.subr.bf16.mxu0 0
        %3751 = vmatpush1.bf16.xpose.msra.mxu0 %v3748
        %3752 = vmatprep.subr.bf16.mxu0 0
        %3753 = vmatpush1.bf16.xpose.msra.mxu0 0
        %3754 = vmatprep.subr.bf16.mxu0 0
        %3755 = vmatpush1.bf16.xpose.msra.mxu0 0
        %3756 = vmatprep.subr.bf16.mxu0 0
        %3757 = vmatpush1.bf16.xpose.msra.mxu0 0
        %3758 = vmatprep.subr.bf16.mxu0 0
        %3759 = vmatpush1.bf16.xpose.msra.mxu0 0
        %3760 = vmatprep.subr.bf16.mxu0 0
        %3761 = vmatpush1.bf16.xpose.msra.mxu0 0
        %3762 = vmatprep.subr.bf16.mxu0 0
        %3763 = vmatpush1.bf16.xpose.msra.mxu0 0
        %3764 = vmatprep.subr.bf16.mxu0 0
        %3765 = vmatpush1.bf16.xpose.msra.mxu0 0
        %3766 = vmatprep.subr.bf16.mxu0 0
        %3767 = vmatpush1.bf16.xpose.msra.mxu0 0
        %3768 = vmatprep.subr.bf16.mxu0 0
        %3769 = vmatpush1.bf16.xpose.msra.mxu0 0
        %3770 = vmatprep.subr.bf16.mxu0 0
        %3771 = vmatpush1.bf16.xpose.msra.mxu0 0
        %3772 = vmatprep.subr.bf16.mxu0 0
        %3773 = vmatpush1.bf16.xpose.msra.mxu0 0
        %3774 = vmatprep.subr.bf16.mxu0 0
        %3775 = vmatpush1.bf16.xpose.msra.mxu0 0
        %3776 = vmatprep.subr.bf16.mxu0 0
        %3777 = vmatpush1.bf16.xpose.msra.mxu0 0
        %3778 = vmatprep.subr.bf16.mxu0 0
        %3779 = vmatpush1.bf16.xpose.msra.mxu0 0
        %3780 = vmatprep.subr.bf16.mxu0 0
        %3781 = vmatpush1.bf16.xpose.msra.mxu0 0
        %3782 = vmatprep.mubr.bf16.mxu0 0
        %3783 = vmatmul.mubr.bf16.gmra.mrb[0].mxu0 %v3745
        %v3784 = vpop.f32.mrb[0].mxu0
        %v3785 = vadd.f32 0.0, %v3784
        %v3786 = vpop.f32.mrb[0].mxu0
        %v3787 = vpop.f32.mrb[0].mxu0
        %v3788 = vadd.f32 0.0, %v3787
        %v3789 = vpop.f32.mrb[0].mxu0
        %3790 = vdwg.mxu0
        %v3791 = vsel %vm1144, %v3785, -inf
        %3792 = vmax.xlane.f32.xlu0 %v3791
        %v3793 = vpop.xlane.xlu0 %3792
        %v3794 = vsel %vm1144, %v3788, -inf
        %3795 = vmax.xlane.f32.xlu0 %v3794
        %v3796 = vpop.xlane.xlu0 %3795
        %v3797 = vsub.f32 %v3785, %v3793
        %v3798 = vsub.f32 %v3788, %v3796
        %v3799 = vmul.f32 %v3797, 1.442695
        %v3800 = vpow.pop %v3799
        %v3801 = vmul.f32 %v3798, 1.442695
        %v3802 = vpow.pop %v3801
        %v3803 = vsel %vm1144, %v3800, 0.0
        %3804 = vadd.xlane.f32.xlu0 %v3803
        %v3805 = vpop.xlane.xlu0 %3804
        %v3806 = vsel %vm1144, %v3802, 0.0
        %3807 = vadd.xlane.f32.xlu0 %v3806
        %v3808 = vpop.xlane.xlu0 %3807
        %v3809 = vrcp.pop %v3805
        %v3810 = vrcp.pop %v3808
        %v3811 = vmul.f32 %v3800, %v3809
        %v3812 = vmul.f32 %v3802, %v3810
        %v3813 = vpack.c.bf16 %v3812, %v3811
        %v3815 = vsel %vm1144, %v3813, 0
        %3817 = vmatprep.subr.bf16.mxu0 0
        %3818 = vmatpush1.bf16.msra.mxu0 %v3743
        %3819 = vmatprep.subr.bf16.mxu0 0
        %3820 = vmatpush1.bf16.msra.mxu0 0
        %3821 = vmatprep.subr.bf16.mxu0 0
        %3822 = vmatpush1.bf16.msra.mxu0 0
        %3823 = vmatprep.subr.bf16.mxu0 0
        %3824 = vmatpush1.bf16.msra.mxu0 0
        %3825 = vmatprep.subr.bf16.mxu0 0
        %3826 = vmatpush1.bf16.msra.mxu0 0
        %3827 = vmatprep.subr.bf16.mxu0 0
        %3828 = vmatpush1.bf16.msra.mxu0 0
        %3829 = vmatprep.subr.bf16.mxu0 0
        %3830 = vmatpush1.bf16.msra.mxu0 0
        %3831 = vmatprep.subr.bf16.mxu0 0
        %3832 = vmatpush1.bf16.msra.mxu0 0
        %3833 = vmatprep.subr.bf16.mxu0 0
        %3834 = vmatpush1.bf16.msra.mxu0 0
        %3835 = vmatprep.subr.bf16.mxu0 0
        %3836 = vmatpush1.bf16.msra.mxu0 0
        %3837 = vmatprep.subr.bf16.mxu0 0
        %3838 = vmatpush1.bf16.msra.mxu0 0
        %3839 = vmatprep.subr.bf16.mxu0 0
        %3840 = vmatpush1.bf16.msra.mxu0 0
        %3841 = vmatprep.subr.bf16.mxu0 0
        %3842 = vmatpush1.bf16.msra.mxu0 0
        %3843 = vmatprep.subr.bf16.mxu0 0
        %3844 = vmatpush1.bf16.msra.mxu0 0
        %3845 = vmatprep.subr.bf16.mxu0 0
        %3846 = vmatpush1.bf16.msra.mxu0 0
        %3847 = vmatprep.subr.bf16.mxu0 0
        %3848 = vmatpush1.bf16.msra.mxu0 0
        %3849 = vmatprep.mubr.bf16.mxu0 0
        %3850 = vmatmul.mubr.bf16.gmra.mrb[0].mxu0 %v3815
        %v3851 = vpop.f32.mrb[0].mxu0
        %v3852 = vadd.f32 0.0, %v3851
        %v3853 = vpop.f32.mrb[0].mxu0
        %v3854 = vpop.f32.mrb[0].mxu0
        %v3855 = vadd.f32 0.0, %v3854
        %v3856 = vpop.f32.mrb[0].mxu0
        %3857 = vdwg.mxu0
        %3859 = vrot.lane.b32.xlu0 %v3741, 96
        %v3860 = vpop.permute.xlu0 %3859
        %3862 = vrot.lane.b32.xlu0 %v3742, 96
        %v3863 = vpop.permute.xlu0 %3862
        %v3865 = vsel %vm1096, %v3860, 0
        %v3868 = vsel %vm1096, %v3863, 0
        %3870 = vmatprep.subr.bf16.mxu0 0
        %3871 = vmatpush1.bf16.xpose.msra.mxu0 %v3868
        %3872 = vmatprep.subr.bf16.mxu0 0
        %3873 = vmatpush1.bf16.xpose.msra.mxu0 0
        %3874 = vmatprep.subr.bf16.mxu0 0
        %3875 = vmatpush1.bf16.xpose.msra.mxu0 0
        %3876 = vmatprep.subr.bf16.mxu0 0
        %3877 = vmatpush1.bf16.xpose.msra.mxu0 0
        %3878 = vmatprep.subr.bf16.mxu0 0
        %3879 = vmatpush1.bf16.xpose.msra.mxu0 0
        %3880 = vmatprep.subr.bf16.mxu0 0
        %3881 = vmatpush1.bf16.xpose.msra.mxu0 0
        %3882 = vmatprep.subr.bf16.mxu0 0
        %3883 = vmatpush1.bf16.xpose.msra.mxu0 0
        %3884 = vmatprep.subr.bf16.mxu0 0
        %3885 = vmatpush1.bf16.xpose.msra.mxu0 0
        %3886 = vmatprep.subr.bf16.mxu0 0
        %3887 = vmatpush1.bf16.xpose.msra.mxu0 0
        %3888 = vmatprep.subr.bf16.mxu0 0
        %3889 = vmatpush1.bf16.xpose.msra.mxu0 0
        %3890 = vmatprep.subr.bf16.mxu0 0
        %3891 = vmatpush1.bf16.xpose.msra.mxu0 0
        %3892 = vmatprep.subr.bf16.mxu0 0
        %3893 = vmatpush1.bf16.xpose.msra.mxu0 0
        %3894 = vmatprep.subr.bf16.mxu0 0
        %3895 = vmatpush1.bf16.xpose.msra.mxu0 0
        %3896 = vmatprep.subr.bf16.mxu0 0
        %3897 = vmatpush1.bf16.xpose.msra.mxu0 0
        %3898 = vmatprep.subr.bf16.mxu0 0
        %3899 = vmatpush1.bf16.xpose.msra.mxu0 0
        %3900 = vmatprep.subr.bf16.mxu0 0
        %3901 = vmatpush1.bf16.xpose.msra.mxu0 0
        %3902 = vmatprep.mubr.bf16.mxu0 0
        %3903 = vmatmul.mubr.bf16.gmra.mrb[0].mxu0 %v3865
        %v3904 = vpop.f32.mrb[0].mxu0
        %v3905 = vadd.f32 0.0, %v3904
        %v3906 = vpop.f32.mrb[0].mxu0
        %v3907 = vpop.f32.mrb[0].mxu0
        %v3908 = vadd.f32 0.0, %v3907
        %v3909 = vpop.f32.mrb[0].mxu0
        %3910 = vdwg.mxu0
        %v3911 = vsel %vm1144, %v3905, -inf
        %3912 = vmax.xlane.f32.xlu0 %v3911
        %v3913 = vpop.xlane.xlu0 %3912
        %v3914 = vsel %vm1144, %v3908, -inf
        %3915 = vmax.xlane.f32.xlu0 %v3914
        %v3916 = vpop.xlane.xlu0 %3915
        %v3917 = vsub.f32 %v3905, %v3913
        %v3918 = vsub.f32 %v3908, %v3916
        %v3919 = vmul.f32 %v3917, 1.442695
        %v3920 = vpow.pop %v3919
        %v3921 = vmul.f32 %v3918, 1.442695
        %v3922 = vpow.pop %v3921
        %v3923 = vsel %vm1144, %v3920, 0.0
        %3924 = vadd.xlane.f32.xlu0 %v3923
        %v3925 = vpop.xlane.xlu0 %3924
        %v3926 = vsel %vm1144, %v3922, 0.0
        %3927 = vadd.xlane.f32.xlu0 %v3926
        %v3928 = vpop.xlane.xlu0 %3927
        %v3929 = vrcp.pop %v3925
        %v3930 = vrcp.pop %v3928
        %v3931 = vmul.f32 %v3920, %v3929
        %v3932 = vmul.f32 %v3922, %v3930
        %v3933 = vpack.c.bf16 %v3932, %v3931
        %3935 = vrot.lane.b32.xlu0 %v3743, 96
        %v3936 = vpop.permute.xlu0 %3935
        %v3939 = vsel %vm1144, %v3933, 0
        %3941 = vmatprep.subr.bf16.mxu0 0
        %3942 = vmatpush1.bf16.msra.mxu0 %v3936
        %3943 = vmatprep.subr.bf16.mxu0 0
        %3944 = vmatpush1.bf16.msra.mxu0 0
        %3945 = vmatprep.subr.bf16.mxu0 0
        %3946 = vmatpush1.bf16.msra.mxu0 0
        %3947 = vmatprep.subr.bf16.mxu0 0
        %3948 = vmatpush1.bf16.msra.mxu0 0
        %3949 = vmatprep.subr.bf16.mxu0 0
        %3950 = vmatpush1.bf16.msra.mxu0 0
        %3951 = vmatprep.subr.bf16.mxu0 0
        %3952 = vmatpush1.bf16.msra.mxu0 0
        %3953 = vmatprep.subr.bf16.mxu0 0
        %3954 = vmatpush1.bf16.msra.mxu0 0
        %3955 = vmatprep.subr.bf16.mxu0 0
        %3956 = vmatpush1.bf16.msra.mxu0 0
        %3957 = vmatprep.subr.bf16.mxu0 0
        %3958 = vmatpush1.bf16.msra.mxu0 0
        %3959 = vmatprep.subr.bf16.mxu0 0
        %3960 = vmatpush1.bf16.msra.mxu0 0
        %3961 = vmatprep.subr.bf16.mxu0 0
        %3962 = vmatpush1.bf16.msra.mxu0 0
        %3963 = vmatprep.subr.bf16.mxu0 0
        %3964 = vmatpush1.bf16.msra.mxu0 0
        %3965 = vmatprep.subr.bf16.mxu0 0
        %3966 = vmatpush1.bf16.msra.mxu0 0
        %3967 = vmatprep.subr.bf16.mxu0 0
        %3968 = vmatpush1.bf16.msra.mxu0 0
        %3969 = vmatprep.subr.bf16.mxu0 0
        %3970 = vmatpush1.bf16.msra.mxu0 0
        %3971 = vmatprep.subr.bf16.mxu0 0
        %3972 = vmatpush1.bf16.msra.mxu0 0
        %3973 = vmatprep.mubr.bf16.mxu0 0
        %3974 = vmatmul.mubr.bf16.gmra.mrb[0].mxu0 %v3939
        %v3975 = vpop.f32.mrb[0].mxu0
        %v3976 = vadd.f32 0.0, %v3975
        %v3977 = vpop.f32.mrb[0].mxu0
        %v3978 = vpop.f32.mrb[0].mxu0
        %v3979 = vadd.f32 0.0, %v3978
        %v3980 = vpop.f32.mrb[0].mxu0
        %3981 = vdwg.mxu0
        %3982 = vrot.lane.b32.xlu0 %v3741, 64
        %v3983 = vpop.permute.xlu0 %3982
        %3984 = vrot.lane.b32.xlu0 %v3742, 64
        %v3985 = vpop.permute.xlu0 %3984
        %v3987 = vsel %vm1096, %v3983, 0
        %v3990 = vsel %vm1096, %v3985, 0
        %3992 = vmatprep.subr.bf16.mxu0 0
        %3993 = vmatpush1.bf16.xpose.msra.mxu0 %v3990
        %3994 = vmatprep.subr.bf16.mxu0 0
        %3995 = vmatpush1.bf16.xpose.msra.mxu0 0
        %3996 = vmatprep.subr.bf16.mxu0 0
        %3997 = vmatpush1.bf16.xpose.msra.mxu0 0
        %3998 = vmatprep.subr.bf16.mxu0 0
        %3999 = vmatpush1.bf16.xpose.msra.mxu0 0
        %4000 = vmatprep.subr.bf16.mxu0 0
        %4001 = vmatpush1.bf16.xpose.msra.mxu0 0
        %4002 = vmatprep.subr.bf16.mxu0 0
        %4003 = vmatpush1.bf16.xpose.msra.mxu0 0
        %4004 = vmatprep.subr.bf16.mxu0 0
        %4005 = vmatpush1.bf16.xpose.msra.mxu0 0
        %4006 = vmatprep.subr.bf16.mxu0 0
        %4007 = vmatpush1.bf16.xpose.msra.mxu0 0
        %4008 = vmatprep.subr.bf16.mxu0 0
        %4009 = vmatpush1.bf16.xpose.msra.mxu0 0
        %4010 = vmatprep.subr.bf16.mxu0 0
        %4011 = vmatpush1.bf16.xpose.msra.mxu0 0
        %4012 = vmatprep.subr.bf16.mxu0 0
        %4013 = vmatpush1.bf16.xpose.msra.mxu0 0
        %4014 = vmatprep.subr.bf16.mxu0 0
        %4015 = vmatpush1.bf16.xpose.msra.mxu0 0
        %4016 = vmatprep.subr.bf16.mxu0 0
        %4017 = vmatpush1.bf16.xpose.msra.mxu0 0
        %4018 = vmatprep.subr.bf16.mxu0 0
        %4019 = vmatpush1.bf16.xpose.msra.mxu0 0
        %4020 = vmatprep.subr.bf16.mxu0 0
        %4021 = vmatpush1.bf16.xpose.msra.mxu0 0
        %4022 = vmatprep.subr.bf16.mxu0 0
        %4023 = vmatpush1.bf16.xpose.msra.mxu0 0
        %4024 = vmatprep.mubr.bf16.mxu0 0
        %4025 = vmatmul.mubr.bf16.gmra.mrb[0].mxu0 %v3987
        %v4026 = vpop.f32.mrb[0].mxu0
        %v4027 = vadd.f32 0.0, %v4026
        %v4028 = vpop.f32.mrb[0].mxu0
        %v4029 = vpop.f32.mrb[0].mxu0
        %v4030 = vadd.f32 0.0, %v4029
        %v4031 = vpop.f32.mrb[0].mxu0
        %4032 = vdwg.mxu0
        %v4033 = vsel %vm1144, %v4027, -inf
        %4034 = vmax.xlane.f32.xlu0 %v4033
        %v4035 = vpop.xlane.xlu0 %4034
        %v4036 = vsel %vm1144, %v4030, -inf
        %4037 = vmax.xlane.f32.xlu0 %v4036
        %v4038 = vpop.xlane.xlu0 %4037
        %v4039 = vsub.f32 %v4027, %v4035
        %v4040 = vsub.f32 %v4030, %v4038
        %v4041 = vmul.f32 %v4039, 1.442695
        %v4042 = vpow.pop %v4041
        %v4043 = vmul.f32 %v4040, 1.442695
        %v4044 = vpow.pop %v4043
        %v4045 = vsel %vm1144, %v4042, 0.0
        %4046 = vadd.xlane.f32.xlu0 %v4045
        %v4047 = vpop.xlane.xlu0 %4046
        %v4048 = vsel %vm1144, %v4044, 0.0
        %4049 = vadd.xlane.f32.xlu0 %v4048
        %v4050 = vpop.xlane.xlu0 %4049
        %v4051 = vrcp.pop %v4047
        %v4052 = vrcp.pop %v4050
        %v4053 = vmul.f32 %v4042, %v4051
        %v4054 = vmul.f32 %v4044, %v4052
        %v4055 = vpack.c.bf16 %v4054, %v4053
        %4056 = vrot.lane.b32.xlu0 %v3743, 64
        %v4057 = vpop.permute.xlu0 %4056
        %v4060 = vsel %vm1144, %v4055, 0
        %4062 = vmatprep.subr.bf16.mxu0 0
        %4063 = vmatpush1.bf16.msra.mxu0 %v4057
        %4064 = vmatprep.subr.bf16.mxu0 0
        %4065 = vmatpush1.bf16.msra.mxu0 0
        %4066 = vmatprep.subr.bf16.mxu0 0
        %4067 = vmatpush1.bf16.msra.mxu0 0
        %4068 = vmatprep.subr.bf16.mxu0 0
        %4069 = vmatpush1.bf16.msra.mxu0 0
        %4070 = vmatprep.subr.bf16.mxu0 0
        %4071 = vmatpush1.bf16.msra.mxu0 0
        %4072 = vmatprep.subr.bf16.mxu0 0
        %4073 = vmatpush1.bf16.msra.mxu0 0
        %4074 = vmatprep.subr.bf16.mxu0 0
        %4075 = vmatpush1.bf16.msra.mxu0 0
        %4076 = vmatprep.subr.bf16.mxu0 0
        %4077 = vmatpush1.bf16.msra.mxu0 0
        %4078 = vmatprep.subr.bf16.mxu0 0
        %4079 = vmatpush1.bf16.msra.mxu0 0
        %4080 = vmatprep.subr.bf16.mxu0 0
        %4081 = vmatpush1.bf16.msra.mxu0 0
        %4082 = vmatprep.subr.bf16.mxu0 0
        %4083 = vmatpush1.bf16.msra.mxu0 0
        %4084 = vmatprep.subr.bf16.mxu0 0
        %4085 = vmatpush1.bf16.msra.mxu0 0
        %4086 = vmatprep.subr.bf16.mxu0 0
        %4087 = vmatpush1.bf16.msra.mxu0 0
        %4088 = vmatprep.subr.bf16.mxu0 0
        %4089 = vmatpush1.bf16.msra.mxu0 0
        %4090 = vmatprep.subr.bf16.mxu0 0
        %4091 = vmatpush1.bf16.msra.mxu0 0
        %4092 = vmatprep.subr.bf16.mxu0 0
        %4093 = vmatpush1.bf16.msra.mxu0 0
        %4094 = vmatprep.mubr.bf16.mxu0 0
        %4095 = vmatmul.mubr.bf16.gmra.mrb[0].mxu0 %v4060
        %v4096 = vpop.f32.mrb[0].mxu0
        %v4097 = vadd.f32 0.0, %v4096
        %v4098 = vpop.f32.mrb[0].mxu0
        %v4099 = vpop.f32.mrb[0].mxu0
        %v4100 = vadd.f32 0.0, %v4099
        %v4101 = vpop.f32.mrb[0].mxu0
        %4102 = vdwg.mxu0
        %4103 = vrot.lane.b32.xlu0 %v3741, 32
        %v4104 = vpop.permute.xlu0 %4103
        %4105 = vrot.lane.b32.xlu0 %v3742, 32
        %v4106 = vpop.permute.xlu0 %4105
        %v4108 = vsel %vm1096, %v4104, 0
        %v4111 = vsel %vm1096, %v4106, 0
        %4113 = vmatprep.subr.bf16.mxu0 0
        %4114 = vmatpush1.bf16.xpose.msra.mxu0 %v4111
        %4115 = vmatprep.subr.bf16.mxu0 0
        %4116 = vmatpush1.bf16.xpose.msra.mxu0 0
        %4117 = vmatprep.subr.bf16.mxu0 0
        %4118 = vmatpush1.bf16.xpose.msra.mxu0 0
        %4119 = vmatprep.subr.bf16.mxu0 0
        %4120 = vmatpush1.bf16.xpose.msra.mxu0 0
        %4121 = vmatprep.subr.bf16.mxu0 0
        %4122 = vmatpush1.bf16.xpose.msra.mxu0 0
        %4123 = vmatprep.subr.bf16.mxu0 0
        %4124 = vmatpush1.bf16.xpose.msra.mxu0 0
        %4125 = vmatprep.subr.bf16.mxu0 0
        %4126 = vmatpush1.bf16.xpose.msra.mxu0 0
        %4127 = vmatprep.subr.bf16.mxu0 0
        %4128 = vmatpush1.bf16.xpose.msra.mxu0 0
        %4129 = vmatprep.subr.bf16.mxu0 0
        %4130 = vmatpush1.bf16.xpose.msra.mxu0 0
        %4131 = vmatprep.subr.bf16.mxu0 0
        %4132 = vmatpush1.bf16.xpose.msra.mxu0 0
        %4133 = vmatprep.subr.bf16.mxu0 0
        %4134 = vmatpush1.bf16.xpose.msra.mxu0 0
        %4135 = vmatprep.subr.bf16.mxu0 0
        %4136 = vmatpush1.bf16.xpose.msra.mxu0 0
        %4137 = vmatprep.subr.bf16.mxu0 0
        %4138 = vmatpush1.bf16.xpose.msra.mxu0 0
        %4139 = vmatprep.subr.bf16.mxu0 0
        %4140 = vmatpush1.bf16.xpose.msra.mxu0 0
        %4141 = vmatprep.subr.bf16.mxu0 0
        %4142 = vmatpush1.bf16.xpose.msra.mxu0 0
        %4143 = vmatprep.subr.bf16.mxu0 0
        %4144 = vmatpush1.bf16.xpose.msra.mxu0 0
        %4145 = vmatprep.mubr.bf16.mxu0 0
        %4146 = vmatmul.mubr.bf16.gmra.mrb[0].mxu0 %v4108
        %v4147 = vpop.f32.mrb[0].mxu0
        %v4148 = vadd.f32 0.0, %v4147
        %v4149 = vpop.f32.mrb[0].mxu0
        %v4150 = vpop.f32.mrb[0].mxu0
        %v4151 = vadd.f32 0.0, %v4150
        %v4152 = vpop.f32.mrb[0].mxu0
        %4153 = vdwg.mxu0
        %v4154 = vsel %vm1144, %v4148, -inf
        %4155 = vmax.xlane.f32.xlu0 %v4154
        %v4156 = vpop.xlane.xlu0 %4155
        %v4157 = vsel %vm1144, %v4151, -inf
        %4158 = vmax.xlane.f32.xlu0 %v4157
        %v4159 = vpop.xlane.xlu0 %4158
        %v4160 = vsub.f32 %v4148, %v4156
        %v4161 = vsub.f32 %v4151, %v4159
        %v4162 = vmul.f32 %v4160, 1.442695
        %v4163 = vpow.pop %v4162
        %v4164 = vmul.f32 %v4161, 1.442695
        %v4165 = vpow.pop %v4164
        %v4166 = vsel %vm1144, %v4163, 0.0
        %4167 = vadd.xlane.f32.xlu0 %v4166
        %v4168 = vpop.xlane.xlu0 %4167
        %v4169 = vsel %vm1144, %v4165, 0.0
        %4170 = vadd.xlane.f32.xlu0 %v4169
        %v4171 = vpop.xlane.xlu0 %4170
        %v4172 = vrcp.pop %v4168
        %v4173 = vrcp.pop %v4171
        %v4174 = vmul.f32 %v4163, %v4172
        %v4175 = vmul.f32 %v4165, %v4173
        %v4176 = vpack.c.bf16 %v4175, %v4174
        %4177 = vrot.lane.b32.xlu0 %v3743, 32
        %v4178 = vpop.permute.xlu0 %4177
        %v4181 = vsel %vm1144, %v4176, 0
        %4183 = vmatprep.subr.bf16.mxu0 0
        %4184 = vmatpush1.bf16.msra.mxu0 %v4178
        %4185 = vmatprep.subr.bf16.mxu0 0
        %4186 = vmatpush1.bf16.msra.mxu0 0
        %4187 = vmatprep.subr.bf16.mxu0 0
        %4188 = vmatpush1.bf16.msra.mxu0 0
        %4189 = vmatprep.subr.bf16.mxu0 0
        %4190 = vmatpush1.bf16.msra.mxu0 0
        %4191 = vmatprep.subr.bf16.mxu0 0
        %4192 = vmatpush1.bf16.msra.mxu0 0
        %4193 = vmatprep.subr.bf16.mxu0 0
        %4194 = vmatpush1.bf16.msra.mxu0 0
        %4195 = vmatprep.subr.bf16.mxu0 0
        %4196 = vmatpush1.bf16.msra.mxu0 0
        %4197 = vmatprep.subr.bf16.mxu0 0
        %4198 = vmatpush1.bf16.msra.mxu0 0
        %4199 = vmatprep.subr.bf16.mxu0 0
        %4200 = vmatpush1.bf16.msra.mxu0 0
        %4201 = vmatprep.subr.bf16.mxu0 0
        %4202 = vmatpush1.bf16.msra.mxu0 0
        %4203 = vmatprep.subr.bf16.mxu0 0
        %4204 = vmatpush1.bf16.msra.mxu0 0
        %4205 = vmatprep.subr.bf16.mxu0 0
        %4206 = vmatpush1.bf16.msra.mxu0 0
        %4207 = vmatprep.subr.bf16.mxu0 0
        %4208 = vmatpush1.bf16.msra.mxu0 0
        %4209 = vmatprep.subr.bf16.mxu0 0
        %4210 = vmatpush1.bf16.msra.mxu0 0
        %4211 = vmatprep.subr.bf16.mxu0 0
        %4212 = vmatpush1.bf16.msra.mxu0 0
        %4213 = vmatprep.subr.bf16.mxu0 0
        %4214 = vmatpush1.bf16.msra.mxu0 0
        %4215 = vmatprep.mubr.bf16.mxu0 0
        %4216 = vmatmul.mubr.bf16.gmra.mrb[0].mxu0 %v4181
        %v4217 = vpop.f32.mrb[0].mxu0
        %v4218 = vadd.f32 0.0, %v4217
        %v4219 = vpop.f32.mrb[0].mxu0
        %v4220 = vpop.f32.mrb[0].mxu0
        %v4221 = vadd.f32 0.0, %v4220
        %v4222 = vpop.f32.mrb[0].mxu0
        %4223 = vdwg.mxu0
        %4226 = vrot.lane.b32.xlu0 %v3976, 32
        %v4227 = vpop.permute.xlu0 %4226
        %4228 = vrot.lane.b32.xlu0 %v3979, 32
        %v4229 = vpop.permute.xlu0 %4228
        %4234 = vrot.lane.b32.xlu0 %v4097, 64
        %v4235 = vpop.permute.xlu0 %4234
        %4236 = vrot.lane.b32.xlu0 %v4100, 64
        %v4237 = vpop.permute.xlu0 %4236
        %4242 = vrot.lane.b32.xlu0 %v4218, 96
        %v4243 = vpop.permute.xlu0 %4242
        %4244 = vrot.lane.b32.xlu0 %v4221, 96
        %v4245 = vpop.permute.xlu0 %4244
        %v4248 = vsel %vm1096, %v3852, %v4227
        %v4249 = vsel %vm1096, %v3855, %v4229
        %v4250 = vsel %vm1604, %v4248, %v4235
        %v4251 = vsel %vm1604, %v4249, %v4237
        %v4252 = vsel %vm1607, %v4250, %v4243
        %v4253 = vsel %vm1607, %v4251, %v4245
        %v4254 = vpack.c.bf16 %v4253, %v4252
        %v4255 = vlaneseq
        %v4256 = vshrl.u32 %v4255, 7
        %v4257 = vsub.s32 3, %v4256
        %v4258 = vrot.slane %v3505, %v4257
        %v4275 = vunpack.c.l.b16 %v3393
        %v4276 = vunpack.c.l.b16 %v3394
        %v4277 = vunpack.c.l.b16 %v3395
        %v4278 = vunpack.c.l.b16 %v3396
        %v4279 = vunpack.c.l.b16 %v3397
        %v4280 = vunpack.c.l.b16 %v3398
        %v4281 = vunpack.c.l.b16 %v3399
        %v4282 = vunpack.c.l.b16 %v3400
        %v4283 = vunpack.c.l.b16 %v3401
        %v4284 = vunpack.c.l.b16 %v3402
        %v4285 = vunpack.c.l.b16 %v3403
        %v4286 = vunpack.c.l.b16 %v3404
        %v4287 = vunpack.c.l.b16 %v3405
        %v4288 = vunpack.c.l.b16 %v3406
        %v4289 = vunpack.c.l.b16 %v3407
        %v4290 = vunpack.c.l.b16 %v3408
        %v4291 = vpack.c.b16 %v4276, %v4275
        %v4292 = vpack.c.b16 %v4278, %v4277
        %v4293 = vpack.c.b16 %v4280, %v4279
        %v4294 = vpack.c.b16 %v4282, %v4281
        %v4295 = vpack.c.b16 %v4284, %v4283
        %v4296 = vpack.c.b16 %v4286, %v4285
        %v4297 = vpack.c.b16 %v4288, %v4287
        %v4298 = vpack.c.b16 %v4290, %v4289
        %4307 = vmatprep.subr.bf16.mxu0 0
        %4308 = vmatpush1.bf16.msra.mxu0 %v4291
        %4309 = vmatprep.subr.bf16.mxu0 0
        %4310 = vmatpush1.bf16.msra.mxu0 %v4292
        %4311 = vmatprep.subr.bf16.mxu0 0
        %4312 = vmatpush1.bf16.msra.mxu0 %v4293
        %4313 = vmatprep.subr.bf16.mxu0 0
        %4314 = vmatpush1.bf16.msra.mxu0 %v4294
        %4315 = vmatprep.subr.bf16.mxu0 0
        %4316 = vmatpush1.bf16.msra.mxu0 %v4295
        %4317 = vmatprep.subr.bf16.mxu0 0
        %4318 = vmatpush1.bf16.msra.mxu0 %v4296
        %4319 = vmatprep.subr.bf16.mxu0 0
        %4320 = vmatpush1.bf16.msra.mxu0 %v4297
        %4321 = vmatprep.subr.bf16.mxu0 0
        %4322 = vmatpush1.bf16.msra.mxu0 %v4298
        %4323 = vmatprep.subr.bf16.mxu0 0
        %4324 = vmatpush1.bf16.msra.mxu0 0
        %4325 = vmatprep.subr.bf16.mxu0 0
        %4326 = vmatpush1.bf16.msra.mxu0 0
        %4327 = vmatprep.subr.bf16.mxu0 0
        %4328 = vmatpush1.bf16.msra.mxu0 0
        %4329 = vmatprep.subr.bf16.mxu0 0
        %4330 = vmatpush1.bf16.msra.mxu0 0
        %4331 = vmatprep.subr.bf16.mxu0 0
        %4332 = vmatpush1.bf16.msra.mxu0 0
        %4333 = vmatprep.subr.bf16.mxu0 0
        %4334 = vmatpush1.bf16.msra.mxu0 0
        %4335 = vmatprep.subr.bf16.mxu0 0
        %4336 = vmatpush1.bf16.msra.mxu0 0
        %4337 = vmatprep.subr.bf16.mxu0 0
        %4338 = vmatpush1.bf16.msra.mxu0 0
        %4339 = vmatprep.mubr.bf16.mxu0 0
        %4340 = vmatmul.mubr.bf16.gmra.mrb[0].mxu0 %v4254
        %v4341 = vpop.f32.mrb[0].mxu0
        %v4342 = vadd.f32 %v4258, %v4341
        %v4343 = vpop.f32.mrb[0].mxu0
        %v4344 = vpop.f32.mrb[0].mxu0
        %v4345 = vadd.f32 %v4258, %v4344
        %v4346 = vpop.f32.mrb[0].mxu0
        %4347 = vdwg.mxu0
        %v4348 = vadd.f32 %v3359, %v4342
        %v4349 = vadd.f32 %v3360, %v4345
        %4350 = vadd.xlane.f32.xlu0 %v4348
        %v4351 = vpop.xlane.xlu0 %4350
        %4352 = vadd.xlane.f32.xlu0 %v4349
        %v4353 = vpop.xlane.xlu0 %4352
        %v4354 = vmul.f32 %v4351, %v1710
        %v4355 = vmul.f32 %v4353, %v1710
        %v4356 = vsub.f32 %v4348, %v4354
        %v4357 = vsub.f32 %v4349, %v4355
        %v4358 = vmul.f32 %v4356, %v4356
        %v4359 = vmul.f32 %v4357, %v4357
        %4360 = vadd.xlane.f32.xlu0 %v4358
        %v4361 = vpop.xlane.xlu0 %4360
        %4362 = vadd.xlane.f32.xlu0 %v4359
        %v4363 = vpop.xlane.xlu0 %4362
        %v4364 = vmul.f32 %v4361, %v1710
        %v4365 = vmul.f32 %v4363, %v1710
        %v4366 = vadd.f32 %v4364, 1e-05
        %v4367 = vadd.f32 %v4365, 1e-05
        %v4368 = vrsqrt.pop %v4366
        %v4369 = vrsqrt.pop %v4367
        %v4370 = vmul.f32 %v4356, %v4368
        %v4371 = vmul.f32 %v4357, %v4369
        %v4372 = vlaneseq
        %v4373 = vshrl.u32 %v4372, 7
        %v4374 = vsub.s32 1, %v4373
        %v4375 = vrot.slane %v3506, %v4374
        %v4376 = vmul.f32 %v4370, %v4375
        %v4377 = vmul.f32 %v4371, %v4375
        %v4378 = vlaneseq
        %v4379 = vshrl.u32 %v4378, 7
        %v4380 = vsub.s32 2, %v4379
        %v4381 = vrot.slane %v3506, %v4380
        %v4382 = vadd.f32 %v4376, %v4381
        %v4383 = vadd.f32 %v4377, %v4381
        %v4384 = vpack.c.bf16 %v4383, %v4382
        %v4385 = vlaneseq
        %v4386 = vshrl.u32 %v4385, 7
        %v4387 = vsub.s32 4, %v4386
        %v4388 = vrot.slane %v3505, %v4387
        %v4405 = vunpack.c.l.b16 %v3409
        %v4406 = vunpack.c.l.b16 %v3410
        %v4407 = vunpack.c.l.b16 %v3411
        %v4408 = vunpack.c.l.b16 %v3412
        %v4409 = vunpack.c.l.b16 %v3413
        %v4410 = vunpack.c.l.b16 %v3414
        %v4411 = vunpack.c.l.b16 %v3415
        %v4412 = vunpack.c.l.b16 %v3416
        %v4413 = vunpack.c.l.b16 %v3417
        %v4414 = vunpack.c.l.b16 %v3418
        %v4415 = vunpack.c.l.b16 %v3419
        %v4416 = vunpack.c.l.b16 %v3420
        %v4417 = vunpack.c.l.b16 %v3421
        %v4418 = vunpack.c.l.b16 %v3422
        %v4419 = vunpack.c.l.b16 %v3423
        %v4420 = vunpack.c.l.b16 %v3424
        %v4421 = vpack.c.b16 %v4406, %v4405
        %v4422 = vpack.c.b16 %v4408, %v4407
        %v4423 = vpack.c.b16 %v4410, %v4409
        %v4424 = vpack.c.b16 %v4412, %v4411
        %v4425 = vpack.c.b16 %v4414, %v4413
        %v4426 = vpack.c.b16 %v4416, %v4415
        %v4427 = vpack.c.b16 %v4418, %v4417
        %v4428 = vpack.c.b16 %v4420, %v4419
        %4437 = vmatprep.subr.bf16.mxu0 0
        %4438 = vmatpush1.bf16.msra.mxu0 %v4421
        %4439 = vmatprep.subr.bf16.mxu0 0
        %4440 = vmatpush1.bf16.msra.mxu0 %v4422
        %4441 = vmatprep.subr.bf16.mxu0 0
        %4442 = vmatpush1.bf16.msra.mxu0 %v4423
        %4443 = vmatprep.subr.bf16.mxu0 0
        %4444 = vmatpush1.bf16.msra.mxu0 %v4424
        %4445 = vmatprep.subr.bf16.mxu0 0
        %4446 = vmatpush1.bf16.msra.mxu0 %v4425
        %4447 = vmatprep.subr.bf16.mxu0 0
        %4448 = vmatpush1.bf16.msra.mxu0 %v4426
        %4449 = vmatprep.subr.bf16.mxu0 0
        %4450 = vmatpush1.bf16.msra.mxu0 %v4427
        %4451 = vmatprep.subr.bf16.mxu0 0
        %4452 = vmatpush1.bf16.msra.mxu0 %v4428
        %4453 = vmatprep.subr.bf16.mxu0 0
        %4454 = vmatpush1.bf16.msra.mxu0 0
        %4455 = vmatprep.subr.bf16.mxu0 0
        %4456 = vmatpush1.bf16.msra.mxu0 0
        %4457 = vmatprep.subr.bf16.mxu0 0
        %4458 = vmatpush1.bf16.msra.mxu0 0
        %4459 = vmatprep.subr.bf16.mxu0 0
        %4460 = vmatpush1.bf16.msra.mxu0 0
        %4461 = vmatprep.subr.bf16.mxu0 0
        %4462 = vmatpush1.bf16.msra.mxu0 0
        %4463 = vmatprep.subr.bf16.mxu0 0
        %4464 = vmatpush1.bf16.msra.mxu0 0
        %4465 = vmatprep.subr.bf16.mxu0 0
        %4466 = vmatpush1.bf16.msra.mxu0 0
        %4467 = vmatprep.subr.bf16.mxu0 0
        %4468 = vmatpush1.bf16.msra.mxu0 0
        %4469 = vmatprep.mubr.bf16.mxu0 0
        %4470 = vmatmul.mubr.bf16.gmra.mrb[0].mxu0 %v4384
        %v4471 = vpop.f32.mrb[0].mxu0
        %v4472 = vadd.f32 %v4388, %v4471
        %v4473 = vpop.f32.mrb[0].mxu0
        %v4474 = vpop.f32.mrb[0].mxu0
        %v4475 = vadd.f32 %v4388, %v4474
        %v4476 = vpop.f32.mrb[0].mxu0
        %4477 = vdwg.mxu0
        %v4494 = vunpack.c.l.b16 %v3425
        %v4495 = vunpack.c.h.b16 %v3425
        %v4496 = vunpack.c.l.b16 %v3426
        %v4497 = vunpack.c.h.b16 %v3426
        %v4498 = vunpack.c.l.b16 %v3427
        %v4499 = vunpack.c.h.b16 %v3427
        %v4500 = vunpack.c.l.b16 %v3428
        %v4501 = vunpack.c.h.b16 %v3428
        %v4502 = vunpack.c.l.b16 %v3429
        %v4503 = vunpack.c.h.b16 %v3429
        %v4504 = vunpack.c.l.b16 %v3430
        %v4505 = vunpack.c.h.b16 %v3430
        %v4506 = vunpack.c.l.b16 %v3431
        %v4507 = vunpack.c.h.b16 %v3431
        %v4508 = vunpack.c.l.b16 %v3432
        %v4509 = vunpack.c.h.b16 %v3432
        %v4510 = vunpack.c.l.b16 %v3433
        %v4511 = vunpack.c.h.b16 %v3433
        %v4512 = vunpack.c.l.b16 %v3434
        %v4513 = vunpack.c.h.b16 %v3434
        %v4514 = vunpack.c.l.b16 %v3435
        %v4515 = vunpack.c.h.b16 %v3435
        %v4516 = vunpack.c.l.b16 %v3436
        %v4517 = vunpack.c.h.b16 %v3436
        %v4518 = vunpack.c.l.b16 %v3437
        %v4519 = vunpack.c.h.b16 %v3437
        %v4520 = vunpack.c.l.b16 %v3438
        %v4521 = vunpack.c.h.b16 %v3438
        %v4522 = vunpack.c.l.b16 %v3439
        %v4523 = vunpack.c.h.b16 %v3439
        %v4524 = vunpack.c.l.b16 %v3440
        %v4525 = vunpack.c.h.b16 %v3440
        %v4526 = vpack.c.b16 %v4496, %v4494
        %v4527 = vpack.c.b16 %v4497, %v4495
        %v4528 = vpack.c.b16 %v4500, %v4498
        %v4529 = vpack.c.b16 %v4501, %v4499
        %v4530 = vpack.c.b16 %v4504, %v4502
        %v4531 = vpack.c.b16 %v4505, %v4503
        %v4532 = vpack.c.b16 %v4508, %v4506
        %v4533 = vpack.c.b16 %v4509, %v4507
        %v4534 = vpack.c.b16 %v4512, %v4510
        %v4535 = vpack.c.b16 %v4513, %v4511
        %v4536 = vpack.c.b16 %v4516, %v4514
        %v4537 = vpack.c.b16 %v4517, %v4515
        %v4538 = vpack.c.b16 %v4520, %v4518
        %v4539 = vpack.c.b16 %v4521, %v4519
        %v4540 = vpack.c.b16 %v4524, %v4522
        %v4541 = vpack.c.b16 %v4525, %v4523
        %4558 = vmatprep.subr.bf16.mxu0 %v4527
        %4559 = vmatpush1.bf16.msra.mxu0 %v4526
        %4560 = vmatprep.subr.bf16.mxu0 %v4529
        %4561 = vmatpush1.bf16.msra.mxu0 %v4528
        %4562 = vmatprep.subr.bf16.mxu0 %v4531
        %4563 = vmatpush1.bf16.msra.mxu0 %v4530
        %4564 = vmatprep.subr.bf16.mxu0 %v4533
        %4565 = vmatpush1.bf16.msra.mxu0 %v4532
        %4566 = vmatprep.subr.bf16.mxu0 %v4535
        %4567 = vmatpush1.bf16.msra.mxu0 %v4534
        %4568 = vmatprep.subr.bf16.mxu0 %v4537
        %4569 = vmatpush1.bf16.msra.mxu0 %v4536
        %4570 = vmatprep.subr.bf16.mxu0 %v4539
        %4571 = vmatpush1.bf16.msra.mxu0 %v4538
        %4572 = vmatprep.subr.bf16.mxu0 %v4541
        %4573 = vmatpush1.bf16.msra.mxu0 %v4540
        %4574 = vmatprep.subr.bf16.mxu0 0
        %4575 = vmatpush1.bf16.msra.mxu0 0
        %4576 = vmatprep.subr.bf16.mxu0 0
        %4577 = vmatpush1.bf16.msra.mxu0 0
        %4578 = vmatprep.subr.bf16.mxu0 0
        %4579 = vmatpush1.bf16.msra.mxu0 0
        %4580 = vmatprep.subr.bf16.mxu0 0
        %4581 = vmatpush1.bf16.msra.mxu0 0
        %4582 = vmatprep.subr.bf16.mxu0 0
        %4583 = vmatpush1.bf16.msra.mxu0 0
        %4584 = vmatprep.subr.bf16.mxu0 0
        %4585 = vmatpush1.bf16.msra.mxu0 0
        %4586 = vmatprep.subr.bf16.mxu0 0
        %4587 = vmatpush1.bf16.msra.mxu0 0
        %4588 = vmatprep.subr.bf16.mxu0 0
        %4589 = vmatpush1.bf16.msra.mxu0 0
        %4590 = vmatprep.mubr.bf16.mxu0 0
        %4591 = vmatmul.mubr.bf16.gmra.mrb[0].mxu0 %v3358
        %v4592 = vpop.f32.mrb[0].mxu0
        %v4593 = vadd.f32 0.0, %v4592
        %v4594 = vpop.f32.mrb[0].mxu0
        %v4595 = vadd.f32 0.0, %v4594
        %v4596 = vpop.f32.mrb[0].mxu0
        %v4597 = vadd.f32 0.0, %v4596
        %v4598 = vpop.f32.mrb[0].mxu0
        %v4599 = vadd.f32 0.0, %v4598
        %4600 = vdwg.mxu0
        %v4601 = vlaneseq
        %v4602 = vshrl.u32 %v4601, 7
        %v4603 = vsub.s32 5, %v4602
        %v4604 = vrot.slane %v3505, %v4603
        %v4605 = vadd.f32 %v4593, %v4604
        %v4606 = vadd.f32 %v4597, %v4604
        %v4607 = vlaneseq
        %v4608 = vshrl.u32 %v4607, 7
        %v4609 = vsub.s32 6, %v4608
        %v4610 = vrot.slane %v3505, %v4609
        %v4611 = vadd.f32 %v4595, %v4610
        %v4612 = vadd.f32 %v4599, %v4610
        %v4613 = vmul.f32 %v4472, 0.17677669
        %v4614 = vmul.f32 %v4475, 0.17677669
        %v4615 = vpack.c.bf16 %v4614, %v4613
        %v4616 = vpack.c.bf16 %v4606, %v4605
        %v4617 = vpack.c.bf16 %v4612, %v4611
        %v4619 = vsel %vm1096, %v4615, 0
        %v4622 = vsel %vm1096, %v4616, 0
        %4624 = vmatprep.subr.bf16.mxu0 0
        %4625 = vmatpush1.bf16.xpose.msra.mxu0 %v4622
        %4626 = vmatprep.subr.bf16.mxu0 0
        %4627 = vmatpush1.bf16.xpose.msra.mxu0 0
        %4628 = vmatprep.subr.bf16.mxu0 0
        %4629 = vmatpush1.bf16.xpose.msra.mxu0 0
        %4630 = vmatprep.subr.bf16.mxu0 0
        %4631 = vmatpush1.bf16.xpose.msra.mxu0 0
        %4632 = vmatprep.subr.bf16.mxu0 0
        %4633 = vmatpush1.bf16.xpose.msra.mxu0 0
        %4634 = vmatprep.subr.bf16.mxu0 0
        %4635 = vmatpush1.bf16.xpose.msra.mxu0 0
        %4636 = vmatprep.subr.bf16.mxu0 0
        %4637 = vmatpush1.bf16.xpose.msra.mxu0 0
        %4638 = vmatprep.subr.bf16.mxu0 0
        %4639 = vmatpush1.bf16.xpose.msra.mxu0 0
        %4640 = vmatprep.subr.bf16.mxu0 0
        %4641 = vmatpush1.bf16.xpose.msra.mxu0 0
        %4642 = vmatprep.subr.bf16.mxu0 0
        %4643 = vmatpush1.bf16.xpose.msra.mxu0 0
        %4644 = vmatprep.subr.bf16.mxu0 0
        %4645 = vmatpush1.bf16.xpose.msra.mxu0 0
        %4646 = vmatprep.subr.bf16.mxu0 0
        %4647 = vmatpush1.bf16.xpose.msra.mxu0 0
        %4648 = vmatprep.subr.bf16.mxu0 0
        %4649 = vmatpush1.bf16.xpose.msra.mxu0 0
        %4650 = vmatprep.subr.bf16.mxu0 0
        %4651 = vmatpush1.bf16.xpose.msra.mxu0 0
        %4652 = vmatprep.subr.bf16.mxu0 0
        %4653 = vmatpush1.bf16.xpose.msra.mxu0 0
        %4654 = vmatprep.subr.bf16.mxu0 0
        %4655 = vmatpush1.bf16.xpose.msra.mxu0 0
        %4656 = vmatprep.mubr.bf16.mxu0 0
        %4657 = vmatmul.mubr.bf16.gmra.mrb[0].mxu0 %v4619
        %v4658 = vpop.f32.mrb[0].mxu0
        %v4659 = vadd.f32 0.0, %v4658
        %v4660 = vpop.f32.mrb[0].mxu0
        %v4661 = vpop.f32.mrb[0].mxu0
        %v4662 = vadd.f32 0.0, %v4661
        %v4663 = vpop.f32.mrb[0].mxu0
        %4664 = vdwg.mxu0
        %v4665 = vsel %vm1144, %v4659, -inf
        %4666 = vmax.xlane.f32.xlu0 %v4665
        %v4667 = vpop.xlane.xlu0 %4666
        %v4668 = vsel %vm1144, %v4662, -inf
        %4669 = vmax.xlane.f32.xlu0 %v4668
        %v4670 = vpop.xlane.xlu0 %4669
        %v4671 = vsub.f32 %v4659, %v4667
        %v4672 = vsub.f32 %v4662, %v4670
        %v4673 = vmul.f32 %v4671, 1.442695
        %v4674 = vpow.pop %v4673
        %v4675 = vmul.f32 %v4672, 1.442695
        %v4676 = vpow.pop %v4675
        %v4677 = vsel %vm1144, %v4674, 0.0
        %4678 = vadd.xlane.f32.xlu0 %v4677
        %v4679 = vpop.xlane.xlu0 %4678
        %v4680 = vsel %vm1144, %v4676, 0.0
        %4681 = vadd.xlane.f32.xlu0 %v4680
        %v4682 = vpop.xlane.xlu0 %4681
        %v4683 = vrcp.pop %v4679
        %v4684 = vrcp.pop %v4682
        %v4685 = vmul.f32 %v4674, %v4683
        %v4686 = vmul.f32 %v4676, %v4684
        %v4687 = vpack.c.bf16 %v4686, %v4685
        %v4689 = vsel %vm1144, %v4687, 0
        %4691 = vmatprep.subr.bf16.mxu0 0
        %4692 = vmatpush1.bf16.msra.mxu0 %v4617
        %4693 = vmatprep.subr.bf16.mxu0 0
        %4694 = vmatpush1.bf16.msra.mxu0 0
        %4695 = vmatprep.subr.bf16.mxu0 0
        %4696 = vmatpush1.bf16.msra.mxu0 0
        %4697 = vmatprep.subr.bf16.mxu0 0
        %4698 = vmatpush1.bf16.msra.mxu0 0
        %4699 = vmatprep.subr.bf16.mxu0 0
        %4700 = vmatpush1.bf16.msra.mxu0 0
        %4701 = vmatprep.subr.bf16.mxu0 0
        %4702 = vmatpush1.bf16.msra.mxu0 0
        %4703 = vmatprep.subr.bf16.mxu0 0
        %4704 = vmatpush1.bf16.msra.mxu0 0
        %4705 = vmatprep.subr.bf16.mxu0 0
        %4706 = vmatpush1.bf16.msra.mxu0 0
        %4707 = vmatprep.subr.bf16.mxu0 0
        %4708 = vmatpush1.bf16.msra.mxu0 0
        %4709 = vmatprep.subr.bf16.mxu0 0
        %4710 = vmatpush1.bf16.msra.mxu0 0
        %4711 = vmatprep.subr.bf16.mxu0 0
        %4712 = vmatpush1.bf16.msra.mxu0 0
        %4713 = vmatprep.subr.bf16.mxu0 0
        %4714 = vmatpush1.bf16.msra.mxu0 0
        %4715 = vmatprep.subr.bf16.mxu0 0
        %4716 = vmatpush1.bf16.msra.mxu0 0
        %4717 = vmatprep.subr.bf16.mxu0 0
        %4718 = vmatpush1.bf16.msra.mxu0 0
        %4719 = vmatprep.subr.bf16.mxu0 0
        %4720 = vmatpush1.bf16.msra.mxu0 0
        %4721 = vmatprep.subr.bf16.mxu0 0
        %4722 = vmatpush1.bf16.msra.mxu0 0
        %4723 = vmatprep.mubr.bf16.mxu0 0
        %4724 = vmatmul.mubr.bf16.gmra.mrb[0].mxu0 %v4689
        %v4725 = vpop.f32.mrb[0].mxu0
        %v4726 = vadd.f32 0.0, %v4725
        %v4727 = vpop.f32.mrb[0].mxu0
        %v4728 = vpop.f32.mrb[0].mxu0
        %v4729 = vadd.f32 0.0, %v4728
        %v4730 = vpop.f32.mrb[0].mxu0
        %4731 = vdwg.mxu0
        %4733 = vrot.lane.b32.xlu0 %v4615, 96
        %v4734 = vpop.permute.xlu0 %4733
        %4736 = vrot.lane.b32.xlu0 %v4616, 96
        %v4737 = vpop.permute.xlu0 %4736
        %v4739 = vsel %vm1096, %v4734, 0
        %v4742 = vsel %vm1096, %v4737, 0
        %4744 = vmatprep.subr.bf16.mxu0 0
        %4745 = vmatpush1.bf16.xpose.msra.mxu0 %v4742
        %4746 = vmatprep.subr.bf16.mxu0 0
        %4747 = vmatpush1.bf16.xpose.msra.mxu0 0
        %4748 = vmatprep.subr.bf16.mxu0 0
        %4749 = vmatpush1.bf16.xpose.msra.mxu0 0
        %4750 = vmatprep.subr.bf16.mxu0 0
        %4751 = vmatpush1.bf16.xpose.msra.mxu0 0
        %4752 = vmatprep.subr.bf16.mxu0 0
        %4753 = vmatpush1.bf16.xpose.msra.mxu0 0
        %4754 = vmatprep.subr.bf16.mxu0 0
        %4755 = vmatpush1.bf16.xpose.msra.mxu0 0
        %4756 = vmatprep.subr.bf16.mxu0 0
        %4757 = vmatpush1.bf16.xpose.msra.mxu0 0
        %4758 = vmatprep.subr.bf16.mxu0 0
        %4759 = vmatpush1.bf16.xpose.msra.mxu0 0
        %4760 = vmatprep.subr.bf16.mxu0 0
        %4761 = vmatpush1.bf16.xpose.msra.mxu0 0
        %4762 = vmatprep.subr.bf16.mxu0 0
        %4763 = vmatpush1.bf16.xpose.msra.mxu0 0
        %4764 = vmatprep.subr.bf16.mxu0 0
        %4765 = vmatpush1.bf16.xpose.msra.mxu0 0
        %4766 = vmatprep.subr.bf16.mxu0 0
        %4767 = vmatpush1.bf16.xpose.msra.mxu0 0
        %4768 = vmatprep.subr.bf16.mxu0 0
        %4769 = vmatpush1.bf16.xpose.msra.mxu0 0
        %4770 = vmatprep.subr.bf16.mxu0 0
        %4771 = vmatpush1.bf16.xpose.msra.mxu0 0
        %4772 = vmatprep.subr.bf16.mxu0 0
        %4773 = vmatpush1.bf16.xpose.msra.mxu0 0
        %4774 = vmatprep.subr.bf16.mxu0 0
        %4775 = vmatpush1.bf16.xpose.msra.mxu0 0
        %4776 = vmatprep.mubr.bf16.mxu0 0
        %4777 = vmatmul.mubr.bf16.gmra.mrb[0].mxu0 %v4739
        %v4778 = vpop.f32.mrb[0].mxu0
        %v4779 = vadd.f32 0.0, %v4778
        %v4780 = vpop.f32.mrb[0].mxu0
        %v4781 = vpop.f32.mrb[0].mxu0
        %v4782 = vadd.f32 0.0, %v4781
        %v4783 = vpop.f32.mrb[0].mxu0
        %4784 = vdwg.mxu0
        %v4785 = vsel %vm1144, %v4779, -inf
        %4786 = vmax.xlane.f32.xlu0 %v4785
        %v4787 = vpop.xlane.xlu0 %4786
        %v4788 = vsel %vm1144, %v4782, -inf
        %4789 = vmax.xlane.f32.xlu0 %v4788
        %v4790 = vpop.xlane.xlu0 %4789
        %v4791 = vsub.f32 %v4779, %v4787
        %v4792 = vsub.f32 %v4782, %v4790
        %v4793 = vmul.f32 %v4791, 1.442695
        %v4794 = vpow.pop %v4793
        %v4795 = vmul.f32 %v4792, 1.442695
        %v4796 = vpow.pop %v4795
        %v4797 = vsel %vm1144, %v4794, 0.0
        %4798 = vadd.xlane.f32.xlu0 %v4797
        %v4799 = vpop.xlane.xlu0 %4798
        %v4800 = vsel %vm1144, %v4796, 0.0
        %4801 = vadd.xlane.f32.xlu0 %v4800
        %v4802 = vpop.xlane.xlu0 %4801
        %v4803 = vrcp.pop %v4799
        %v4804 = vrcp.pop %v4802
        %v4805 = vmul.f32 %v4794, %v4803
        %v4806 = vmul.f32 %v4796, %v4804
        %v4807 = vpack.c.bf16 %v4806, %v4805
        %4809 = vrot.lane.b32.xlu0 %v4617, 96
        %v4810 = vpop.permute.xlu0 %4809
        %v4813 = vsel %vm1144, %v4807, 0
        %4815 = vmatprep.subr.bf16.mxu0 0
        %4816 = vmatpush1.bf16.msra.mxu0 %v4810
        %4817 = vmatprep.subr.bf16.mxu0 0
        %4818 = vmatpush1.bf16.msra.mxu0 0
        %4819 = vmatprep.subr.bf16.mxu0 0
        %4820 = vmatpush1.bf16.msra.mxu0 0
        %4821 = vmatprep.subr.bf16.mxu0 0
        %4822 = vmatpush1.bf16.msra.mxu0 0
        %4823 = vmatprep.subr.bf16.mxu0 0
        %4824 = vmatpush1.bf16.msra.mxu0 0
        %4825 = vmatprep.subr.bf16.mxu0 0
        %4826 = vmatpush1.bf16.msra.mxu0 0
        %4827 = vmatprep.subr.bf16.mxu0 0
        %4828 = vmatpush1.bf16.msra.mxu0 0
        %4829 = vmatprep.subr.bf16.mxu0 0
        %4830 = vmatpush1.bf16.msra.mxu0 0
        %4831 = vmatprep.subr.bf16.mxu0 0
        %4832 = vmatpush1.bf16.msra.mxu0 0
        %4833 = vmatprep.subr.bf16.mxu0 0
        %4834 = vmatpush1.bf16.msra.mxu0 0
        %4835 = vmatprep.subr.bf16.mxu0 0
        %4836 = vmatpush1.bf16.msra.mxu0 0
        %4837 = vmatprep.subr.bf16.mxu0 0
        %4838 = vmatpush1.bf16.msra.mxu0 0
        %4839 = vmatprep.subr.bf16.mxu0 0
        %4840 = vmatpush1.bf16.msra.mxu0 0
        %4841 = vmatprep.subr.bf16.mxu0 0
        %4842 = vmatpush1.bf16.msra.mxu0 0
        %4843 = vmatprep.subr.bf16.mxu0 0
        %4844 = vmatpush1.bf16.msra.mxu0 0
        %4845 = vmatprep.subr.bf16.mxu0 0
        %4846 = vmatpush1.bf16.msra.mxu0 0
        %4847 = vmatprep.mubr.bf16.mxu0 0
        %4848 = vmatmul.mubr.bf16.gmra.mrb[0].mxu0 %v4813
        %v4849 = vpop.f32.mrb[0].mxu0
        %v4850 = vadd.f32 0.0, %v4849
        %v4851 = vpop.f32.mrb[0].mxu0
        %v4852 = vpop.f32.mrb[0].mxu0
        %v4853 = vadd.f32 0.0, %v4852
        %v4854 = vpop.f32.mrb[0].mxu0
        %4855 = vdwg.mxu0
        %4856 = vrot.lane.b32.xlu0 %v4615, 64
        %v4857 = vpop.permute.xlu0 %4856
        %4858 = vrot.lane.b32.xlu0 %v4616, 64
        %v4859 = vpop.permute.xlu0 %4858
        %v4861 = vsel %vm1096, %v4857, 0
        %v4864 = vsel %vm1096, %v4859, 0
        %4866 = vmatprep.subr.bf16.mxu0 0
        %4867 = vmatpush1.bf16.xpose.msra.mxu0 %v4864
        %4868 = vmatprep.subr.bf16.mxu0 0
        %4869 = vmatpush1.bf16.xpose.msra.mxu0 0
        %4870 = vmatprep.subr.bf16.mxu0 0
        %4871 = vmatpush1.bf16.xpose.msra.mxu0 0
        %4872 = vmatprep.subr.bf16.mxu0 0
        %4873 = vmatpush1.bf16.xpose.msra.mxu0 0
        %4874 = vmatprep.subr.bf16.mxu0 0
        %4875 = vmatpush1.bf16.xpose.msra.mxu0 0
        %4876 = vmatprep.subr.bf16.mxu0 0
        %4877 = vmatpush1.bf16.xpose.msra.mxu0 0
        %4878 = vmatprep.subr.bf16.mxu0 0
        %4879 = vmatpush1.bf16.xpose.msra.mxu0 0
        %4880 = vmatprep.subr.bf16.mxu0 0
        %4881 = vmatpush1.bf16.xpose.msra.mxu0 0
        %4882 = vmatprep.subr.bf16.mxu0 0
        %4883 = vmatpush1.bf16.xpose.msra.mxu0 0
        %4884 = vmatprep.subr.bf16.mxu0 0
        %4885 = vmatpush1.bf16.xpose.msra.mxu0 0
        %4886 = vmatprep.subr.bf16.mxu0 0
        %4887 = vmatpush1.bf16.xpose.msra.mxu0 0
        %4888 = vmatprep.subr.bf16.mxu0 0
        %4889 = vmatpush1.bf16.xpose.msra.mxu0 0
        %4890 = vmatprep.subr.bf16.mxu0 0
        %4891 = vmatpush1.bf16.xpose.msra.mxu0 0
        %4892 = vmatprep.subr.bf16.mxu0 0
        %4893 = vmatpush1.bf16.xpose.msra.mxu0 0
        %4894 = vmatprep.subr.bf16.mxu0 0
        %4895 = vmatpush1.bf16.xpose.msra.mxu0 0
        %4896 = vmatprep.subr.bf16.mxu0 0
        %4897 = vmatpush1.bf16.xpose.msra.mxu0 0
        %4898 = vmatprep.mubr.bf16.mxu0 0
        %4899 = vmatmul.mubr.bf16.gmra.mrb[0].mxu0 %v4861
        %v4900 = vpop.f32.mrb[0].mxu0
        %v4901 = vadd.f32 0.0, %v4900
        %v4902 = vpop.f32.mrb[0].mxu0
        %v4903 = vpop.f32.mrb[0].mxu0
        %v4904 = vadd.f32 0.0, %v4903
        %v4905 = vpop.f32.mrb[0].mxu0
        %4906 = vdwg.mxu0
        %v4907 = vsel %vm1144, %v4901, -inf
        %4908 = vmax.xlane.f32.xlu0 %v4907
        %v4909 = vpop.xlane.xlu0 %4908
        %v4910 = vsel %vm1144, %v4904, -inf
        %4911 = vmax.xlane.f32.xlu0 %v4910
        %v4912 = vpop.xlane.xlu0 %4911
        %v4913 = vsub.f32 %v4901, %v4909
        %v4914 = vsub.f32 %v4904, %v4912
        %v4915 = vmul.f32 %v4913, 1.442695
        %v4916 = vpow.pop %v4915
        %v4917 = vmul.f32 %v4914, 1.442695
        %v4918 = vpow.pop %v4917
        %v4919 = vsel %vm1144, %v4916, 0.0
        %4920 = vadd.xlane.f32.xlu0 %v4919
        %v4921 = vpop.xlane.xlu0 %4920
        %v4922 = vsel %vm1144, %v4918, 0.0
        %4923 = vadd.xlane.f32.xlu0 %v4922
        %v4924 = vpop.xlane.xlu0 %4923
        %v4925 = vrcp.pop %v4921
        %v4926 = vrcp.pop %v4924
        %v4927 = vmul.f32 %v4916, %v4925
        %v4928 = vmul.f32 %v4918, %v4926
        %v4929 = vpack.c.bf16 %v4928, %v4927
        %4930 = vrot.lane.b32.xlu0 %v4617, 64
        %v4931 = vpop.permute.xlu0 %4930
        %v4934 = vsel %vm1144, %v4929, 0
        %4936 = vmatprep.subr.bf16.mxu0 0
        %4937 = vmatpush1.bf16.msra.mxu0 %v4931
        %4938 = vmatprep.subr.bf16.mxu0 0
        %4939 = vmatpush1.bf16.msra.mxu0 0
        %4940 = vmatprep.subr.bf16.mxu0 0
        %4941 = vmatpush1.bf16.msra.mxu0 0
        %4942 = vmatprep.subr.bf16.mxu0 0
        %4943 = vmatpush1.bf16.msra.mxu0 0
        %4944 = vmatprep.subr.bf16.mxu0 0
        %4945 = vmatpush1.bf16.msra.mxu0 0
        %4946 = vmatprep.subr.bf16.mxu0 0
        %4947 = vmatpush1.bf16.msra.mxu0 0
        %4948 = vmatprep.subr.bf16.mxu0 0
        %4949 = vmatpush1.bf16.msra.mxu0 0
        %4950 = vmatprep.subr.bf16.mxu0 0
        %4951 = vmatpush1.bf16.msra.mxu0 0
        %4952 = vmatprep.subr.bf16.mxu0 0
        %4953 = vmatpush1.bf16.msra.mxu0 0
        %4954 = vmatprep.subr.bf16.mxu0 0
        %4955 = vmatpush1.bf16.msra.mxu0 0
        %4956 = vmatprep.subr.bf16.mxu0 0
        %4957 = vmatpush1.bf16.msra.mxu0 0
        %4958 = vmatprep.subr.bf16.mxu0 0
        %4959 = vmatpush1.bf16.msra.mxu0 0
        %4960 = vmatprep.subr.bf16.mxu0 0
        %4961 = vmatpush1.bf16.msra.mxu0 0
        %4962 = vmatprep.subr.bf16.mxu0 0
        %4963 = vmatpush1.bf16.msra.mxu0 0
        %4964 = vmatprep.subr.bf16.mxu0 0
        %4965 = vmatpush1.bf16.msra.mxu0 0
        %4966 = vmatprep.subr.bf16.mxu0 0
        %4967 = vmatpush1.bf16.msra.mxu0 0
        %4968 = vmatprep.mubr.bf16.mxu0 0
        %4969 = vmatmul.mubr.bf16.gmra.mrb[0].mxu0 %v4934
        %v4970 = vpop.f32.mrb[0].mxu0
        %v4971 = vadd.f32 0.0, %v4970
        %v4972 = vpop.f32.mrb[0].mxu0
        %v4973 = vpop.f32.mrb[0].mxu0
        %v4974 = vadd.f32 0.0, %v4973
        %v4975 = vpop.f32.mrb[0].mxu0
        %4976 = vdwg.mxu0
        %4977 = vrot.lane.b32.xlu0 %v4615, 32
        %v4978 = vpop.permute.xlu0 %4977
        %4979 = vrot.lane.b32.xlu0 %v4616, 32
        %v4980 = vpop.permute.xlu0 %4979
        %v4982 = vsel %vm1096, %v4978, 0
        %v4985 = vsel %vm1096, %v4980, 0
        %4987 = vmatprep.subr.bf16.mxu0 0
        %4988 = vmatpush1.bf16.xpose.msra.mxu0 %v4985
        %4989 = vmatprep.subr.bf16.mxu0 0
        %4990 = vmatpush1.bf16.xpose.msra.mxu0 0
        %4991 = vmatprep.subr.bf16.mxu0 0
        %4992 = vmatpush1.bf16.xpose.msra.mxu0 0
        %4993 = vmatprep.subr.bf16.mxu0 0
        %4994 = vmatpush1.bf16.xpose.msra.mxu0 0
        %4995 = vmatprep.subr.bf16.mxu0 0
        %4996 = vmatpush1.bf16.xpose.msra.mxu0 0
        %4997 = vmatprep.subr.bf16.mxu0 0
        %4998 = vmatpush1.bf16.xpose.msra.mxu0 0
        %4999 = vmatprep.subr.bf16.mxu0 0
        %5000 = vmatpush1.bf16.xpose.msra.mxu0 0
        %5001 = vmatprep.subr.bf16.mxu0 0
        %5002 = vmatpush1.bf16.xpose.msra.mxu0 0
        %5003 = vmatprep.subr.bf16.mxu0 0
        %5004 = vmatpush1.bf16.xpose.msra.mxu0 0
        %5005 = vmatprep.subr.bf16.mxu0 0
        %5006 = vmatpush1.bf16.xpose.msra.mxu0 0
        %5007 = vmatprep.subr.bf16.mxu0 0
        %5008 = vmatpush1.bf16.xpose.msra.mxu0 0
        %5009 = vmatprep.subr.bf16.mxu0 0
        %5010 = vmatpush1.bf16.xpose.msra.mxu0 0
        %5011 = vmatprep.subr.bf16.mxu0 0
        %5012 = vmatpush1.bf16.xpose.msra.mxu0 0
        %5013 = vmatprep.subr.bf16.mxu0 0
        %5014 = vmatpush1.bf16.xpose.msra.mxu0 0
        %5015 = vmatprep.subr.bf16.mxu0 0
        %5016 = vmatpush1.bf16.xpose.msra.mxu0 0
        %5017 = vmatprep.subr.bf16.mxu0 0
        %5018 = vmatpush1.bf16.xpose.msra.mxu0 0
        %5019 = vmatprep.mubr.bf16.mxu0 0
        %5020 = vmatmul.mubr.bf16.gmra.mrb[0].mxu0 %v4982
        %v5021 = vpop.f32.mrb[0].mxu0
        %v5022 = vadd.f32 0.0, %v5021
        %v5023 = vpop.f32.mrb[0].mxu0
        %v5024 = vpop.f32.mrb[0].mxu0
        %v5025 = vadd.f32 0.0, %v5024
        %v5026 = vpop.f32.mrb[0].mxu0
        %5027 = vdwg.mxu0
        %v5028 = vsel %vm1144, %v5022, -inf
        %5029 = vmax.xlane.f32.xlu0 %v5028
        %v5030 = vpop.xlane.xlu0 %5029
        %v5031 = vsel %vm1144, %v5025, -inf
        %5032 = vmax.xlane.f32.xlu0 %v5031
        %v5033 = vpop.xlane.xlu0 %5032
        %v5034 = vsub.f32 %v5022, %v5030
        %v5035 = vsub.f32 %v5025, %v5033
        %v5036 = vmul.f32 %v5034, 1.442695
        %v5037 = vpow.pop %v5036
        %v5038 = vmul.f32 %v5035, 1.442695
        %v5039 = vpow.pop %v5038
        %v5040 = vsel %vm1144, %v5037, 0.0
        %5041 = vadd.xlane.f32.xlu0 %v5040
        %v5042 = vpop.xlane.xlu0 %5041
        %v5043 = vsel %vm1144, %v5039, 0.0
        %5044 = vadd.xlane.f32.xlu0 %v5043
        %v5045 = vpop.xlane.xlu0 %5044
        %v5046 = vrcp.pop %v5042
        %v5047 = vrcp.pop %v5045
        %v5048 = vmul.f32 %v5037, %v5046
        %v5049 = vmul.f32 %v5039, %v5047
        %v5050 = vpack.c.bf16 %v5049, %v5048
        %5051 = vrot.lane.b32.xlu0 %v4617, 32
        %v5052 = vpop.permute.xlu0 %5051
        %v5055 = vsel %vm1144, %v5050, 0
        %5057 = vmatprep.subr.bf16.mxu0 0
        %5058 = vmatpush1.bf16.msra.mxu0 %v5052
        %5059 = vmatprep.subr.bf16.mxu0 0
        %5060 = vmatpush1.bf16.msra.mxu0 0
        %5061 = vmatprep.subr.bf16.mxu0 0
        %5062 = vmatpush1.bf16.msra.mxu0 0
        %5063 = vmatprep.subr.bf16.mxu0 0
        %5064 = vmatpush1.bf16.msra.mxu0 0
        %5065 = vmatprep.subr.bf16.mxu0 0
        %5066 = vmatpush1.bf16.msra.mxu0 0
        %5067 = vmatprep.subr.bf16.mxu0 0
        %5068 = vmatpush1.bf16.msra.mxu0 0
        %5069 = vmatprep.subr.bf16.mxu0 0
        %5070 = vmatpush1.bf16.msra.mxu0 0
        %5071 = vmatprep.subr.bf16.mxu0 0
        %5072 = vmatpush1.bf16.msra.mxu0 0
        %5073 = vmatprep.subr.bf16.mxu0 0
        %5074 = vmatpush1.bf16.msra.mxu0 0
        %5075 = vmatprep.subr.bf16.mxu0 0
        %5076 = vmatpush1.bf16.msra.mxu0 0
        %5077 = vmatprep.subr.bf16.mxu0 0
        %5078 = vmatpush1.bf16.msra.mxu0 0
        %5079 = vmatprep.subr.bf16.mxu0 0
        %5080 = vmatpush1.bf16.msra.mxu0 0
        %5081 = vmatprep.subr.bf16.mxu0 0
        %5082 = vmatpush1.bf16.msra.mxu0 0
        %5083 = vmatprep.subr.bf16.mxu0 0
        %5084 = vmatpush1.bf16.msra.mxu0 0
        %5085 = vmatprep.subr.bf16.mxu0 0
        %5086 = vmatpush1.bf16.msra.mxu0 0
        %5087 = vmatprep.subr.bf16.mxu0 0
        %5088 = vmatpush1.bf16.msra.mxu0 0
        %5089 = vmatprep.mubr.bf16.mxu0 0
        %5090 = vmatmul.mubr.bf16.gmra.mrb[0].mxu0 %v5055
        %v5091 = vpop.f32.mrb[0].mxu0
        %v5092 = vadd.f32 0.0, %v5091
        %v5093 = vpop.f32.mrb[0].mxu0
        %v5094 = vpop.f32.mrb[0].mxu0
        %v5095 = vadd.f32 0.0, %v5094
        %v5096 = vpop.f32.mrb[0].mxu0
        %5097 = vdwg.mxu0
        %5100 = vrot.lane.b32.xlu0 %v4850, 32
        %v5101 = vpop.permute.xlu0 %5100
        %5102 = vrot.lane.b32.xlu0 %v4853, 32
        %v5103 = vpop.permute.xlu0 %5102
        %5108 = vrot.lane.b32.xlu0 %v4971, 64
        %v5109 = vpop.permute.xlu0 %5108
        %5110 = vrot.lane.b32.xlu0 %v4974, 64
        %v5111 = vpop.permute.xlu0 %5110
        %5116 = vrot.lane.b32.xlu0 %v5092, 96
        %v5117 = vpop.permute.xlu0 %5116
        %5118 = vrot.lane.b32.xlu0 %v5095, 96
        %v5119 = vpop.permute.xlu0 %5118
        %v5122 = vsel %vm1096, %v4726, %v5101
        %v5123 = vsel %vm1096, %v4729, %v5103
        %v5124 = vsel %vm1604, %v5122, %v5109
        %v5125 = vsel %vm1604, %v5123, %v5111
        %v5126 = vsel %vm1607, %v5124, %v5117
        %v5127 = vsel %vm1607, %v5125, %v5119
        %v5128 = vpack.c.bf16 %v5127, %v5126
        %v5129 = vlaneseq
        %v5130 = vshrl.u32 %v5129, 7
        %v5131 = vsub.s32 7, %v5130
        %v5132 = vrot.slane %v3505, %v5131
        %v5149 = vunpack.c.l.b16 %v3441
        %v5150 = vunpack.c.l.b16 %v3442
        %v5151 = vunpack.c.l.b16 %v3443
        %v5152 = vunpack.c.l.b16 %v3444
        %v5153 = vunpack.c.l.b16 %v3445
        %v5154 = vunpack.c.l.b16 %v3446
        %v5155 = vunpack.c.l.b16 %v3447
        %v5156 = vunpack.c.l.b16 %v3448
        %v5157 = vunpack.c.l.b16 %v3449
        %v5158 = vunpack.c.l.b16 %v3450
        %v5159 = vunpack.c.l.b16 %v3451
        %v5160 = vunpack.c.l.b16 %v3452
        %v5161 = vunpack.c.l.b16 %v3453
        %v5162 = vunpack.c.l.b16 %v3454
        %v5163 = vunpack.c.l.b16 %v3455
        %v5164 = vunpack.c.l.b16 %v3456
        %v5165 = vpack.c.b16 %v5150, %v5149
        %v5166 = vpack.c.b16 %v5152, %v5151
        %v5167 = vpack.c.b16 %v5154, %v5153
        %v5168 = vpack.c.b16 %v5156, %v5155
        %v5169 = vpack.c.b16 %v5158, %v5157
        %v5170 = vpack.c.b16 %v5160, %v5159
        %v5171 = vpack.c.b16 %v5162, %v5161
        %v5172 = vpack.c.b16 %v5164, %v5163
        %5181 = vmatprep.subr.bf16.mxu0 0
        %5182 = vmatpush1.bf16.msra.mxu0 %v5165
        %5183 = vmatprep.subr.bf16.mxu0 0
        %5184 = vmatpush1.bf16.msra.mxu0 %v5166
        %5185 = vmatprep.subr.bf16.mxu0 0
        %5186 = vmatpush1.bf16.msra.mxu0 %v5167
        %5187 = vmatprep.subr.bf16.mxu0 0
        %5188 = vmatpush1.bf16.msra.mxu0 %v5168
        %5189 = vmatprep.subr.bf16.mxu0 0
        %5190 = vmatpush1.bf16.msra.mxu0 %v5169
        %5191 = vmatprep.subr.bf16.mxu0 0
        %5192 = vmatpush1.bf16.msra.mxu0 %v5170
        %5193 = vmatprep.subr.bf16.mxu0 0
        %5194 = vmatpush1.bf16.msra.mxu0 %v5171
        %5195 = vmatprep.subr.bf16.mxu0 0
        %5196 = vmatpush1.bf16.msra.mxu0 %v5172
        %5197 = vmatprep.subr.bf16.mxu0 0
        %5198 = vmatpush1.bf16.msra.mxu0 0
        %5199 = vmatprep.subr.bf16.mxu0 0
        %5200 = vmatpush1.bf16.msra.mxu0 0
        %5201 = vmatprep.subr.bf16.mxu0 0
        %5202 = vmatpush1.bf16.msra.mxu0 0
        %5203 = vmatprep.subr.bf16.mxu0 0
        %5204 = vmatpush1.bf16.msra.mxu0 0
        %5205 = vmatprep.subr.bf16.mxu0 0
        %5206 = vmatpush1.bf16.msra.mxu0 0
        %5207 = vmatprep.subr.bf16.mxu0 0
        %5208 = vmatpush1.bf16.msra.mxu0 0
        %5209 = vmatprep.subr.bf16.mxu0 0
        %5210 = vmatpush1.bf16.msra.mxu0 0
        %5211 = vmatprep.subr.bf16.mxu0 0
        %5212 = vmatpush1.bf16.msra.mxu0 0
        %5213 = vmatprep.mubr.bf16.mxu0 0
        %5214 = vmatmul.mubr.bf16.gmra.mrb[0].mxu0 %v5128
        %v5215 = vpop.f32.mrb[0].mxu0
        %v5216 = vadd.f32 %v5132, %v5215
        %v5217 = vpop.f32.mrb[0].mxu0
        %v5218 = vpop.f32.mrb[0].mxu0
        %v5219 = vadd.f32 %v5132, %v5218
        %v5220 = vpop.f32.mrb[0].mxu0
        %5221 = vdwg.mxu0
        %v5222 = vadd.f32 %v4382, %v5216
        %v5223 = vadd.f32 %v4383, %v5219
        %5224 = vadd.xlane.f32.xlu0 %v5222
        %v5225 = vpop.xlane.xlu0 %5224
        %5226 = vadd.xlane.f32.xlu0 %v5223
        %v5227 = vpop.xlane.xlu0 %5226
        %v5228 = vmul.f32 %v5225, %v1710
        %v5229 = vmul.f32 %v5227, %v1710
        %v5230 = vsub.f32 %v5222, %v5228
        %v5231 = vsub.f32 %v5223, %v5229
        %v5232 = vmul.f32 %v5230, %v5230
        %v5233 = vmul.f32 %v5231, %v5231
        %5234 = vadd.xlane.f32.xlu0 %v5232
        %v5235 = vpop.xlane.xlu0 %5234
        %5236 = vadd.xlane.f32.xlu0 %v5233
        %v5237 = vpop.xlane.xlu0 %5236
        %v5238 = vmul.f32 %v5235, %v1710
        %v5239 = vmul.f32 %v5237, %v1710
        %v5240 = vadd.f32 %v5238, 1e-05
        %v5241 = vadd.f32 %v5239, 1e-05
        %v5242 = vrsqrt.pop %v5240
        %v5243 = vrsqrt.pop %v5241
        %v5244 = vmul.f32 %v5230, %v5242
        %v5245 = vmul.f32 %v5231, %v5243
        %v5246 = vlaneseq
        %v5247 = vshrl.u32 %v5246, 7
        %v5248 = vsub.s32 3, %v5247
        %v5249 = vrot.slane %v3506, %v5248
        %v5250 = vmul.f32 %v5244, %v5249
        %v5251 = vmul.f32 %v5245, %v5249
        %v5252 = vlaneseq
        %v5253 = vshrl.u32 %v5252, 7
        %v5254 = vsub.s32 4, %v5253
        %v5255 = vrot.slane %v3506, %v5254
        %v5256 = vadd.f32 %v5250, %v5255
        %v5257 = vadd.f32 %v5251, %v5255
        %v5258 = vpack.c.bf16 %v5257, %v5256
        %v5260 = vlaneseq
        %v5261 = vshrl.u32 %v5260, 7
        %v5262 = vsub.s32 0, %v5261
        %v5263 = vrot.slane %v3507, %v5262
        %v5264 = vlaneseq
        %v5265 = vshrl.u32 %v5264, 7
        %v5266 = vsub.s32 1, %v5265
        %v5267 = vrot.slane %v3507, %v5266
        %v5286 = vunpack.c.l.b16 %v3457
        %v5287 = vunpack.c.h.b16 %v3457
        %v5288 = vunpack.c.l.b16 %v3458
        %v5289 = vunpack.c.h.b16 %v3458
        %v5290 = vunpack.c.l.b16 %v3459
        %v5291 = vunpack.c.h.b16 %v3459
        %v5292 = vunpack.c.l.b16 %v3460
        %v5293 = vunpack.c.h.b16 %v3460
        %v5294 = vunpack.c.l.b16 %v3461
        %v5295 = vunpack.c.h.b16 %v3461
        %v5296 = vunpack.c.l.b16 %v3462
        %v5297 = vunpack.c.h.b16 %v3462
        %v5298 = vunpack.c.l.b16 %v3463
        %v5299 = vunpack.c.h.b16 %v3463
        %v5300 = vunpack.c.l.b16 %v3464
        %v5301 = vunpack.c.h.b16 %v3464
        %v5302 = vunpack.c.l.b16 %v3465
        %v5303 = vunpack.c.h.b16 %v3465
        %v5304 = vunpack.c.l.b16 %v3466
        %v5305 = vunpack.c.h.b16 %v3466
        %v5306 = vunpack.c.l.b16 %v3467
        %v5307 = vunpack.c.h.b16 %v3467
        %v5308 = vunpack.c.l.b16 %v3468
        %v5309 = vunpack.c.h.b16 %v3468
        %v5310 = vunpack.c.l.b16 %v3469
        %v5311 = vunpack.c.h.b16 %v3469
        %v5312 = vunpack.c.l.b16 %v3470
        %v5313 = vunpack.c.h.b16 %v3470
        %v5314 = vunpack.c.l.b16 %v3471
        %v5315 = vunpack.c.h.b16 %v3471
        %v5316 = vunpack.c.l.b16 %v3472
        %v5317 = vunpack.c.h.b16 %v3472
        %v5318 = vpack.c.b16 %v5288, %v5286
        %v5319 = vpack.c.b16 %v5289, %v5287
        %v5320 = vpack.c.b16 %v5292, %v5290
        %v5321 = vpack.c.b16 %v5293, %v5291
        %v5322 = vpack.c.b16 %v5296, %v5294
        %v5323 = vpack.c.b16 %v5297, %v5295
        %v5324 = vpack.c.b16 %v5300, %v5298
        %v5325 = vpack.c.b16 %v5301, %v5299
        %v5326 = vpack.c.b16 %v5304, %v5302
        %v5327 = vpack.c.b16 %v5305, %v5303
        %v5328 = vpack.c.b16 %v5308, %v5306
        %v5329 = vpack.c.b16 %v5309, %v5307
        %v5330 = vpack.c.b16 %v5312, %v5310
        %v5331 = vpack.c.b16 %v5313, %v5311
        %v5332 = vpack.c.b16 %v5316, %v5314
        %v5333 = vpack.c.b16 %v5317, %v5315
        %5350 = vmatprep.subr.bf16.mxu0 %v5319
        %5351 = vmatpush1.bf16.msra.mxu0 %v5318
        %5352 = vmatprep.subr.bf16.mxu0 %v5321
        %5353 = vmatpush1.bf16.msra.mxu0 %v5320
        %5354 = vmatprep.subr.bf16.mxu0 %v5323
        %5355 = vmatpush1.bf16.msra.mxu0 %v5322
        %5356 = vmatprep.subr.bf16.mxu0 %v5325
        %5357 = vmatpush1.bf16.msra.mxu0 %v5324
        %5358 = vmatprep.subr.bf16.mxu0 %v5327
        %5359 = vmatpush1.bf16.msra.mxu0 %v5326
        %5360 = vmatprep.subr.bf16.mxu0 %v5329
        %5361 = vmatpush1.bf16.msra.mxu0 %v5328
        %5362 = vmatprep.subr.bf16.mxu0 %v5331
        %5363 = vmatpush1.bf16.msra.mxu0 %v5330
        %5364 = vmatprep.subr.bf16.mxu0 %v5333
        %5365 = vmatpush1.bf16.msra.mxu0 %v5332
        %5366 = vmatprep.subr.bf16.mxu0 0
        %5367 = vmatpush1.bf16.msra.mxu0 0
        %5368 = vmatprep.subr.bf16.mxu0 0
        %5369 = vmatpush1.bf16.msra.mxu0 0
        %5370 = vmatprep.subr.bf16.mxu0 0
        %5371 = vmatpush1.bf16.msra.mxu0 0
        %5372 = vmatprep.subr.bf16.mxu0 0
        %5373 = vmatpush1.bf16.msra.mxu0 0
        %5374 = vmatprep.subr.bf16.mxu0 0
        %5375 = vmatpush1.bf16.msra.mxu0 0
        %5376 = vmatprep.subr.bf16.mxu0 0
        %5377 = vmatpush1.bf16.msra.mxu0 0
        %5378 = vmatprep.subr.bf16.mxu0 0
        %5379 = vmatpush1.bf16.msra.mxu0 0
        %5380 = vmatprep.subr.bf16.mxu0 0
        %5381 = vmatpush1.bf16.msra.mxu0 0
        %5382 = vmatprep.mubr.bf16.mxu0 0
        %5383 = vmatmul.mubr.bf16.gmra.mrb[0].mxu0 %v5258
        %v5384 = vpop.f32.mrb[0].mxu0
        %v5385 = vadd.f32 %v5263, %v5384
        %v5386 = vpop.f32.mrb[0].mxu0
        %v5387 = vadd.f32 %v5267, %v5386
        %v5388 = vpop.f32.mrb[0].mxu0
        %v5389 = vadd.f32 %v5263, %v5388
        %v5390 = vpop.f32.mrb[0].mxu0
        %v5391 = vadd.f32 %v5267, %v5390
        %5392 = vdwg.mxu0
        %v5393 = vmax.f32 %v5385, 0.0
        %v5394 = vmax.f32 %v5387, 0.0
        %v5395 = vmax.f32 %v5389, 0.0
        %v5396 = vmax.f32 %v5391, 0.0
        %v5397 = vpack.c.bf16 %v5395, %v5393
        %v5398 = vpack.c.bf16 %v5396, %v5394
        %v5399 = vlaneseq
        %v5400 = vshrl.u32 %v5399, 7
        %v5401 = vsub.s32 0, %v5400
        %v5402 = vrot.slane %v3506, %v5401
        %v5435 = vunpack.c.l.b16 %v3473
        %v5436 = vunpack.c.l.b16 %v3474
        %v5437 = vunpack.c.l.b16 %v3475
        %v5438 = vunpack.c.l.b16 %v3476
        %v5439 = vunpack.c.l.b16 %v3477
        %v5440 = vunpack.c.l.b16 %v3478
        %v5441 = vunpack.c.l.b16 %v3479
        %v5442 = vunpack.c.l.b16 %v3480
        %v5443 = vunpack.c.l.b16 %v3481
        %v5444 = vunpack.c.l.b16 %v3482
        %v5445 = vunpack.c.l.b16 %v3483
        %v5446 = vunpack.c.l.b16 %v3484
        %v5447 = vunpack.c.l.b16 %v3485
        %v5448 = vunpack.c.l.b16 %v3486
        %v5449 = vunpack.c.l.b16 %v3487
        %v5450 = vunpack.c.l.b16 %v3488
        %v5451 = vunpack.c.l.b16 %v3489
        %v5452 = vunpack.c.l.b16 %v3490
        %v5453 = vunpack.c.l.b16 %v3491
        %v5454 = vunpack.c.l.b16 %v3492
        %v5455 = vunpack.c.l.b16 %v3493
        %v5456 = vunpack.c.l.b16 %v3494
        %v5457 = vunpack.c.l.b16 %v3495
        %v5458 = vunpack.c.l.b16 %v3496
        %v5459 = vunpack.c.l.b16 %v3497
        %v5460 = vunpack.c.l.b16 %v3498
        %v5461 = vunpack.c.l.b16 %v3499
        %v5462 = vunpack.c.l.b16 %v3500
        %v5463 = vunpack.c.l.b16 %v3501
        %v5464 = vunpack.c.l.b16 %v3502
        %v5465 = vunpack.c.l.b16 %v3503
        %v5466 = vunpack.c.l.b16 %v3504
        %v5467 = vpack.c.b16 %v5436, %v5435
        %v5468 = vpack.c.b16 %v5438, %v5437
        %v5469 = vpack.c.b16 %v5440, %v5439
        %v5470 = vpack.c.b16 %v5442, %v5441
        %v5471 = vpack.c.b16 %v5444, %v5443
        %v5472 = vpack.c.b16 %v5446, %v5445
        %v5473 = vpack.c.b16 %v5448, %v5447
        %v5474 = vpack.c.b16 %v5450, %v5449
        %v5475 = vpack.c.b16 %v5452, %v5451
        %v5476 = vpack.c.b16 %v5454, %v5453
        %v5477 = vpack.c.b16 %v5456, %v5455
        %v5478 = vpack.c.b16 %v5458, %v5457
        %v5479 = vpack.c.b16 %v5460, %v5459
        %v5480 = vpack.c.b16 %v5462, %v5461
        %v5481 = vpack.c.b16 %v5464, %v5463
        %v5482 = vpack.c.b16 %v5466, %v5465
        %5499 = vmatprep.subr.bf16.mxu0 0
        %5500 = vmatpush1.bf16.msra.mxu0 %v5467
        %5501 = vmatprep.subr.bf16.mxu0 0
        %5502 = vmatpush1.bf16.msra.mxu0 %v5468
        %5503 = vmatprep.subr.bf16.mxu0 0
        %5504 = vmatpush1.bf16.msra.mxu0 %v5469
        %5505 = vmatprep.subr.bf16.mxu0 0
        %5506 = vmatpush1.bf16.msra.mxu0 %v5470
        %5507 = vmatprep.subr.bf16.mxu0 0
        %5508 = vmatpush1.bf16.msra.mxu0 %v5471
        %5509 = vmatprep.subr.bf16.mxu0 0
        %5510 = vmatpush1.bf16.msra.mxu0 %v5472
        %5511 = vmatprep.subr.bf16.mxu0 0
        %5512 = vmatpush1.bf16.msra.mxu0 %v5473
        %5513 = vmatprep.subr.bf16.mxu0 0
        %5514 = vmatpush1.bf16.msra.mxu0 %v5474
        %5515 = vmatprep.subr.bf16.mxu0 0
        %5516 = vmatpush1.bf16.msra.mxu0 %v5475
        %5517 = vmatprep.subr.bf16.mxu0 0
        %5518 = vmatpush1.bf16.msra.mxu0 %v5476
        %5519 = vmatprep.subr.bf16.mxu0 0
        %5520 = vmatpush1.bf16.msra.mxu0 %v5477
        %5521 = vmatprep.subr.bf16.mxu0 0
        %5522 = vmatpush1.bf16.msra.mxu0 %v5478
        %5523 = vmatprep.subr.bf16.mxu0 0
        %5524 = vmatpush1.bf16.msra.mxu0 %v5479
        %5525 = vmatprep.subr.bf16.mxu0 0
        %5526 = vmatpush1.bf16.msra.mxu0 %v5480
        %5527 = vmatprep.subr.bf16.mxu0 0
        %5528 = vmatpush1.bf16.msra.mxu0 %v5481
        %5529 = vmatprep.subr.bf16.mxu0 0
        %5530 = vmatpush1.bf16.msra.mxu0 %v5482
        %5531 = vmatprep.mubr.bf16.mxu0 %v5398
        %5532 = vmatmul.mubr.bf16.gmra.mrb[0].mxu0 %v5397
        %v5533 = vpop.f32.mrb[0].mxu0
        %v5534 = vadd.f32 %v5402, %v5533
        %v5535 = vpop.f32.mrb[0].mxu0
        %v5536 = vpop.f32.mrb[0].mxu0
        %v5537 = vadd.f32 %v5402, %v5536
        %v5538 = vpop.f32.mrb[0].mxu0
        %5539 = vdwg.mxu0
        %v5540 = vadd.f32 %v5256, %v5534
        %v5541 = vadd.f32 %v5257, %v5537
        %5542 = vadd.xlane.f32.xlu0 %v5540
        %v5543 = vpop.xlane.xlu0 %5542
        %5544 = vadd.xlane.f32.xlu0 %v5541
        %v5545 = vpop.xlane.xlu0 %5544
        %v5546 = vmul.f32 %v5543, %v1710
        %v5547 = vmul.f32 %v5545, %v1710
        %v5548 = vsub.f32 %v5540, %v5546
        %v5549 = vsub.f32 %v5541, %v5547
        %v5550 = vmul.f32 %v5548, %v5548
        %v5551 = vmul.f32 %v5549, %v5549
        %5552 = vadd.xlane.f32.xlu0 %v5550
        %v5553 = vpop.xlane.xlu0 %5552
        %5554 = vadd.xlane.f32.xlu0 %v5551
        %v5555 = vpop.xlane.xlu0 %5554
        %v5556 = vmul.f32 %v5553, %v1710
        %v5557 = vmul.f32 %v5555, %v1710
        %v5558 = vadd.f32 %v5556, 1e-05
        %v5559 = vadd.f32 %v5557, 1e-05
        %v5560 = vrsqrt.pop %v5558
        %v5561 = vrsqrt.pop %v5559
        %v5562 = vmul.f32 %v5548, %v5560
        %v5563 = vmul.f32 %v5549, %v5561
        %v5564 = vlaneseq
        %v5565 = vshrl.u32 %v5564, 7
        %v5566 = vsub.s32 5, %v5565
        %v5567 = vrot.slane %v3506, %v5566
        %v5568 = vmul.f32 %v5562, %v5567
        %v5569 = vmul.f32 %v5563, %v5567
        %v5570 = vlaneseq
        %v5571 = vshrl.u32 %v5570, 7
        %v5572 = vsub.s32 6, %v5571
        %v5573 = vrot.slane %v3506, %v5572
        %v5574 = vadd.f32 %v5568, %v5573
        %v5575 = vadd.f32 %v5569, %v5573
        %s5576 = scalar_lea.vmem [#allocation8], 192
        %v5577 = vld [vmem:[%s5576] sm:$0xff]
        %v5578 = vld [vmem:[%s5576 + $0x8] sm:$0xf]
        %v5579 = vld [vmem:[%s5576 + $0xc] sm:$0xff]
        %v5580 = vld [vmem:[%s5576 + $0x14] sm:$0xf]
        %v5581 = vld [vmem:[%s5576 + $0x18] sm:$0xff]
        %v5582 = vld [vmem:[%s5576 + $0x20] sm:$0xf]
        %v5583 = vld [vmem:[%s5576 + $0x24] sm:$0xff]
        %v5584 = vld [vmem:[%s5576 + $0x2c] sm:$0xf]
        %v5585 = vld [vmem:[%s5576 + $0x30] sm:$0xff]
        %v5586 = vld [vmem:[%s5576 + $0x38] sm:$0xf]
        %v5587 = vld [vmem:[%s5576 + $0x3c] sm:$0xff]
        %v5588 = vld [vmem:[%s5576 + $0x44] sm:$0xf]
        %v5589 = vld [vmem:[%s5576 + $0x48] sm:$0xff]
        %v5590 = vld [vmem:[%s5576 + $0x50] sm:$0xf]
        %v5591 = vld [vmem:[%s5576 + $0x54] sm:$0xff]
        %v5592 = vld [vmem:[%s5576 + $0x5c] sm:$0xf]
        %v5593 = vld [vmem:[%s5576 + $0x60] sm:$0xff]
        %v5594 = vld [vmem:[%s5576 + $0x68] sm:$0xf]
        %v5595 = vld [vmem:[%s5576 + $0x6c] sm:$0xff]
        %v5596 = vld [vmem:[%s5576 + $0x74] sm:$0xf]
        %v5597 = vld [vmem:[%s5576 + $0x78] sm:$0xff]
        %v5598 = vld [vmem:[%s5576 + $0x80] sm:$0xf]
        %v5599 = vld [vmem:[%s5576 + $0x84] sm:$0xff]
        %v5600 = vld [vmem:[%s5576 + $0x8c] sm:$0xf]
        %v5601 = vld [vmem:[%s5576 + $0x90] sm:$0xff]
        %v5602 = vld [vmem:[%s5576 + $0x98] sm:$0xf]
        %v5603 = vld [vmem:[%s5576 + $0x9c] sm:$0xff]
        %v5604 = vld [vmem:[%s5576 + $0xa4] sm:$0xf]
        %v5605 = vld [vmem:[%s5576 + $0xa8] sm:$0xff]
        %v5606 = vld [vmem:[%s5576 + $0xb0] sm:$0xf]
        %v5607 = vld [vmem:[%s5576 + $0xb4] sm:$0xff]
        %v5608 = vld [vmem:[%s5576 + $0xbc] sm:$0xf]
        %s5609 = scalar_lea.vmem [#allocation10], 64
        %v5610 = vld [vmem:[%s5609] sm:$0xf]
        %v5611 = vld [vmem:[%s5609 + $0x4] sm:$0xf]
        %v5612 = vld [vmem:[%s5609 + $0x8] sm:$0xf]
        %v5613 = vld [vmem:[%s5609 + $0xc] sm:$0xf]
        %v5614 = vld [vmem:[%s5609 + $0x10] sm:$0xf]
        %v5615 = vld [vmem:[%s5609 + $0x14] sm:$0xf]
        %v5616 = vld [vmem:[%s5609 + $0x18] sm:$0xf]
        %v5617 = vld [vmem:[%s5609 + $0x1c] sm:$0xf]
        %v5618 = vld [vmem:[%s5609 + $0x20] sm:$0xf]
        %v5619 = vld [vmem:[%s5609 + $0x24] sm:$0xf]
        %v5620 = vld [vmem:[%s5609 + $0x28] sm:$0xf]
        %v5621 = vld [vmem:[%s5609 + $0x2c] sm:$0xf]
        %v5622 = vld [vmem:[%s5609 + $0x30] sm:$0xf]
        %v5623 = vld [vmem:[%s5609 + $0x34] sm:$0xf]
        %v5624 = vld [vmem:[%s5609 + $0x38] sm:$0xf]
        %v5625 = vld [vmem:[%s5609 + $0x3c] sm:$0xf]
        %s5626 = scalar_lea.vmem [#allocation11], 64
        %v5627 = vld [vmem:[%s5626] sm:$0xf]
        %v5628 = vld [vmem:[%s5626 + $0x4] sm:$0xf]
        %v5629 = vld [vmem:[%s5626 + $0x8] sm:$0xf]
        %v5630 = vld [vmem:[%s5626 + $0xc] sm:$0xf]
        %v5631 = vld [vmem:[%s5626 + $0x10] sm:$0xf]
        %v5632 = vld [vmem:[%s5626 + $0x14] sm:$0xf]
        %v5633 = vld [vmem:[%s5626 + $0x18] sm:$0xf]
        %v5634 = vld [vmem:[%s5626 + $0x1c] sm:$0xf]
        %v5635 = vld [vmem:[%s5626 + $0x20] sm:$0xf]
        %v5636 = vld [vmem:[%s5626 + $0x24] sm:$0xf]
        %v5637 = vld [vmem:[%s5626 + $0x28] sm:$0xf]
        %v5638 = vld [vmem:[%s5626 + $0x2c] sm:$0xf]
        %v5639 = vld [vmem:[%s5626 + $0x30] sm:$0xf]
        %v5640 = vld [vmem:[%s5626 + $0x34] sm:$0xf]
        %v5641 = vld [vmem:[%s5626 + $0x38] sm:$0xf]
        %v5642 = vld [vmem:[%s5626 + $0x3c] sm:$0xf]
        %s5643 = scalar_lea.vmem [#allocation13], 128
        %v5644 = vld [vmem:[%s5643] sm:$0xff]
        %v5645 = vld [vmem:[%s5643 + $0x8] sm:$0xff]
        %v5646 = vld [vmem:[%s5643 + $0x10] sm:$0xff]
        %v5647 = vld [vmem:[%s5643 + $0x18] sm:$0xff]
        %v5648 = vld [vmem:[%s5643 + $0x20] sm:$0xff]
        %v5649 = vld [vmem:[%s5643 + $0x28] sm:$0xff]
        %v5650 = vld [vmem:[%s5643 + $0x30] sm:$0xff]
        %v5651 = vld [vmem:[%s5643 + $0x38] sm:$0xff]
        %v5652 = vld [vmem:[%s5643 + $0x40] sm:$0xff]
        %v5653 = vld [vmem:[%s5643 + $0x48] sm:$0xff]
        %v5654 = vld [vmem:[%s5643 + $0x50] sm:$0xff]
        %v5655 = vld [vmem:[%s5643 + $0x58] sm:$0xff]
        %v5656 = vld [vmem:[%s5643 + $0x60] sm:$0xff]
        %v5657 = vld [vmem:[%s5643 + $0x68] sm:$0xff]
        %v5658 = vld [vmem:[%s5643 + $0x70] sm:$0xff]
        %v5659 = vld [vmem:[%s5643 + $0x78] sm:$0xff]
        %s5660 = scalar_lea.vmem [#allocation14], 64
        %v5661 = vld [vmem:[%s5660] sm:$0xf]
        %v5662 = vld [vmem:[%s5660 + $0x4] sm:$0xf]
        %v5663 = vld [vmem:[%s5660 + $0x8] sm:$0xf]
        %v5664 = vld [vmem:[%s5660 + $0xc] sm:$0xf]
        %v5665 = vld [vmem:[%s5660 + $0x10] sm:$0xf]
        %v5666 = vld [vmem:[%s5660 + $0x14] sm:$0xf]
        %v5667 = vld [vmem:[%s5660 + $0x18] sm:$0xf]
        %v5668 = vld [vmem:[%s5660 + $0x1c] sm:$0xf]
        %v5669 = vld [vmem:[%s5660 + $0x20] sm:$0xf]
        %v5670 = vld [vmem:[%s5660 + $0x24] sm:$0xf]
        %v5671 = vld [vmem:[%s5660 + $0x28] sm:$0xf]
        %v5672 = vld [vmem:[%s5660 + $0x2c] sm:$0xf]
        %v5673 = vld [vmem:[%s5660 + $0x30] sm:$0xf]
        %v5674 = vld [vmem:[%s5660 + $0x34] sm:$0xf]
        %v5675 = vld [vmem:[%s5660 + $0x38] sm:$0xf]
        %v5676 = vld [vmem:[%s5660 + $0x3c] sm:$0xf]
        %s5677 = scalar_lea.vmem [#allocation16], 128
        %v5678 = vld [vmem:[%s5677] sm:$0xff]
        %v5679 = vld [vmem:[%s5677 + $0x8] sm:$0xff]
        %v5680 = vld [vmem:[%s5677 + $0x10] sm:$0xff]
        %v5681 = vld [vmem:[%s5677 + $0x18] sm:$0xff]
        %v5682 = vld [vmem:[%s5677 + $0x20] sm:$0xff]
        %v5683 = vld [vmem:[%s5677 + $0x28] sm:$0xff]
        %v5684 = vld [vmem:[%s5677 + $0x30] sm:$0xff]
        %v5685 = vld [vmem:[%s5677 + $0x38] sm:$0xff]
        %v5686 = vld [vmem:[%s5677 + $0x40] sm:$0xff]
        %v5687 = vld [vmem:[%s5677 + $0x48] sm:$0xff]
        %v5688 = vld [vmem:[%s5677 + $0x50] sm:$0xff]
        %v5689 = vld [vmem:[%s5677 + $0x58] sm:$0xff]
        %v5690 = vld [vmem:[%s5677 + $0x60] sm:$0xff]
        %v5691 = vld [vmem:[%s5677 + $0x68] sm:$0xff]
        %v5692 = vld [vmem:[%s5677 + $0x70] sm:$0xff]
        %v5693 = vld [vmem:[%s5677 + $0x78] sm:$0xff]
        %s5694 = scalar_lea.vmem [#allocation17], 128
        %v5695 = vld [vmem:[%s5694] sm:$0xf]
        %v5696 = vld [vmem:[%s5694 + $0x4] sm:$0xf]
        %v5697 = vld [vmem:[%s5694 + $0x8] sm:$0xf]
        %v5698 = vld [vmem:[%s5694 + $0xc] sm:$0xf]
        %v5699 = vld [vmem:[%s5694 + $0x10] sm:$0xf]
        %v5700 = vld [vmem:[%s5694 + $0x14] sm:$0xf]
        %v5701 = vld [vmem:[%s5694 + $0x18] sm:$0xf]
        %v5702 = vld [vmem:[%s5694 + $0x1c] sm:$0xf]
        %v5703 = vld [vmem:[%s5694 + $0x20] sm:$0xf]
        %v5704 = vld [vmem:[%s5694 + $0x24] sm:$0xf]
        %v5705 = vld [vmem:[%s5694 + $0x28] sm:$0xf]
        %v5706 = vld [vmem:[%s5694 + $0x2c] sm:$0xf]
        %v5707 = vld [vmem:[%s5694 + $0x30] sm:$0xf]
        %v5708 = vld [vmem:[%s5694 + $0x34] sm:$0xf]
        %v5709 = vld [vmem:[%s5694 + $0x38] sm:$0xf]
        %v5710 = vld [vmem:[%s5694 + $0x3c] sm:$0xf]
        %v5711 = vld [vmem:[%s5694 + $0x40] sm:$0xf]
        %v5712 = vld [vmem:[%s5694 + $0x44] sm:$0xf]
        %v5713 = vld [vmem:[%s5694 + $0x48] sm:$0xf]
        %v5714 = vld [vmem:[%s5694 + $0x4c] sm:$0xf]
        %v5715 = vld [vmem:[%s5694 + $0x50] sm:$0xf]
        %v5716 = vld [vmem:[%s5694 + $0x54] sm:$0xf]
        %v5717 = vld [vmem:[%s5694 + $0x58] sm:$0xf]
        %v5718 = vld [vmem:[%s5694 + $0x5c] sm:$0xf]
        %v5719 = vld [vmem:[%s5694 + $0x60] sm:$0xf]
        %v5720 = vld [vmem:[%s5694 + $0x64] sm:$0xf]
        %v5721 = vld [vmem:[%s5694 + $0x68] sm:$0xf]
        %v5722 = vld [vmem:[%s5694 + $0x6c] sm:$0xf]
        %v5723 = vld [vmem:[%s5694 + $0x70] sm:$0xf]
        %v5724 = vld [vmem:[%s5694 + $0x74] sm:$0xf]
        %v5725 = vld [vmem:[%s5694 + $0x78] sm:$0xf]
        %v5726 = vld [vmem:[%s5694 + $0x7c] sm:$0xf]
        %s5727 = scalar_lea.vmem %s16, 16
        %v5728 = vld [vmem:[%s5727] sm:$0xff]
        %v5729 = vld [vmem:[%s5727 + $0x8] sm:$0x7f]
        %s5730 = scalar_lea.vmem [#allocation19], 2
        %v5731 = vld [vmem:[%s5730] sm:$0x3]
        %v5732 = vpack.c.bf16 %v5575, %v5574
        %v5765 = vunpack.c.l.b16 %v5577
        %v5766 = vunpack.c.h.b16 %v5577
        %v5767 = vunpack.c.l.b16 %v5578
        %v5768 = vunpack.c.l.b16 %v5579
        %v5769 = vunpack.c.h.b16 %v5579
        %v5770 = vunpack.c.l.b16 %v5580
        %v5771 = vunpack.c.l.b16 %v5581
        %v5772 = vunpack.c.h.b16 %v5581
        %v5773 = vunpack.c.l.b16 %v5582
        %v5774 = vunpack.c.l.b16 %v5583
        %v5775 = vunpack.c.h.b16 %v5583
        %v5776 = vunpack.c.l.b16 %v5584
        %v5777 = vunpack.c.l.b16 %v5585
        %v5778 = vunpack.c.h.b16 %v5585
        %v5779 = vunpack.c.l.b16 %v5586
        %v5780 = vunpack.c.l.b16 %v5587
        %v5781 = vunpack.c.h.b16 %v5587
        %v5782 = vunpack.c.l.b16 %v5588
        %v5783 = vunpack.c.l.b16 %v5589
        %v5784 = vunpack.c.h.b16 %v5589
        %v5785 = vunpack.c.l.b16 %v5590
        %v5786 = vunpack.c.l.b16 %v5591
        %v5787 = vunpack.c.h.b16 %v5591
        %v5788 = vunpack.c.l.b16 %v5592
        %v5789 = vunpack.c.l.b16 %v5593
        %v5790 = vunpack.c.h.b16 %v5593
        %v5791 = vunpack.c.l.b16 %v5594
        %v5792 = vunpack.c.l.b16 %v5595
        %v5793 = vunpack.c.h.b16 %v5595
        %v5794 = vunpack.c.l.b16 %v5596
        %v5795 = vunpack.c.l.b16 %v5597
        %v5796 = vunpack.c.h.b16 %v5597
        %v5797 = vunpack.c.l.b16 %v5598
        %v5798 = vunpack.c.l.b16 %v5599
        %v5799 = vunpack.c.h.b16 %v5599
        %v5800 = vunpack.c.l.b16 %v5600
        %v5801 = vunpack.c.l.b16 %v5601
        %v5802 = vunpack.c.h.b16 %v5601
        %v5803 = vunpack.c.l.b16 %v5602
        %v5804 = vunpack.c.l.b16 %v5603
        %v5805 = vunpack.c.h.b16 %v5603
        %v5806 = vunpack.c.l.b16 %v5604
        %v5807 = vunpack.c.l.b16 %v5605
        %v5808 = vunpack.c.h.b16 %v5605
        %v5809 = vunpack.c.l.b16 %v5606
        %v5810 = vunpack.c.l.b16 %v5607
        %v5811 = vunpack.c.h.b16 %v5607
        %v5812 = vunpack.c.l.b16 %v5608
        %v5813 = vpack.c.b16 %v5768, %v5765
        %v5814 = vpack.c.b16 %v5769, %v5766
        %v5815 = vpack.c.b16 %v5770, %v5767
        %v5816 = vpack.c.b16 %v5774, %v5771
        %v5817 = vpack.c.b16 %v5775, %v5772
        %v5818 = vpack.c.b16 %v5776, %v5773
        %v5819 = vpack.c.b16 %v5780, %v5777
        %v5820 = vpack.c.b16 %v5781, %v5778
        %v5821 = vpack.c.b16 %v5782, %v5779
        %v5822 = vpack.c.b16 %v5786, %v5783
        %v5823 = vpack.c.b16 %v5787, %v5784
        %v5824 = vpack.c.b16 %v5788, %v5785
        %v5825 = vpack.c.b16 %v5792, %v5789
        %v5826 = vpack.c.b16 %v5793, %v5790
        %v5827 = vpack.c.b16 %v5794, %v5791
        %v5828 = vpack.c.b16 %v5798, %v5795
        %v5829 = vpack.c.b16 %v5799, %v5796
        %v5830 = vpack.c.b16 %v5800, %v5797
        %v5831 = vpack.c.b16 %v5804, %v5801
        %v5832 = vpack.c.b16 %v5805, %v5802
        %v5833 = vpack.c.b16 %v5806, %v5803
        %v5834 = vpack.c.b16 %v5810, %v5807
        %v5835 = vpack.c.b16 %v5811, %v5808
        %v5836 = vpack.c.b16 %v5812, %v5809
        %5861 = vmatprep.subr.bf16.mxu0 %v5814
        %5862 = vmatpush1.bf16.msra.mxu0 %v5813
        %5863 = vmatprep.subr.bf16.mxu0 %v5817
        %5864 = vmatpush1.bf16.msra.mxu0 %v5816
        %5865 = vmatprep.subr.bf16.mxu0 %v5820
        %5866 = vmatpush1.bf16.msra.mxu0 %v5819
        %5867 = vmatprep.subr.bf16.mxu0 %v5823
        %5868 = vmatpush1.bf16.msra.mxu0 %v5822
        %5869 = vmatprep.subr.bf16.mxu0 %v5826
        %5870 = vmatpush1.bf16.msra.mxu0 %v5825
        %5871 = vmatprep.subr.bf16.mxu0 %v5829
        %5872 = vmatpush1.bf16.msra.mxu0 %v5828
        %5873 = vmatprep.subr.bf16.mxu0 %v5832
        %5874 = vmatpush1.bf16.msra.mxu0 %v5831
        %5875 = vmatprep.subr.bf16.mxu0 %v5835
        %5876 = vmatpush1.bf16.msra.mxu0 %v5834
        %5877 = vmatprep.subr.bf16.mxu0 0
        %5878 = vmatpush1.bf16.msra.mxu0 0
        %5879 = vmatprep.subr.bf16.mxu0 0
        %5880 = vmatpush1.bf16.msra.mxu0 0
        %5881 = vmatprep.subr.bf16.mxu0 0
        %5882 = vmatpush1.bf16.msra.mxu0 0
        %5883 = vmatprep.subr.bf16.mxu0 0
        %5884 = vmatpush1.bf16.msra.mxu0 0
        %5885 = vmatprep.subr.bf16.mxu0 0
        %5886 = vmatpush1.bf16.msra.mxu0 0
        %5887 = vmatprep.subr.bf16.mxu0 0
        %5888 = vmatpush1.bf16.msra.mxu0 0
        %5889 = vmatprep.subr.bf16.mxu0 0
        %5890 = vmatpush1.bf16.msra.mxu0 0
        %5891 = vmatprep.subr.bf16.mxu0 0
        %5892 = vmatpush1.bf16.msra.mxu0 0
        %5893 = vmatprep.mubr.bf16.mxu0 0
        %5894 = vmatmul.mubr.bf16.gmra.mrb[0].mxu0 %v5732
        %v5895 = vpop.f32.mrb[0].mxu0
        %v5896 = vadd.f32 0.0, %v5895
        %v5897 = vpop.f32.mrb[0].mxu0
        %v5898 = vadd.f32 0.0, %v5897
        %v5899 = vpop.f32.mrb[0].mxu0
        %v5900 = vadd.f32 0.0, %v5899
        %v5901 = vpop.f32.mrb[0].mxu0
        %v5902 = vadd.f32 0.0, %v5901
        %5903 = vdwg.mxu0
        %5904 = vmatprep.subr.bf16.mxu0 0
        %5905 = vmatpush1.bf16.msra.mxu0 %v5815
        %5906 = vmatprep.subr.bf16.mxu0 0
        %5907 = vmatpush1.bf16.msra.mxu0 %v5818
        %5908 = vmatprep.subr.bf16.mxu0 0
        %5909 = vmatpush1.bf16.msra.mxu0 %v5821
        %5910 = vmatprep.subr.bf16.mxu0 0
        %5911 = vmatpush1.bf16.msra.mxu0 %v5824
        %5912 = vmatprep.subr.bf16.mxu0 0
        %5913 = vmatpush1.bf16.msra.mxu0 %v5827
        %5914 = vmatprep.subr.bf16.mxu0 0
        %5915 = vmatpush1.bf16.msra.mxu0 %v5830
        %5916 = vmatprep.subr.bf16.mxu0 0
        %5917 = vmatpush1.bf16.msra.mxu0 %v5833
        %5918 = vmatprep.subr.bf16.mxu0 0
        %5919 = vmatpush1.bf16.msra.mxu0 %v5836
        %5920 = vmatprep.subr.bf16.mxu0 0
        %5921 = vmatpush1.bf16.msra.mxu0 0
        %5922 = vmatprep.subr.bf16.mxu0 0
        %5923 = vmatpush1.bf16.msra.mxu0 0
        %5924 = vmatprep.subr.bf16.mxu0 0
        %5925 = vmatpush1.bf16.msra.mxu0 0
        %5926 = vmatprep.subr.bf16.mxu0 0
        %5927 = vmatpush1.bf16.msra.mxu0 0
        %5928 = vmatprep.subr.bf16.mxu0 0
        %5929 = vmatpush1.bf16.msra.mxu0 0
        %5930 = vmatprep.subr.bf16.mxu0 0
        %5931 = vmatpush1.bf16.msra.mxu0 0
        %5932 = vmatprep.subr.bf16.mxu0 0
        %5933 = vmatpush1.bf16.msra.mxu0 0
        %5934 = vmatprep.subr.bf16.mxu0 0
        %5935 = vmatpush1.bf16.msra.mxu0 0
        %5936 = vmatprep.mubr.bf16.mxu0 0
        %5937 = vmatmul.mubr.bf16.gmra.mrb[0].mxu0 %v5732
        %v5938 = vpop.f32.mrb[0].mxu0
        %v5939 = vadd.f32 0.0, %v5938
        %v5940 = vpop.f32.mrb[0].mxu0
        %v5941 = vpop.f32.mrb[0].mxu0
        %v5942 = vadd.f32 0.0, %v5941
        %v5943 = vpop.f32.mrb[0].mxu0
        %5944 = vdwg.mxu0
        %v5945 = vlaneseq
        %v5946 = vshrl.u32 %v5945, 7
        %v5947 = vsub.s32 0, %v5946
        %v5948 = vrot.slane %v5728, %v5947
        %v5949 = vadd.f32 %v5896, %v5948
        %v5950 = vadd.f32 %v5900, %v5948
        %v5951 = vlaneseq
        %v5952 = vshrl.u32 %v5951, 7
        %v5953 = vsub.s32 1, %v5952
        %v5954 = vrot.slane %v5728, %v5953
        %v5955 = vadd.f32 %v5898, %v5954
        %v5956 = vadd.f32 %v5902, %v5954
        %v5957 = vlaneseq
        %v5958 = vshrl.u32 %v5957, 7
        %v5959 = vsub.s32 2, %v5958
        %v5960 = vrot.slane %v5728, %v5959
        %v5961 = vadd.f32 %v5939, %v5960
        %v5962 = vadd.f32 %v5942, %v5960
        %v5963 = vmul.f32 %v5949, 0.17677669
        %v5964 = vmul.f32 %v5950, 0.17677669
        %v5965 = vpack.c.bf16 %v5964, %v5963
        %v5966 = vpack.c.bf16 %v5956, %v5955
        %v5967 = vpack.c.bf16 %v5962, %v5961
        %v5969 = vsel %vm1096, %v5965, 0
        %v5972 = vsel %vm1096, %v5966, 0
        %5974 = vmatprep.subr.bf16.mxu0 0
        %5975 = vmatpush1.bf16.xpose.msra.mxu0 %v5972
        %5976 = vmatprep.subr.bf16.mxu0 0
        %5977 = vmatpush1.bf16.xpose.msra.mxu0 0
        %5978 = vmatprep.subr.bf16.mxu0 0
        %5979 = vmatpush1.bf16.xpose.msra.mxu0 0
        %5980 = vmatprep.subr.bf16.mxu0 0
        %5981 = vmatpush1.bf16.xpose.msra.mxu0 0
        %5982 = vmatprep.subr.bf16.mxu0 0
        %5983 = vmatpush1.bf16.xpose.msra.mxu0 0
        %5984 = vmatprep.subr.bf16.mxu0 0
        %5985 = vmatpush1.bf16.xpose.msra.mxu0 0
        %5986 = vmatprep.subr.bf16.mxu0 0
        %5987 = vmatpush1.bf16.xpose.msra.mxu0 0
        %5988 = vmatprep.subr.bf16.mxu0 0
        %5989 = vmatpush1.bf16.xpose.msra.mxu0 0
        %5990 = vmatprep.subr.bf16.mxu0 0
        %5991 = vmatpush1.bf16.xpose.msra.mxu0 0
        %5992 = vmatprep.subr.bf16.mxu0 0
        %5993 = vmatpush1.bf16.xpose.msra.mxu0 0
        %5994 = vmatprep.subr.bf16.mxu0 0
        %5995 = vmatpush1.bf16.xpose.msra.mxu0 0
        %5996 = vmatprep.subr.bf16.mxu0 0
        %5997 = vmatpush1.bf16.xpose.msra.mxu0 0
        %5998 = vmatprep.subr.bf16.mxu0 0
        %5999 = vmatpush1.bf16.xpose.msra.mxu0 0
        %6000 = vmatprep.subr.bf16.mxu0 0
        %6001 = vmatpush1.bf16.xpose.msra.mxu0 0
        %6002 = vmatprep.subr.bf16.mxu0 0
        %6003 = vmatpush1.bf16.xpose.msra.mxu0 0
        %6004 = vmatprep.subr.bf16.mxu0 0
        %6005 = vmatpush1.bf16.xpose.msra.mxu0 0
        %6006 = vmatprep.mubr.bf16.mxu0 0
        %6007 = vmatmul.mubr.bf16.gmra.mrb[0].mxu0 %v5969
        %v6008 = vpop.f32.mrb[0].mxu0
        %v6009 = vadd.f32 0.0, %v6008
        %v6010 = vpop.f32.mrb[0].mxu0
        %v6011 = vpop.f32.mrb[0].mxu0
        %v6012 = vadd.f32 0.0, %v6011
        %v6013 = vpop.f32.mrb[0].mxu0
        %6014 = vdwg.mxu0
        %v6015 = vsel %vm1144, %v6009, -inf
        %6016 = vmax.xlane.f32.xlu0 %v6015
        %v6017 = vpop.xlane.xlu0 %6016
        %v6018 = vsel %vm1144, %v6012, -inf
        %6019 = vmax.xlane.f32.xlu0 %v6018
        %v6020 = vpop.xlane.xlu0 %6019
        %v6021 = vsub.f32 %v6009, %v6017
        %v6022 = vsub.f32 %v6012, %v6020
        %v6023 = vmul.f32 %v6021, 1.442695
        %v6024 = vpow.pop %v6023
        %v6025 = vmul.f32 %v6022, 1.442695
        %v6026 = vpow.pop %v6025
        %v6027 = vsel %vm1144, %v6024, 0.0
        %6028 = vadd.xlane.f32.xlu0 %v6027
        %v6029 = vpop.xlane.xlu0 %6028
        %v6030 = vsel %vm1144, %v6026, 0.0
        %6031 = vadd.xlane.f32.xlu0 %v6030
        %v6032 = vpop.xlane.xlu0 %6031
        %v6033 = vrcp.pop %v6029
        %v6034 = vrcp.pop %v6032
        %v6035 = vmul.f32 %v6024, %v6033
        %v6036 = vmul.f32 %v6026, %v6034
        %v6037 = vpack.c.bf16 %v6036, %v6035
        %v6039 = vsel %vm1144, %v6037, 0
        %6041 = vmatprep.subr.bf16.mxu0 0
        %6042 = vmatpush1.bf16.msra.mxu0 %v5967
        %6043 = vmatprep.subr.bf16.mxu0 0
        %6044 = vmatpush1.bf16.msra.mxu0 0
        %6045 = vmatprep.subr.bf16.mxu0 0
        %6046 = vmatpush1.bf16.msra.mxu0 0
        %6047 = vmatprep.subr.bf16.mxu0 0
        %6048 = vmatpush1.bf16.msra.mxu0 0
        %6049 = vmatprep.subr.bf16.mxu0 0
        %6050 = vmatpush1.bf16.msra.mxu0 0
        %6051 = vmatprep.subr.bf16.mxu0 0
        %6052 = vmatpush1.bf16.msra.mxu0 0
        %6053 = vmatprep.subr.bf16.mxu0 0
        %6054 = vmatpush1.bf16.msra.mxu0 0
        %6055 = vmatprep.subr.bf16.mxu0 0
        %6056 = vmatpush1.bf16.msra.mxu0 0
        %6057 = vmatprep.subr.bf16.mxu0 0
        %6058 = vmatpush1.bf16.msra.mxu0 0
        %6059 = vmatprep.subr.bf16.mxu0 0
        %6060 = vmatpush1.bf16.msra.mxu0 0
        %6061 = vmatprep.subr.bf16.mxu0 0
        %6062 = vmatpush1.bf16.msra.mxu0 0
        %6063 = vmatprep.subr.bf16.mxu0 0
        %6064 = vmatpush1.bf16.msra.mxu0 0
        %6065 = vmatprep.subr.bf16.mxu0 0
        %6066 = vmatpush1.bf16.msra.mxu0 0
        %6067 = vmatprep.subr.bf16.mxu0 0
        %6068 = vmatpush1.bf16.msra.mxu0 0
        %6069 = vmatprep.subr.bf16.mxu0 0
        %6070 = vmatpush1.bf16.msra.mxu0 0
        %6071 = vmatprep.subr.bf16.mxu0 0
        %6072 = vmatpush1.bf16.msra.mxu0 0
        %6073 = vmatprep.mubr.bf16.mxu0 0
        %6074 = vmatmul.mubr.bf16.gmra.mrb[0].mxu0 %v6039
        %v6075 = vpop.f32.mrb[0].mxu0
        %v6076 = vadd.f32 0.0, %v6075
        %v6077 = vpop.f32.mrb[0].mxu0
        %v6078 = vpop.f32.mrb[0].mxu0
        %v6079 = vadd.f32 0.0, %v6078
        %v6080 = vpop.f32.mrb[0].mxu0
        %6081 = vdwg.mxu0
        %6083 = vrot.lane.b32.xlu0 %v5965, 96
        %v6084 = vpop.permute.xlu0 %6083
        %6086 = vrot.lane.b32.xlu0 %v5966, 96
        %v6087 = vpop.permute.xlu0 %6086
        %v6089 = vsel %vm1096, %v6084, 0
        %v6092 = vsel %vm1096, %v6087, 0
        %6094 = vmatprep.subr.bf16.mxu0 0
        %6095 = vmatpush1.bf16.xpose.msra.mxu0 %v6092
        %6096 = vmatprep.subr.bf16.mxu0 0
        %6097 = vmatpush1.bf16.xpose.msra.mxu0 0
        %6098 = vmatprep.subr.bf16.mxu0 0
        %6099 = vmatpush1.bf16.xpose.msra.mxu0 0
        %6100 = vmatprep.subr.bf16.mxu0 0
        %6101 = vmatpush1.bf16.xpose.msra.mxu0 0
        %6102 = vmatprep.subr.bf16.mxu0 0
        %6103 = vmatpush1.bf16.xpose.msra.mxu0 0
        %6104 = vmatprep.subr.bf16.mxu0 0
        %6105 = vmatpush1.bf16.xpose.msra.mxu0 0
        %6106 = vmatprep.subr.bf16.mxu0 0
        %6107 = vmatpush1.bf16.xpose.msra.mxu0 0
        %6108 = vmatprep.subr.bf16.mxu0 0
        %6109 = vmatpush1.bf16.xpose.msra.mxu0 0
        %6110 = vmatprep.subr.bf16.mxu0 0
        %6111 = vmatpush1.bf16.xpose.msra.mxu0 0
        %6112 = vmatprep.subr.bf16.mxu0 0
        %6113 = vmatpush1.bf16.xpose.msra.mxu0 0
        %6114 = vmatprep.subr.bf16.mxu0 0
        %6115 = vmatpush1.bf16.xpose.msra.mxu0 0
        %6116 = vmatprep.subr.bf16.mxu0 0
        %6117 = vmatpush1.bf16.xpose.msra.mxu0 0
        %6118 = vmatprep.subr.bf16.mxu0 0
        %6119 = vmatpush1.bf16.xpose.msra.mxu0 0
        %6120 = vmatprep.subr.bf16.mxu0 0
        %6121 = vmatpush1.bf16.xpose.msra.mxu0 0
        %6122 = vmatprep.subr.bf16.mxu0 0
        %6123 = vmatpush1.bf16.xpose.msra.mxu0 0
        %6124 = vmatprep.subr.bf16.mxu0 0
        %6125 = vmatpush1.bf16.xpose.msra.mxu0 0
        %6126 = vmatprep.mubr.bf16.mxu0 0
        %6127 = vmatmul.mubr.bf16.gmra.mrb[0].mxu0 %v6089
        %v6128 = vpop.f32.mrb[0].mxu0
        %v6129 = vadd.f32 0.0, %v6128
        %v6130 = vpop.f32.mrb[0].mxu0
        %v6131 = vpop.f32.mrb[0].mxu0
        %v6132 = vadd.f32 0.0, %v6131
        %v6133 = vpop.f32.mrb[0].mxu0
        %6134 = vdwg.mxu0
        %v6135 = vsel %vm1144, %v6129, -inf
        %6136 = vmax.xlane.f32.xlu0 %v6135
        %v6137 = vpop.xlane.xlu0 %6136
        %v6138 = vsel %vm1144, %v6132, -inf
        %6139 = vmax.xlane.f32.xlu0 %v6138
        %v6140 = vpop.xlane.xlu0 %6139
        %v6141 = vsub.f32 %v6129, %v6137
        %v6142 = vsub.f32 %v6132, %v6140
        %v6143 = vmul.f32 %v6141, 1.442695
        %v6144 = vpow.pop %v6143
        %v6145 = vmul.f32 %v6142, 1.442695
        %v6146 = vpow.pop %v6145
        %v6147 = vsel %vm1144, %v6144, 0.0
        %6148 = vadd.xlane.f32.xlu0 %v6147
        %v6149 = vpop.xlane.xlu0 %6148
        %v6150 = vsel %vm1144, %v6146, 0.0
        %6151 = vadd.xlane.f32.xlu0 %v6150
        %v6152 = vpop.xlane.xlu0 %6151
        %v6153 = vrcp.pop %v6149
        %v6154 = vrcp.pop %v6152
        %v6155 = vmul.f32 %v6144, %v6153
        %v6156 = vmul.f32 %v6146, %v6154
        %v6157 = vpack.c.bf16 %v6156, %v6155
        %6159 = vrot.lane.b32.xlu0 %v5967, 96
        %v6160 = vpop.permute.xlu0 %6159
        %v6163 = vsel %vm1144, %v6157, 0
        %6165 = vmatprep.subr.bf16.mxu0 0
        %6166 = vmatpush1.bf16.msra.mxu0 %v6160
        %6167 = vmatprep.subr.bf16.mxu0 0
        %6168 = vmatpush1.bf16.msra.mxu0 0
        %6169 = vmatprep.subr.bf16.mxu0 0
        %6170 = vmatpush1.bf16.msra.mxu0 0
        %6171 = vmatprep.subr.bf16.mxu0 0
        %6172 = vmatpush1.bf16.msra.mxu0 0
        %6173 = vmatprep.subr.bf16.mxu0 0
        %6174 = vmatpush1.bf16.msra.mxu0 0
        %6175 = vmatprep.subr.bf16.mxu0 0
        %6176 = vmatpush1.bf16.msra.mxu0 0
        %6177 = vmatprep.subr.bf16.mxu0 0
        %6178 = vmatpush1.bf16.msra.mxu0 0
        %6179 = vmatprep.subr.bf16.mxu0 0
        %6180 = vmatpush1.bf16.msra.mxu0 0
        %6181 = vmatprep.subr.bf16.mxu0 0
        %6182 = vmatpush1.bf16.msra.mxu0 0
        %6183 = vmatprep.subr.bf16.mxu0 0
        %6184 = vmatpush1.bf16.msra.mxu0 0
        %6185 = vmatprep.subr.bf16.mxu0 0
        %6186 = vmatpush1.bf16.msra.mxu0 0
        %6187 = vmatprep.subr.bf16.mxu0 0
        %6188 = vmatpush1.bf16.msra.mxu0 0
        %6189 = vmatprep.subr.bf16.mxu0 0
        %6190 = vmatpush1.bf16.msra.mxu0 0
        %6191 = vmatprep.subr.bf16.mxu0 0
        %6192 = vmatpush1.bf16.msra.mxu0 0
        %6193 = vmatprep.subr.bf16.mxu0 0
        %6194 = vmatpush1.bf16.msra.mxu0 0
        %6195 = vmatprep.subr.bf16.mxu0 0
        %6196 = vmatpush1.bf16.msra.mxu0 0
        %6197 = vmatprep.mubr.bf16.mxu0 0
        %6198 = vmatmul.mubr.bf16.gmra.mrb[0].mxu0 %v6163
        %v6199 = vpop.f32.mrb[0].mxu0
        %v6200 = vadd.f32 0.0, %v6199
        %v6201 = vpop.f32.mrb[0].mxu0
        %v6202 = vpop.f32.mrb[0].mxu0
        %v6203 = vadd.f32 0.0, %v6202
        %v6204 = vpop.f32.mrb[0].mxu0
        %6205 = vdwg.mxu0
        %6206 = vrot.lane.b32.xlu0 %v5965, 64
        %v6207 = vpop.permute.xlu0 %6206
        %6208 = vrot.lane.b32.xlu0 %v5966, 64
        %v6209 = vpop.permute.xlu0 %6208
        %v6211 = vsel %vm1096, %v6207, 0
        %v6214 = vsel %vm1096, %v6209, 0
        %6216 = vmatprep.subr.bf16.mxu0 0
        %6217 = vmatpush1.bf16.xpose.msra.mxu0 %v6214
        %6218 = vmatprep.subr.bf16.mxu0 0
        %6219 = vmatpush1.bf16.xpose.msra.mxu0 0
        %6220 = vmatprep.subr.bf16.mxu0 0
        %6221 = vmatpush1.bf16.xpose.msra.mxu0 0
        %6222 = vmatprep.subr.bf16.mxu0 0
        %6223 = vmatpush1.bf16.xpose.msra.mxu0 0
        %6224 = vmatprep.subr.bf16.mxu0 0
        %6225 = vmatpush1.bf16.xpose.msra.mxu0 0
        %6226 = vmatprep.subr.bf16.mxu0 0
        %6227 = vmatpush1.bf16.xpose.msra.mxu0 0
        %6228 = vmatprep.subr.bf16.mxu0 0
        %6229 = vmatpush1.bf16.xpose.msra.mxu0 0
        %6230 = vmatprep.subr.bf16.mxu0 0
        %6231 = vmatpush1.bf16.xpose.msra.mxu0 0
        %6232 = vmatprep.subr.bf16.mxu0 0
        %6233 = vmatpush1.bf16.xpose.msra.mxu0 0
        %6234 = vmatprep.subr.bf16.mxu0 0
        %6235 = vmatpush1.bf16.xpose.msra.mxu0 0
        %6236 = vmatprep.subr.bf16.mxu0 0
        %6237 = vmatpush1.bf16.xpose.msra.mxu0 0
        %6238 = vmatprep.subr.bf16.mxu0 0
        %6239 = vmatpush1.bf16.xpose.msra.mxu0 0
        %6240 = vmatprep.subr.bf16.mxu0 0
        %6241 = vmatpush1.bf16.xpose.msra.mxu0 0
        %6242 = vmatprep.subr.bf16.mxu0 0
        %6243 = vmatpush1.bf16.xpose.msra.mxu0 0
        %6244 = vmatprep.subr.bf16.mxu0 0
        %6245 = vmatpush1.bf16.xpose.msra.mxu0 0
        %6246 = vmatprep.subr.bf16.mxu0 0
        %6247 = vmatpush1.bf16.xpose.msra.mxu0 0
        %6248 = vmatprep.mubr.bf16.mxu0 0
        %6249 = vmatmul.mubr.bf16.gmra.mrb[0].mxu0 %v6211
        %v6250 = vpop.f32.mrb[0].mxu0
        %v6251 = vadd.f32 0.0, %v6250
        %v6252 = vpop.f32.mrb[0].mxu0
        %v6253 = vpop.f32.mrb[0].mxu0
        %v6254 = vadd.f32 0.0, %v6253
        %v6255 = vpop.f32.mrb[0].mxu0
        %6256 = vdwg.mxu0
        %v6257 = vsel %vm1144, %v6251, -inf
        %6258 = vmax.xlane.f32.xlu0 %v6257
        %v6259 = vpop.xlane.xlu0 %6258
        %v6260 = vsel %vm1144, %v6254, -inf
        %6261 = vmax.xlane.f32.xlu0 %v6260
        %v6262 = vpop.xlane.xlu0 %6261
        %v6263 = vsub.f32 %v6251, %v6259
        %v6264 = vsub.f32 %v6254, %v6262
        %v6265 = vmul.f32 %v6263, 1.442695
        %v6266 = vpow.pop %v6265
        %v6267 = vmul.f32 %v6264, 1.442695
        %v6268 = vpow.pop %v6267
        %v6269 = vsel %vm1144, %v6266, 0.0
        %6270 = vadd.xlane.f32.xlu0 %v6269
        %v6271 = vpop.xlane.xlu0 %6270
        %v6272 = vsel %vm1144, %v6268, 0.0
        %6273 = vadd.xlane.f32.xlu0 %v6272
        %v6274 = vpop.xlane.xlu0 %6273
        %v6275 = vrcp.pop %v6271
        %v6276 = vrcp.pop %v6274
        %v6277 = vmul.f32 %v6266, %v6275
        %v6278 = vmul.f32 %v6268, %v6276
        %v6279 = vpack.c.bf16 %v6278, %v6277
        %6280 = vrot.lane.b32.xlu0 %v5967, 64
        %v6281 = vpop.permute.xlu0 %6280
        %v6284 = vsel %vm1144, %v6279, 0
        %6286 = vmatprep.subr.bf16.mxu0 0
        %6287 = vmatpush1.bf16.msra.mxu0 %v6281
        %6288 = vmatprep.subr.bf16.mxu0 0
        %6289 = vmatpush1.bf16.msra.mxu0 0
        %6290 = vmatprep.subr.bf16.mxu0 0
        %6291 = vmatpush1.bf16.msra.mxu0 0
        %6292 = vmatprep.subr.bf16.mxu0 0
        %6293 = vmatpush1.bf16.msra.mxu0 0
        %6294 = vmatprep.subr.bf16.mxu0 0
        %6295 = vmatpush1.bf16.msra.mxu0 0
        %6296 = vmatprep.subr.bf16.mxu0 0
        %6297 = vmatpush1.bf16.msra.mxu0 0
        %6298 = vmatprep.subr.bf16.mxu0 0
        %6299 = vmatpush1.bf16.msra.mxu0 0
        %6300 = vmatprep.subr.bf16.mxu0 0
        %6301 = vmatpush1.bf16.msra.mxu0 0
        %6302 = vmatprep.subr.bf16.mxu0 0
        %6303 = vmatpush1.bf16.msra.mxu0 0
        %6304 = vmatprep.subr.bf16.mxu0 0
        %6305 = vmatpush1.bf16.msra.mxu0 0
        %6306 = vmatprep.subr.bf16.mxu0 0
        %6307 = vmatpush1.bf16.msra.mxu0 0
        %6308 = vmatprep.subr.bf16.mxu0 0
        %6309 = vmatpush1.bf16.msra.mxu0 0
        %6310 = vmatprep.subr.bf16.mxu0 0
        %6311 = vmatpush1.bf16.msra.mxu0 0
        %6312 = vmatprep.subr.bf16.mxu0 0
        %6313 = vmatpush1.bf16.msra.mxu0 0
        %6314 = vmatprep.subr.bf16.mxu0 0
        %6315 = vmatpush1.bf16.msra.mxu0 0
        %6316 = vmatprep.subr.bf16.mxu0 0
        %6317 = vmatpush1.bf16.msra.mxu0 0
        %6318 = vmatprep.mubr.bf16.mxu0 0
        %6319 = vmatmul.mubr.bf16.gmra.mrb[0].mxu0 %v6284
        %v6320 = vpop.f32.mrb[0].mxu0
        %v6321 = vadd.f32 0.0, %v6320
        %v6322 = vpop.f32.mrb[0].mxu0
        %v6323 = vpop.f32.mrb[0].mxu0
        %v6324 = vadd.f32 0.0, %v6323
        %v6325 = vpop.f32.mrb[0].mxu0
        %6326 = vdwg.mxu0
        %6327 = vrot.lane.b32.xlu0 %v5965, 32
        %v6328 = vpop.permute.xlu0 %6327
        %6329 = vrot.lane.b32.xlu0 %v5966, 32
        %v6330 = vpop.permute.xlu0 %6329
        %v6332 = vsel %vm1096, %v6328, 0
        %v6335 = vsel %vm1096, %v6330, 0
        %6337 = vmatprep.subr.bf16.mxu0 0
        %6338 = vmatpush1.bf16.xpose.msra.mxu0 %v6335
        %6339 = vmatprep.subr.bf16.mxu0 0
        %6340 = vmatpush1.bf16.xpose.msra.mxu0 0
        %6341 = vmatprep.subr.bf16.mxu0 0
        %6342 = vmatpush1.bf16.xpose.msra.mxu0 0
        %6343 = vmatprep.subr.bf16.mxu0 0
        %6344 = vmatpush1.bf16.xpose.msra.mxu0 0
        %6345 = vmatprep.subr.bf16.mxu0 0
        %6346 = vmatpush1.bf16.xpose.msra.mxu0 0
        %6347 = vmatprep.subr.bf16.mxu0 0
        %6348 = vmatpush1.bf16.xpose.msra.mxu0 0
        %6349 = vmatprep.subr.bf16.mxu0 0
        %6350 = vmatpush1.bf16.xpose.msra.mxu0 0
        %6351 = vmatprep.subr.bf16.mxu0 0
        %6352 = vmatpush1.bf16.xpose.msra.mxu0 0
        %6353 = vmatprep.subr.bf16.mxu0 0
        %6354 = vmatpush1.bf16.xpose.msra.mxu0 0
        %6355 = vmatprep.subr.bf16.mxu0 0
        %6356 = vmatpush1.bf16.xpose.msra.mxu0 0
        %6357 = vmatprep.subr.bf16.mxu0 0
        %6358 = vmatpush1.bf16.xpose.msra.mxu0 0
        %6359 = vmatprep.subr.bf16.mxu0 0
        %6360 = vmatpush1.bf16.xpose.msra.mxu0 0
        %6361 = vmatprep.subr.bf16.mxu0 0
        %6362 = vmatpush1.bf16.xpose.msra.mxu0 0
        %6363 = vmatprep.subr.bf16.mxu0 0
        %6364 = vmatpush1.bf16.xpose.msra.mxu0 0
        %6365 = vmatprep.subr.bf16.mxu0 0
        %6366 = vmatpush1.bf16.xpose.msra.mxu0 0
        %6367 = vmatprep.subr.bf16.mxu0 0
        %6368 = vmatpush1.bf16.xpose.msra.mxu0 0
        %6369 = vmatprep.mubr.bf16.mxu0 0
        %6370 = vmatmul.mubr.bf16.gmra.mrb[0].mxu0 %v6332
        %v6371 = vpop.f32.mrb[0].mxu0
        %v6372 = vadd.f32 0.0, %v6371
        %v6373 = vpop.f32.mrb[0].mxu0
        %v6374 = vpop.f32.mrb[0].mxu0
        %v6375 = vadd.f32 0.0, %v6374
        %v6376 = vpop.f32.mrb[0].mxu0
        %6377 = vdwg.mxu0
        %v6378 = vsel %vm1144, %v6372, -inf
        %6379 = vmax.xlane.f32.xlu0 %v6378
        %v6380 = vpop.xlane.xlu0 %6379
        %v6381 = vsel %vm1144, %v6375, -inf
        %6382 = vmax.xlane.f32.xlu0 %v6381
        %v6383 = vpop.xlane.xlu0 %6382
        %v6384 = vsub.f32 %v6372, %v6380
        %v6385 = vsub.f32 %v6375, %v6383
        %v6386 = vmul.f32 %v6384, 1.442695
        %v6387 = vpow.pop %v6386
        %v6388 = vmul.f32 %v6385, 1.442695
        %v6389 = vpow.pop %v6388
        %v6390 = vsel %vm1144, %v6387, 0.0
        %6391 = vadd.xlane.f32.xlu0 %v6390
        %v6392 = vpop.xlane.xlu0 %6391
        %v6393 = vsel %vm1144, %v6389, 0.0
        %6394 = vadd.xlane.f32.xlu0 %v6393
        %v6395 = vpop.xlane.xlu0 %6394
        %v6396 = vrcp.pop %v6392
        %v6397 = vrcp.pop %v6395
        %v6398 = vmul.f32 %v6387, %v6396
        %v6399 = vmul.f32 %v6389, %v6397
        %v6400 = vpack.c.bf16 %v6399, %v6398
        %6401 = vrot.lane.b32.xlu0 %v5967, 32
        %v6402 = vpop.permute.xlu0 %6401
        %v6405 = vsel %vm1144, %v6400, 0
        %6407 = vmatprep.subr.bf16.mxu0 0
        %6408 = vmatpush1.bf16.msra.mxu0 %v6402
        %6409 = vmatprep.subr.bf16.mxu0 0
        %6410 = vmatpush1.bf16.msra.mxu0 0
        %6411 = vmatprep.subr.bf16.mxu0 0
        %6412 = vmatpush1.bf16.msra.mxu0 0
        %6413 = vmatprep.subr.bf16.mxu0 0
        %6414 = vmatpush1.bf16.msra.mxu0 0
        %6415 = vmatprep.subr.bf16.mxu0 0
        %6416 = vmatpush1.bf16.msra.mxu0 0
        %6417 = vmatprep.subr.bf16.mxu0 0
        %6418 = vmatpush1.bf16.msra.mxu0 0
        %6419 = vmatprep.subr.bf16.mxu0 0
        %6420 = vmatpush1.bf16.msra.mxu0 0
        %6421 = vmatprep.subr.bf16.mxu0 0
        %6422 = vmatpush1.bf16.msra.mxu0 0
        %6423 = vmatprep.subr.bf16.mxu0 0
        %6424 = vmatpush1.bf16.msra.mxu0 0
        %6425 = vmatprep.subr.bf16.mxu0 0
        %6426 = vmatpush1.bf16.msra.mxu0 0
        %6427 = vmatprep.subr.bf16.mxu0 0
        %6428 = vmatpush1.bf16.msra.mxu0 0
        %6429 = vmatprep.subr.bf16.mxu0 0
        %6430 = vmatpush1.bf16.msra.mxu0 0
        %6431 = vmatprep.subr.bf16.mxu0 0
        %6432 = vmatpush1.bf16.msra.mxu0 0
        %6433 = vmatprep.subr.bf16.mxu0 0
        %6434 = vmatpush1.bf16.msra.mxu0 0
        %6435 = vmatprep.subr.bf16.mxu0 0
        %6436 = vmatpush1.bf16.msra.mxu0 0
        %6437 = vmatprep.subr.bf16.mxu0 0
        %6438 = vmatpush1.bf16.msra.mxu0 0
        %6439 = vmatprep.mubr.bf16.mxu0 0
        %6440 = vmatmul.mubr.bf16.gmra.mrb[0].mxu0 %v6405
        %v6441 = vpop.f32.mrb[0].mxu0
        %v6442 = vadd.f32 0.0, %v6441
        %v6443 = vpop.f32.mrb[0].mxu0
        %v6444 = vpop.f32.mrb[0].mxu0
        %v6445 = vadd.f32 0.0, %v6444
        %v6446 = vpop.f32.mrb[0].mxu0
        %6447 = vdwg.mxu0
        %6450 = vrot.lane.b32.xlu0 %v6200, 32
        %v6451 = vpop.permute.xlu0 %6450
        %6452 = vrot.lane.b32.xlu0 %v6203, 32
        %v6453 = vpop.permute.xlu0 %6452
        %6458 = vrot.lane.b32.xlu0 %v6321, 64
        %v6459 = vpop.permute.xlu0 %6458
        %6460 = vrot.lane.b32.xlu0 %v6324, 64
        %v6461 = vpop.permute.xlu0 %6460
        %6466 = vrot.lane.b32.xlu0 %v6442, 96
        %v6467 = vpop.permute.xlu0 %6466
        %6468 = vrot.lane.b32.xlu0 %v6445, 96
        %v6469 = vpop.permute.xlu0 %6468
        %v6472 = vsel %vm1096, %v6076, %v6451
        %v6473 = vsel %vm1096, %v6079, %v6453
        %v6474 = vsel %vm1604, %v6472, %v6459
        %v6475 = vsel %vm1604, %v6473, %v6461
        %v6476 = vsel %vm1607, %v6474, %v6467
        %v6477 = vsel %vm1607, %v6475, %v6469
        %v6478 = vpack.c.bf16 %v6477, %v6476
        %v6479 = vlaneseq
        %v6480 = vshrl.u32 %v6479, 7
        %v6481 = vsub.s32 3, %v6480
        %v6482 = vrot.slane %v5728, %v6481
        %v6499 = vunpack.c.l.b16 %v5610
        %v6500 = vunpack.c.l.b16 %v5611
        %v6501 = vunpack.c.l.b16 %v5612
        %v6502 = vunpack.c.l.b16 %v5613
        %v6503 = vunpack.c.l.b16 %v5614
        %v6504 = vunpack.c.l.b16 %v5615
        %v6505 = vunpack.c.l.b16 %v5616
        %v6506 = vunpack.c.l.b16 %v5617
        %v6507 = vunpack.c.l.b16 %v5618
        %v6508 = vunpack.c.l.b16 %v5619
        %v6509 = vunpack.c.l.b16 %v5620
        %v6510 = vunpack.c.l.b16 %v5621
        %v6511 = vunpack.c.l.b16 %v5622
        %v6512 = vunpack.c.l.b16 %v5623
        %v6513 = vunpack.c.l.b16 %v5624
        %v6514 = vunpack.c.l.b16 %v5625
        %v6515 = vpack.c.b16 %v6500, %v6499
        %v6516 = vpack.c.b16 %v6502, %v6501
        %v6517 = vpack.c.b16 %v6504, %v6503
        %v6518 = vpack.c.b16 %v6506, %v6505
        %v6519 = vpack.c.b16 %v6508, %v6507
        %v6520 = vpack.c.b16 %v6510, %v6509
        %v6521 = vpack.c.b16 %v6512, %v6511
        %v6522 = vpack.c.b16 %v6514, %v6513
        %6531 = vmatprep.subr.bf16.mxu0 0
        %6532 = vmatpush1.bf16.msra.mxu0 %v6515
        %6533 = vmatprep.subr.bf16.mxu0 0
        %6534 = vmatpush1.bf16.msra.mxu0 %v6516
        %6535 = vmatprep.subr.bf16.mxu0 0
        %6536 = vmatpush1.bf16.msra.mxu0 %v6517
        %6537 = vmatprep.subr.bf16.mxu0 0
        %6538 = vmatpush1.bf16.msra.mxu0 %v6518
        %6539 = vmatprep.subr.bf16.mxu0 0
        %6540 = vmatpush1.bf16.msra.mxu0 %v6519
        %6541 = vmatprep.subr.bf16.mxu0 0
        %6542 = vmatpush1.bf16.msra.mxu0 %v6520
        %6543 = vmatprep.subr.bf16.mxu0 0
        %6544 = vmatpush1.bf16.msra.mxu0 %v6521
        %6545 = vmatprep.subr.bf16.mxu0 0
        %6546 = vmatpush1.bf16.msra.mxu0 %v6522
        %6547 = vmatprep.subr.bf16.mxu0 0
        %6548 = vmatpush1.bf16.msra.mxu0 0
        %6549 = vmatprep.subr.bf16.mxu0 0
        %6550 = vmatpush1.bf16.msra.mxu0 0
        %6551 = vmatprep.subr.bf16.mxu0 0
        %6552 = vmatpush1.bf16.msra.mxu0 0
        %6553 = vmatprep.subr.bf16.mxu0 0
        %6554 = vmatpush1.bf16.msra.mxu0 0
        %6555 = vmatprep.subr.bf16.mxu0 0
        %6556 = vmatpush1.bf16.msra.mxu0 0
        %6557 = vmatprep.subr.bf16.mxu0 0
        %6558 = vmatpush1.bf16.msra.mxu0 0
        %6559 = vmatprep.subr.bf16.mxu0 0
        %6560 = vmatpush1.bf16.msra.mxu0 0
        %6561 = vmatprep.subr.bf16.mxu0 0
        %6562 = vmatpush1.bf16.msra.mxu0 0
        %6563 = vmatprep.mubr.bf16.mxu0 0
        %6564 = vmatmul.mubr.bf16.gmra.mrb[0].mxu0 %v6478
        %v6565 = vpop.f32.mrb[0].mxu0
        %v6566 = vadd.f32 %v6482, %v6565
        %v6567 = vpop.f32.mrb[0].mxu0
        %v6568 = vpop.f32.mrb[0].mxu0
        %v6569 = vadd.f32 %v6482, %v6568
        %v6570 = vpop.f32.mrb[0].mxu0
        %6571 = vdwg.mxu0
        %v6572 = vadd.f32 %v5574, %v6566
        %v6573 = vadd.f32 %v5575, %v6569
        %6574 = vadd.xlane.f32.xlu0 %v6572
        %v6575 = vpop.xlane.xlu0 %6574
        %6576 = vadd.xlane.f32.xlu0 %v6573
        %v6577 = vpop.xlane.xlu0 %6576
        %v6578 = vmul.f32 %v6575, %v1710
        %v6579 = vmul.f32 %v6577, %v1710
        %v6580 = vsub.f32 %v6572, %v6578
        %v6581 = vsub.f32 %v6573, %v6579
        %v6582 = vmul.f32 %v6580, %v6580
        %v6583 = vmul.f32 %v6581, %v6581
        %6584 = vadd.xlane.f32.xlu0 %v6582
        %v6585 = vpop.xlane.xlu0 %6584
        %6586 = vadd.xlane.f32.xlu0 %v6583
        %v6587 = vpop.xlane.xlu0 %6586
        %v6588 = vmul.f32 %v6585, %v1710
        %v6589 = vmul.f32 %v6587, %v1710
        %v6590 = vadd.f32 %v6588, 1e-05
        %v6591 = vadd.f32 %v6589, 1e-05
        %v6592 = vrsqrt.pop %v6590
        %v6593 = vrsqrt.pop %v6591
        %v6594 = vmul.f32 %v6580, %v6592
        %v6595 = vmul.f32 %v6581, %v6593
        %v6596 = vlaneseq
        %v6597 = vshrl.u32 %v6596, 7
        %v6598 = vsub.s32 1, %v6597
        %v6599 = vrot.slane %v5729, %v6598
        %v6600 = vmul.f32 %v6594, %v6599
        %v6601 = vmul.f32 %v6595, %v6599
        %v6602 = vlaneseq
        %v6603 = vshrl.u32 %v6602, 7
        %v6604 = vsub.s32 2, %v6603
        %v6605 = vrot.slane %v5729, %v6604
        %v6606 = vadd.f32 %v6600, %v6605
        %v6607 = vadd.f32 %v6601, %v6605
        %v6608 = vpack.c.bf16 %v6607, %v6606
        %v6609 = vlaneseq
        %v6610 = vshrl.u32 %v6609, 7
        %v6611 = vsub.s32 4, %v6610
        %v6612 = vrot.slane %v5728, %v6611
        %v6629 = vunpack.c.l.b16 %v5627
        %v6630 = vunpack.c.l.b16 %v5628
        %v6631 = vunpack.c.l.b16 %v5629
        %v6632 = vunpack.c.l.b16 %v5630
        %v6633 = vunpack.c.l.b16 %v5631
        %v6634 = vunpack.c.l.b16 %v5632
        %v6635 = vunpack.c.l.b16 %v5633
        %v6636 = vunpack.c.l.b16 %v5634
        %v6637 = vunpack.c.l.b16 %v5635
        %v6638 = vunpack.c.l.b16 %v5636
        %v6639 = vunpack.c.l.b16 %v5637
        %v6640 = vunpack.c.l.b16 %v5638
        %v6641 = vunpack.c.l.b16 %v5639
        %v6642 = vunpack.c.l.b16 %v5640
        %v6643 = vunpack.c.l.b16 %v5641
        %v6644 = vunpack.c.l.b16 %v5642
        %v6645 = vpack.c.b16 %v6630, %v6629
        %v6646 = vpack.c.b16 %v6632, %v6631
        %v6647 = vpack.c.b16 %v6634, %v6633
        %v6648 = vpack.c.b16 %v6636, %v6635
        %v6649 = vpack.c.b16 %v6638, %v6637
        %v6650 = vpack.c.b16 %v6640, %v6639
        %v6651 = vpack.c.b16 %v6642, %v6641
        %v6652 = vpack.c.b16 %v6644, %v6643
        %6661 = vmatprep.subr.bf16.mxu0 0
        %6662 = vmatpush1.bf16.msra.mxu0 %v6645
        %6663 = vmatprep.subr.bf16.mxu0 0
        %6664 = vmatpush1.bf16.msra.mxu0 %v6646
        %6665 = vmatprep.subr.bf16.mxu0 0
        %6666 = vmatpush1.bf16.msra.mxu0 %v6647
        %6667 = vmatprep.subr.bf16.mxu0 0
        %6668 = vmatpush1.bf16.msra.mxu0 %v6648
        %6669 = vmatprep.subr.bf16.mxu0 0
        %6670 = vmatpush1.bf16.msra.mxu0 %v6649
        %6671 = vmatprep.subr.bf16.mxu0 0
        %6672 = vmatpush1.bf16.msra.mxu0 %v6650
        %6673 = vmatprep.subr.bf16.mxu0 0
        %6674 = vmatpush1.bf16.msra.mxu0 %v6651
        %6675 = vmatprep.subr.bf16.mxu0 0
        %6676 = vmatpush1.bf16.msra.mxu0 %v6652
        %6677 = vmatprep.subr.bf16.mxu0 0
        %6678 = vmatpush1.bf16.msra.mxu0 0
        %6679 = vmatprep.subr.bf16.mxu0 0
        %6680 = vmatpush1.bf16.msra.mxu0 0
        %6681 = vmatprep.subr.bf16.mxu0 0
        %6682 = vmatpush1.bf16.msra.mxu0 0
        %6683 = vmatprep.subr.bf16.mxu0 0
        %6684 = vmatpush1.bf16.msra.mxu0 0
        %6685 = vmatprep.subr.bf16.mxu0 0
        %6686 = vmatpush1.bf16.msra.mxu0 0
        %6687 = vmatprep.subr.bf16.mxu0 0
        %6688 = vmatpush1.bf16.msra.mxu0 0
        %6689 = vmatprep.subr.bf16.mxu0 0
        %6690 = vmatpush1.bf16.msra.mxu0 0
        %6691 = vmatprep.subr.bf16.mxu0 0
        %6692 = vmatpush1.bf16.msra.mxu0 0
        %6693 = vmatprep.mubr.bf16.mxu0 0
        %6694 = vmatmul.mubr.bf16.gmra.mrb[0].mxu0 %v6608
        %v6695 = vpop.f32.mrb[0].mxu0
        %v6696 = vadd.f32 %v6612, %v6695
        %v6697 = vpop.f32.mrb[0].mxu0
        %v6698 = vpop.f32.mrb[0].mxu0
        %v6699 = vadd.f32 %v6612, %v6698
        %v6700 = vpop.f32.mrb[0].mxu0
        %6701 = vdwg.mxu0
        %v6718 = vunpack.c.l.b16 %v5644
        %v6719 = vunpack.c.h.b16 %v5644
        %v6720 = vunpack.c.l.b16 %v5645
        %v6721 = vunpack.c.h.b16 %v5645
        %v6722 = vunpack.c.l.b16 %v5646
        %v6723 = vunpack.c.h.b16 %v5646
        %v6724 = vunpack.c.l.b16 %v5647
        %v6725 = vunpack.c.h.b16 %v5647
        %v6726 = vunpack.c.l.b16 %v5648
        %v6727 = vunpack.c.h.b16 %v5648
        %v6728 = vunpack.c.l.b16 %v5649
        %v6729 = vunpack.c.h.b16 %v5649
        %v6730 = vunpack.c.l.b16 %v5650
        %v6731 = vunpack.c.h.b16 %v5650
        %v6732 = vunpack.c.l.b16 %v5651
        %v6733 = vunpack.c.h.b16 %v5651
        %v6734 = vunpack.c.l.b16 %v5652
        %v6735 = vunpack.c.h.b16 %v5652
        %v6736 = vunpack.c.l.b16 %v5653
        %v6737 = vunpack.c.h.b16 %v5653
        %v6738 = vunpack.c.l.b16 %v5654
        %v6739 = vunpack.c.h.b16 %v5654
        %v6740 = vunpack.c.l.b16 %v5655
        %v6741 = vunpack.c.h.b16 %v5655
        %v6742 = vunpack.c.l.b16 %v5656
        %v6743 = vunpack.c.h.b16 %v5656
        %v6744 = vunpack.c.l.b16 %v5657
        %v6745 = vunpack.c.h.b16 %v5657
        %v6746 = vunpack.c.l.b16 %v5658
        %v6747 = vunpack.c.h.b16 %v5658
        %v6748 = vunpack.c.l.b16 %v5659
        %v6749 = vunpack.c.h.b16 %v5659
        %v6750 = vpack.c.b16 %v6720, %v6718
        %v6751 = vpack.c.b16 %v6721, %v6719
        %v6752 = vpack.c.b16 %v6724, %v6722
        %v6753 = vpack.c.b16 %v6725, %v6723
        %v6754 = vpack.c.b16 %v6728, %v6726
        %v6755 = vpack.c.b16 %v6729, %v6727
        %v6756 = vpack.c.b16 %v6732, %v6730
        %v6757 = vpack.c.b16 %v6733, %v6731
        %v6758 = vpack.c.b16 %v6736, %v6734
        %v6759 = vpack.c.b16 %v6737, %v6735
        %v6760 = vpack.c.b16 %v6740, %v6738
        %v6761 = vpack.c.b16 %v6741, %v6739
        %v6762 = vpack.c.b16 %v6744, %v6742
        %v6763 = vpack.c.b16 %v6745, %v6743
        %v6764 = vpack.c.b16 %v6748, %v6746
        %v6765 = vpack.c.b16 %v6749, %v6747
        %6782 = vmatprep.subr.bf16.mxu0 %v6751
        %6783 = vmatpush1.bf16.msra.mxu0 %v6750
        %6784 = vmatprep.subr.bf16.mxu0 %v6753
        %6785 = vmatpush1.bf16.msra.mxu0 %v6752
        %6786 = vmatprep.subr.bf16.mxu0 %v6755
        %6787 = vmatpush1.bf16.msra.mxu0 %v6754
        %6788 = vmatprep.subr.bf16.mxu0 %v6757
        %6789 = vmatpush1.bf16.msra.mxu0 %v6756
        %6790 = vmatprep.subr.bf16.mxu0 %v6759
        %6791 = vmatpush1.bf16.msra.mxu0 %v6758
        %6792 = vmatprep.subr.bf16.mxu0 %v6761
        %6793 = vmatpush1.bf16.msra.mxu0 %v6760
        %6794 = vmatprep.subr.bf16.mxu0 %v6763
        %6795 = vmatpush1.bf16.msra.mxu0 %v6762
        %6796 = vmatprep.subr.bf16.mxu0 %v6765
        %6797 = vmatpush1.bf16.msra.mxu0 %v6764
        %6798 = vmatprep.subr.bf16.mxu0 0
        %6799 = vmatpush1.bf16.msra.mxu0 0
        %6800 = vmatprep.subr.bf16.mxu0 0
        %6801 = vmatpush1.bf16.msra.mxu0 0
        %6802 = vmatprep.subr.bf16.mxu0 0
        %6803 = vmatpush1.bf16.msra.mxu0 0
        %6804 = vmatprep.subr.bf16.mxu0 0
        %6805 = vmatpush1.bf16.msra.mxu0 0
        %6806 = vmatprep.subr.bf16.mxu0 0
        %6807 = vmatpush1.bf16.msra.mxu0 0
        %6808 = vmatprep.subr.bf16.mxu0 0
        %6809 = vmatpush1.bf16.msra.mxu0 0
        %6810 = vmatprep.subr.bf16.mxu0 0
        %6811 = vmatpush1.bf16.msra.mxu0 0
        %6812 = vmatprep.subr.bf16.mxu0 0
        %6813 = vmatpush1.bf16.msra.mxu0 0
        %6814 = vmatprep.mubr.bf16.mxu0 0
        %6815 = vmatmul.mubr.bf16.gmra.mrb[0].mxu0 %v3358
        %v6816 = vpop.f32.mrb[0].mxu0
        %v6817 = vadd.f32 0.0, %v6816
        %v6818 = vpop.f32.mrb[0].mxu0
        %v6819 = vadd.f32 0.0, %v6818
        %v6820 = vpop.f32.mrb[0].mxu0
        %v6821 = vadd.f32 0.0, %v6820
        %v6822 = vpop.f32.mrb[0].mxu0
        %v6823 = vadd.f32 0.0, %v6822
        %6824 = vdwg.mxu0
        %v6825 = vlaneseq
        %v6826 = vshrl.u32 %v6825, 7
        %v6827 = vsub.s32 5, %v6826
        %v6828 = vrot.slane %v5728, %v6827
        %v6829 = vadd.f32 %v6817, %v6828
        %v6830 = vadd.f32 %v6821, %v6828
        %v6831 = vlaneseq
        %v6832 = vshrl.u32 %v6831, 7
        %v6833 = vsub.s32 6, %v6832
        %v6834 = vrot.slane %v5728, %v6833
        %v6835 = vadd.f32 %v6819, %v6834
        %v6836 = vadd.f32 %v6823, %v6834
        %v6837 = vmul.f32 %v6696, 0.17677669
        %v6838 = vmul.f32 %v6699, 0.17677669
        %v6839 = vpack.c.bf16 %v6838, %v6837
        %v6840 = vpack.c.bf16 %v6830, %v6829
        %v6841 = vpack.c.bf16 %v6836, %v6835
        %v6843 = vsel %vm1096, %v6839, 0
        %v6846 = vsel %vm1096, %v6840, 0
        %6848 = vmatprep.subr.bf16.mxu0 0
        %6849 = vmatpush1.bf16.xpose.msra.mxu0 %v6846
        %6850 = vmatprep.subr.bf16.mxu0 0
        %6851 = vmatpush1.bf16.xpose.msra.mxu0 0
        %6852 = vmatprep.subr.bf16.mxu0 0
        %6853 = vmatpush1.bf16.xpose.msra.mxu0 0
        %6854 = vmatprep.subr.bf16.mxu0 0
        %6855 = vmatpush1.bf16.xpose.msra.mxu0 0
        %6856 = vmatprep.subr.bf16.mxu0 0
        %6857 = vmatpush1.bf16.xpose.msra.mxu0 0
        %6858 = vmatprep.subr.bf16.mxu0 0
        %6859 = vmatpush1.bf16.xpose.msra.mxu0 0
        %6860 = vmatprep.subr.bf16.mxu0 0
        %6861 = vmatpush1.bf16.xpose.msra.mxu0 0
        %6862 = vmatprep.subr.bf16.mxu0 0
        %6863 = vmatpush1.bf16.xpose.msra.mxu0 0
        %6864 = vmatprep.subr.bf16.mxu0 0
        %6865 = vmatpush1.bf16.xpose.msra.mxu0 0
        %6866 = vmatprep.subr.bf16.mxu0 0
        %6867 = vmatpush1.bf16.xpose.msra.mxu0 0
        %6868 = vmatprep.subr.bf16.mxu0 0
        %6869 = vmatpush1.bf16.xpose.msra.mxu0 0
        %6870 = vmatprep.subr.bf16.mxu0 0
        %6871 = vmatpush1.bf16.xpose.msra.mxu0 0
        %6872 = vmatprep.subr.bf16.mxu0 0
        %6873 = vmatpush1.bf16.xpose.msra.mxu0 0
        %6874 = vmatprep.subr.bf16.mxu0 0
        %6875 = vmatpush1.bf16.xpose.msra.mxu0 0
        %6876 = vmatprep.subr.bf16.mxu0 0
        %6877 = vmatpush1.bf16.xpose.msra.mxu0 0
        %6878 = vmatprep.subr.bf16.mxu0 0
        %6879 = vmatpush1.bf16.xpose.msra.mxu0 0
        %6880 = vmatprep.mubr.bf16.mxu0 0
        %6881 = vmatmul.mubr.bf16.gmra.mrb[0].mxu0 %v6843
        %v6882 = vpop.f32.mrb[0].mxu0
        %v6883 = vadd.f32 0.0, %v6882
        %v6884 = vpop.f32.mrb[0].mxu0
        %v6885 = vpop.f32.mrb[0].mxu0
        %v6886 = vadd.f32 0.0, %v6885
        %v6887 = vpop.f32.mrb[0].mxu0
        %6888 = vdwg.mxu0
        %v6889 = vsel %vm1144, %v6883, -inf
        %6890 = vmax.xlane.f32.xlu0 %v6889
        %v6891 = vpop.xlane.xlu0 %6890
        %v6892 = vsel %vm1144, %v6886, -inf
        %6893 = vmax.xlane.f32.xlu0 %v6892
        %v6894 = vpop.xlane.xlu0 %6893
        %v6895 = vsub.f32 %v6883, %v6891
        %v6896 = vsub.f32 %v6886, %v6894
        %v6897 = vmul.f32 %v6895, 1.442695
        %v6898 = vpow.pop %v6897
        %v6899 = vmul.f32 %v6896, 1.442695
        %v6900 = vpow.pop %v6899
        %v6901 = vsel %vm1144, %v6898, 0.0
        %6902 = vadd.xlane.f32.xlu0 %v6901
        %v6903 = vpop.xlane.xlu0 %6902
        %v6904 = vsel %vm1144, %v6900, 0.0
        %6905 = vadd.xlane.f32.xlu0 %v6904
        %v6906 = vpop.xlane.xlu0 %6905
        %v6907 = vrcp.pop %v6903
        %v6908 = vrcp.pop %v6906
        %v6909 = vmul.f32 %v6898, %v6907
        %v6910 = vmul.f32 %v6900, %v6908
        %v6911 = vpack.c.bf16 %v6910, %v6909
        %v6913 = vsel %vm1144, %v6911, 0
        %6915 = vmatprep.subr.bf16.mxu0 0
        %6916 = vmatpush1.bf16.msra.mxu0 %v6841
        %6917 = vmatprep.subr.bf16.mxu0 0
        %6918 = vmatpush1.bf16.msra.mxu0 0
        %6919 = vmatprep.subr.bf16.mxu0 0
        %6920 = vmatpush1.bf16.msra.mxu0 0
        %6921 = vmatprep.subr.bf16.mxu0 0
        %6922 = vmatpush1.bf16.msra.mxu0 0
        %6923 = vmatprep.subr.bf16.mxu0 0
        %6924 = vmatpush1.bf16.msra.mxu0 0
        %6925 = vmatprep.subr.bf16.mxu0 0
        %6926 = vmatpush1.bf16.msra.mxu0 0
        %6927 = vmatprep.subr.bf16.mxu0 0
        %6928 = vmatpush1.bf16.msra.mxu0 0
        %6929 = vmatprep.subr.bf16.mxu0 0
        %6930 = vmatpush1.bf16.msra.mxu0 0
        %6931 = vmatprep.subr.bf16.mxu0 0
        %6932 = vmatpush1.bf16.msra.mxu0 0
        %6933 = vmatprep.subr.bf16.mxu0 0
        %6934 = vmatpush1.bf16.msra.mxu0 0
        %6935 = vmatprep.subr.bf16.mxu0 0
        %6936 = vmatpush1.bf16.msra.mxu0 0
        %6937 = vmatprep.subr.bf16.mxu0 0
        %6938 = vmatpush1.bf16.msra.mxu0 0
        %6939 = vmatprep.subr.bf16.mxu0 0
        %6940 = vmatpush1.bf16.msra.mxu0 0
        %6941 = vmatprep.subr.bf16.mxu0 0
        %6942 = vmatpush1.bf16.msra.mxu0 0
        %6943 = vmatprep.subr.bf16.mxu0 0
        %6944 = vmatpush1.bf16.msra.mxu0 0
        %6945 = vmatprep.subr.bf16.mxu0 0
        %6946 = vmatpush1.bf16.msra.mxu0 0
        %6947 = vmatprep.mubr.bf16.mxu0 0
        %6948 = vmatmul.mubr.bf16.gmra.mrb[0].mxu0 %v6913
        %v6949 = vpop.f32.mrb[0].mxu0
        %v6950 = vadd.f32 0.0, %v6949
        %v6951 = vpop.f32.mrb[0].mxu0
        %v6952 = vpop.f32.mrb[0].mxu0
        %v6953 = vadd.f32 0.0, %v6952
        %v6954 = vpop.f32.mrb[0].mxu0
        %6955 = vdwg.mxu0
        %6957 = vrot.lane.b32.xlu0 %v6839, 96
        %v6958 = vpop.permute.xlu0 %6957
        %6960 = vrot.lane.b32.xlu0 %v6840, 96
        %v6961 = vpop.permute.xlu0 %6960
        %v6963 = vsel %vm1096, %v6958, 0
        %v6966 = vsel %vm1096, %v6961, 0
        %6968 = vmatprep.subr.bf16.mxu0 0
        %6969 = vmatpush1.bf16.xpose.msra.mxu0 %v6966
        %6970 = vmatprep.subr.bf16.mxu0 0
        %6971 = vmatpush1.bf16.xpose.msra.mxu0 0
        %6972 = vmatprep.subr.bf16.mxu0 0
        %6973 = vmatpush1.bf16.xpose.msra.mxu0 0
        %6974 = vmatprep.subr.bf16.mxu0 0
        %6975 = vmatpush1.bf16.xpose.msra.mxu0 0
        %6976 = vmatprep.subr.bf16.mxu0 0
        %6977 = vmatpush1.bf16.xpose.msra.mxu0 0
        %6978 = vmatprep.subr.bf16.mxu0 0
        %6979 = vmatpush1.bf16.xpose.msra.mxu0 0
        %6980 = vmatprep.subr.bf16.mxu0 0
        %6981 = vmatpush1.bf16.xpose.msra.mxu0 0
        %6982 = vmatprep.subr.bf16.mxu0 0
        %6983 = vmatpush1.bf16.xpose.msra.mxu0 0
        %6984 = vmatprep.subr.bf16.mxu0 0
        %6985 = vmatpush1.bf16.xpose.msra.mxu0 0
        %6986 = vmatprep.subr.bf16.mxu0 0
        %6987 = vmatpush1.bf16.xpose.msra.mxu0 0
        %6988 = vmatprep.subr.bf16.mxu0 0
        %6989 = vmatpush1.bf16.xpose.msra.mxu0 0
        %6990 = vmatprep.subr.bf16.mxu0 0
        %6991 = vmatpush1.bf16.xpose.msra.mxu0 0
        %6992 = vmatprep.subr.bf16.mxu0 0
        %6993 = vmatpush1.bf16.xpose.msra.mxu0 0
        %6994 = vmatprep.subr.bf16.mxu0 0
        %6995 = vmatpush1.bf16.xpose.msra.mxu0 0
        %6996 = vmatprep.subr.bf16.mxu0 0
        %6997 = vmatpush1.bf16.xpose.msra.mxu0 0
        %6998 = vmatprep.subr.bf16.mxu0 0
        %6999 = vmatpush1.bf16.xpose.msra.mxu0 0
        %7000 = vmatprep.mubr.bf16.mxu0 0
        %7001 = vmatmul.mubr.bf16.gmra.mrb[0].mxu0 %v6963
        %v7002 = vpop.f32.mrb[0].mxu0
        %v7003 = vadd.f32 0.0, %v7002
        %v7004 = vpop.f32.mrb[0].mxu0
        %v7005 = vpop.f32.mrb[0].mxu0
        %v7006 = vadd.f32 0.0, %v7005
        %v7007 = vpop.f32.mrb[0].mxu0
        %7008 = vdwg.mxu0
        %v7009 = vsel %vm1144, %v7003, -inf
        %7010 = vmax.xlane.f32.xlu0 %v7009
        %v7011 = vpop.xlane.xlu0 %7010
        %v7012 = vsel %vm1144, %v7006, -inf
        %7013 = vmax.xlane.f32.xlu0 %v7012
        %v7014 = vpop.xlane.xlu0 %7013
        %v7015 = vsub.f32 %v7003, %v7011
        %v7016 = vsub.f32 %v7006, %v7014
        %v7017 = vmul.f32 %v7015, 1.442695
        %v7018 = vpow.pop %v7017
        %v7019 = vmul.f32 %v7016, 1.442695
        %v7020 = vpow.pop %v7019
        %v7021 = vsel %vm1144, %v7018, 0.0
        %7022 = vadd.xlane.f32.xlu0 %v7021
        %v7023 = vpop.xlane.xlu0 %7022
        %v7024 = vsel %vm1144, %v7020, 0.0
        %7025 = vadd.xlane.f32.xlu0 %v7024
        %v7026 = vpop.xlane.xlu0 %7025
        %v7027 = vrcp.pop %v7023
        %v7028 = vrcp.pop %v7026
        %v7029 = vmul.f32 %v7018, %v7027
        %v7030 = vmul.f32 %v7020, %v7028
        %v7031 = vpack.c.bf16 %v7030, %v7029
        %7033 = vrot.lane.b32.xlu0 %v6841, 96
        %v7034 = vpop.permute.xlu0 %7033
        %v7037 = vsel %vm1144, %v7031, 0
        %7039 = vmatprep.subr.bf16.mxu0 0
        %7040 = vmatpush1.bf16.msra.mxu0 %v7034
        %7041 = vmatprep.subr.bf16.mxu0 0
        %7042 = vmatpush1.bf16.msra.mxu0 0
        %7043 = vmatprep.subr.bf16.mxu0 0
        %7044 = vmatpush1.bf16.msra.mxu0 0
        %7045 = vmatprep.subr.bf16.mxu0 0
        %7046 = vmatpush1.bf16.msra.mxu0 0
        %7047 = vmatprep.subr.bf16.mxu0 0
        %7048 = vmatpush1.bf16.msra.mxu0 0
        %7049 = vmatprep.subr.bf16.mxu0 0
        %7050 = vmatpush1.bf16.msra.mxu0 0
        %7051 = vmatprep.subr.bf16.mxu0 0
        %7052 = vmatpush1.bf16.msra.mxu0 0
        %7053 = vmatprep.subr.bf16.mxu0 0
        %7054 = vmatpush1.bf16.msra.mxu0 0
        %7055 = vmatprep.subr.bf16.mxu0 0
        %7056 = vmatpush1.bf16.msra.mxu0 0
        %7057 = vmatprep.subr.bf16.mxu0 0
        %7058 = vmatpush1.bf16.msra.mxu0 0
        %7059 = vmatprep.subr.bf16.mxu0 0
        %7060 = vmatpush1.bf16.msra.mxu0 0
        %7061 = vmatprep.subr.bf16.mxu0 0
        %7062 = vmatpush1.bf16.msra.mxu0 0
        %7063 = vmatprep.subr.bf16.mxu0 0
        %7064 = vmatpush1.bf16.msra.mxu0 0
        %7065 = vmatprep.subr.bf16.mxu0 0
        %7066 = vmatpush1.bf16.msra.mxu0 0
        %7067 = vmatprep.subr.bf16.mxu0 0
        %7068 = vmatpush1.bf16.msra.mxu0 0
        %7069 = vmatprep.subr.bf16.mxu0 0
        %7070 = vmatpush1.bf16.msra.mxu0 0
        %7071 = vmatprep.mubr.bf16.mxu0 0
        %7072 = vmatmul.mubr.bf16.gmra.mrb[0].mxu0 %v7037
        %v7073 = vpop.f32.mrb[0].mxu0
        %v7074 = vadd.f32 0.0, %v7073
        %v7075 = vpop.f32.mrb[0].mxu0
        %v7076 = vpop.f32.mrb[0].mxu0
        %v7077 = vadd.f32 0.0, %v7076
        %v7078 = vpop.f32.mrb[0].mxu0
        %7079 = vdwg.mxu0
        %7080 = vrot.lane.b32.xlu0 %v6839, 64
        %v7081 = vpop.permute.xlu0 %7080
        %7082 = vrot.lane.b32.xlu0 %v6840, 64
        %v7083 = vpop.permute.xlu0 %7082
        %v7085 = vsel %vm1096, %v7081, 0
        %v7088 = vsel %vm1096, %v7083, 0
        %7090 = vmatprep.subr.bf16.mxu0 0
        %7091 = vmatpush1.bf16.xpose.msra.mxu0 %v7088
        %7092 = vmatprep.subr.bf16.mxu0 0
        %7093 = vmatpush1.bf16.xpose.msra.mxu0 0
        %7094 = vmatprep.subr.bf16.mxu0 0
        %7095 = vmatpush1.bf16.xpose.msra.mxu0 0
        %7096 = vmatprep.subr.bf16.mxu0 0
        %7097 = vmatpush1.bf16.xpose.msra.mxu0 0
        %7098 = vmatprep.subr.bf16.mxu0 0
        %7099 = vmatpush1.bf16.xpose.msra.mxu0 0
        %7100 = vmatprep.subr.bf16.mxu0 0
        %7101 = vmatpush1.bf16.xpose.msra.mxu0 0
        %7102 = vmatprep.subr.bf16.mxu0 0
        %7103 = vmatpush1.bf16.xpose.msra.mxu0 0
        %7104 = vmatprep.subr.bf16.mxu0 0
        %7105 = vmatpush1.bf16.xpose.msra.mxu0 0
        %7106 = vmatprep.subr.bf16.mxu0 0
        %7107 = vmatpush1.bf16.xpose.msra.mxu0 0
        %7108 = vmatprep.subr.bf16.mxu0 0
        %7109 = vmatpush1.bf16.xpose.msra.mxu0 0
        %7110 = vmatprep.subr.bf16.mxu0 0
        %7111 = vmatpush1.bf16.xpose.msra.mxu0 0
        %7112 = vmatprep.subr.bf16.mxu0 0
        %7113 = vmatpush1.bf16.xpose.msra.mxu0 0
        %7114 = vmatprep.subr.bf16.mxu0 0
        %7115 = vmatpush1.bf16.xpose.msra.mxu0 0
        %7116 = vmatprep.subr.bf16.mxu0 0
        %7117 = vmatpush1.bf16.xpose.msra.mxu0 0
        %7118 = vmatprep.subr.bf16.mxu0 0
        %7119 = vmatpush1.bf16.xpose.msra.mxu0 0
        %7120 = vmatprep.subr.bf16.mxu0 0
        %7121 = vmatpush1.bf16.xpose.msra.mxu0 0
        %7122 = vmatprep.mubr.bf16.mxu0 0
        %7123 = vmatmul.mubr.bf16.gmra.mrb[0].mxu0 %v7085
        %v7124 = vpop.f32.mrb[0].mxu0
        %v7125 = vadd.f32 0.0, %v7124
        %v7126 = vpop.f32.mrb[0].mxu0
        %v7127 = vpop.f32.mrb[0].mxu0
        %v7128 = vadd.f32 0.0, %v7127
        %v7129 = vpop.f32.mrb[0].mxu0
        %7130 = vdwg.mxu0
        %v7131 = vsel %vm1144, %v7125, -inf
        %7132 = vmax.xlane.f32.xlu0 %v7131
        %v7133 = vpop.xlane.xlu0 %7132
        %v7134 = vsel %vm1144, %v7128, -inf
        %7135 = vmax.xlane.f32.xlu0 %v7134
        %v7136 = vpop.xlane.xlu0 %7135
        %v7137 = vsub.f32 %v7125, %v7133
        %v7138 = vsub.f32 %v7128, %v7136
        %v7139 = vmul.f32 %v7137, 1.442695
        %v7140 = vpow.pop %v7139
        %v7141 = vmul.f32 %v7138, 1.442695
        %v7142 = vpow.pop %v7141
        %v7143 = vsel %vm1144, %v7140, 0.0
        %7144 = vadd.xlane.f32.xlu0 %v7143
        %v7145 = vpop.xlane.xlu0 %7144
        %v7146 = vsel %vm1144, %v7142, 0.0
        %7147 = vadd.xlane.f32.xlu0 %v7146
        %v7148 = vpop.xlane.xlu0 %7147
        %v7149 = vrcp.pop %v7145
        %v7150 = vrcp.pop %v7148
        %v7151 = vmul.f32 %v7140, %v7149
        %v7152 = vmul.f32 %v7142, %v7150
        %v7153 = vpack.c.bf16 %v7152, %v7151
        %7154 = vrot.lane.b32.xlu0 %v6841, 64
        %v7155 = vpop.permute.xlu0 %7154
        %v7158 = vsel %vm1144, %v7153, 0
        %7160 = vmatprep.subr.bf16.mxu0 0
        %7161 = vmatpush1.bf16.msra.mxu0 %v7155
        %7162 = vmatprep.subr.bf16.mxu0 0
        %7163 = vmatpush1.bf16.msra.mxu0 0
        %7164 = vmatprep.subr.bf16.mxu0 0
        %7165 = vmatpush1.bf16.msra.mxu0 0
        %7166 = vmatprep.subr.bf16.mxu0 0
        %7167 = vmatpush1.bf16.msra.mxu0 0
        %7168 = vmatprep.subr.bf16.mxu0 0
        %7169 = vmatpush1.bf16.msra.mxu0 0
        %7170 = vmatprep.subr.bf16.mxu0 0
        %7171 = vmatpush1.bf16.msra.mxu0 0
        %7172 = vmatprep.subr.bf16.mxu0 0
        %7173 = vmatpush1.bf16.msra.mxu0 0
        %7174 = vmatprep.subr.bf16.mxu0 0
        %7175 = vmatpush1.bf16.msra.mxu0 0
        %7176 = vmatprep.subr.bf16.mxu0 0
        %7177 = vmatpush1.bf16.msra.mxu0 0
        %7178 = vmatprep.subr.bf16.mxu0 0
        %7179 = vmatpush1.bf16.msra.mxu0 0
        %7180 = vmatprep.subr.bf16.mxu0 0
        %7181 = vmatpush1.bf16.msra.mxu0 0
        %7182 = vmatprep.subr.bf16.mxu0 0
        %7183 = vmatpush1.bf16.msra.mxu0 0
        %7184 = vmatprep.subr.bf16.mxu0 0
        %7185 = vmatpush1.bf16.msra.mxu0 0
        %7186 = vmatprep.subr.bf16.mxu0 0
        %7187 = vmatpush1.bf16.msra.mxu0 0
        %7188 = vmatprep.subr.bf16.mxu0 0
        %7189 = vmatpush1.bf16.msra.mxu0 0
        %7190 = vmatprep.subr.bf16.mxu0 0
        %7191 = vmatpush1.bf16.msra.mxu0 0
        %7192 = vmatprep.mubr.bf16.mxu0 0
        %7193 = vmatmul.mubr.bf16.gmra.mrb[0].mxu0 %v7158
        %v7194 = vpop.f32.mrb[0].mxu0
        %v7195 = vadd.f32 0.0, %v7194
        %v7196 = vpop.f32.mrb[0].mxu0
        %v7197 = vpop.f32.mrb[0].mxu0
        %v7198 = vadd.f32 0.0, %v7197
        %v7199 = vpop.f32.mrb[0].mxu0
        %7200 = vdwg.mxu0
        %7201 = vrot.lane.b32.xlu0 %v6839, 32
        %v7202 = vpop.permute.xlu0 %7201
        %7203 = vrot.lane.b32.xlu0 %v6840, 32
        %v7204 = vpop.permute.xlu0 %7203
        %v7206 = vsel %vm1096, %v7202, 0
        %v7209 = vsel %vm1096, %v7204, 0
        %7211 = vmatprep.subr.bf16.mxu0 0
        %7212 = vmatpush1.bf16.xpose.msra.mxu0 %v7209
        %7213 = vmatprep.subr.bf16.mxu0 0
        %7214 = vmatpush1.bf16.xpose.msra.mxu0 0
        %7215 = vmatprep.subr.bf16.mxu0 0
        %7216 = vmatpush1.bf16.xpose.msra.mxu0 0
        %7217 = vmatprep.subr.bf16.mxu0 0
        %7218 = vmatpush1.bf16.xpose.msra.mxu0 0
        %7219 = vmatprep.subr.bf16.mxu0 0
        %7220 = vmatpush1.bf16.xpose.msra.mxu0 0
        %7221 = vmatprep.subr.bf16.mxu0 0
        %7222 = vmatpush1.bf16.xpose.msra.mxu0 0
        %7223 = vmatprep.subr.bf16.mxu0 0
        %7224 = vmatpush1.bf16.xpose.msra.mxu0 0
        %7225 = vmatprep.subr.bf16.mxu0 0
        %7226 = vmatpush1.bf16.xpose.msra.mxu0 0
        %7227 = vmatprep.subr.bf16.mxu0 0
        %7228 = vmatpush1.bf16.xpose.msra.mxu0 0
        %7229 = vmatprep.subr.bf16.mxu0 0
        %7230 = vmatpush1.bf16.xpose.msra.mxu0 0
        %7231 = vmatprep.subr.bf16.mxu0 0
        %7232 = vmatpush1.bf16.xpose.msra.mxu0 0
        %7233 = vmatprep.subr.bf16.mxu0 0
        %7234 = vmatpush1.bf16.xpose.msra.mxu0 0
        %7235 = vmatprep.subr.bf16.mxu0 0
        %7236 = vmatpush1.bf16.xpose.msra.mxu0 0
        %7237 = vmatprep.subr.bf16.mxu0 0
        %7238 = vmatpush1.bf16.xpose.msra.mxu0 0
        %7239 = vmatprep.subr.bf16.mxu0 0
        %7240 = vmatpush1.bf16.xpose.msra.mxu0 0
        %7241 = vmatprep.subr.bf16.mxu0 0
        %7242 = vmatpush1.bf16.xpose.msra.mxu0 0
        %7243 = vmatprep.mubr.bf16.mxu0 0
        %7244 = vmatmul.mubr.bf16.gmra.mrb[0].mxu0 %v7206
        %v7245 = vpop.f32.mrb[0].mxu0
        %v7246 = vadd.f32 0.0, %v7245
        %v7247 = vpop.f32.mrb[0].mxu0
        %v7248 = vpop.f32.mrb[0].mxu0
        %v7249 = vadd.f32 0.0, %v7248
        %v7250 = vpop.f32.mrb[0].mxu0
        %7251 = vdwg.mxu0
        %v7252 = vsel %vm1144, %v7246, -inf
        %7253 = vmax.xlane.f32.xlu0 %v7252
        %v7254 = vpop.xlane.xlu0 %7253
        %v7255 = vsel %vm1144, %v7249, -inf
        %7256 = vmax.xlane.f32.xlu0 %v7255
        %v7257 = vpop.xlane.xlu0 %7256
        %v7258 = vsub.f32 %v7246, %v7254
        %v7259 = vsub.f32 %v7249, %v7257
        %v7260 = vmul.f32 %v7258, 1.442695
        %v7261 = vpow.pop %v7260
        %v7262 = vmul.f32 %v7259, 1.442695
        %v7263 = vpow.pop %v7262
        %v7264 = vsel %vm1144, %v7261, 0.0
        %7265 = vadd.xlane.f32.xlu0 %v7264
        %v7266 = vpop.xlane.xlu0 %7265
        %v7267 = vsel %vm1144, %v7263, 0.0
        %7268 = vadd.xlane.f32.xlu0 %v7267
        %v7269 = vpop.xlane.xlu0 %7268
        %v7270 = vrcp.pop %v7266
        %v7271 = vrcp.pop %v7269
        %v7272 = vmul.f32 %v7261, %v7270
        %v7273 = vmul.f32 %v7263, %v7271
        %v7274 = vpack.c.bf16 %v7273, %v7272
        %7275 = vrot.lane.b32.xlu0 %v6841, 32
        %v7276 = vpop.permute.xlu0 %7275
        %v7279 = vsel %vm1144, %v7274, 0
        %7281 = vmatprep.subr.bf16.mxu0 0
        %7282 = vmatpush1.bf16.msra.mxu0 %v7276
        %7283 = vmatprep.subr.bf16.mxu0 0
        %7284 = vmatpush1.bf16.msra.mxu0 0
        %7285 = vmatprep.subr.bf16.mxu0 0
        %7286 = vmatpush1.bf16.msra.mxu0 0
        %7287 = vmatprep.subr.bf16.mxu0 0
        %7288 = vmatpush1.bf16.msra.mxu0 0
        %7289 = vmatprep.subr.bf16.mxu0 0
        %7290 = vmatpush1.bf16.msra.mxu0 0
        %7291 = vmatprep.subr.bf16.mxu0 0
        %7292 = vmatpush1.bf16.msra.mxu0 0
        %7293 = vmatprep.subr.bf16.mxu0 0
        %7294 = vmatpush1.bf16.msra.mxu0 0
        %7295 = vmatprep.subr.bf16.mxu0 0
        %7296 = vmatpush1.bf16.msra.mxu0 0
        %7297 = vmatprep.subr.bf16.mxu0 0
        %7298 = vmatpush1.bf16.msra.mxu0 0
        %7299 = vmatprep.subr.bf16.mxu0 0
        %7300 = vmatpush1.bf16.msra.mxu0 0
        %7301 = vmatprep.subr.bf16.mxu0 0
        %7302 = vmatpush1.bf16.msra.mxu0 0
        %7303 = vmatprep.subr.bf16.mxu0 0
        %7304 = vmatpush1.bf16.msra.mxu0 0
        %7305 = vmatprep.subr.bf16.mxu0 0
        %7306 = vmatpush1.bf16.msra.mxu0 0
        %7307 = vmatprep.subr.bf16.mxu0 0
        %7308 = vmatpush1.bf16.msra.mxu0 0
        %7309 = vmatprep.subr.bf16.mxu0 0
        %7310 = vmatpush1.bf16.msra.mxu0 0
        %7311 = vmatprep.subr.bf16.mxu0 0
        %7312 = vmatpush1.bf16.msra.mxu0 0
        %7313 = vmatprep.mubr.bf16.mxu0 0
        %7314 = vmatmul.mubr.bf16.gmra.mrb[0].mxu0 %v7279
        %v7315 = vpop.f32.mrb[0].mxu0
        %v7316 = vadd.f32 0.0, %v7315
        %v7317 = vpop.f32.mrb[0].mxu0
        %v7318 = vpop.f32.mrb[0].mxu0
        %v7319 = vadd.f32 0.0, %v7318
        %v7320 = vpop.f32.mrb[0].mxu0
        %7321 = vdwg.mxu0
        %7324 = vrot.lane.b32.xlu0 %v7074, 32
        %v7325 = vpop.permute.xlu0 %7324
        %7326 = vrot.lane.b32.xlu0 %v7077, 32
        %v7327 = vpop.permute.xlu0 %7326
        %7332 = vrot.lane.b32.xlu0 %v7195, 64
        %v7333 = vpop.permute.xlu0 %7332
        %7334 = vrot.lane.b32.xlu0 %v7198, 64
        %v7335 = vpop.permute.xlu0 %7334
        %7340 = vrot.lane.b32.xlu0 %v7316, 96
        %v7341 = vpop.permute.xlu0 %7340
        %7342 = vrot.lane.b32.xlu0 %v7319, 96
        %v7343 = vpop.permute.xlu0 %7342
        %v7346 = vsel %vm1096, %v6950, %v7325
        %v7347 = vsel %vm1096, %v6953, %v7327
        %v7348 = vsel %vm1604, %v7346, %v7333
        %v7349 = vsel %vm1604, %v7347, %v7335
        %v7350 = vsel %vm1607, %v7348, %v7341
        %v7351 = vsel %vm1607, %v7349, %v7343
        %v7352 = vpack.c.bf16 %v7351, %v7350
        %v7353 = vlaneseq
        %v7354 = vshrl.u32 %v7353, 7
        %v7355 = vsub.s32 7, %v7354
        %v7356 = vrot.slane %v5728, %v7355
        %v7373 = vunpack.c.l.b16 %v5661
        %v7374 = vunpack.c.l.b16 %v5662
        %v7375 = vunpack.c.l.b16 %v5663
        %v7376 = vunpack.c.l.b16 %v5664
        %v7377 = vunpack.c.l.b16 %v5665
        %v7378 = vunpack.c.l.b16 %v5666
        %v7379 = vunpack.c.l.b16 %v5667
        %v7380 = vunpack.c.l.b16 %v5668
        %v7381 = vunpack.c.l.b16 %v5669
        %v7382 = vunpack.c.l.b16 %v5670
        %v7383 = vunpack.c.l.b16 %v5671
        %v7384 = vunpack.c.l.b16 %v5672
        %v7385 = vunpack.c.l.b16 %v5673
        %v7386 = vunpack.c.l.b16 %v5674
        %v7387 = vunpack.c.l.b16 %v5675
        %v7388 = vunpack.c.l.b16 %v5676
        %v7389 = vpack.c.b16 %v7374, %v7373
        %v7390 = vpack.c.b16 %v7376, %v7375
        %v7391 = vpack.c.b16 %v7378, %v7377
        %v7392 = vpack.c.b16 %v7380, %v7379
        %v7393 = vpack.c.b16 %v7382, %v7381
        %v7394 = vpack.c.b16 %v7384, %v7383
        %v7395 = vpack.c.b16 %v7386, %v7385
        %v7396 = vpack.c.b16 %v7388, %v7387
        %7405 = vmatprep.subr.bf16.mxu0 0
        %7406 = vmatpush1.bf16.msra.mxu0 %v7389
        %7407 = vmatprep.subr.bf16.mxu0 0
        %7408 = vmatpush1.bf16.msra.mxu0 %v7390
        %7409 = vmatprep.subr.bf16.mxu0 0
        %7410 = vmatpush1.bf16.msra.mxu0 %v7391
        %7411 = vmatprep.subr.bf16.mxu0 0
        %7412 = vmatpush1.bf16.msra.mxu0 %v7392
        %7413 = vmatprep.subr.bf16.mxu0 0
        %7414 = vmatpush1.bf16.msra.mxu0 %v7393
        %7415 = vmatprep.subr.bf16.mxu0 0
        %7416 = vmatpush1.bf16.msra.mxu0 %v7394
        %7417 = vmatprep.subr.bf16.mxu0 0
        %7418 = vmatpush1.bf16.msra.mxu0 %v7395
        %7419 = vmatprep.subr.bf16.mxu0 0
        %7420 = vmatpush1.bf16.msra.mxu0 %v7396
        %7421 = vmatprep.subr.bf16.mxu0 0
        %7422 = vmatpush1.bf16.msra.mxu0 0
        %7423 = vmatprep.subr.bf16.mxu0 0
        %7424 = vmatpush1.bf16.msra.mxu0 0
        %7425 = vmatprep.subr.bf16.mxu0 0
        %7426 = vmatpush1.bf16.msra.mxu0 0
        %7427 = vmatprep.subr.bf16.mxu0 0
        %7428 = vmatpush1.bf16.msra.mxu0 0
        %7429 = vmatprep.subr.bf16.mxu0 0
        %7430 = vmatpush1.bf16.msra.mxu0 0
        %7431 = vmatprep.subr.bf16.mxu0 0
        %7432 = vmatpush1.bf16.msra.mxu0 0
        %7433 = vmatprep.subr.bf16.mxu0 0
        %7434 = vmatpush1.bf16.msra.mxu0 0
        %7435 = vmatprep.subr.bf16.mxu0 0
        %7436 = vmatpush1.bf16.msra.mxu0 0
        %7437 = vmatprep.mubr.bf16.mxu0 0
        %7438 = vmatmul.mubr.bf16.gmra.mrb[0].mxu0 %v7352
        %v7439 = vpop.f32.mrb[0].mxu0
        %v7440 = vadd.f32 %v7356, %v7439
        %v7441 = vpop.f32.mrb[0].mxu0
        %v7442 = vpop.f32.mrb[0].mxu0
        %v7443 = vadd.f32 %v7356, %v7442
        %v7444 = vpop.f32.mrb[0].mxu0
        %7445 = vdwg.mxu0
        %v7446 = vadd.f32 %v6606, %v7440
        %v7447 = vadd.f32 %v6607, %v7443
        %7448 = vadd.xlane.f32.xlu0 %v7446
        %v7449 = vpop.xlane.xlu0 %7448
        %7450 = vadd.xlane.f32.xlu0 %v7447
        %v7451 = vpop.xlane.xlu0 %7450
        %v7452 = vmul.f32 %v7449, %v1710
        %v7453 = vmul.f32 %v7451, %v1710
        %v7454 = vsub.f32 %v7446, %v7452
        %v7455 = vsub.f32 %v7447, %v7453
        %v7456 = vmul.f32 %v7454, %v7454
        %v7457 = vmul.f32 %v7455, %v7455
        %7458 = vadd.xlane.f32.xlu0 %v7456
        %v7459 = vpop.xlane.xlu0 %7458
        %7460 = vadd.xlane.f32.xlu0 %v7457
        %v7461 = vpop.xlane.xlu0 %7460
        %v7462 = vmul.f32 %v7459, %v1710
        %v7463 = vmul.f32 %v7461, %v1710
        %v7464 = vadd.f32 %v7462, 1e-05
        %v7465 = vadd.f32 %v7463, 1e-05
        %v7466 = vrsqrt.pop %v7464
        %v7467 = vrsqrt.pop %v7465
        %v7468 = vmul.f32 %v7454, %v7466
        %v7469 = vmul.f32 %v7455, %v7467
        %v7470 = vlaneseq
        %v7471 = vshrl.u32 %v7470, 7
        %v7472 = vsub.s32 3, %v7471
        %v7473 = vrot.slane %v5729, %v7472
        %v7474 = vmul.f32 %v7468, %v7473
        %v7475 = vmul.f32 %v7469, %v7473
        %v7476 = vlaneseq
        %v7477 = vshrl.u32 %v7476, 7
        %v7478 = vsub.s32 4, %v7477
        %v7479 = vrot.slane %v5729, %v7478
        %v7480 = vadd.f32 %v7474, %v7479
        %v7481 = vadd.f32 %v7475, %v7479
        %v7482 = vpack.c.bf16 %v7481, %v7480
        %v7484 = vlaneseq
        %v7485 = vshrl.u32 %v7484, 7
        %v7486 = vsub.s32 0, %v7485
        %v7487 = vrot.slane %v5731, %v7486
        %v7488 = vlaneseq
        %v7489 = vshrl.u32 %v7488, 7
        %v7490 = vsub.s32 1, %v7489
        %v7491 = vrot.slane %v5731, %v7490
        %v7510 = vunpack.c.l.b16 %v5678
        %v7511 = vunpack.c.h.b16 %v5678
        %v7512 = vunpack.c.l.b16 %v5679
        %v7513 = vunpack.c.h.b16 %v5679
        %v7514 = vunpack.c.l.b16 %v5680
        %v7515 = vunpack.c.h.b16 %v5680
        %v7516 = vunpack.c.l.b16 %v5681
        %v7517 = vunpack.c.h.b16 %v5681
        %v7518 = vunpack.c.l.b16 %v5682
        %v7519 = vunpack.c.h.b16 %v5682
        %v7520 = vunpack.c.l.b16 %v5683
        %v7521 = vunpack.c.h.b16 %v5683
        %v7522 = vunpack.c.l.b16 %v5684
        %v7523 = vunpack.c.h.b16 %v5684
        %v7524 = vunpack.c.l.b16 %v5685
        %v7525 = vunpack.c.h.b16 %v5685
        %v7526 = vunpack.c.l.b16 %v5686
        %v7527 = vunpack.c.h.b16 %v5686
        %v7528 = vunpack.c.l.b16 %v5687
        %v7529 = vunpack.c.h.b16 %v5687
        %v7530 = vunpack.c.l.b16 %v5688
        %v7531 = vunpack.c.h.b16 %v5688
        %v7532 = vunpack.c.l.b16 %v5689
        %v7533 = vunpack.c.h.b16 %v5689
        %v7534 = vunpack.c.l.b16 %v5690
        %v7535 = vunpack.c.h.b16 %v5690
        %v7536 = vunpack.c.l.b16 %v5691
        %v7537 = vunpack.c.h.b16 %v5691
        %v7538 = vunpack.c.l.b16 %v5692
        %v7539 = vunpack.c.h.b16 %v5692
        %v7540 = vunpack.c.l.b16 %v5693
        %v7541 = vunpack.c.h.b16 %v5693
        %v7542 = vpack.c.b16 %v7512, %v7510
        %v7543 = vpack.c.b16 %v7513, %v7511
        %v7544 = vpack.c.b16 %v7516, %v7514
        %v7545 = vpack.c.b16 %v7517, %v7515
        %v7546 = vpack.c.b16 %v7520, %v7518
        %v7547 = vpack.c.b16 %v7521, %v7519
        %v7548 = vpack.c.b16 %v7524, %v7522
        %v7549 = vpack.c.b16 %v7525, %v7523
        %v7550 = vpack.c.b16 %v7528, %v7526
        %v7551 = vpack.c.b16 %v7529, %v7527
        %v7552 = vpack.c.b16 %v7532, %v7530
        %v7553 = vpack.c.b16 %v7533, %v7531
        %v7554 = vpack.c.b16 %v7536, %v7534
        %v7555 = vpack.c.b16 %v7537, %v7535
        %v7556 = vpack.c.b16 %v7540, %v7538
        %v7557 = vpack.c.b16 %v7541, %v7539
        %7574 = vmatprep.subr.bf16.mxu0 %v7543
        %7575 = vmatpush1.bf16.msra.mxu0 %v7542
        %7576 = vmatprep.subr.bf16.mxu0 %v7545
        %7577 = vmatpush1.bf16.msra.mxu0 %v7544
        %7578 = vmatprep.subr.bf16.mxu0 %v7547
        %7579 = vmatpush1.bf16.msra.mxu0 %v7546
        %7580 = vmatprep.subr.bf16.mxu0 %v7549
        %7581 = vmatpush1.bf16.msra.mxu0 %v7548
        %7582 = vmatprep.subr.bf16.mxu0 %v7551
        %7583 = vmatpush1.bf16.msra.mxu0 %v7550
        %7584 = vmatprep.subr.bf16.mxu0 %v7553
        %7585 = vmatpush1.bf16.msra.mxu0 %v7552
        %7586 = vmatprep.subr.bf16.mxu0 %v7555
        %7587 = vmatpush1.bf16.msra.mxu0 %v7554
        %7588 = vmatprep.subr.bf16.mxu0 %v7557
        %7589 = vmatpush1.bf16.msra.mxu0 %v7556
        %7590 = vmatprep.subr.bf16.mxu0 0
        %7591 = vmatpush1.bf16.msra.mxu0 0
        %7592 = vmatprep.subr.bf16.mxu0 0
        %7593 = vmatpush1.bf16.msra.mxu0 0
        %7594 = vmatprep.subr.bf16.mxu0 0
        %7595 = vmatpush1.bf16.msra.mxu0 0
        %7596 = vmatprep.subr.bf16.mxu0 0
        %7597 = vmatpush1.bf16.msra.mxu0 0
        %7598 = vmatprep.subr.bf16.mxu0 0
        %7599 = vmatpush1.bf16.msra.mxu0 0
        %7600 = vmatprep.subr.bf16.mxu0 0
        %7601 = vmatpush1.bf16.msra.mxu0 0
        %7602 = vmatprep.subr.bf16.mxu0 0
        %7603 = vmatpush1.bf16.msra.mxu0 0
        %7604 = vmatprep.subr.bf16.mxu0 0
        %7605 = vmatpush1.bf16.msra.mxu0 0
        %7606 = vmatprep.mubr.bf16.mxu0 0
        %7607 = vmatmul.mubr.bf16.gmra.mrb[0].mxu0 %v7482
        %v7608 = vpop.f32.mrb[0].mxu0
        %v7609 = vadd.f32 %v7487, %v7608
        %v7610 = vpop.f32.mrb[0].mxu0
        %v7611 = vadd.f32 %v7491, %v7610
        %v7612 = vpop.f32.mrb[0].mxu0
        %v7613 = vadd.f32 %v7487, %v7612
        %v7614 = vpop.f32.mrb[0].mxu0
        %v7615 = vadd.f32 %v7491, %v7614
        %7616 = vdwg.mxu0
        %v7617 = vmax.f32 %v7609, 0.0
        %v7618 = vmax.f32 %v7611, 0.0
        %v7619 = vmax.f32 %v7613, 0.0
        %v7620 = vmax.f32 %v7615, 0.0
        %v7621 = vpack.c.bf16 %v7619, %v7617
        %v7622 = vpack.c.bf16 %v7620, %v7618
        %v7623 = vlaneseq
        %v7624 = vshrl.u32 %v7623, 7
        %v7625 = vsub.s32 0, %v7624
        %v7626 = vrot.slane %v5729, %v7625
        %v7659 = vunpack.c.l.b16 %v5695
        %v7660 = vunpack.c.l.b16 %v5696
        %v7661 = vunpack.c.l.b16 %v5697
        %v7662 = vunpack.c.l.b16 %v5698
        %v7663 = vunpack.c.l.b16 %v5699
        %v7664 = vunpack.c.l.b16 %v5700
        %v7665 = vunpack.c.l.b16 %v5701
        %v7666 = vunpack.c.l.b16 %v5702
        %v7667 = vunpack.c.l.b16 %v5703
        %v7668 = vunpack.c.l.b16 %v5704
        %v7669 = vunpack.c.l.b16 %v5705
        %v7670 = vunpack.c.l.b16 %v5706
        %v7671 = vunpack.c.l.b16 %v5707
        %v7672 = vunpack.c.l.b16 %v5708
        %v7673 = vunpack.c.l.b16 %v5709
        %v7674 = vunpack.c.l.b16 %v5710
        %v7675 = vunpack.c.l.b16 %v5711
        %v7676 = vunpack.c.l.b16 %v5712
        %v7677 = vunpack.c.l.b16 %v5713
        %v7678 = vunpack.c.l.b16 %v5714
        %v7679 = vunpack.c.l.b16 %v5715
        %v7680 = vunpack.c.l.b16 %v5716
        %v7681 = vunpack.c.l.b16 %v5717
        %v7682 = vunpack.c.l.b16 %v5718
        %v7683 = vunpack.c.l.b16 %v5719
        %v7684 = vunpack.c.l.b16 %v5720
        %v7685 = vunpack.c.l.b16 %v5721
        %v7686 = vunpack.c.l.b16 %v5722
        %v7687 = vunpack.c.l.b16 %v5723
        %v7688 = vunpack.c.l.b16 %v5724
        %v7689 = vunpack.c.l.b16 %v5725
        %v7690 = vunpack.c.l.b16 %v5726
        %v7691 = vpack.c.b16 %v7660, %v7659
        %v7692 = vpack.c.b16 %v7662, %v7661
        %v7693 = vpack.c.b16 %v7664, %v7663
        %v7694 = vpack.c.b16 %v7666, %v7665
        %v7695 = vpack.c.b16 %v7668, %v7667
        %v7696 = vpack.c.b16 %v7670, %v7669
        %v7697 = vpack.c.b16 %v7672, %v7671
        %v7698 = vpack.c.b16 %v7674, %v7673
        %v7699 = vpack.c.b16 %v7676, %v7675
        %v7700 = vpack.c.b16 %v7678, %v7677
        %v7701 = vpack.c.b16 %v7680, %v7679
        %v7702 = vpack.c.b16 %v7682, %v7681
        %v7703 = vpack.c.b16 %v7684, %v7683
        %v7704 = vpack.c.b16 %v7686, %v7685
        %v7705 = vpack.c.b16 %v7688, %v7687
        %v7706 = vpack.c.b16 %v7690, %v7689
        %7723 = vmatprep.subr.bf16.mxu0 0
        %7724 = vmatpush1.bf16.msra.mxu0 %v7691
        %7725 = vmatprep.subr.bf16.mxu0 0
        %7726 = vmatpush1.bf16.msra.mxu0 %v7692
        %7727 = vmatprep.subr.bf16.mxu0 0
        %7728 = vmatpush1.bf16.msra.mxu0 %v7693
        %7729 = vmatprep.subr.bf16.mxu0 0
        %7730 = vmatpush1.bf16.msra.mxu0 %v7694
        %7731 = vmatprep.subr.bf16.mxu0 0
        %7732 = vmatpush1.bf16.msra.mxu0 %v7695
        %7733 = vmatprep.subr.bf16.mxu0 0
        %7734 = vmatpush1.bf16.msra.mxu0 %v7696
        %7735 = vmatprep.subr.bf16.mxu0 0
        %7736 = vmatpush1.bf16.msra.mxu0 %v7697
        %7737 = vmatprep.subr.bf16.mxu0 0
        %7738 = vmatpush1.bf16.msra.mxu0 %v7698
        %7739 = vmatprep.subr.bf16.mxu0 0
        %7740 = vmatpush1.bf16.msra.mxu0 %v7699
        %7741 = vmatprep.subr.bf16.mxu0 0
        %7742 = vmatpush1.bf16.msra.mxu0 %v7700
        %7743 = vmatprep.subr.bf16.mxu0 0
        %7744 = vmatpush1.bf16.msra.mxu0 %v7701
        %7745 = vmatprep.subr.bf16.mxu0 0
        %7746 = vmatpush1.bf16.msra.mxu0 %v7702
        %7747 = vmatprep.subr.bf16.mxu0 0
        %7748 = vmatpush1.bf16.msra.mxu0 %v7703
        %7749 = vmatprep.subr.bf16.mxu0 0
        %7750 = vmatpush1.bf16.msra.mxu0 %v7704
        %7751 = vmatprep.subr.bf16.mxu0 0
        %7752 = vmatpush1.bf16.msra.mxu0 %v7705
        %7753 = vmatprep.subr.bf16.mxu0 0
        %7754 = vmatpush1.bf16.msra.mxu0 %v7706
        %7755 = vmatprep.mubr.bf16.mxu0 %v7622
        %7756 = vmatmul.mubr.bf16.gmra.mrb[0].mxu0 %v7621
        %v7757 = vpop.f32.mrb[0].mxu0
        %v7758 = vadd.f32 %v7626, %v7757
        %v7759 = vpop.f32.mrb[0].mxu0
        %v7760 = vpop.f32.mrb[0].mxu0
        %v7761 = vadd.f32 %v7626, %v7760
        %v7762 = vpop.f32.mrb[0].mxu0
        %7763 = vdwg.mxu0
        %v7764 = vadd.f32 %v7480, %v7758
        %v7765 = vadd.f32 %v7481, %v7761
        %7766 = vadd.xlane.f32.xlu0 %v7764
        %v7767 = vpop.xlane.xlu0 %7766
        %7768 = vadd.xlane.f32.xlu0 %v7765
        %v7769 = vpop.xlane.xlu0 %7768
        %v7770 = vmul.f32 %v7767, %v1710
        %v7771 = vmul.f32 %v7769, %v1710
        %v7772 = vsub.f32 %v7764, %v7770
        %v7773 = vsub.f32 %v7765, %v7771
        %v7774 = vmul.f32 %v7772, %v7772
        %v7775 = vmul.f32 %v7773, %v7773
        %7776 = vadd.xlane.f32.xlu0 %v7774
        %v7777 = vpop.xlane.xlu0 %7776
        %7778 = vadd.xlane.f32.xlu0 %v7775
        %v7779 = vpop.xlane.xlu0 %7778
        %v7780 = vmul.f32 %v7777, %v1710
        %v7781 = vmul.f32 %v7779, %v1710
        %v7782 = vadd.f32 %v7780, 1e-05
        %v7783 = vadd.f32 %v7781, 1e-05
        %v7784 = vrsqrt.pop %v7782
        %v7785 = vrsqrt.pop %v7783
        %v7786 = vmul.f32 %v7772, %v7784
        %v7787 = vmul.f32 %v7773, %v7785
        %v7788 = vlaneseq
        %v7789 = vshrl.u32 %v7788, 7
        %v7790 = vsub.s32 5, %v7789
        %v7791 = vrot.slane %v5729, %v7790
        %v7792 = vmul.f32 %v7786, %v7791
        %v7793 = vmul.f32 %v7787, %v7791
        %v7794 = vlaneseq
        %v7795 = vshrl.u32 %v7794, 7
        %v7796 = vsub.s32 6, %v7795
        %v7797 = vrot.slane %v5729, %v7796
        %v7798 = vadd.f32 %v7792, %v7797
        %v7799 = vadd.f32 %v7793, %v7797
        %7800 = vst [vmem:[%s743] sm:$0xff] %v7798
        %7801 = vst [vmem:[%s743 + $0x8] sm:$0xff] %v7799
        %s7802 = sand.u32 %s434, 1
        %s7803 = scalar_lea.sflag [#allocation4], %s7802
        %s7804 = sand.u32 %s434, 1
        %s7805 = smul.addr %s7804, 16
        %s7806 = scalar_lea.vmem [#allocation20], %s7805
        // Predicated region
        $region137: #{transformer_forward.1} parent=91 // pred_check
          %p7807 = pneg %p444
        $region138: #{transformer_forward.1} parent=91 // pred_check_branch
          %7809 = sbr.rel (%p7807) target = $region140
        $region139: #{transformer_forward.1} parent=91 // pred_region
          %s7811 = ssub.s32 256, 256
          %7812 = vsyncadd %s7803, %s7811
          %s7813 = smul.addr %s38, 2
          %s7814 = smul.addr %s7813, 128
          %s7815 = scalar_lea.hbm %s18, %s7814
          %s7816 = sshll.u32 %s7806, 4
          %s7817 = int_to_ptr.vmem [resolvable:$true] %s7816
          %7822 = dma.vmem_to_hbm [thread:$0]  %s7817, 256, %s7815, %s7803, 128, 128, 8
        $region140: #{transformer_forward.1} parent=91 // pred_fallthru
          _
      $region92: #{transformer_forward.1} parent=5 // pred_fallthru
        _
      %p7823 = scmp.le.s32.totalorder 2, %s33
      // Predicated region
      $region141: #{transformer_forward.1} parent=5 // pred_check
        %p7824 = pneg %p7823
      $region142: #{transformer_forward.1} parent=5 // pred_check_branch
        %7826 = sbr.rel (%p7824) target = $region144
      $region143: #{transformer_forward.1} parent=5 // pred_region
        %s7827 = ssub.s32 %s33, 2
        // Predicated region
        $region145: #{transformer_forward.1} parent=143 // pred_check
          %p7828 = pneg %p450
        $region146: #{transformer_forward.1} parent=143 // pred_check_branch
          %7830 = sbr.rel (%p7828) target = $region148
        $region147: #{transformer_forward.1} parent=143 // pred_region
          %s7831 = sand.u32 %s435, 1
          %s7832 = scalar_lea.sflag [#allocation4], %s7831
          %s7833 = sand.u32 %s435, 1
          %s7834 = smul.addr %s7833, 16
          %s7835 = scalar_lea.vmem [#allocation20], %s7834
          %7836 = dma.done %s7832, 256
        $region148: #{transformer_forward.1} parent=143 // pred_fallthru
          _
      $region144: #{transformer_forward.1} parent=5 // pred_fallthru
        _
    $region6: #{transformer_forward.1} parent=1 // loop_footer
      %s37 = sadd.s32 1, %s33
    $region7: #{transformer_forward.1} parent=1 // loop_footer_branch
      %32 = sbr.rel target = $region3
    $region8: #{transformer_forward.1} parent=1 // loop_exit
      _
    %7837 = vsyncpa [#allocation3], 1
    %s7838 = scalar_lea.sflag [#allocation3], 1
    %7839 = vsyncpa %s7838, 1
    %7840 = vsyncpa [#allocation6], 1
    %7841 = vsyncpa [#allocation9], 1
    %7842 = vsyncpa [#allocation12], 1
    %7843 = vsyncpa [#allocation15], 1
    %7844 = vsyncpa [#allocation18], 1
    %7845 = vsyncpa [#allocation4], 1
    %s7846 = scalar_lea.sflag [#allocation4], 1
    %7847 = vsyncpa %s7846, 1

</llo_original>
